<compile_context>
chip_gen: v6e
topology: v6e:2x2x1
jax: 0.10.0
libtpu: 0.0.40
codegen_flags: <defaults>
</compile_context>

<pallas_src>
import functools

import jax
import jax.numpy as jnp
from jax import lax
from jax.experimental import pallas as pl
from jax.experimental.pallas import tpu as pltpu

CLASS_PAD = 128  # lane-dense padded class dimension


# ----------------------------------------------------------------------------
# Pallas kernel: full forward pass of en_gnn
# ----------------------------------------------------------------------------
def en_gnn_kernel(
    # graph data (indices + features)
    gat_idx_ref, sct_row_ref, batch_ref, h_ref, x_ref,
    # embedding_in
    ei_w_ref, ei_b_ref,
    # E_GCL edge_mlp (stacked over layers; first Linear split [src|dst|radial])
    ew1s_ref, ew1d_ref, ew1r_ref, eb1_ref, ew2_ref, eb2_ref,
    # E_GCL node_mlp (first Linear split [h|agg])
    nw1h_ref, nw1a_ref, nb1_ref, nw2_ref, nb2_ref,
    # E_GCL coord_mlp
    cw1_ref, cb1_ref, cw2_ref,
    # embedding_out
    eo_w_ref, eo_b_ref,
    # fc head (last layer padded to CLASS_PAD lanes)
    f1w_ref, f1b_ref, f2w_ref, f2b_ref, f3w_ref, f3b_ref,
    # output (B, CLASS_PAD)
    out_ref,
):
    f32 = jnp.float32

    def dot(a, b):
        # f32 operands, f32 accumulation (keeps coords/radial exact; also the
        # only dot dtype supported by the interpret-mode CPU DotThunk).
        return jnp.dot(a, b, preferred_element_type=f32)

    def silu(v):
        return v * jax.nn.sigmoid(v)

    H = ei_b_ref.shape[-1]
    E = sct_row_ref.shape[-1]
    E2 = gat_idx_ref.shape[0]           # 2E
    N = h_ref.shape[0]
    B = out_ref.shape[0]
    num_layers = ew2_ref.shape[0]

    # --- build gather / scatter matrices once from O(E) indices -------------
    gat_idx = gat_idx_ref[...]                                   # (2E, 1) int32 [row; col]
    sct_row = sct_row_ref[...]                                   # (1, E)  int32 row (receiver)

    lane_iota = lax.broadcasted_iota(jnp.int32, (E2, N), 1)      # node id along lanes
    sgat = (lane_iota == gat_idx).astype(f32)                    # (2E, N): gather rows

    node_iota = lax.broadcasted_iota(jnp.int32, (N, E), 0)       # node id along sublanes
    ssum = (node_iota == sct_row).astype(f32)                    # (N, E): scatter-sum
    deg = jnp.sum(ssum, axis=1, keepdims=True)                   # (N, 1) in-degree
    smean = ssum * (1.0 / jnp.maximum(deg, 1.0))                 # (N, E): scatter-mean

    # --- embedding_in --------------------------------------------------------
    h = dot(h_ref[...], ei_w_ref[...]) + ei_b_ref[...]           # (N, H) f32
    x = x_ref[...]                                               # (N, 3) f32

    for l in range(num_layers):                                  # 4 E_GCL layers, unrolled
        # hoist per-layer params once per unrolled body
        ew1s, ew1d, ew1r = ew1s_ref[l], ew1d_ref[l], ew1r_ref[l]
        eb1, ew2, eb2 = eb1_ref[l], ew2_ref[l], eb2_ref[l]
        nw1h, nw1a, nb1 = nw1h_ref[l], nw1a_ref[l], nb1_ref[l]
        nw2, nb2 = nw2_ref[l], nb2_ref[l]
        cw1, cb1, cw2 = cw1_ref[l], cb1_ref[l], cw2_ref[l]

        # gathers: h[row], h[col] in one matmul; coords in their own 3-wide one
        gh = dot(sgat, h)                                        # (2E, H)
        gx = dot(sgat, x)                                        # (2E, 3)
        h_row, h_col = gh[:E], gh[E:]                            # sublane-aligned split
        x_row, x_col = gx[:E], gx[E:]
        coord_diff = x_row - x_col                               # (E, 3)
        radial = jnp.sum(coord_diff * coord_diff, axis=-1, keepdims=True)   # (E, 1)

        # edge_model: edge_mlp(cat([h_row, h_col, radial])) computed without
        # the lane-misaligned concat: split first Linear over its inputs.
        pre = dot(h_row, ew1s) + dot(h_col, ew1d) + radial * ew1r + eb1     # (E, H)
        edge_feat = silu(dot(silu(pre), ew2) + eb2)              # (E, H)

        # coord_model: trans = coord_diff * coord_mlp(edge_feat)
        cm = dot(silu(dot(edge_feat, cw1) + cb1), cw2)           # (E, 1)
        trans = coord_diff * cm                                  # (E, 3)

        # aggregations: sum for node features, mean (pre-scaled) for coords
        agg = dot(ssum, edge_feat)                               # (N, H)
        x = x + dot(smean, trans)                                # (N, 3)

        # node_model: node_mlp(cat([h, agg])) without the concat; residual=False
        m = silu(dot(h, nw1h) + dot(agg, nw1a) + nb1)            # (N, H)
        h = dot(m, nw2) + nb2                                    # (N, H)

    # --- embedding_out --------------------------------------------------------
    h = dot(h, eo_w_ref[...]) + eo_b_ref[...]                    # (N, out_nf)

    # --- global_max_pool over `batch` (2-D ops only) -------------------------
    batch_col = batch_ref[...]                                   # (N, 1) int32
    rows = []
    for b in range(B):                                           # B is small & static
        hb = jnp.where(batch_col == b, h, -1e30)                 # (N, out_nf)
        rows.append(jnp.max(hb, axis=0, keepdims=True))          # (1, out_nf)
    pooled = jnp.concatenate(rows, axis=0)                       # (B, out_nf)

    # --- fc head (Linear, ReLU, Linear, ReLU, Linear[padded to 128 lanes]) ---
    z = jnp.maximum(dot(pooled, f1w_ref[...]) + f1b_ref[...], 0.0)
    z = jnp.maximum(dot(z, f2w_ref[...]) + f2b_ref[...], 0.0)
    logits = dot(z, f3w_ref[...]) + f3b_ref[...]                 # (B, CLASS_PAD)

    # --- log_softmax (padded columns carry -1e30 bias -> exp underflows to 0)
    mx = jnp.max(logits, axis=-1, keepdims=True)
    lse = jnp.log(jnp.sum(jnp.exp(logits - mx), axis=-1, keepdims=True)) + mx
    out_ref[...] = logits - lse


# ----------------------------------------------------------------------------
# Wrapper: pad shapes, pack indices, pad classifier, call the kernel
# ----------------------------------------------------------------------------
def en_gnn_forward(h, x, edge_index, batch, num_graphs, params):
    f32, i32 = jnp.float32, jnp.int32
    n_nodes_in = h.shape[0]
    n_edges_in = edge_index.shape[1]
    in_nf = params["ei_w"].shape[0]
    hidden = params["ei_w"].shape[1]
    out_nf = params["eo_w"].shape[1]
    n_layers = params["e_w2"].shape[0]
    m1, m2 = params["f1_w"].shape[1], params["f2_w"].shape[1]
    num_classes = params["f3_w"].shape[1]

    # pad node / edge counts to sublane multiples; pad entries use index == N,
    # which matches no iota value -> zero gather rows / zero scatter columns,
    # and pad nodes carry batch id == num_graphs -> excluded from pooling.
    N = int(-(-n_nodes_in // 8) * 8)
    E = int(-(-n_edges_in // 8) * 8)

    h_p = jnp.zeros((N, in_nf), f32).at[:n_nodes_in].set(h.astype(f32))
    x_p = jnp.zeros((N, 3), f32).at[:n_nodes_in].set(x.astype(f32))
    row = jnp.full((E,), N, i32).at[:n_edges_in].set(edge_index[0].astype(i32))
    col = jnp.full((E,), N, i32).at[:n_edges_in].set(edge_index[1].astype(i32))
    batch_p = jnp.full((N,), num_graphs, i32).at[:n_nodes_in].set(batch.astype(i32))

    gat_idx = jnp.concatenate([row, col], axis=0).reshape(2 * E, 1)   # (2E, 1)
    sct_row = row.reshape(1, E)                                       # (1, E) lane-dense
    batch_col = batch_p.reshape(N, 1)                                 # (N, 1)

    # pad classifier to a lane-dense 128-wide output; pad columns: zero weight,
    # -1e30 bias so they vanish under softmax; sliced off below.
    mlp_last = params["f3_w"].shape[0]
    f3_w_pad = jnp.zeros((mlp_last, CLASS_PAD), f32).at[:, :num_classes].set(params["f3_w"])
    f3_b_pad = jnp.full((1, CLASS_PAD), -1e30, f32).at[:, :num_classes].set(params["f3_b"])

    inputs = (
        gat_idx, sct_row, batch_col, h_p, x_p,
        params["ei_w"], params["ei_b"],
        params["e_w1s"], params["e_w1d"], params["e_w1r"], params["e_b1"],
        params["e_w2"], params["e_b2"],
        params["n_w1h"], params["n_w1a"], params["n_b1"],
        params["n_w2"], params["n_b2"],
        params["c_w1"], params["c_b1"], params["c_w2"],
        params["eo_w"], params["eo_b"],
        params["f1_w"], params["f1_b"],
        params["f2_w"], params["f2_b"],
        f3_w_pad, f3_b_pad,
    )

    # advisory cost estimate + scoped-VMEM ceiling sized from the footprint
    B, H, L = int(num_graphs), int(hidden), int(n_layers)
    flops_layer = (2 * (2 * E) * N * (H + 3)            # gathers
                   + 2 * E * H * H * 4 + 2 * E * H      # edge + coord MLPs
                   + 2 * N * E * (H + 3)                # scatters
                   + 2 * N * H * H * 3)                 # node MLP
    flops = (L * flops_layer + 2 * N * int(in_nf) * H + 2 * N * H * int(out_nf)
             + 2 * B * (int(out_nf) * int(m1) + int(m1) * int(m2) + int(m2) * CLASS_PAD))
    transcendentals = L * (3 * E * H + N * H) + B * CLASS_PAD
    in_bytes = sum(int(a.size) * a.dtype.itemsize for a in inputs)
    out_bytes = B * CLASS_PAD * 4
    work_bytes = 4 * (2 * E * N + 2 * N * E + 6 * E * (H + 8) + 3 * N * (H + 8))
    ce = pl.CostEstimate(flops=int(flops), transcendentals=int(transcendentals),
                         bytes_accessed=int(in_bytes + out_bytes))
    vmem_limit = int(min(100 * 2 ** 20, max(32 * 2 ** 20, 4 * (in_bytes + work_bytes))))

    vmem = pl.BlockSpec(memory_space=pltpu.MemorySpace.VMEM)
    out = pl.pallas_call(
        en_gnn_kernel,
        out_shape=jax.ShapeDtypeStruct((num_graphs, CLASS_PAD), jnp.float32),
        in_specs=[vmem] * len(inputs),
        out_specs=vmem,
        cost_estimate=ce,
        compiler_params=pltpu.CompilerParams(vmem_limit_bytes=vmem_limit),
    )(*inputs)
    return out[:, :num_classes]


# ----------------------------------------------------------------------------
# Deterministic parameter init (synthetic weights, matching module shapes)
# ----------------------------------------------------------------------------
def init_params(key, in_nfs, hidden_nf, out_nf, num_classes, mlp_dims, n_layers):
    keys = iter(jax.random.split(key, 128))

    def lin_w(fan_in, fan_out):
        return (jax.random.normal(next(keys), (fan_in, fan_out), jnp.float32)
                / jnp.sqrt(jnp.float32(fan_in)))

    def stack_w(fan_in, fan_out):
        return jnp.stack([lin_w(fan_in, fan_out) for _ in range(n_layers)])

    def stack_b(dim):
        return jnp.stack([
            0.01 * jax.random.normal(next(keys), (1, dim), jnp.float32)
            for _ in range(n_layers)
        ])

    H = hidden_nf
    params = {
        # EGNN embedding_in / embedding_out
        "ei_w": lin_w(in_nfs, H), "ei_b": jnp.zeros((1, H), jnp.float32),
        "eo_w": lin_w(H, out_nf), "eo_b": jnp.zeros((1, out_nf), jnp.float32),
        # E_GCL edge_mlp: Linear(2H+1, H) split into [src | dst | radial] parts
        "e_w1s": stack_w(H, H), "e_w1d": stack_w(H, H),
        "e_w1r": jnp.stack([lin_w(1, H) for _ in range(n_layers)]),
        "e_b1": stack_b(H),
        "e_w2": stack_w(H, H), "e_b2": stack_b(H),
        # E_GCL node_mlp: Linear(2H, H) split into [h | agg] parts, Linear(H, H)
        "n_w1h": stack_w(H, H), "n_w1a": stack_w(H, H), "n_b1": stack_b(H),
        "n_w2": stack_w(H, H), "n_b2": stack_b(H),
        # E_GCL coord_mlp: Linear(H, H), SiLU, Linear(H, 1, bias=False)
        "c_w1": stack_w(H, H), "c_b1": stack_b(H),
        "c_w2": jnp.stack([lin_w(H, 1) for _ in range(n_layers)]),
        # fc head
        "f1_w": lin_w(out_nf, mlp_dims[0]), "f1_b": jnp.zeros((1, mlp_dims[0]), jnp.float32),
        "f2_w": lin_w(mlp_dims[0], mlp_dims[1]), "f2_b": jnp.zeros((1, mlp_dims[1]), jnp.float32),
        "f3_w": lin_w(mlp_dims[1], num_classes), "f3_b": jnp.zeros((1, num_classes), jnp.float32),
    }
    return params


if __name__ == "__main__":
    # Module hyper-params (en_gnn defaults: 4 EGNN layers, residual=False,
    # coords_agg='mean', pooling='max', num_classes=55, mlp_dims=[128,128]).
    in_nfs, hidden_nf, out_nf = 8, 32, 32
    num_classes, mlp_dims, n_layers = 55, [128, 128], 4

    # Small synthetic graph batch: 2 graphs x 8 nodes, bidirectional ring edges.
    nodes_per_graph, num_graphs = 8, 2
    n_nodes = nodes_per_graph * num_graphs

    rows, cols = [], []
    for g in range(num_graphs):
        off = g * nodes_per_graph
        for i in range(nodes_per_graph):
            a, b = off + i, off + (i + 1) % nodes_per_graph
            rows += [a, b]
            cols += [b, a]
    edge_index = jnp.array([rows, cols], dtype=jnp.int32)        # (2, E), E = 32
    batch = jnp.array(
        [g for g in range(num_graphs) for _ in range(nodes_per_graph)], dtype=jnp.int32)

    key = jax.random.PRNGKey(0)
    k_h, k_x, k_p = jax.random.split(key, 3)
    h = jax.random.normal(k_h, (n_nodes, in_nfs), jnp.float32)
    x = jax.random.normal(k_x, (n_nodes, 3), jnp.float32)
    params = init_params(k_p, in_nfs, hidden_nf, out_nf, num_classes, mlp_dims, n_layers)

    fwd = jax.jit(functools.partial(en_gnn_forward, num_graphs=num_graphs))
    log_probs = fwd(h, x, edge_index, batch, params=params)
    jax.block_until_ready(log_probs)

    assert log_probs.shape == (num_graphs, num_classes)
    assert bool(jnp.all(jnp.isfinite(log_probs)))
    # log_softmax rows must sum (in prob space) to ~1
    assert bool(jnp.all(jnp.abs(jnp.sum(jnp.exp(log_probs), axis=-1) - 1.0) < 1e-4))
    print("KERNEL_OK")
</pallas_src>

<mosaic_0001>
module attributes {stable_mosaic.version = 11 : i64} {
  func.func @en_gnn_kernel(%arg0: memref<64x1xi32, #tpu.memory_space<vmem>>, %arg1: memref<1x32xi32, #tpu.memory_space<vmem>>, %arg2: memref<16x1xi32, #tpu.memory_space<vmem>>, %arg3: memref<16x8xf32, #tpu.memory_space<vmem>>, %arg4: memref<16x3xf32, #tpu.memory_space<vmem>>, %arg5: memref<8x32xf32, #tpu.memory_space<vmem>>, %arg6: memref<1x32xf32, #tpu.memory_space<vmem>>, %arg7: memref<4x32x32xf32, #tpu.memory_space<vmem>>, %arg8: memref<4x32x32xf32, #tpu.memory_space<vmem>>, %arg9: memref<4x1x32xf32, #tpu.memory_space<vmem>>, %arg10: memref<4x1x32xf32, #tpu.memory_space<vmem>>, %arg11: memref<4x32x32xf32, #tpu.memory_space<vmem>>, %arg12: memref<4x1x32xf32, #tpu.memory_space<vmem>>, %arg13: memref<4x32x32xf32, #tpu.memory_space<vmem>>, %arg14: memref<4x32x32xf32, #tpu.memory_space<vmem>>, %arg15: memref<4x1x32xf32, #tpu.memory_space<vmem>>, %arg16: memref<4x32x32xf32, #tpu.memory_space<vmem>>, %arg17: memref<4x1x32xf32, #tpu.memory_space<vmem>>, %arg18: memref<4x32x32xf32, #tpu.memory_space<vmem>>, %arg19: memref<4x1x32xf32, #tpu.memory_space<vmem>>, %arg20: memref<4x32x1xf32, #tpu.memory_space<vmem>>, %arg21: memref<32x32xf32, #tpu.memory_space<vmem>>, %arg22: memref<1x32xf32, #tpu.memory_space<vmem>>, %arg23: memref<32x128xf32, #tpu.memory_space<vmem>>, %arg24: memref<1x128xf32, #tpu.memory_space<vmem>>, %arg25: memref<128x128xf32, #tpu.memory_space<vmem>>, %arg26: memref<1x128xf32, #tpu.memory_space<vmem>>, %arg27: memref<128x128xf32, #tpu.memory_space<vmem>>, %arg28: memref<1x128xf32, #tpu.memory_space<vmem>>, %arg29: memref<2x128xf32, #tpu.memory_space<vmem>>) attributes {dimension_semantics = [], scalar_prefetch = 0 : i64, scratch_operands = 0 : i64, tpu.core_type = #tpu.core_type<tc>} {
    %c0 = arith.constant 0 : index
    %c0_0 = arith.constant 0 : index
    %0 = vector.load %arg0[%c0, %c0_0] : memref<64x1xi32, #tpu.memory_space<vmem>>, vector<64x1xi32>
    %c0_1 = arith.constant 0 : index
    %c0_2 = arith.constant 0 : index
    %1 = vector.load %arg1[%c0_1, %c0_2] : memref<1x32xi32, #tpu.memory_space<vmem>>, vector<1x32xi32>
    %2 = tpu.iota {dimensions = array<i32: 1>} : vector<64x16xi32>
    %3 = vector.broadcast %0 : vector<64x1xi32> to vector<64x16xi32>
    %4 = arith.cmpi eq, %2, %3 : vector<64x16xi32>
    %5 = arith.extui %4 : vector<64x16xi1> to vector<64x16xi32>
    %6 = arith.sitofp %5 : vector<64x16xi32> to vector<64x16xf32>
    %7 = tpu.iota {dimensions = array<i32: 0>} : vector<16x32xi32>
    %8 = vector.broadcast %1 : vector<1x32xi32> to vector<16x32xi32>
    %9 = arith.cmpi eq, %7, %8 : vector<16x32xi32>
    %10 = arith.extui %9 : vector<16x32xi1> to vector<16x32xi32>
    %11 = arith.sitofp %10 : vector<16x32xi32> to vector<16x32xf32>
    %cst = arith.constant dense<0.000000e+00> : vector<16xf32>
    %12 = vector.multi_reduction <add>, %11, %cst [1] : vector<16x32xf32> to vector<16xf32>
    %13 = vector.shape_cast %12 : vector<16xf32> to vector<16x1xf32>
    %cst_3 = arith.constant 1.000000e+00 : f32
    %14 = vector.broadcast %cst_3 : f32 to vector<16x1xf32>
    %15 = arith.maximumf %13, %14 : vector<16x1xf32>
    %cst_4 = arith.constant 1.000000e+00 : f32
    %16 = vector.broadcast %cst_4 : f32 to vector<16x1xf32>
    %17 = arith.divf %16, %15 : vector<16x1xf32>
    %18 = vector.broadcast %17 : vector<16x1xf32> to vector<16x32xf32>
    %19 = arith.mulf %11, %18 : vector<16x32xf32>
    %c0_5 = arith.constant 0 : index
    %c0_6 = arith.constant 0 : index
    %20 = vector.load %arg3[%c0_5, %c0_6] : memref<16x8xf32, #tpu.memory_space<vmem>>, vector<16x8xf32>
    %c0_7 = arith.constant 0 : index
    %c0_8 = arith.constant 0 : index
    %21 = vector.load %arg5[%c0_7, %c0_8] : memref<8x32xf32, #tpu.memory_space<vmem>>, vector<8x32xf32>
    %cst_9 = arith.constant dense<0.000000e+00> : vector<16x32xf32>
    %22 = tpu.matmul %20, %21, %cst_9 {dimension_numbers = #tpu.dot_dimension_numbers<[1], [0], [0], [1], [0, 0, 1, 1], [], []>} : vector<16x8xf32>, vector<8x32xf32>, vector<16x32xf32> -> vector<16x32xf32>
    %c0_10 = arith.constant 0 : index
    %c0_11 = arith.constant 0 : index
    %23 = vector.load %arg6[%c0_10, %c0_11] : memref<1x32xf32, #tpu.memory_space<vmem>>, vector<1x32xf32>
    %24 = vector.broadcast %23 : vector<1x32xf32> to vector<16x32xf32>
    %25 = arith.addf %22, %24 : vector<16x32xf32>
    %c0_12 = arith.constant 0 : index
    %c0_13 = arith.constant 0 : index
    %26 = vector.load %arg4[%c0_12, %c0_13] : memref<16x3xf32, #tpu.memory_space<vmem>>, vector<16x3xf32>
    %c0_14 = arith.constant 0 : index
    %c0_15 = arith.constant 0 : index
    %c0_16 = arith.constant 0 : index
    %27 = vector.load %arg7[%c0_14, %c0_15, %c0_16] : memref<4x32x32xf32, #tpu.memory_space<vmem>>, vector<1x32x32xf32>
    %28 = vector.shape_cast %27 : vector<1x32x32xf32> to vector<32x32xf32>
    %c0_17 = arith.constant 0 : index
    %c0_18 = arith.constant 0 : index
    %c0_19 = arith.constant 0 : index
    %29 = vector.load %arg8[%c0_17, %c0_18, %c0_19] : memref<4x32x32xf32, #tpu.memory_space<vmem>>, vector<1x32x32xf32>
    %30 = vector.shape_cast %29 : vector<1x32x32xf32> to vector<32x32xf32>
    %c0_20 = arith.constant 0 : index
    %c0_21 = arith.constant 0 : index
    %c0_22 = arith.constant 0 : index
    %31 = vector.load %arg9[%c0_20, %c0_21, %c0_22] : memref<4x1x32xf32, #tpu.memory_space<vmem>>, vector<1x1x32xf32>
    %32 = vector.shape_cast %31 : vector<1x1x32xf32> to vector<1x32xf32>
    %c0_23 = arith.constant 0 : index
    %c0_24 = arith.constant 0 : index
    %c0_25 = arith.constant 0 : index
    %33 = vector.load %arg10[%c0_23, %c0_24, %c0_25] : memref<4x1x32xf32, #tpu.memory_space<vmem>>, vector<1x1x32xf32>
    %34 = vector.shape_cast %33 : vector<1x1x32xf32> to vector<1x32xf32>
    %c0_26 = arith.constant 0 : index
    %c0_27 = arith.constant 0 : index
    %c0_28 = arith.constant 0 : index
    %35 = vector.load %arg11[%c0_26, %c0_27, %c0_28] : memref<4x32x32xf32, #tpu.memory_space<vmem>>, vector<1x32x32xf32>
    %36 = vector.shape_cast %35 : vector<1x32x32xf32> to vector<32x32xf32>
    %c0_29 = arith.constant 0 : index
    %c0_30 = arith.constant 0 : index
    %c0_31 = arith.constant 0 : index
    %37 = vector.load %arg12[%c0_29, %c0_30, %c0_31] : memref<4x1x32xf32, #tpu.memory_space<vmem>>, vector<1x1x32xf32>
    %38 = vector.shape_cast %37 : vector<1x1x32xf32> to vector<1x32xf32>
    %c0_32 = arith.constant 0 : index
    %c0_33 = arith.constant 0 : index
    %c0_34 = arith.constant 0 : index
    %39 = vector.load %arg13[%c0_32, %c0_33, %c0_34] : memref<4x32x32xf32, #tpu.memory_space<vmem>>, vector<1x32x32xf32>
    %40 = vector.shape_cast %39 : vector<1x32x32xf32> to vector<32x32xf32>
    %c0_35 = arith.constant 0 : index
    %c0_36 = arith.constant 0 : index
    %c0_37 = arith.constant 0 : index
    %41 = vector.load %arg14[%c0_35, %c0_36, %c0_37] : memref<4x32x32xf32, #tpu.memory_space<vmem>>, vector<1x32x32xf32>
    %42 = vector.shape_cast %41 : vector<1x32x32xf32> to vector<32x32xf32>
    %c0_38 = arith.constant 0 : index
    %c0_39 = arith.constant 0 : index
    %c0_40 = arith.constant 0 : index
    %43 = vector.load %arg15[%c0_38, %c0_39, %c0_40] : memref<4x1x32xf32, #tpu.memory_space<vmem>>, vector<1x1x32xf32>
    %44 = vector.shape_cast %43 : vector<1x1x32xf32> to vector<1x32xf32>
    %c0_41 = arith.constant 0 : index
    %c0_42 = arith.constant 0 : index
    %c0_43 = arith.constant 0 : index
    %45 = vector.load %arg16[%c0_41, %c0_42, %c0_43] : memref<4x32x32xf32, #tpu.memory_space<vmem>>, vector<1x32x32xf32>
    %46 = vector.shape_cast %45 : vector<1x32x32xf32> to vector<32x32xf32>
    %c0_44 = arith.constant 0 : index
    %c0_45 = arith.constant 0 : index
    %c0_46 = arith.constant 0 : index
    %47 = vector.load %arg17[%c0_44, %c0_45, %c0_46] : memref<4x1x32xf32, #tpu.memory_space<vmem>>, vector<1x1x32xf32>
    %48 = vector.shape_cast %47 : vector<1x1x32xf32> to vector<1x32xf32>
    %c0_47 = arith.constant 0 : index
    %c0_48 = arith.constant 0 : index
    %c0_49 = arith.constant 0 : index
    %49 = vector.load %arg18[%c0_47, %c0_48, %c0_49] : memref<4x32x32xf32, #tpu.memory_space<vmem>>, vector<1x32x32xf32>
    %50 = vector.shape_cast %49 : vector<1x32x32xf32> to vector<32x32xf32>
    %c0_50 = arith.constant 0 : index
    %c0_51 = arith.constant 0 : index
    %c0_52 = arith.constant 0 : index
    %51 = vector.load %arg19[%c0_50, %c0_51, %c0_52] : memref<4x1x32xf32, #tpu.memory_space<vmem>>, vector<1x1x32xf32>
    %52 = vector.shape_cast %51 : vector<1x1x32xf32> to vector<1x32xf32>
    %c0_53 = arith.constant 0 : index
    %c0_54 = arith.constant 0 : index
    %c0_55 = arith.constant 0 : index
    %53 = vector.load %arg20[%c0_53, %c0_54, %c0_55] : memref<4x32x1xf32, #tpu.memory_space<vmem>>, vector<1x32x1xf32>
    %54 = vector.shape_cast %53 : vector<1x32x1xf32> to vector<32x1xf32>
    %cst_56 = arith.constant dense<0.000000e+00> : vector<64x32xf32>
    %55 = tpu.matmul %6, %25, %cst_56 {dimension_numbers = #tpu.dot_dimension_numbers<[1], [0], [0], [1], [0, 0, 1, 1], [], []>} : vector<64x16xf32>, vector<16x32xf32>, vector<64x32xf32> -> vector<64x32xf32>
    %cst_57 = arith.constant dense<0.000000e+00> : vector<64x3xf32>
    %56 = tpu.matmul %6, %26, %cst_57 {dimension_numbers = #tpu.dot_dimension_numbers<[1], [0], [0], [1], [0, 0, 1, 1], [], []>} : vector<64x16xf32>, vector<16x3xf32>, vector<64x3xf32> -> vector<64x3xf32>
    %57 = vector.extract_strided_slice %55 {offsets = [0, 0], sizes = [32, 32], strides = [1, 1]} : vector<64x32xf32> to vector<32x32xf32>
    %58 = vector.extract_strided_slice %55 {offsets = [32, 0], sizes = [32, 32], strides = [1, 1]} : vector<64x32xf32> to vector<32x32xf32>
    %59 = vector.extract_strided_slice %56 {offsets = [0, 0], sizes = [32, 3], strides = [1, 1]} : vector<64x3xf32> to vector<32x3xf32>
    %60 = vector.extract_strided_slice %56 {offsets = [32, 0], sizes = [32, 3], strides = [1, 1]} : vector<64x3xf32> to vector<32x3xf32>
    %61 = arith.subf %59, %60 : vector<32x3xf32>
    %62 = arith.mulf %61, %61 : vector<32x3xf32>
    %cst_58 = arith.constant dense<0.000000e+00> : vector<32xf32>
    %63 = vector.multi_reduction <add>, %62, %cst_58 [1] : vector<32x3xf32> to vector<32xf32>
    %64 = vector.shape_cast %63 : vector<32xf32> to vector<32x1xf32>
    %cst_59 = arith.constant dense<0.000000e+00> : vector<32x32xf32>
    %65 = tpu.matmul %57, %28, %cst_59 {dimension_numbers = #tpu.dot_dimension_numbers<[1], [0], [0], [1], [0, 0, 1, 1], [], []>} : vector<32x32xf32>, vector<32x32xf32>, vector<32x32xf32> -> vector<32x32xf32>
    %cst_60 = arith.constant dense<0.000000e+00> : vector<32x32xf32>
    %66 = tpu.matmul %58, %30, %cst_60 {dimension_numbers = #tpu.dot_dimension_numbers<[1], [0], [0], [1], [0, 0, 1, 1], [], []>} : vector<32x32xf32>, vector<32x32xf32>, vector<32x32xf32> -> vector<32x32xf32>
    %67 = arith.addf %65, %66 : vector<32x32xf32>
    %68 = vector.broadcast %64 : vector<32x1xf32> to vector<32x32xf32>
    %69 = vector.broadcast %32 : vector<1x32xf32> to vector<32x32xf32>
    %70 = arith.mulf %68, %69 : vector<32x32xf32>
    %71 = arith.addf %67, %70 : vector<32x32xf32>
    %72 = vector.broadcast %34 : vector<1x32xf32> to vector<32x32xf32>
    %73 = arith.addf %71, %72 : vector<32x32xf32>
    %74 = arith.negf %73 : vector<32x32xf32>
    %75 = math.exp %74 : vector<32x32xf32>
    %cst_61 = arith.constant 1.000000e+00 : f32
    %76 = vector.broadcast %cst_61 : f32 to vector<32x32xf32>
    %77 = arith.addf %76, %75 : vector<32x32xf32>
    %78 = arith.divf %76, %77 : vector<32x32xf32>
    %79 = arith.mulf %73, %78 : vector<32x32xf32>
    %cst_62 = arith.constant dense<0.000000e+00> : vector<32x32xf32>
    %80 = tpu.matmul %79, %36, %cst_62 {dimension_numbers = #tpu.dot_dimension_numbers<[1], [0], [0], [1], [0, 0, 1, 1], [], []>} : vector<32x32xf32>, vector<32x32xf32>, vector<32x32xf32> -> vector<32x32xf32>
    %81 = vector.broadcast %38 : vector<1x32xf32> to vector<32x32xf32>
    %82 = arith.addf %80, %81 : vector<32x32xf32>
    %83 = arith.negf %82 : vector<32x32xf32>
    %84 = math.exp %83 : vector<32x32xf32>
    %cst_63 = arith.constant 1.000000e+00 : f32
    %85 = vector.broadcast %cst_63 : f32 to vector<32x32xf32>
    %86 = arith.addf %85, %84 : vector<32x32xf32>
    %87 = arith.divf %85, %86 : vector<32x32xf32>
    %88 = arith.mulf %82, %87 : vector<32x32xf32>
    %cst_64 = arith.constant dense<0.000000e+00> : vector<32x32xf32>
    %89 = tpu.matmul %88, %50, %cst_64 {dimension_numbers = #tpu.dot_dimension_numbers<[1], [0], [0], [1], [0, 0, 1, 1], [], []>} : vector<32x32xf32>, vector<32x32xf32>, vector<32x32xf32> -> vector<32x32xf32>
    %90 = vector.broadcast %52 : vector<1x32xf32> to vector<32x32xf32>
    %91 = arith.addf %89, %90 : vector<32x32xf32>
    %92 = arith.negf %91 : vector<32x32xf32>
    %93 = math.exp %92 : vector<32x32xf32>
    %cst_65 = arith.constant 1.000000e+00 : f32
    %94 = vector.broadcast %cst_65 : f32 to vector<32x32xf32>
    %95 = arith.addf %94, %93 : vector<32x32xf32>
    %96 = arith.divf %94, %95 : vector<32x32xf32>
    %97 = arith.mulf %91, %96 : vector<32x32xf32>
    %cst_66 = arith.constant dense<0.000000e+00> : vector<32x1xf32>
    %98 = tpu.matmul %97, %54, %cst_66 {dimension_numbers = #tpu.dot_dimension_numbers<[1], [0], [0], [1], [0, 0, 1, 1], [], []>} : vector<32x32xf32>, vector<32x1xf32>, vector<32x1xf32> -> vector<32x1xf32>
    %99 = vector.broadcast %98 : vector<32x1xf32> to vector<32x3xf32>
    %100 = arith.mulf %61, %99 : vector<32x3xf32>
    %cst_67 = arith.constant dense<0.000000e+00> : vector<16x32xf32>
    %101 = tpu.matmul %11, %88, %cst_67 {dimension_numbers = #tpu.dot_dimension_numbers<[1], [0], [0], [1], [0, 0, 1, 1], [], []>} : vector<16x32xf32>, vector<32x32xf32>, vector<16x32xf32> -> vector<16x32xf32>
    %cst_68 = arith.constant dense<0.000000e+00> : vector<16x3xf32>
    %102 = tpu.matmul %19, %100, %cst_68 {dimension_numbers = #tpu.dot_dimension_numbers<[1], [0], [0], [1], [0, 0, 1, 1], [], []>} : vector<16x32xf32>, vector<32x3xf32>, vector<16x3xf32> -> vector<16x3xf32>
    %103 = arith.addf %26, %102 : vector<16x3xf32>
    %cst_69 = arith.constant dense<0.000000e+00> : vector<16x32xf32>
    %104 = tpu.matmul %25, %40, %cst_69 {dimension_numbers = #tpu.dot_dimension_numbers<[1], [0], [0], [1], [0, 0, 1, 1], [], []>} : vector<16x32xf32>, vector<32x32xf32>, vector<16x32xf32> -> vector<16x32xf32>
    %cst_70 = arith.constant dense<0.000000e+00> : vector<16x32xf32>
    %105 = tpu.matmul %101, %42, %cst_70 {dimension_numbers = #tpu.dot_dimension_numbers<[1], [0], [0], [1], [0, 0, 1, 1], [], []>} : vector<16x32xf32>, vector<32x32xf32>, vector<16x32xf32> -> vector<16x32xf32>
    %106 = arith.addf %104, %105 : vector<16x32xf32>
    %107 = vector.broadcast %44 : vector<1x32xf32> to vector<16x32xf32>
    %108 = arith.addf %106, %107 : vector<16x32xf32>
    %109 = arith.negf %108 : vector<16x32xf32>
    %110 = math.exp %109 : vector<16x32xf32>
    %cst_71 = arith.constant 1.000000e+00 : f32
    %111 = vector.broadcast %cst_71 : f32 to vector<16x32xf32>
    %112 = arith.addf %111, %110 : vector<16x32xf32>
    %113 = arith.divf %111, %112 : vector<16x32xf32>
    %114 = arith.mulf %108, %113 : vector<16x32xf32>
    %cst_72 = arith.constant dense<0.000000e+00> : vector<16x32xf32>
    %115 = tpu.matmul %114, %46, %cst_72 {dimension_numbers = #tpu.dot_dimension_numbers<[1], [0], [0], [1], [0, 0, 1, 1], [], []>} : vector<16x32xf32>, vector<32x32xf32>, vector<16x32xf32> -> vector<16x32xf32>
    %116 = vector.broadcast %48 : vector<1x32xf32> to vector<16x32xf32>
    %117 = arith.addf %115, %116 : vector<16x32xf32>
    %c1 = arith.constant 1 : index
    %c0_73 = arith.constant 0 : index
    %c0_74 = arith.constant 0 : index
    %118 = vector.load %arg7[%c1, %c0_73, %c0_74] : memref<4x32x32xf32, #tpu.memory_space<vmem>>, vector<1x32x32xf32>
    %119 = vector.shape_cast %118 : vector<1x32x32xf32> to vector<32x32xf32>
    %c1_75 = arith.constant 1 : index
    %c0_76 = arith.constant 0 : index
    %c0_77 = arith.constant 0 : index
    %120 = vector.load %arg8[%c1_75, %c0_76, %c0_77] : memref<4x32x32xf32, #tpu.memory_space<vmem>>, vector<1x32x32xf32>
    %121 = vector.shape_cast %120 : vector<1x32x32xf32> to vector<32x32xf32>
    %c1_78 = arith.constant 1 : index
    %c0_79 = arith.constant 0 : index
    %c0_80 = arith.constant 0 : index
    %122 = vector.load %arg9[%c1_78, %c0_79, %c0_80] : memref<4x1x32xf32, #tpu.memory_space<vmem>>, vector<1x1x32xf32>
    %123 = vector.shape_cast %122 : vector<1x1x32xf32> to vector<1x32xf32>
    %c1_81 = arith.constant 1 : index
    %c0_82 = arith.constant 0 : index
    %c0_83 = arith.constant 0 : index
    %124 = vector.load %arg10[%c1_81, %c0_82, %c0_83] : memref<4x1x32xf32, #tpu.memory_space<vmem>>, vector<1x1x32xf32>
    %125 = vector.shape_cast %124 : vector<1x1x32xf32> to vector<1x32xf32>
    %c1_84 = arith.constant 1 : index
    %c0_85 = arith.constant 0 : index
    %c0_86 = arith.constant 0 : index
    %126 = vector.load %arg11[%c1_84, %c0_85, %c0_86] : memref<4x32x32xf32, #tpu.memory_space<vmem>>, vector<1x32x32xf32>
    %127 = vector.shape_cast %126 : vector<1x32x32xf32> to vector<32x32xf32>
    %c1_87 = arith.constant 1 : index
    %c0_88 = arith.constant 0 : index
    %c0_89 = arith.constant 0 : index
    %128 = vector.load %arg12[%c1_87, %c0_88, %c0_89] : memref<4x1x32xf32, #tpu.memory_space<vmem>>, vector<1x1x32xf32>
    %129 = vector.shape_cast %128 : vector<1x1x32xf32> to vector<1x32xf32>
    %c1_90 = arith.constant 1 : index
    %c0_91 = arith.constant 0 : index
    %c0_92 = arith.constant 0 : index
    %130 = vector.load %arg13[%c1_90, %c0_91, %c0_92] : memref<4x32x32xf32, #tpu.memory_space<vmem>>, vector<1x32x32xf32>
    %131 = vector.shape_cast %130 : vector<1x32x32xf32> to vector<32x32xf32>
    %c1_93 = arith.constant 1 : index
    %c0_94 = arith.constant 0 : index
    %c0_95 = arith.constant 0 : index
    %132 = vector.load %arg14[%c1_93, %c0_94, %c0_95] : memref<4x32x32xf32, #tpu.memory_space<vmem>>, vector<1x32x32xf32>
    %133 = vector.shape_cast %132 : vector<1x32x32xf32> to vector<32x32xf32>
    %c1_96 = arith.constant 1 : index
    %c0_97 = arith.constant 0 : index
    %c0_98 = arith.constant 0 : index
    %134 = vector.load %arg15[%c1_96, %c0_97, %c0_98] : memref<4x1x32xf32, #tpu.memory_space<vmem>>, vector<1x1x32xf32>
    %135 = vector.shape_cast %134 : vector<1x1x32xf32> to vector<1x32xf32>
    %c1_99 = arith.constant 1 : index
    %c0_100 = arith.constant 0 : index
    %c0_101 = arith.constant 0 : index
    %136 = vector.load %arg16[%c1_99, %c0_100, %c0_101] : memref<4x32x32xf32, #tpu.memory_space<vmem>>, vector<1x32x32xf32>
    %137 = vector.shape_cast %136 : vector<1x32x32xf32> to vector<32x32xf32>
    %c1_102 = arith.constant 1 : index
    %c0_103 = arith.constant 0 : index
    %c0_104 = arith.constant 0 : index
    %138 = vector.load %arg17[%c1_102, %c0_103, %c0_104] : memref<4x1x32xf32, #tpu.memory_space<vmem>>, vector<1x1x32xf32>
    %139 = vector.shape_cast %138 : vector<1x1x32xf32> to vector<1x32xf32>
    %c1_105 = arith.constant 1 : index
    %c0_106 = arith.constant 0 : index
    %c0_107 = arith.constant 0 : index
    %140 = vector.load %arg18[%c1_105, %c0_106, %c0_107] : memref<4x32x32xf32, #tpu.memory_space<vmem>>, vector<1x32x32xf32>
    %141 = vector.shape_cast %140 : vector<1x32x32xf32> to vector<32x32xf32>
    %c1_108 = arith.constant 1 : index
    %c0_109 = arith.constant 0 : index
    %c0_110 = arith.constant 0 : index
    %142 = vector.load %arg19[%c1_108, %c0_109, %c0_110] : memref<4x1x32xf32, #tpu.memory_space<vmem>>, vector<1x1x32xf32>
    %143 = vector.shape_cast %142 : vector<1x1x32xf32> to vector<1x32xf32>
    %c1_111 = arith.constant 1 : index
    %c0_112 = arith.constant 0 : index
    %c0_113 = arith.constant 0 : index
    %144 = vector.load %arg20[%c1_111, %c0_112, %c0_113] : memref<4x32x1xf32, #tpu.memory_space<vmem>>, vector<1x32x1xf32>
    %145 = vector.shape_cast %144 : vector<1x32x1xf32> to vector<32x1xf32>
    %cst_114 = arith.constant dense<0.000000e+00> : vector<64x32xf32>
    %146 = tpu.matmul %6, %117, %cst_114 {dimension_numbers = #tpu.dot_dimension_numbers<[1], [0], [0], [1], [0, 0, 1, 1], [], []>} : vector<64x16xf32>, vector<16x32xf32>, vector<64x32xf32> -> vector<64x32xf32>
    %cst_115 = arith.constant dense<0.000000e+00> : vector<64x3xf32>
    %147 = tpu.matmul %6, %103, %cst_115 {dimension_numbers = #tpu.dot_dimension_numbers<[1], [0], [0], [1], [0, 0, 1, 1], [], []>} : vector<64x16xf32>, vector<16x3xf32>, vector<64x3xf32> -> vector<64x3xf32>
    %148 = vector.extract_strided_slice %146 {offsets = [0, 0], sizes = [32, 32], strides = [1, 1]} : vector<64x32xf32> to vector<32x32xf32>
    %149 = vector.extract_strided_slice %146 {offsets = [32, 0], sizes = [32, 32], strides = [1, 1]} : vector<64x32xf32> to vector<32x32xf32>
    %150 = vector.extract_strided_slice %147 {offsets = [0, 0], sizes = [32, 3], strides = [1, 1]} : vector<64x3xf32> to vector<32x3xf32>
    %151 = vector.extract_strided_slice %147 {offsets = [32, 0], sizes = [32, 3], strides = [1, 1]} : vector<64x3xf32> to vector<32x3xf32>
    %152 = arith.subf %150, %151 : vector<32x3xf32>
    %153 = arith.mulf %152, %152 : vector<32x3xf32>
    %cst_116 = arith.constant dense<0.000000e+00> : vector<32xf32>
    %154 = vector.multi_reduction <add>, %153, %cst_116 [1] : vector<32x3xf32> to vector<32xf32>
    %155 = vector.shape_cast %154 : vector<32xf32> to vector<32x1xf32>
    %cst_117 = arith.constant dense<0.000000e+00> : vector<32x32xf32>
    %156 = tpu.matmul %148, %119, %cst_117 {dimension_numbers = #tpu.dot_dimension_numbers<[1], [0], [0], [1], [0, 0, 1, 1], [], []>} : vector<32x32xf32>, vector<32x32xf32>, vector<32x32xf32> -> vector<32x32xf32>
    %cst_118 = arith.constant dense<0.000000e+00> : vector<32x32xf32>
    %157 = tpu.matmul %149, %121, %cst_118 {dimension_numbers = #tpu.dot_dimension_numbers<[1], [0], [0], [1], [0, 0, 1, 1], [], []>} : vector<32x32xf32>, vector<32x32xf32>, vector<32x32xf32> -> vector<32x32xf32>
    %158 = arith.addf %156, %157 : vector<32x32xf32>
    %159 = vector.broadcast %155 : vector<32x1xf32> to vector<32x32xf32>
    %160 = vector.broadcast %123 : vector<1x32xf32> to vector<32x32xf32>
    %161 = arith.mulf %159, %160 : vector<32x32xf32>
    %162 = arith.addf %158, %161 : vector<32x32xf32>
    %163 = vector.broadcast %125 : vector<1x32xf32> to vector<32x32xf32>
    %164 = arith.addf %162, %163 : vector<32x32xf32>
    %165 = arith.negf %164 : vector<32x32xf32>
    %166 = math.exp %165 : vector<32x32xf32>
    %cst_119 = arith.constant 1.000000e+00 : f32
    %167 = vector.broadcast %cst_119 : f32 to vector<32x32xf32>
    %168 = arith.addf %167, %166 : vector<32x32xf32>
    %169 = arith.divf %167, %168 : vector<32x32xf32>
    %170 = arith.mulf %164, %169 : vector<32x32xf32>
    %cst_120 = arith.constant dense<0.000000e+00> : vector<32x32xf32>
    %171 = tpu.matmul %170, %127, %cst_120 {dimension_numbers = #tpu.dot_dimension_numbers<[1], [0], [0], [1], [0, 0, 1, 1], [], []>} : vector<32x32xf32>, vector<32x32xf32>, vector<32x32xf32> -> vector<32x32xf32>
    %172 = vector.broadcast %129 : vector<1x32xf32> to vector<32x32xf32>
    %173 = arith.addf %171, %172 : vector<32x32xf32>
    %174 = arith.negf %173 : vector<32x32xf32>
    %175 = math.exp %174 : vector<32x32xf32>
    %cst_121 = arith.constant 1.000000e+00 : f32
    %176 = vector.broadcast %cst_121 : f32 to vector<32x32xf32>
    %177 = arith.addf %176, %175 : vector<32x32xf32>
    %178 = arith.divf %176, %177 : vector<32x32xf32>
    %179 = arith.mulf %173, %178 : vector<32x32xf32>
    %cst_122 = arith.constant dense<0.000000e+00> : vector<32x32xf32>
    %180 = tpu.matmul %179, %141, %cst_122 {dimension_numbers = #tpu.dot_dimension_numbers<[1], [0], [0], [1], [0, 0, 1, 1], [], []>} : vector<32x32xf32>, vector<32x32xf32>, vector<32x32xf32> -> vector<32x32xf32>
    %181 = vector.broadcast %143 : vector<1x32xf32> to vector<32x32xf32>
    %182 = arith.addf %180, %181 : vector<32x32xf32>
    %183 = arith.negf %182 : vector<32x32xf32>
    %184 = math.exp %183 : vector<32x32xf32>
    %cst_123 = arith.constant 1.000000e+00 : f32
    %185 = vector.broadcast %cst_123 : f32 to vector<32x32xf32>
    %186 = arith.addf %185, %184 : vector<32x32xf32>
    %187 = arith.divf %185, %186 : vector<32x32xf32>
    %188 = arith.mulf %182, %187 : vector<32x32xf32>
    %cst_124 = arith.constant dense<0.000000e+00> : vector<32x1xf32>
    %189 = tpu.matmul %188, %145, %cst_124 {dimension_numbers = #tpu.dot_dimension_numbers<[1], [0], [0], [1], [0, 0, 1, 1], [], []>} : vector<32x32xf32>, vector<32x1xf32>, vector<32x1xf32> -> vector<32x1xf32>
    %190 = vector.broadcast %189 : vector<32x1xf32> to vector<32x3xf32>
    %191 = arith.mulf %152, %190 : vector<32x3xf32>
    %cst_125 = arith.constant dense<0.000000e+00> : vector<16x32xf32>
    %192 = tpu.matmul %11, %179, %cst_125 {dimension_numbers = #tpu.dot_dimension_numbers<[1], [0], [0], [1], [0, 0, 1, 1], [], []>} : vector<16x32xf32>, vector<32x32xf32>, vector<16x32xf32> -> vector<16x32xf32>
    %cst_126 = arith.constant dense<0.000000e+00> : vector<16x3xf32>
    %193 = tpu.matmul %19, %191, %cst_126 {dimension_numbers = #tpu.dot_dimension_numbers<[1], [0], [0], [1], [0, 0, 1, 1], [], []>} : vector<16x32xf32>, vector<32x3xf32>, vector<16x3xf32> -> vector<16x3xf32>
    %194 = arith.addf %103, %193 : vector<16x3xf32>
    %cst_127 = arith.constant dense<0.000000e+00> : vector<16x32xf32>
    %195 = tpu.matmul %117, %131, %cst_127 {dimension_numbers = #tpu.dot_dimension_numbers<[1], [0], [0], [1], [0, 0, 1, 1], [], []>} : vector<16x32xf32>, vector<32x32xf32>, vector<16x32xf32> -> vector<16x32xf32>
    %cst_128 = arith.constant dense<0.000000e+00> : vector<16x32xf32>
    %196 = tpu.matmul %192, %133, %cst_128 {dimension_numbers = #tpu.dot_dimension_numbers<[1], [0], [0], [1], [0, 0, 1, 1], [], []>} : vector<16x32xf32>, vector<32x32xf32>, vector<16x32xf32> -> vector<16x32xf32>
    %197 = arith.addf %195, %196 : vector<16x32xf32>
    %198 = vector.broadcast %135 : vector<1x32xf32> to vector<16x32xf32>
    %199 = arith.addf %197, %198 : vector<16x32xf32>
    %200 = arith.negf %199 : vector<16x32xf32>
    %201 = math.exp %200 : vector<16x32xf32>
    %cst_129 = arith.constant 1.000000e+00 : f32
    %202 = vector.broadcast %cst_129 : f32 to vector<16x32xf32>
    %203 = arith.addf %202, %201 : vector<16x32xf32>
    %204 = arith.divf %202, %203 : vector<16x32xf32>
    %205 = arith.mulf %199, %204 : vector<16x32xf32>
    %cst_130 = arith.constant dense<0.000000e+00> : vector<16x32xf32>
    %206 = tpu.matmul %205, %137, %cst_130 {dimension_numbers = #tpu.dot_dimension_numbers<[1], [0], [0], [1], [0, 0, 1, 1], [], []>} : vector<16x32xf32>, vector<32x32xf32>, vector<16x32xf32> -> vector<16x32xf32>
    %207 = vector.broadcast %139 : vector<1x32xf32> to vector<16x32xf32>
    %208 = arith.addf %206, %207 : vector<16x32xf32>
    %c2 = arith.constant 2 : index
    %c0_131 = arith.constant 0 : index
    %c0_132 = arith.constant 0 : index
    %209 = vector.load %arg7[%c2, %c0_131, %c0_132] : memref<4x32x32xf32, #tpu.memory_space<vmem>>, vector<1x32x32xf32>
    %210 = vector.shape_cast %209 : vector<1x32x32xf32> to vector<32x32xf32>
    %c2_133 = arith.constant 2 : index
    %c0_134 = arith.constant 0 : index
    %c0_135 = arith.constant 0 : index
    %211 = vector.load %arg8[%c2_133, %c0_134, %c0_135] : memref<4x32x32xf32, #tpu.memory_space<vmem>>, vector<1x32x32xf32>
    %212 = vector.shape_cast %211 : vector<1x32x32xf32> to vector<32x32xf32>
    %c2_136 = arith.constant 2 : index
    %c0_137 = arith.constant 0 : index
    %c0_138 = arith.constant 0 : index
    %213 = vector.load %arg9[%c2_136, %c0_137, %c0_138] : memref<4x1x32xf32, #tpu.memory_space<vmem>>, vector<1x1x32xf32>
    %214 = vector.shape_cast %213 : vector<1x1x32xf32> to vector<1x32xf32>
    %c2_139 = arith.constant 2 : index
    %c0_140 = arith.constant 0 : index
    %c0_141 = arith.constant 0 : index
    %215 = vector.load %arg10[%c2_139, %c0_140, %c0_141] : memref<4x1x32xf32, #tpu.memory_space<vmem>>, vector<1x1x32xf32>
    %216 = vector.shape_cast %215 : vector<1x1x32xf32> to vector<1x32xf32>
    %c2_142 = arith.constant 2 : index
    %c0_143 = arith.constant 0 : index
    %c0_144 = arith.constant 0 : index
    %217 = vector.load %arg11[%c2_142, %c0_143, %c0_144] : memref<4x32x32xf32, #tpu.memory_space<vmem>>, vector<1x32x32xf32>
    %218 = vector.shape_cast %217 : vector<1x32x32xf32> to vector<32x32xf32>
    %c2_145 = arith.constant 2 : index
    %c0_146 = arith.constant 0 : index
    %c0_147 = arith.constant 0 : index
    %219 = vector.load %arg12[%c2_145, %c0_146, %c0_147] : memref<4x1x32xf32, #tpu.memory_space<vmem>>, vector<1x1x32xf32>
    %220 = vector.shape_cast %219 : vector<1x1x32xf32> to vector<1x32xf32>
    %c2_148 = arith.constant 2 : index
    %c0_149 = arith.constant 0 : index
    %c0_150 = arith.constant 0 : index
    %221 = vector.load %arg13[%c2_148, %c0_149, %c0_150] : memref<4x32x32xf32, #tpu.memory_space<vmem>>, vector<1x32x32xf32>
    %222 = vector.shape_cast %221 : vector<1x32x32xf32> to vector<32x32xf32>
    %c2_151 = arith.constant 2 : index
    %c0_152 = arith.constant 0 : index
    %c0_153 = arith.constant 0 : index
    %223 = vector.load %arg14[%c2_151, %c0_152, %c0_153] : memref<4x32x32xf32, #tpu.memory_space<vmem>>, vector<1x32x32xf32>
    %224 = vector.shape_cast %223 : vector<1x32x32xf32> to vector<32x32xf32>
    %c2_154 = arith.constant 2 : index
    %c0_155 = arith.constant 0 : index
    %c0_156 = arith.constant 0 : index
    %225 = vector.load %arg15[%c2_154, %c0_155, %c0_156] : memref<4x1x32xf32, #tpu.memory_space<vmem>>, vector<1x1x32xf32>
    %226 = vector.shape_cast %225 : vector<1x1x32xf32> to vector<1x32xf32>
    %c2_157 = arith.constant 2 : index
    %c0_158 = arith.constant 0 : index
    %c0_159 = arith.constant 0 : index
    %227 = vector.load %arg16[%c2_157, %c0_158, %c0_159] : memref<4x32x32xf32, #tpu.memory_space<vmem>>, vector<1x32x32xf32>
    %228 = vector.shape_cast %227 : vector<1x32x32xf32> to vector<32x32xf32>
    %c2_160 = arith.constant 2 : index
    %c0_161 = arith.constant 0 : index
    %c0_162 = arith.constant 0 : index
    %229 = vector.load %arg17[%c2_160, %c0_161, %c0_162] : memref<4x1x32xf32, #tpu.memory_space<vmem>>, vector<1x1x32xf32>
    %230 = vector.shape_cast %229 : vector<1x1x32xf32> to vector<1x32xf32>
    %c2_163 = arith.constant 2 : index
    %c0_164 = arith.constant 0 : index
    %c0_165 = arith.constant 0 : index
    %231 = vector.load %arg18[%c2_163, %c0_164, %c0_165] : memref<4x32x32xf32, #tpu.memory_space<vmem>>, vector<1x32x32xf32>
    %232 = vector.shape_cast %231 : vector<1x32x32xf32> to vector<32x32xf32>
    %c2_166 = arith.constant 2 : index
    %c0_167 = arith.constant 0 : index
    %c0_168 = arith.constant 0 : index
    %233 = vector.load %arg19[%c2_166, %c0_167, %c0_168] : memref<4x1x32xf32, #tpu.memory_space<vmem>>, vector<1x1x32xf32>
    %234 = vector.shape_cast %233 : vector<1x1x32xf32> to vector<1x32xf32>
    %c2_169 = arith.constant 2 : index
    %c0_170 = arith.constant 0 : index
    %c0_171 = arith.constant 0 : index
    %235 = vector.load %arg20[%c2_169, %c0_170, %c0_171] : memref<4x32x1xf32, #tpu.memory_space<vmem>>, vector<1x32x1xf32>
    %236 = vector.shape_cast %235 : vector<1x32x1xf32> to vector<32x1xf32>
    %cst_172 = arith.constant dense<0.000000e+00> : vector<64x32xf32>
    %237 = tpu.matmul %6, %208, %cst_172 {dimension_numbers = #tpu.dot_dimension_numbers<[1], [0], [0], [1], [0, 0, 1, 1], [], []>} : vector<64x16xf32>, vector<16x32xf32>, vector<64x32xf32> -> vector<64x32xf32>
    %cst_173 = arith.constant dense<0.000000e+00> : vector<64x3xf32>
    %238 = tpu.matmul %6, %194, %cst_173 {dimension_numbers = #tpu.dot_dimension_numbers<[1], [0], [0], [1], [0, 0, 1, 1], [], []>} : vector<64x16xf32>, vector<16x3xf32>, vector<64x3xf32> -> vector<64x3xf32>
    %239 = vector.extract_strided_slice %237 {offsets = [0, 0], sizes = [32, 32], strides = [1, 1]} : vector<64x32xf32> to vector<32x32xf32>
    %240 = vector.extract_strided_slice %237 {offsets = [32, 0], sizes = [32, 32], strides = [1, 1]} : vector<64x32xf32> to vector<32x32xf32>
    %241 = vector.extract_strided_slice %238 {offsets = [0, 0], sizes = [32, 3], strides = [1, 1]} : vector<64x3xf32> to vector<32x3xf32>
    %242 = vector.extract_strided_slice %238 {offsets = [32, 0], sizes = [32, 3], strides = [1, 1]} : vector<64x3xf32> to vector<32x3xf32>
    %243 = arith.subf %241, %242 : vector<32x3xf32>
    %244 = arith.mulf %243, %243 : vector<32x3xf32>
    %cst_174 = arith.constant dense<0.000000e+00> : vector<32xf32>
    %245 = vector.multi_reduction <add>, %244, %cst_174 [1] : vector<32x3xf32> to vector<32xf32>
    %246 = vector.shape_cast %245 : vector<32xf32> to vector<32x1xf32>
    %cst_175 = arith.constant dense<0.000000e+00> : vector<32x32xf32>
    %247 = tpu.matmul %239, %210, %cst_175 {dimension_numbers = #tpu.dot_dimension_numbers<[1], [0], [0], [1], [0, 0, 1, 1], [], []>} : vector<32x32xf32>, vector<32x32xf32>, vector<32x32xf32> -> vector<32x32xf32>
    %cst_176 = arith.constant dense<0.000000e+00> : vector<32x32xf32>
    %248 = tpu.matmul %240, %212, %cst_176 {dimension_numbers = #tpu.dot_dimension_numbers<[1], [0], [0], [1], [0, 0, 1, 1], [], []>} : vector<32x32xf32>, vector<32x32xf32>, vector<32x32xf32> -> vector<32x32xf32>
    %249 = arith.addf %247, %248 : vector<32x32xf32>
    %250 = vector.broadcast %246 : vector<32x1xf32> to vector<32x32xf32>
    %251 = vector.broadcast %214 : vector<1x32xf32> to vector<32x32xf32>
    %252 = arith.mulf %250, %251 : vector<32x32xf32>
    %253 = arith.addf %249, %252 : vector<32x32xf32>
    %254 = vector.broadcast %216 : vector<1x32xf32> to vector<32x32xf32>
    %255 = arith.addf %253, %254 : vector<32x32xf32>
    %256 = arith.negf %255 : vector<32x32xf32>
    %257 = math.exp %256 : vector<32x32xf32>
    %cst_177 = arith.constant 1.000000e+00 : f32
    %258 = vector.broadcast %cst_177 : f32 to vector<32x32xf32>
    %259 = arith.addf %258, %257 : vector<32x32xf32>
    %260 = arith.divf %258, %259 : vector<32x32xf32>
    %261 = arith.mulf %255, %260 : vector<32x32xf32>
    %cst_178 = arith.constant dense<0.000000e+00> : vector<32x32xf32>
    %262 = tpu.matmul %261, %218, %cst_178 {dimension_numbers = #tpu.dot_dimension_numbers<[1], [0], [0], [1], [0, 0, 1, 1], [], []>} : vector<32x32xf32>, vector<32x32xf32>, vector<32x32xf32> -> vector<32x32xf32>
    %263 = vector.broadcast %220 : vector<1x32xf32> to vector<32x32xf32>
    %264 = arith.addf %262, %263 : vector<32x32xf32>
    %265 = arith.negf %264 : vector<32x32xf32>
    %266 = math.exp %265 : vector<32x32xf32>
    %cst_179 = arith.constant 1.000000e+00 : f32
    %267 = vector.broadcast %cst_179 : f32 to vector<32x32xf32>
    %268 = arith.addf %267, %266 : vector<32x32xf32>
    %269 = arith.divf %267, %268 : vector<32x32xf32>
    %270 = arith.mulf %264, %269 : vector<32x32xf32>
    %cst_180 = arith.constant dense<0.000000e+00> : vector<32x32xf32>
    %271 = tpu.matmul %270, %232, %cst_180 {dimension_numbers = #tpu.dot_dimension_numbers<[1], [0], [0], [1], [0, 0, 1, 1], [], []>} : vector<32x32xf32>, vector<32x32xf32>, vector<32x32xf32> -> vector<32x32xf32>
    %272 = vector.broadcast %234 : vector<1x32xf32> to vector<32x32xf32>
    %273 = arith.addf %271, %272 : vector<32x32xf32>
    %274 = arith.negf %273 : vector<32x32xf32>
    %275 = math.exp %274 : vector<32x32xf32>
    %cst_181 = arith.constant 1.000000e+00 : f32
    %276 = vector.broadcast %cst_181 : f32 to vector<32x32xf32>
    %277 = arith.addf %276, %275 : vector<32x32xf32>
    %278 = arith.divf %276, %277 : vector<32x32xf32>
    %279 = arith.mulf %273, %278 : vector<32x32xf32>
    %cst_182 = arith.constant dense<0.000000e+00> : vector<32x1xf32>
    %280 = tpu.matmul %279, %236, %cst_182 {dimension_numbers = #tpu.dot_dimension_numbers<[1], [0], [0], [1], [0, 0, 1, 1], [], []>} : vector<32x32xf32>, vector<32x1xf32>, vector<32x1xf32> -> vector<32x1xf32>
    %281 = vector.broadcast %280 : vector<32x1xf32> to vector<32x3xf32>
    %282 = arith.mulf %243, %281 : vector<32x3xf32>
    %cst_183 = arith.constant dense<0.000000e+00> : vector<16x32xf32>
    %283 = tpu.matmul %11, %270, %cst_183 {dimension_numbers = #tpu.dot_dimension_numbers<[1], [0], [0], [1], [0, 0, 1, 1], [], []>} : vector<16x32xf32>, vector<32x32xf32>, vector<16x32xf32> -> vector<16x32xf32>
    %cst_184 = arith.constant dense<0.000000e+00> : vector<16x3xf32>
    %284 = tpu.matmul %19, %282, %cst_184 {dimension_numbers = #tpu.dot_dimension_numbers<[1], [0], [0], [1], [0, 0, 1, 1], [], []>} : vector<16x32xf32>, vector<32x3xf32>, vector<16x3xf32> -> vector<16x3xf32>
    %285 = arith.addf %194, %284 : vector<16x3xf32>
    %cst_185 = arith.constant dense<0.000000e+00> : vector<16x32xf32>
    %286 = tpu.matmul %208, %222, %cst_185 {dimension_numbers = #tpu.dot_dimension_numbers<[1], [0], [0], [1], [0, 0, 1, 1], [], []>} : vector<16x32xf32>, vector<32x32xf32>, vector<16x32xf32> -> vector<16x32xf32>
    %cst_186 = arith.constant dense<0.000000e+00> : vector<16x32xf32>
    %287 = tpu.matmul %283, %224, %cst_186 {dimension_numbers = #tpu.dot_dimension_numbers<[1], [0], [0], [1], [0, 0, 1, 1], [], []>} : vector<16x32xf32>, vector<32x32xf32>, vector<16x32xf32> -> vector<16x32xf32>
    %288 = arith.addf %286, %287 : vector<16x32xf32>
    %289 = vector.broadcast %226 : vector<1x32xf32> to vector<16x32xf32>
    %290 = arith.addf %288, %289 : vector<16x32xf32>
    %291 = arith.negf %290 : vector<16x32xf32>
    %292 = math.exp %291 : vector<16x32xf32>
    %cst_187 = arith.constant 1.000000e+00 : f32
    %293 = vector.broadcast %cst_187 : f32 to vector<16x32xf32>
    %294 = arith.addf %293, %292 : vector<16x32xf32>
    %295 = arith.divf %293, %294 : vector<16x32xf32>
    %296 = arith.mulf %290, %295 : vector<16x32xf32>
    %cst_188 = arith.constant dense<0.000000e+00> : vector<16x32xf32>
    %297 = tpu.matmul %296, %228, %cst_188 {dimension_numbers = #tpu.dot_dimension_numbers<[1], [0], [0], [1], [0, 0, 1, 1], [], []>} : vector<16x32xf32>, vector<32x32xf32>, vector<16x32xf32> -> vector<16x32xf32>
    %298 = vector.broadcast %230 : vector<1x32xf32> to vector<16x32xf32>
    %299 = arith.addf %297, %298 : vector<16x32xf32>
    %c3 = arith.constant 3 : index
    %c0_189 = arith.constant 0 : index
    %c0_190 = arith.constant 0 : index
    %300 = vector.load %arg7[%c3, %c0_189, %c0_190] : memref<4x32x32xf32, #tpu.memory_space<vmem>>, vector<1x32x32xf32>
    %301 = vector.shape_cast %300 : vector<1x32x32xf32> to vector<32x32xf32>
    %c3_191 = arith.constant 3 : index
    %c0_192 = arith.constant 0 : index
    %c0_193 = arith.constant 0 : index
    %302 = vector.load %arg8[%c3_191, %c0_192, %c0_193] : memref<4x32x32xf32, #tpu.memory_space<vmem>>, vector<1x32x32xf32>
    %303 = vector.shape_cast %302 : vector<1x32x32xf32> to vector<32x32xf32>
    %c3_194 = arith.constant 3 : index
    %c0_195 = arith.constant 0 : index
    %c0_196 = arith.constant 0 : index
    %304 = vector.load %arg9[%c3_194, %c0_195, %c0_196] : memref<4x1x32xf32, #tpu.memory_space<vmem>>, vector<1x1x32xf32>
    %305 = vector.shape_cast %304 : vector<1x1x32xf32> to vector<1x32xf32>
    %c3_197 = arith.constant 3 : index
    %c0_198 = arith.constant 0 : index
    %c0_199 = arith.constant 0 : index
    %306 = vector.load %arg10[%c3_197, %c0_198, %c0_199] : memref<4x1x32xf32, #tpu.memory_space<vmem>>, vector<1x1x32xf32>
    %307 = vector.shape_cast %306 : vector<1x1x32xf32> to vector<1x32xf32>
    %c3_200 = arith.constant 3 : index
    %c0_201 = arith.constant 0 : index
    %c0_202 = arith.constant 0 : index
    %308 = vector.load %arg11[%c3_200, %c0_201, %c0_202] : memref<4x32x32xf32, #tpu.memory_space<vmem>>, vector<1x32x32xf32>
    %309 = vector.shape_cast %308 : vector<1x32x32xf32> to vector<32x32xf32>
    %c3_203 = arith.constant 3 : index
    %c0_204 = arith.constant 0 : index
    %c0_205 = arith.constant 0 : index
    %310 = vector.load %arg12[%c3_203, %c0_204, %c0_205] : memref<4x1x32xf32, #tpu.memory_space<vmem>>, vector<1x1x32xf32>
    %311 = vector.shape_cast %310 : vector<1x1x32xf32> to vector<1x32xf32>
    %c3_206 = arith.constant 3 : index
    %c0_207 = arith.constant 0 : index
    %c0_208 = arith.constant 0 : index
    %312 = vector.load %arg13[%c3_206, %c0_207, %c0_208] : memref<4x32x32xf32, #tpu.memory_space<vmem>>, vector<1x32x32xf32>
    %313 = vector.shape_cast %312 : vector<1x32x32xf32> to vector<32x32xf32>
    %c3_209 = arith.constant 3 : index
    %c0_210 = arith.constant 0 : index
    %c0_211 = arith.constant 0 : index
    %314 = vector.load %arg14[%c3_209, %c0_210, %c0_211] : memref<4x32x32xf32, #tpu.memory_space<vmem>>, vector<1x32x32xf32>
    %315 = vector.shape_cast %314 : vector<1x32x32xf32> to vector<32x32xf32>
    %c3_212 = arith.constant 3 : index
    %c0_213 = arith.constant 0 : index
    %c0_214 = arith.constant 0 : index
    %316 = vector.load %arg15[%c3_212, %c0_213, %c0_214] : memref<4x1x32xf32, #tpu.memory_space<vmem>>, vector<1x1x32xf32>
    %317 = vector.shape_cast %316 : vector<1x1x32xf32> to vector<1x32xf32>
    %c3_215 = arith.constant 3 : index
    %c0_216 = arith.constant 0 : index
    %c0_217 = arith.constant 0 : index
    %318 = vector.load %arg16[%c3_215, %c0_216, %c0_217] : memref<4x32x32xf32, #tpu.memory_space<vmem>>, vector<1x32x32xf32>
    %319 = vector.shape_cast %318 : vector<1x32x32xf32> to vector<32x32xf32>
    %c3_218 = arith.constant 3 : index
    %c0_219 = arith.constant 0 : index
    %c0_220 = arith.constant 0 : index
    %320 = vector.load %arg17[%c3_218, %c0_219, %c0_220] : memref<4x1x32xf32, #tpu.memory_space<vmem>>, vector<1x1x32xf32>
    %321 = vector.shape_cast %320 : vector<1x1x32xf32> to vector<1x32xf32>
    %cst_221 = arith.constant dense<0.000000e+00> : vector<64x32xf32>
    %322 = tpu.matmul %6, %299, %cst_221 {dimension_numbers = #tpu.dot_dimension_numbers<[1], [0], [0], [1], [0, 0, 1, 1], [], []>} : vector<64x16xf32>, vector<16x32xf32>, vector<64x32xf32> -> vector<64x32xf32>
    %cst_222 = arith.constant dense<0.000000e+00> : vector<64x3xf32>
    %323 = tpu.matmul %6, %285, %cst_222 {dimension_numbers = #tpu.dot_dimension_numbers<[1], [0], [0], [1], [0, 0, 1, 1], [], []>} : vector<64x16xf32>, vector<16x3xf32>, vector<64x3xf32> -> vector<64x3xf32>
    %324 = vector.extract_strided_slice %322 {offsets = [0, 0], sizes = [32, 32], strides = [1, 1]} : vector<64x32xf32> to vector<32x32xf32>
    %325 = vector.extract_strided_slice %322 {offsets = [32, 0], sizes = [32, 32], strides = [1, 1]} : vector<64x32xf32> to vector<32x32xf32>
    %326 = vector.extract_strided_slice %323 {offsets = [0, 0], sizes = [32, 3], strides = [1, 1]} : vector<64x3xf32> to vector<32x3xf32>
    %327 = vector.extract_strided_slice %323 {offsets = [32, 0], sizes = [32, 3], strides = [1, 1]} : vector<64x3xf32> to vector<32x3xf32>
    %328 = arith.subf %326, %327 : vector<32x3xf32>
    %329 = arith.mulf %328, %328 : vector<32x3xf32>
    %cst_223 = arith.constant dense<0.000000e+00> : vector<32xf32>
    %330 = vector.multi_reduction <add>, %329, %cst_223 [1] : vector<32x3xf32> to vector<32xf32>
    %331 = vector.shape_cast %330 : vector<32xf32> to vector<32x1xf32>
    %cst_224 = arith.constant dense<0.000000e+00> : vector<32x32xf32>
    %332 = tpu.matmul %324, %301, %cst_224 {dimension_numbers = #tpu.dot_dimension_numbers<[1], [0], [0], [1], [0, 0, 1, 1], [], []>} : vector<32x32xf32>, vector<32x32xf32>, vector<32x32xf32> -> vector<32x32xf32>
    %cst_225 = arith.constant dense<0.000000e+00> : vector<32x32xf32>
    %333 = tpu.matmul %325, %303, %cst_225 {dimension_numbers = #tpu.dot_dimension_numbers<[1], [0], [0], [1], [0, 0, 1, 1], [], []>} : vector<32x32xf32>, vector<32x32xf32>, vector<32x32xf32> -> vector<32x32xf32>
    %334 = arith.addf %332, %333 : vector<32x32xf32>
    %335 = vector.broadcast %331 : vector<32x1xf32> to vector<32x32xf32>
    %336 = vector.broadcast %305 : vector<1x32xf32> to vector<32x32xf32>
    %337 = arith.mulf %335, %336 : vector<32x32xf32>
    %338 = arith.addf %334, %337 : vector<32x32xf32>
    %339 = vector.broadcast %307 : vector<1x32xf32> to vector<32x32xf32>
    %340 = arith.addf %338, %339 : vector<32x32xf32>
    %341 = arith.negf %340 : vector<32x32xf32>
    %342 = math.exp %341 : vector<32x32xf32>
    %cst_226 = arith.constant 1.000000e+00 : f32
    %343 = vector.broadcast %cst_226 : f32 to vector<32x32xf32>
    %344 = arith.addf %343, %342 : vector<32x32xf32>
    %345 = arith.divf %343, %344 : vector<32x32xf32>
    %346 = arith.mulf %340, %345 : vector<32x32xf32>
    %cst_227 = arith.constant dense<0.000000e+00> : vector<32x32xf32>
    %347 = tpu.matmul %346, %309, %cst_227 {dimension_numbers = #tpu.dot_dimension_numbers<[1], [0], [0], [1], [0, 0, 1, 1], [], []>} : vector<32x32xf32>, vector<32x32xf32>, vector<32x32xf32> -> vector<32x32xf32>
    %348 = vector.broadcast %311 : vector<1x32xf32> to vector<32x32xf32>
    %349 = arith.addf %347, %348 : vector<32x32xf32>
    %350 = arith.negf %349 : vector<32x32xf32>
    %351 = math.exp %350 : vector<32x32xf32>
    %cst_228 = arith.constant 1.000000e+00 : f32
    %352 = vector.broadcast %cst_228 : f32 to vector<32x32xf32>
    %353 = arith.addf %352, %351 : vector<32x32xf32>
    %354 = arith.divf %352, %353 : vector<32x32xf32>
    %355 = arith.mulf %349, %354 : vector<32x32xf32>
    %cst_229 = arith.constant dense<0.000000e+00> : vector<16x32xf32>
    %356 = tpu.matmul %11, %355, %cst_229 {dimension_numbers = #tpu.dot_dimension_numbers<[1], [0], [0], [1], [0, 0, 1, 1], [], []>} : vector<16x32xf32>, vector<32x32xf32>, vector<16x32xf32> -> vector<16x32xf32>
    %cst_230 = arith.constant dense<0.000000e+00> : vector<16x32xf32>
    %357 = tpu.matmul %299, %313, %cst_230 {dimension_numbers = #tpu.dot_dimension_numbers<[1], [0], [0], [1], [0, 0, 1, 1], [], []>} : vector<16x32xf32>, vector<32x32xf32>, vector<16x32xf32> -> vector<16x32xf32>
    %cst_231 = arith.constant dense<0.000000e+00> : vector<16x32xf32>
    %358 = tpu.matmul %356, %315, %cst_231 {dimension_numbers = #tpu.dot_dimension_numbers<[1], [0], [0], [1], [0, 0, 1, 1], [], []>} : vector<16x32xf32>, vector<32x32xf32>, vector<16x32xf32> -> vector<16x32xf32>
    %359 = arith.addf %357, %358 : vector<16x32xf32>
    %360 = vector.broadcast %317 : vector<1x32xf32> to vector<16x32xf32>
    %361 = arith.addf %359, %360 : vector<16x32xf32>
    %362 = arith.negf %361 : vector<16x32xf32>
    %363 = math.exp %362 : vector<16x32xf32>
    %cst_232 = arith.constant 1.000000e+00 : f32
    %364 = vector.broadcast %cst_232 : f32 to vector<16x32xf32>
    %365 = arith.addf %364, %363 : vector<16x32xf32>
    %366 = arith.divf %364, %365 : vector<16x32xf32>
    %367 = arith.mulf %361, %366 : vector<16x32xf32>
    %cst_233 = arith.constant dense<0.000000e+00> : vector<16x32xf32>
    %368 = tpu.matmul %367, %319, %cst_233 {dimension_numbers = #tpu.dot_dimension_numbers<[1], [0], [0], [1], [0, 0, 1, 1], [], []>} : vector<16x32xf32>, vector<32x32xf32>, vector<16x32xf32> -> vector<16x32xf32>
    %369 = vector.broadcast %321 : vector<1x32xf32> to vector<16x32xf32>
    %370 = arith.addf %368, %369 : vector<16x32xf32>
    %c0_234 = arith.constant 0 : index
    %c0_235 = arith.constant 0 : index
    %371 = vector.load %arg21[%c0_234, %c0_235] : memref<32x32xf32, #tpu.memory_space<vmem>>, vector<32x32xf32>
    %cst_236 = arith.constant dense<0.000000e+00> : vector<16x32xf32>
    %372 = tpu.matmul %370, %371, %cst_236 {dimension_numbers = #tpu.dot_dimension_numbers<[1], [0], [0], [1], [0, 0, 1, 1], [], []>} : vector<16x32xf32>, vector<32x32xf32>, vector<16x32xf32> -> vector<16x32xf32>
    %c0_237 = arith.constant 0 : index
    %c0_238 = arith.constant 0 : index
    %373 = vector.load %arg22[%c0_237, %c0_238] : memref<1x32xf32, #tpu.memory_space<vmem>>, vector<1x32xf32>
    %374 = vector.broadcast %373 : vector<1x32xf32> to vector<16x32xf32>
    %375 = arith.addf %372, %374 : vector<16x32xf32>
    %c0_239 = arith.constant 0 : index
    %c0_240 = arith.constant 0 : index
    %376 = vector.load %arg2[%c0_239, %c0_240] : memref<16x1xi32, #tpu.memory_space<vmem>>, vector<16x1xi32>
    %c0_i32 = arith.constant 0 : i32
    %377 = vector.broadcast %c0_i32 : i32 to vector<16x1xi32>
    %378 = arith.cmpi eq, %376, %377 : vector<16x1xi32>
    %cst_241 = arith.constant -1.000000e+30 : f32
    %379 = vector.shape_cast %378 : vector<16x1xi1> to vector<16x1xi1>
    %380 = vector.broadcast %379 : vector<16x1xi1> to vector<16x32xi1>
    %381 = vector.broadcast %cst_241 : f32 to vector<16x32xf32>
    %382 = arith.select %380, %375, %381 : vector<16x32xi1>, vector<16x32xf32>
    %cst_242 = arith.constant dense<0xFF800000> : vector<32xf32>
    %383 = vector.multi_reduction <maximumf>, %382, %cst_242 [0] : vector<16x32xf32> to vector<32xf32>
    %384 = vector.shape_cast %383 : vector<32xf32> to vector<1x32xf32>
    %c1_i32 = arith.constant 1 : i32
    %385 = vector.broadcast %c1_i32 : i32 to vector<16x1xi32>
    %386 = arith.cmpi eq, %376, %385 : vector<16x1xi32>
    %cst_243 = arith.constant -1.000000e+30 : f32
    %387 = vector.shape_cast %386 : vector<16x1xi1> to vector<16x1xi1>
    %388 = vector.broadcast %387 : vector<16x1xi1> to vector<16x32xi1>
    %389 = vector.broadcast %cst_243 : f32 to vector<16x32xf32>
    %390 = arith.select %388, %375, %389 : vector<16x32xi1>, vector<16x32xf32>
    %cst_244 = arith.constant dense<0xFF800000> : vector<32xf32>
    %391 = vector.multi_reduction <maximumf>, %390, %cst_244 [0] : vector<16x32xf32> to vector<32xf32>
    %392 = vector.shape_cast %391 : vector<32xf32> to vector<1x32xf32>
    %393 = tpu.concatenate %384, %392 in 0 : vector<1x32xf32>, vector<1x32xf32> -> vector<2x32xf32>
    %c0_245 = arith.constant 0 : index
    %c0_246 = arith.constant 0 : index
    %394 = vector.load %arg23[%c0_245, %c0_246] : memref<32x128xf32, #tpu.memory_space<vmem>>, vector<32x128xf32>
    %cst_247 = arith.constant dense<0.000000e+00> : vector<2x128xf32>
    %395 = tpu.matmul %393, %394, %cst_247 {dimension_numbers = #tpu.dot_dimension_numbers<[1], [0], [0], [1], [0, 0, 1, 1], [], []>} : vector<2x32xf32>, vector<32x128xf32>, vector<2x128xf32> -> vector<2x128xf32>
    %c0_248 = arith.constant 0 : index
    %c0_249 = arith.constant 0 : index
    %396 = vector.load %arg24[%c0_248, %c0_249] : memref<1x128xf32, #tpu.memory_space<vmem>>, vector<1x128xf32>
    %397 = vector.broadcast %396 : vector<1x128xf32> to vector<2x128xf32>
    %398 = arith.addf %395, %397 : vector<2x128xf32>
    %cst_250 = arith.constant 0.000000e+00 : f32
    %399 = vector.broadcast %cst_250 : f32 to vector<2x128xf32>
    %400 = arith.maximumf %398, %399 : vector<2x128xf32>
    %c0_251 = arith.constant 0 : index
    %c0_252 = arith.constant 0 : index
    %401 = vector.load %arg25[%c0_251, %c0_252] : memref<128x128xf32, #tpu.memory_space<vmem>>, vector<128x128xf32>
    %cst_253 = arith.constant dense<0.000000e+00> : vector<2x128xf32>
    %402 = tpu.matmul %400, %401, %cst_253 {dimension_numbers = #tpu.dot_dimension_numbers<[1], [0], [0], [1], [0, 0, 1, 1], [], []>} : vector<2x128xf32>, vector<128x128xf32>, vector<2x128xf32> -> vector<2x128xf32>
    %c0_254 = arith.constant 0 : index
    %c0_255 = arith.constant 0 : index
    %403 = vector.load %arg26[%c0_254, %c0_255] : memref<1x128xf32, #tpu.memory_space<vmem>>, vector<1x128xf32>
    %404 = vector.broadcast %403 : vector<1x128xf32> to vector<2x128xf32>
    %405 = arith.addf %402, %404 : vector<2x128xf32>
    %cst_256 = arith.constant 0.000000e+00 : f32
    %406 = vector.broadcast %cst_256 : f32 to vector<2x128xf32>
    %407 = arith.maximumf %405, %406 : vector<2x128xf32>
    %c0_257 = arith.constant 0 : index
    %c0_258 = arith.constant 0 : index
    %408 = vector.load %arg27[%c0_257, %c0_258] : memref<128x128xf32, #tpu.memory_space<vmem>>, vector<128x128xf32>
    %cst_259 = arith.constant dense<0.000000e+00> : vector<2x128xf32>
    %409 = tpu.matmul %407, %408, %cst_259 {dimension_numbers = #tpu.dot_dimension_numbers<[1], [0], [0], [1], [0, 0, 1, 1], [], []>} : vector<2x128xf32>, vector<128x128xf32>, vector<2x128xf32> -> vector<2x128xf32>
    %c0_260 = arith.constant 0 : index
    %c0_261 = arith.constant 0 : index
    %410 = vector.load %arg28[%c0_260, %c0_261] : memref<1x128xf32, #tpu.memory_space<vmem>>, vector<1x128xf32>
    %411 = vector.broadcast %410 : vector<1x128xf32> to vector<2x128xf32>
    %412 = arith.addf %409, %411 : vector<2x128xf32>
    %cst_262 = arith.constant dense<0xFF800000> : vector<2xf32>
    %413 = vector.multi_reduction <maximumf>, %412, %cst_262 [1] : vector<2x128xf32> to vector<2xf32>
    %414 = vector.shape_cast %413 : vector<2xf32> to vector<2x1xf32>
    %415 = vector.broadcast %414 : vector<2x1xf32> to vector<2x128xf32>
    %416 = arith.subf %412, %415 : vector<2x128xf32>
    %417 = math.exp %416 : vector<2x128xf32>
    %cst_263 = arith.constant dense<0.000000e+00> : vector<2xf32>
    %418 = vector.multi_reduction <add>, %417, %cst_263 [1] : vector<2x128xf32> to vector<2xf32>
    %419 = vector.shape_cast %418 : vector<2xf32> to vector<2x1xf32>
    %420 = math.log %419 : vector<2x1xf32>
    %421 = arith.addf %420, %414 : vector<2x1xf32>
    %422 = vector.broadcast %421 : vector<2x1xf32> to vector<2x128xf32>
    %423 = arith.subf %412, %422 : vector<2x128xf32>
    %c0_264 = arith.constant 0 : index
    %c0_265 = arith.constant 0 : index
    %424 = vector.load %arg29[%c0_264, %c0_265] : memref<2x128xf32, #tpu.memory_space<vmem>>, vector<2x128xf32>
    tpu.vector_store %arg29[%c0_264, %c0_265], %423 {strides = array<i32>} : memref<2x128xf32, #tpu.memory_space<vmem>>, vector<2x128xf32>,
    return
  }
}

</mosaic_0001>

<llo_original>
// kernel: en_gnn_forward.1
$region0: #{en_gnn_forward.1}
  #allocation0 [shape = 'u32[]', space=smem, size = 0x4, offset = 0x4, fixed_abs, tag = 'smem constant byte address 0x4 - core index']
  #allocation1 [shape = 'u32[144,128]{1,0:T(1,128)}', space=vmem, size = 0x12000, scoped, tag = 'internal scratch']
  %s0 = inlined_call_operand.smem [shape: u32[30], index: -1, kind: input, shape index: {}]
  %s1 = sld [smem:[%s0]]
  %s2 = scalar_lea.smem %s0, 1
  %s3 = sld [smem:[%s2]]
  %s4 = scalar_lea.smem %s0, 2
  %s5 = sld [smem:[%s4]]
  %s6 = scalar_lea.smem %s0, 3
  %s7 = sld [smem:[%s6]]
  %s8 = scalar_lea.smem %s0, 4
  %s9 = sld [smem:[%s8]]
  %s10 = scalar_lea.smem %s0, 5
  %s11 = sld [smem:[%s10]]
  %s12 = scalar_lea.smem %s0, 6
  %s13 = sld [smem:[%s12]]
  %s14 = scalar_lea.smem %s0, 7
  %s15 = sld [smem:[%s14]]
  %s16 = scalar_lea.smem %s0, 8
  %s17 = sld [smem:[%s16]]
  %s18 = scalar_lea.smem %s0, 9
  %s19 = sld [smem:[%s18]]
  %s20 = scalar_lea.smem %s0, 10
  %s21 = sld [smem:[%s20]]
  %s22 = scalar_lea.smem %s0, 11
  %s23 = sld [smem:[%s22]]
  %s24 = scalar_lea.smem %s0, 12
  %s25 = sld [smem:[%s24]]
  %s26 = scalar_lea.smem %s0, 13
  %s27 = sld [smem:[%s26]]
  %s28 = scalar_lea.smem %s0, 14
  %s29 = sld [smem:[%s28]]
  %s30 = scalar_lea.smem %s0, 15
  %s31 = sld [smem:[%s30]]
  %s32 = scalar_lea.smem %s0, 16
  %s33 = sld [smem:[%s32]]
  %s34 = scalar_lea.smem %s0, 17
  %s35 = sld [smem:[%s34]]
  %s36 = scalar_lea.smem %s0, 18
  %s37 = sld [smem:[%s36]]
  %s38 = scalar_lea.smem %s0, 19
  %s39 = sld [smem:[%s38]]
  %s40 = scalar_lea.smem %s0, 20
  %s41 = sld [smem:[%s40]]
  %s42 = scalar_lea.smem %s0, 21
  %s43 = sld [smem:[%s42]]
  %s44 = scalar_lea.smem %s0, 22
  %s45 = sld [smem:[%s44]]
  %s46 = scalar_lea.smem %s0, 23
  %s47 = sld [smem:[%s46]]
  %s48 = scalar_lea.smem %s0, 24
  %s49 = sld [smem:[%s48]]
  %s50 = scalar_lea.smem %s0, 25
  %s51 = sld [smem:[%s50]]
  %s52 = scalar_lea.smem %s0, 26
  %s53 = sld [smem:[%s52]]
  %s54 = scalar_lea.smem %s0, 27
  %s55 = sld [smem:[%s54]]
  %s56 = scalar_lea.smem %s0, 28
  %s57 = sld [smem:[%s56]]
  %s58 = scalar_lea.smem %s0, 29
  %s59 = sld [smem:[%s58]]
  %s60 = sld [smem:[#allocation0]]
  $region170: #{en_gnn_forward.1} parent=0
    _
  %s62 = ssub.s32 1, %s60
  %s63 = scalar_select 0, %s62, %s60
  $region1: #{en_gnn_forward.1} parent=0
    #allocation2 [shape = 'u8[512]{0}', space=vmem, size = 0x400, scoped, tag = 'input window, operand 6, single buffered']
    #allocation3 [shape = 's32[1]{0}', space=sflag, size = 0x4, scoped, tag = 'scoped memory for en_gnn_forward.1']
    #allocation4 [shape = 's32[1]{0}', space=sflag, size = 0x4, scoped, tag = 'scoped memory for en_gnn_forward.1']
    #allocation5 [shape = 'u8[2048]{0}', space=vmem, size = 0x800, scoped, tag = 'input window, operand 9, single buffered']
    #allocation6 [shape = 's32[1]{0}', space=sflag, size = 0x4, scoped, tag = 'scoped memory for en_gnn_forward.1']
    #allocation7 [shape = 'u8[2048]{0}', space=vmem, size = 0x800, scoped, tag = 'input window, operand 12, single buffered']
    #allocation8 [shape = 'u8[2048]{0}', space=vmem, size = 0x800, scoped, tag = 'input window, operand 15, single buffered']
    #allocation9 [shape = 's32[1]{0}', space=sflag, size = 0x4, scoped, tag = 'scoped memory for en_gnn_forward.1']
    #allocation10 [shape = 'u8[2048]{0}', space=vmem, size = 0x800, scoped, tag = 'input window, operand 17, single buffered']
    #allocation11 [shape = 'u8[2048]{0}', space=vmem, size = 0x800, scoped, tag = 'input window, operand 19, single buffered']
    #allocation12 [shape = 's32[1]{0}', space=sflag, size = 0x4, scoped, tag = 'scoped memory for en_gnn_forward.1']
    #allocation13 [shape = 'u8[512]{0}', space=vmem, size = 0x400, scoped, tag = 'input window, operand 22, single buffered']
    #allocation14 [shape = 'u8[16384]{0}', space=vmem, size = 0x4000, scoped, tag = 'input window, operand 23, single buffered']
    #allocation15 [shape = 's32[1]{0}', space=sflag, size = 0x4, scoped, tag = 'scoped memory for en_gnn_forward.1']
    #allocation16 [shape = 'u8[512]{0}', space=vmem, size = 0x400, scoped, tag = 'input window, operand 24, single buffered']
    #allocation17 [shape = 'u8[65536]{0}', space=vmem, size = 0x10000, scoped, tag = 'input window, operand 25, single buffered']
    #allocation18 [shape = 's32[1]{0}', space=sflag, size = 0x4, scoped, tag = 'scoped memory for en_gnn_forward.1']
    #allocation19 [shape = 'u8[512]{0}', space=vmem, size = 0x400, scoped, tag = 'input window, operand 26, single buffered']
    #allocation20 [shape = 'u8[1024]{0}', space=vmem, size = 0x400, scoped, tag = 'output window, operand 0, single buffered']
    %64 = vsyncpa [#allocation3], 0
    %65 = vsyncpa [#allocation6], 0
    %66 = vsyncpa [#allocation9], 0
    %67 = vsyncpa [#allocation12], 0
    %68 = vsyncpa [#allocation15], 0
    %69 = vsyncpa [#allocation18], 0
    %70 = vsyncpa [#allocation4], 0
    // Predicated region
    $region2: #{en_gnn_forward.1} parent=1 // pred_check
      _
    $region3: #{en_gnn_forward.1} parent=1 // pred_check_branch
      %72 = sbr.rel (0) target = $region5
    $region4: #{en_gnn_forward.1} parent=1 // pred_region
      _
    $region5: #{en_gnn_forward.1} parent=1 // pred_fallthru
      _
    // Predicated region
    $region6: #{en_gnn_forward.1} parent=1 // pred_check
      _
    $region7: #{en_gnn_forward.1} parent=1 // pred_check_branch
      %74 = sbr.rel (0) target = $region9
    $region8: #{en_gnn_forward.1} parent=1 // pred_region
      _
    $region9: #{en_gnn_forward.1} parent=1 // pred_fallthru
      _
    // Predicated region
    $region10: #{en_gnn_forward.1} parent=1 // pred_check
      _
    $region11: #{en_gnn_forward.1} parent=1 // pred_check_branch
      %76 = sbr.rel (0) target = $region13
    $region12: #{en_gnn_forward.1} parent=1 // pred_region
      _
    $region13: #{en_gnn_forward.1} parent=1 // pred_fallthru
      _
    // Predicated region
    $region14: #{en_gnn_forward.1} parent=1 // pred_check
      _
    $region15: #{en_gnn_forward.1} parent=1 // pred_check_branch
      %78 = sbr.rel (0) target = $region17
    $region16: #{en_gnn_forward.1} parent=1 // pred_region
      _
    $region17: #{en_gnn_forward.1} parent=1 // pred_fallthru
      _
    // Predicated region
    $region18: #{en_gnn_forward.1} parent=1 // pred_check
      _
    $region19: #{en_gnn_forward.1} parent=1 // pred_check_branch
      %80 = sbr.rel (0) target = $region21
    $region20: #{en_gnn_forward.1} parent=1 // pred_region
      _
    $region21: #{en_gnn_forward.1} parent=1 // pred_fallthru
      _
    // Predicated region
    $region22: #{en_gnn_forward.1} parent=1 // pred_check
      _
    $region23: #{en_gnn_forward.1} parent=1 // pred_check_branch
      %82 = sbr.rel (0) target = $region25
    $region24: #{en_gnn_forward.1} parent=1 // pred_region
      _
    $region25: #{en_gnn_forward.1} parent=1 // pred_fallthru
      _
    // Predicated region
    $region26: #{en_gnn_forward.1} parent=1 // pred_check
      _
    $region27: #{en_gnn_forward.1} parent=1 // pred_check_branch
      %84 = sbr.rel (0) target = $region29
    $region28: #{en_gnn_forward.1} parent=1 // pred_region
      %s86 = ssub.s32 16, 16
      %87 = vsyncadd [#allocation3], %s86
      %s89 = sshll.u32 [#allocation2], 4
      %s90 = int_to_ptr.vmem [resolvable:$true] %s89
      %92 = dma.hbm_to_vmem [thread:$0]  %s13, 16, %s90, [#allocation3]
    $region29: #{en_gnn_forward.1} parent=1 // pred_fallthru
      _
    // Predicated region
    $region30: #{en_gnn_forward.1} parent=1 // pred_check
      _
    $region31: #{en_gnn_forward.1} parent=1 // pred_check_branch
      %94 = sbr.rel (0) target = $region33
    $region32: #{en_gnn_forward.1} parent=1 // pred_region
      _
    $region33: #{en_gnn_forward.1} parent=1 // pred_fallthru
      _
    // Predicated region
    $region34: #{en_gnn_forward.1} parent=1 // pred_check
      _
    $region35: #{en_gnn_forward.1} parent=1 // pred_check_branch
      %96 = sbr.rel (0) target = $region37
    $region36: #{en_gnn_forward.1} parent=1 // pred_region
      _
    $region37: #{en_gnn_forward.1} parent=1 // pred_fallthru
      _
    // Predicated region
    $region38: #{en_gnn_forward.1} parent=1 // pred_check
      _
    $region39: #{en_gnn_forward.1} parent=1 // pred_check_branch
      %98 = sbr.rel (0) target = $region41
    $region40: #{en_gnn_forward.1} parent=1 // pred_region
      %s100 = ssub.s32 64, 64
      %101 = vsyncadd [#allocation6], %s100
      %s102 = sshll.u32 [#allocation5], 4
      %s103 = int_to_ptr.vmem [resolvable:$true] %s102
      %108 = dma.hbm_to_vmem [thread:$0]  %s19, 64, %s103, [#allocation6], 16, 16, 1
    $region41: #{en_gnn_forward.1} parent=1 // pred_fallthru
      _
    // Predicated region
    $region42: #{en_gnn_forward.1} parent=1 // pred_check
      _
    $region43: #{en_gnn_forward.1} parent=1 // pred_check_branch
      %110 = sbr.rel (0) target = $region45
    $region44: #{en_gnn_forward.1} parent=1 // pred_region
      _
    $region45: #{en_gnn_forward.1} parent=1 // pred_fallthru
      _
    // Predicated region
    $region46: #{en_gnn_forward.1} parent=1 // pred_check
      _
    $region47: #{en_gnn_forward.1} parent=1 // pred_check_branch
      %112 = sbr.rel (0) target = $region49
    $region48: #{en_gnn_forward.1} parent=1 // pred_region
      _
    $region49: #{en_gnn_forward.1} parent=1 // pred_fallthru
      _
    // Predicated region
    $region50: #{en_gnn_forward.1} parent=1 // pred_check
      _
    $region51: #{en_gnn_forward.1} parent=1 // pred_check_branch
      %114 = sbr.rel (0) target = $region53
    $region52: #{en_gnn_forward.1} parent=1 // pred_region
      %s116 = ssub.s32 64, 64
      %117 = vsyncadd [#allocation6], %s116
      %s118 = sshll.u32 [#allocation7], 4
      %s119 = int_to_ptr.vmem [resolvable:$true] %s118
      %124 = dma.hbm_to_vmem [thread:$0]  %s25, 64, %s119, [#allocation6], 16, 16, 1
    $region53: #{en_gnn_forward.1} parent=1 // pred_fallthru
      _
    // Predicated region
    $region54: #{en_gnn_forward.1} parent=1 // pred_check
      _
    $region55: #{en_gnn_forward.1} parent=1 // pred_check_branch
      %126 = sbr.rel (0) target = $region57
    $region56: #{en_gnn_forward.1} parent=1 // pred_region
      _
    $region57: #{en_gnn_forward.1} parent=1 // pred_fallthru
      _
    // Predicated region
    $region58: #{en_gnn_forward.1} parent=1 // pred_check
      _
    $region59: #{en_gnn_forward.1} parent=1 // pred_check_branch
      %128 = sbr.rel (0) target = $region61
    $region60: #{en_gnn_forward.1} parent=1 // pred_region
      _
    $region61: #{en_gnn_forward.1} parent=1 // pred_fallthru
      _
    // Predicated region
    $region62: #{en_gnn_forward.1} parent=1 // pred_check
      _
    $region63: #{en_gnn_forward.1} parent=1 // pred_check_branch
      %130 = sbr.rel (0) target = $region65
    $region64: #{en_gnn_forward.1} parent=1 // pred_region
      %s132 = ssub.s32 64, 64
      %133 = vsyncadd [#allocation9], %s132
      %s134 = sshll.u32 [#allocation8], 4
      %s135 = int_to_ptr.vmem [resolvable:$true] %s134
      %140 = dma.hbm_to_vmem [thread:$0]  %s31, 64, %s135, [#allocation9], 16, 16, 1
    $region65: #{en_gnn_forward.1} parent=1 // pred_fallthru
      _
    // Predicated region
    $region66: #{en_gnn_forward.1} parent=1 // pred_check
      _
    $region67: #{en_gnn_forward.1} parent=1 // pred_check_branch
      %142 = sbr.rel (0) target = $region69
    $region68: #{en_gnn_forward.1} parent=1 // pred_region
      _
    $region69: #{en_gnn_forward.1} parent=1 // pred_fallthru
      _
    // Predicated region
    $region70: #{en_gnn_forward.1} parent=1 // pred_check
      _
    $region71: #{en_gnn_forward.1} parent=1 // pred_check_branch
      %144 = sbr.rel (0) target = $region73
    $region72: #{en_gnn_forward.1} parent=1 // pred_region
      %s146 = ssub.s32 64, 64
      %147 = vsyncadd [#allocation9], %s146
      %s148 = sshll.u32 [#allocation10], 4
      %s149 = int_to_ptr.vmem [resolvable:$true] %s148
      %154 = dma.hbm_to_vmem [thread:$0]  %s35, 64, %s149, [#allocation9], 16, 16, 1
    $region73: #{en_gnn_forward.1} parent=1 // pred_fallthru
      _
    // Predicated region
    $region74: #{en_gnn_forward.1} parent=1 // pred_check
      _
    $region75: #{en_gnn_forward.1} parent=1 // pred_check_branch
      %156 = sbr.rel (0) target = $region77
    $region76: #{en_gnn_forward.1} parent=1 // pred_region
      _
    $region77: #{en_gnn_forward.1} parent=1 // pred_fallthru
      _
    // Predicated region
    $region78: #{en_gnn_forward.1} parent=1 // pred_check
      _
    $region79: #{en_gnn_forward.1} parent=1 // pred_check_branch
      %158 = sbr.rel (0) target = $region81
    $region80: #{en_gnn_forward.1} parent=1 // pred_region
      %s160 = ssub.s32 64, 64
      %161 = vsyncadd [#allocation12], %s160
      %s162 = sshll.u32 [#allocation11], 4
      %s163 = int_to_ptr.vmem [resolvable:$true] %s162
      %168 = dma.hbm_to_vmem [thread:$0]  %s39, 64, %s163, [#allocation12], 16, 16, 1
    $region81: #{en_gnn_forward.1} parent=1 // pred_fallthru
      _
    // Predicated region
    $region82: #{en_gnn_forward.1} parent=1 // pred_check
      _
    $region83: #{en_gnn_forward.1} parent=1 // pred_check_branch
      %170 = sbr.rel (0) target = $region85
    $region84: #{en_gnn_forward.1} parent=1 // pred_region
      _
    $region85: #{en_gnn_forward.1} parent=1 // pred_fallthru
      _
    // Predicated region
    $region86: #{en_gnn_forward.1} parent=1 // pred_check
      _
    $region87: #{en_gnn_forward.1} parent=1 // pred_check_branch
      %172 = sbr.rel (0) target = $region89
    $region88: #{en_gnn_forward.1} parent=1 // pred_region
      _
    $region89: #{en_gnn_forward.1} parent=1 // pred_fallthru
      _
    // Predicated region
    $region90: #{en_gnn_forward.1} parent=1 // pred_check
      _
    $region91: #{en_gnn_forward.1} parent=1 // pred_check_branch
      %174 = sbr.rel (0) target = $region93
    $region92: #{en_gnn_forward.1} parent=1 // pred_region
      %s176 = ssub.s32 16, 16
      %177 = vsyncadd [#allocation12], %s176
      %s179 = sshll.u32 [#allocation13], 4
      %s180 = int_to_ptr.vmem [resolvable:$true] %s179
      %182 = dma.hbm_to_vmem [thread:$0]  %s45, 16, %s180, [#allocation12]
    $region93: #{en_gnn_forward.1} parent=1 // pred_fallthru
      _
    // Predicated region
    $region94: #{en_gnn_forward.1} parent=1 // pred_check
      _
    $region95: #{en_gnn_forward.1} parent=1 // pred_check_branch
      %184 = sbr.rel (0) target = $region97
    $region96: #{en_gnn_forward.1} parent=1 // pred_region
      %s186 = ssub.s32 512, 512
      %187 = vsyncadd [#allocation15], %s186
      %s188 = sshll.u32 [#allocation14], 4
      %s189 = int_to_ptr.vmem [resolvable:$true] %s188
      %194 = dma.hbm_to_vmem [thread:$0]  %s47, 512, %s189, [#allocation15], 128, 128, 8
    $region97: #{en_gnn_forward.1} parent=1 // pred_fallthru
      _
    // Predicated region
    $region98: #{en_gnn_forward.1} parent=1 // pred_check
      _
    $region99: #{en_gnn_forward.1} parent=1 // pred_check_branch
      %196 = sbr.rel (0) target = $region101
    $region100: #{en_gnn_forward.1} parent=1 // pred_region
      %s198 = ssub.s32 16, 16
      %199 = vsyncadd [#allocation15], %s198
      %s201 = sshll.u32 [#allocation16], 4
      %s202 = int_to_ptr.vmem [resolvable:$true] %s201
      %204 = dma.hbm_to_vmem [thread:$0]  %s49, 16, %s202, [#allocation15]
    $region101: #{en_gnn_forward.1} parent=1 // pred_fallthru
      _
    // Predicated region
    $region102: #{en_gnn_forward.1} parent=1 // pred_check
      _
    $region103: #{en_gnn_forward.1} parent=1 // pred_check_branch
      %206 = sbr.rel (0) target = $region105
    $region104: #{en_gnn_forward.1} parent=1 // pred_region
      %s208 = ssub.s32 2048, 2048
      %209 = vsyncadd [#allocation18], %s208
      %s210 = sshll.u32 [#allocation17], 4
      %s211 = int_to_ptr.vmem [resolvable:$true] %s210
      %216 = dma.hbm_to_vmem [thread:$0]  %s51, 2048, %s211, [#allocation18], 128, 128, 8
    $region105: #{en_gnn_forward.1} parent=1 // pred_fallthru
      _
    // Predicated region
    $region106: #{en_gnn_forward.1} parent=1 // pred_check
      _
    $region107: #{en_gnn_forward.1} parent=1 // pred_check_branch
      %218 = sbr.rel (0) target = $region109
    $region108: #{en_gnn_forward.1} parent=1 // pred_region
      %s220 = ssub.s32 16, 16
      %221 = vsyncadd [#allocation18], %s220
      %s223 = sshll.u32 [#allocation19], 4
      %s224 = int_to_ptr.vmem [resolvable:$true] %s223
      %226 = dma.hbm_to_vmem [thread:$0]  %s53, 16, %s224, [#allocation18]
    $region109: #{en_gnn_forward.1} parent=1 // pred_fallthru
      _
    // Predicated region
    $region110: #{en_gnn_forward.1} parent=1 // pred_check
      _
    $region111: #{en_gnn_forward.1} parent=1 // pred_check_branch
      %228 = sbr.rel (0) target = $region113
    $region112: #{en_gnn_forward.1} parent=1 // pred_region
      _
    $region113: #{en_gnn_forward.1} parent=1 // pred_fallthru
      _
    // Predicated region
    $region114: #{en_gnn_forward.1} parent=1 // pred_check
      _
    $region115: #{en_gnn_forward.1} parent=1 // pred_check_branch
      %230 = sbr.rel (0) target = $region117
    $region116: #{en_gnn_forward.1} parent=1 // pred_region
      _
    $region117: #{en_gnn_forward.1} parent=1 // pred_fallthru
      _
    // Predicated region
    $region118: #{en_gnn_forward.1} parent=1 // pred_check
      _
    $region119: #{en_gnn_forward.1} parent=1 // pred_check_branch
      %232 = sbr.rel (0) target = $region121
    $region120: #{en_gnn_forward.1} parent=1 // pred_region
      %233 = dma.done [#allocation3], 16
    $region121: #{en_gnn_forward.1} parent=1 // pred_fallthru
      _
    // Predicated region
    $region122: #{en_gnn_forward.1} parent=1 // pred_check
      _
    $region123: #{en_gnn_forward.1} parent=1 // pred_check_branch
      %235 = sbr.rel (0) target = $region125
    $region124: #{en_gnn_forward.1} parent=1 // pred_region
      %236 = dma.done [#allocation6], 64
    $region125: #{en_gnn_forward.1} parent=1 // pred_fallthru
      _
    // Predicated region
    $region126: #{en_gnn_forward.1} parent=1 // pred_check
      _
    $region127: #{en_gnn_forward.1} parent=1 // pred_check_branch
      %238 = sbr.rel (0) target = $region129
    $region128: #{en_gnn_forward.1} parent=1 // pred_region
      %239 = dma.done [#allocation6], 64
    $region129: #{en_gnn_forward.1} parent=1 // pred_fallthru
      _
    // Predicated region
    $region130: #{en_gnn_forward.1} parent=1 // pred_check
      _
    $region131: #{en_gnn_forward.1} parent=1 // pred_check_branch
      %241 = sbr.rel (0) target = $region133
    $region132: #{en_gnn_forward.1} parent=1 // pred_region
      %242 = dma.done [#allocation9], 64
    $region133: #{en_gnn_forward.1} parent=1 // pred_fallthru
      _
    // Predicated region
    $region134: #{en_gnn_forward.1} parent=1 // pred_check
      _
    $region135: #{en_gnn_forward.1} parent=1 // pred_check_branch
      %244 = sbr.rel (0) target = $region137
    $region136: #{en_gnn_forward.1} parent=1 // pred_region
      %245 = dma.done [#allocation9], 64
    $region137: #{en_gnn_forward.1} parent=1 // pred_fallthru
      _
    // Predicated region
    $region138: #{en_gnn_forward.1} parent=1 // pred_check
      _
    $region139: #{en_gnn_forward.1} parent=1 // pred_check_branch
      %247 = sbr.rel (0) target = $region141
    $region140: #{en_gnn_forward.1} parent=1 // pred_region
      %248 = dma.done [#allocation12], 64
    $region141: #{en_gnn_forward.1} parent=1 // pred_fallthru
      _
    // Predicated region
    $region142: #{en_gnn_forward.1} parent=1 // pred_check
      _
    $region143: #{en_gnn_forward.1} parent=1 // pred_check_branch
      %250 = sbr.rel (0) target = $region145
    $region144: #{en_gnn_forward.1} parent=1 // pred_region
      %251 = dma.done [#allocation12], 16
    $region145: #{en_gnn_forward.1} parent=1 // pred_fallthru
      _
    // Predicated region
    $region146: #{en_gnn_forward.1} parent=1 // pred_check
      _
    $region147: #{en_gnn_forward.1} parent=1 // pred_check_branch
      %253 = sbr.rel (0) target = $region149
    $region148: #{en_gnn_forward.1} parent=1 // pred_region
      %254 = dma.done [#allocation15], 512
    $region149: #{en_gnn_forward.1} parent=1 // pred_fallthru
      _
    // Predicated region
    $region150: #{en_gnn_forward.1} parent=1 // pred_check
      _
    $region151: #{en_gnn_forward.1} parent=1 // pred_check_branch
      %256 = sbr.rel (0) target = $region153
    $region152: #{en_gnn_forward.1} parent=1 // pred_region
      %257 = dma.done [#allocation15], 16
    $region153: #{en_gnn_forward.1} parent=1 // pred_fallthru
      _
    // Predicated region
    $region154: #{en_gnn_forward.1} parent=1 // pred_check
      _
    $region155: #{en_gnn_forward.1} parent=1 // pred_check_branch
      %259 = sbr.rel (0) target = $region157
    $region156: #{en_gnn_forward.1} parent=1 // pred_region
      %260 = dma.done [#allocation18], 2048
    $region157: #{en_gnn_forward.1} parent=1 // pred_fallthru
      _
    // Predicated region
    $region158: #{en_gnn_forward.1} parent=1 // pred_check
      _
    $region159: #{en_gnn_forward.1} parent=1 // pred_check_branch
      %262 = sbr.rel (0) target = $region161
    $region160: #{en_gnn_forward.1} parent=1 // pred_region
      %263 = dma.done [#allocation18], 16
    $region161: #{en_gnn_forward.1} parent=1 // pred_fallthru
      _
    %v264 = vld [vmem:[%s1] sm:$0xff]
    %v265 = vld [vmem:[%s1 + $0x8] sm:$0xff]
    %v266 = vld [vmem:[%s1 + $0x10] sm:$0xff]
    %v267 = vld [vmem:[%s1 + $0x18] sm:$0xff]
    %v268 = vld [vmem:[%s1 + $0x20] sm:$0xff]
    %v269 = vld [vmem:[%s1 + $0x28] sm:$0xff]
    %v270 = vld [vmem:[%s1 + $0x30] sm:$0xff]
    %v271 = vld [vmem:[%s1 + $0x38] sm:$0xff]
    %v272 = vld [vmem:[%s3] sm:$0x1]
    %v273 = vlaneseq
    %v274 = vand.u32 %v273, 127
    %275 = vset.pattern.permute.xlu0 0
    %276 = vperm.xlu0 %275, %v264
    %v277 = vpop.permute.xlu0 %276
    %278 = vset.pattern.permute.xlu0 0
    %279 = vperm.xlu0 %278, %v265
    %v280 = vpop.permute.xlu0 %279
    %281 = vset.pattern.permute.xlu0 0
    %282 = vperm.xlu0 %281, %v266
    %v283 = vpop.permute.xlu0 %282
    %284 = vset.pattern.permute.xlu0 0
    %285 = vperm.xlu0 %284, %v267
    %v286 = vpop.permute.xlu0 %285
    %287 = vset.pattern.permute.xlu0 0
    %288 = vperm.xlu0 %287, %v268
    %v289 = vpop.permute.xlu0 %288
    %290 = vset.pattern.permute.xlu0 0
    %291 = vperm.xlu0 %290, %v269
    %v292 = vpop.permute.xlu0 %291
    %293 = vset.pattern.permute.xlu0 0
    %294 = vperm.xlu0 %293, %v270
    %v295 = vpop.permute.xlu0 %294
    %296 = vset.pattern.permute.xlu0 0
    %297 = vperm.xlu0 %296, %v271
    %v298 = vpop.permute.xlu0 %297
    %vm299 = vcmp.eq.s32.totalorder %v274, %v277
    %vm300 = vcmp.eq.s32.totalorder %v274, %v280
    %vm301 = vcmp.eq.s32.totalorder %v274, %v283
    %vm302 = vcmp.eq.s32.totalorder %v274, %v286
    %vm303 = vcmp.eq.s32.totalorder %v274, %v289
    %vm304 = vcmp.eq.s32.totalorder %v274, %v292
    %vm305 = vcmp.eq.s32.totalorder %v274, %v295
    %vm306 = vcmp.eq.s32.totalorder %v274, %v298
    %v307 = vsel %vm299, 1, 0
    %v308 = vsel %vm300, 1, 0
    %v309 = vsel %vm301, 1, 0
    %v310 = vsel %vm302, 1, 0
    %v311 = vsel %vm303, 1, 0
    %v312 = vsel %vm304, 1, 0
    %v313 = vsel %vm305, 1, 0
    %v314 = vsel %vm306, 1, 0
    %v315 = vcvt.s32.f32 %v307
    %v316 = vcvt.s32.f32 %v308
    %v317 = vcvt.s32.f32 %v309
    %v318 = vcvt.s32.f32 %v310
    %v319 = vcvt.s32.f32 %v311
    %v320 = vcvt.s32.f32 %v312
    %v321 = vcvt.s32.f32 %v313
    %v322 = vcvt.s32.f32 %v314
    %v323 = vlaneseq
    %v324 = vshrl.u32 %v323, 7
    %v325 = vadd.s32 %v324, 8
    %v326 = vlaneseq
    %v327 = vshrl.u32 %v326, 7
    %v328 = vsub.s32 0, %v327
    %v329 = vrot.slane %v272, %v328
    %vm330 = vcmp.eq.s32.totalorder %v324, %v329
    %vm331 = vcmp.eq.s32.totalorder %v325, %v329
    %v332 = vsel %vm330, 1, 0
    %v333 = vsel %vm331, 1, 0
    %v334 = vcvt.s32.f32 %v332
    %v335 = vcvt.s32.f32 %v333
    %vm336 = vcmask 261120
    %v337 = vsel %vm336, %v334, 0.0
    %338 = vadd.xlane.f32.xlu0 %v337
    %v339 = vpop.xlane.xlu0 %338
    %v340 = vsel %vm336, %v335, 0.0
    %341 = vadd.xlane.f32.xlu0 %v340
    %v342 = vpop.xlane.xlu0 %341
    %v343 = vmax.f32 %v339, 1.0
    %v344 = vmax.f32 %v342, 1.0
    %v345 = vrcp.pop %v343
    %v346 = vmul.f32 1.0, %v345
    %v347 = vrcp.pop %v344
    %v348 = vmul.f32 1.0, %v347
    %v349 = vmul.f32 %v334, %v346
    %v350 = vmul.f32 %v335, %v348
    %v351 = vld [vmem:[%s7] sm:$0xff]
    %v352 = vld [vmem:[%s7 + $0x8] sm:$0xff]
    %v353 = vld [vmem:[%s11] sm:$0xff]
    %v354 = vld [vmem:[#allocation2] sm:$0x1]
    %v356 = vlaneseq
    %v357 = vshrl.u32 %v356, 7
    %v358 = vsub.s32 0, %v357
    %v359 = vrot.slane %v354, %v358
    %vm361 = vcmask 64512
    %v363 = vsel %vm361, %v351, 0
    %v366 = vsel %vm361, %v352, 0
    %368 = vmatprep.subr.mxu0 0.0
    %369 = vmatpush1.msra.mxu0 0.0
    %370 = vmatprep.subr.mxu0 0.0
    %371 = vmatpush1.msra.mxu0 0.0
    %372 = vmatprep.subr.mxu0 0.0
    %373 = vmatpush1.msra.mxu0 0.0
    %374 = vmatprep.subr.mxu0 0.0
    %375 = vmatpush1.msra.mxu0 0.0
    %376 = vmatprep.subr.mxu0 0.0
    %377 = vmatpush1.msra.mxu0 0.0
    %378 = vmatprep.subr.mxu0 0.0
    %379 = vmatpush1.msra.mxu0 0.0
    %380 = vmatprep.subr.mxu0 0.0
    %381 = vmatpush1.msra.mxu0 0.0
    %382 = vmatprep.subr.mxu0 0.0
    %383 = vmatpush1.msra.mxu0 0.0
    %384 = vmatprep.subr.mxu0 0.0
    %385 = vmatpush1.msra.mxu0 0.0
    %386 = vmatprep.subr.mxu0 0.0
    %387 = vmatpush1.msra.mxu0 0.0
    %388 = vmatprep.subr.mxu0 0.0
    %389 = vmatpush1.msra.mxu0 0.0
    %390 = vmatprep.subr.mxu0 0.0
    %391 = vmatpush1.msra.mxu0 0.0
    %392 = vmatprep.subr.mxu0 0.0
    %393 = vmatpush1.msra.mxu0 0.0
    %394 = vmatprep.subr.mxu0 0.0
    %395 = vmatpush1.msra.mxu0 0.0
    %396 = vmatprep.subr.mxu0 0.0
    %397 = vmatpush1.msra.mxu0 0.0
    %398 = vmatprep.subr.mxu0 0.0
    %399 = vmatpush1.msra.mxu0 %v353
    %400 = vmatprep.subr.mxu0 0.0
    %401 = vmatpush2.msra.mxu0 0.0
    %402 = vmatprep.subr.mxu0 0.0
    %403 = vmatpush2.msra.mxu0 0.0
    %404 = vmatprep.subr.mxu0 0.0
    %405 = vmatpush2.msra.mxu0 0.0
    %406 = vmatprep.subr.mxu0 0.0
    %407 = vmatpush2.msra.mxu0 0.0
    %408 = vmatprep.subr.mxu0 0.0
    %409 = vmatpush2.msra.mxu0 0.0
    %410 = vmatprep.subr.mxu0 0.0
    %411 = vmatpush2.msra.mxu0 0.0
    %412 = vmatprep.subr.mxu0 0.0
    %413 = vmatpush2.msra.mxu0 0.0
    %414 = vmatprep.subr.mxu0 0.0
    %415 = vmatpush2.msra.mxu0 0.0
    %416 = vmatprep.subr.mxu0 0.0
    %417 = vmatpush2.msra.mxu0 0.0
    %418 = vmatprep.subr.mxu0 0.0
    %419 = vmatpush2.msra.mxu0 0.0
    %420 = vmatprep.subr.mxu0 0.0
    %421 = vmatpush2.msra.mxu0 0.0
    %422 = vmatprep.subr.mxu0 0.0
    %423 = vmatpush2.msra.mxu0 0.0
    %424 = vmatprep.subr.mxu0 0.0
    %425 = vmatpush2.msra.mxu0 0.0
    %426 = vmatprep.subr.mxu0 0.0
    %427 = vmatpush2.msra.mxu0 0.0
    %428 = vmatprep.subr.mxu0 0.0
    %429 = vmatpush2.msra.mxu0 0.0
    %430 = vmatprep.subr.mxu0 0.0
    %431 = vmatpush2.msra.mxu0 0.0
    %432 = vmatprep.mubr.f32.mxu0 0.0
    %433 = vmatmul.mubr.f32.gmra.mxu0 %v363
    %v434 = vpop.f32.mrf.mxu0
    %v435 = vadd.f32 %v359, %v434
    %v436 = vpop.f32.mrf.mxu0
    %437 = vmatprep.mubr.f32.mxu0 0.0
    %438 = vmatmul.mubr.f32.gmra.mxu0 %v366
    %v439 = vpop.f32.mrf.mxu0
    %v440 = vadd.f32 %v359, %v439
    %v441 = vpop.f32.mrf.mxu0
    %442 = vdwg.mxu0
    %v443 = vld [vmem:[%s9] sm:$0xff]
    %v444 = vld [vmem:[%s9 + $0x8] sm:$0xff]
    %v445 = vld [vmem:[%s15] sm:$0xff]
    %v446 = vld [vmem:[%s15 + $0x8] sm:$0xff]
    %v447 = vld [vmem:[%s15 + $0x10] sm:$0xff]
    %v448 = vld [vmem:[%s15 + $0x18] sm:$0xff]
    %v449 = vld [vmem:[%s17] sm:$0xff]
    %v450 = vld [vmem:[%s17 + $0x8] sm:$0xff]
    %v451 = vld [vmem:[%s17 + $0x10] sm:$0xff]
    %v452 = vld [vmem:[%s17 + $0x18] sm:$0xff]
    %v453 = vld [vmem:[#allocation5] sm:$0x1]
    %v454 = vld [vmem:[%s21] sm:$0x1]
    %v455 = vld [vmem:[%s23] sm:$0xff]
    %v456 = vld [vmem:[%s23 + $0x8] sm:$0xff]
    %v457 = vld [vmem:[%s23 + $0x10] sm:$0xff]
    %v458 = vld [vmem:[%s23 + $0x18] sm:$0xff]
    %v459 = vld [vmem:[#allocation7] sm:$0x1]
    %v460 = vld [vmem:[%s27] sm:$0xff]
    %v461 = vld [vmem:[%s27 + $0x8] sm:$0xff]
    %v462 = vld [vmem:[%s27 + $0x10] sm:$0xff]
    %v463 = vld [vmem:[%s27 + $0x18] sm:$0xff]
    %v464 = vld [vmem:[%s29] sm:$0xff]
    %v465 = vld [vmem:[%s29 + $0x8] sm:$0xff]
    %v466 = vld [vmem:[%s29 + $0x10] sm:$0xff]
    %v467 = vld [vmem:[%s29 + $0x18] sm:$0xff]
    %v468 = vld [vmem:[#allocation8] sm:$0x1]
    %v469 = vld [vmem:[%s33] sm:$0xff]
    %v470 = vld [vmem:[%s33 + $0x8] sm:$0xff]
    %v471 = vld [vmem:[%s33 + $0x10] sm:$0xff]
    %v472 = vld [vmem:[%s33 + $0x18] sm:$0xff]
    %v473 = vld [vmem:[#allocation10] sm:$0x1]
    %v474 = vld [vmem:[%s37] sm:$0xff]
    %v475 = vld [vmem:[%s37 + $0x8] sm:$0xff]
    %v476 = vld [vmem:[%s37 + $0x10] sm:$0xff]
    %v477 = vld [vmem:[%s37 + $0x18] sm:$0xff]
    %v478 = vld [vmem:[#allocation11] sm:$0x1]
    %v479 = vld [vmem:[%s41] sm:$0xff]
    %v480 = vld [vmem:[%s41 + $0x8] sm:$0xff]
    %v481 = vld [vmem:[%s41 + $0x10] sm:$0xff]
    %v482 = vld [vmem:[%s41 + $0x18] sm:$0xff]
    %vm483 = vcmask 130048
    %v485 = vsel %vm483, %v315, 0
    %v488 = vsel %vm483, %v316, 0
    %v491 = vsel %vm483, %v317, 0
    %v494 = vsel %vm483, %v318, 0
    %v497 = vsel %vm483, %v319, 0
    %v500 = vsel %vm483, %v320, 0
    %v503 = vsel %vm483, %v321, 0
    %v506 = vsel %vm483, %v322, 0
    %508 = vmatprep.subr.mxu0 0.0
    %509 = vmatpush1.msra.mxu0 0.0
    %510 = vmatprep.subr.mxu0 0.0
    %511 = vmatpush1.msra.mxu0 0.0
    %512 = vmatprep.subr.mxu0 0.0
    %513 = vmatpush1.msra.mxu0 0.0
    %514 = vmatprep.subr.mxu0 0.0
    %515 = vmatpush1.msra.mxu0 0.0
    %516 = vmatprep.subr.mxu0 0.0
    %517 = vmatpush1.msra.mxu0 0.0
    %518 = vmatprep.subr.mxu0 0.0
    %519 = vmatpush1.msra.mxu0 0.0
    %520 = vmatprep.subr.mxu0 0.0
    %521 = vmatpush1.msra.mxu0 0.0
    %522 = vmatprep.subr.mxu0 0.0
    %523 = vmatpush1.msra.mxu0 0.0
    %524 = vmatprep.subr.mxu0 0.0
    %525 = vmatpush1.msra.mxu0 0.0
    %526 = vmatprep.subr.mxu0 0.0
    %527 = vmatpush1.msra.mxu0 0.0
    %528 = vmatprep.subr.mxu0 0.0
    %529 = vmatpush1.msra.mxu0 0.0
    %530 = vmatprep.subr.mxu0 0.0
    %531 = vmatpush1.msra.mxu0 0.0
    %532 = vmatprep.subr.mxu0 0.0
    %533 = vmatpush1.msra.mxu0 0.0
    %534 = vmatprep.subr.mxu0 0.0
    %535 = vmatpush1.msra.mxu0 0.0
    %536 = vmatprep.subr.mxu0 0.0
    %537 = vmatpush1.msra.mxu0 %v440
    %538 = vmatprep.subr.mxu0 0.0
    %539 = vmatpush1.msra.mxu0 %v435
    %540 = vmatprep.subr.mxu0 0.0
    %541 = vmatpush2.msra.mxu0 0.0
    %542 = vmatprep.subr.mxu0 0.0
    %543 = vmatpush2.msra.mxu0 0.0
    %544 = vmatprep.subr.mxu0 0.0
    %545 = vmatpush2.msra.mxu0 0.0
    %546 = vmatprep.subr.mxu0 0.0
    %547 = vmatpush2.msra.mxu0 0.0
    %548 = vmatprep.subr.mxu0 0.0
    %549 = vmatpush2.msra.mxu0 0.0
    %550 = vmatprep.subr.mxu0 0.0
    %551 = vmatpush2.msra.mxu0 0.0
    %552 = vmatprep.subr.mxu0 0.0
    %553 = vmatpush2.msra.mxu0 0.0
    %554 = vmatprep.subr.mxu0 0.0
    %555 = vmatpush2.msra.mxu0 0.0
    %556 = vmatprep.subr.mxu0 0.0
    %557 = vmatpush2.msra.mxu0 0.0
    %558 = vmatprep.subr.mxu0 0.0
    %559 = vmatpush2.msra.mxu0 0.0
    %560 = vmatprep.subr.mxu0 0.0
    %561 = vmatpush2.msra.mxu0 0.0
    %562 = vmatprep.subr.mxu0 0.0
    %563 = vmatpush2.msra.mxu0 0.0
    %564 = vmatprep.subr.mxu0 0.0
    %565 = vmatpush2.msra.mxu0 0.0
    %566 = vmatprep.subr.mxu0 0.0
    %567 = vmatpush2.msra.mxu0 0.0
    %568 = vmatprep.subr.mxu0 0.0
    %569 = vmatpush2.msra.mxu0 0.0
    %570 = vmatprep.subr.mxu0 0.0
    %571 = vmatpush2.msra.mxu0 0.0
    %572 = vmatprep.mubr.f32.mxu0 0.0
    %573 = vmatmul.mubr.f32.gmra.mxu0 %v485
    %v574 = vpop.f32.mrf.mxu0
    %v575 = vadd.f32 0.0, %v574
    %v576 = vpop.f32.mrf.mxu0
    %577 = vmatprep.mubr.f32.mxu0 0.0
    %578 = vmatmul.mubr.f32.gmra.mxu0 %v488
    %v579 = vpop.f32.mrf.mxu0
    %v580 = vadd.f32 0.0, %v579
    %v581 = vpop.f32.mrf.mxu0
    %582 = vmatprep.mubr.f32.mxu0 0.0
    %583 = vmatmul.mubr.f32.gmra.mxu0 %v491
    %v584 = vpop.f32.mrf.mxu0
    %v585 = vadd.f32 0.0, %v584
    %v586 = vpop.f32.mrf.mxu0
    %587 = vmatprep.mubr.f32.mxu0 0.0
    %588 = vmatmul.mubr.f32.gmra.mxu0 %v494
    %v589 = vpop.f32.mrf.mxu0
    %v590 = vadd.f32 0.0, %v589
    %v591 = vpop.f32.mrf.mxu0
    %592 = vmatprep.mubr.f32.mxu0 0.0
    %593 = vmatmul.mubr.f32.gmra.mxu0 %v497
    %v594 = vpop.f32.mrf.mxu0
    %v595 = vadd.f32 0.0, %v594
    %v596 = vpop.f32.mrf.mxu0
    %597 = vmatprep.mubr.f32.mxu0 0.0
    %598 = vmatmul.mubr.f32.gmra.mxu0 %v500
    %v599 = vpop.f32.mrf.mxu0
    %v600 = vadd.f32 0.0, %v599
    %v601 = vpop.f32.mrf.mxu0
    %602 = vmatprep.mubr.f32.mxu0 0.0
    %603 = vmatmul.mubr.f32.gmra.mxu0 %v503
    %v604 = vpop.f32.mrf.mxu0
    %v605 = vadd.f32 0.0, %v604
    %v606 = vpop.f32.mrf.mxu0
    %607 = vmatprep.mubr.f32.mxu0 0.0
    %608 = vmatmul.mubr.f32.gmra.mxu0 %v506
    %v609 = vpop.f32.mrf.mxu0
    %v610 = vadd.f32 0.0, %v609
    %v611 = vpop.f32.mrf.mxu0
    %612 = vdwg.mxu0
    %613 = vmatprep.subr.mxu0 0.0
    %614 = vmatpush1.msra.mxu0 0.0
    %615 = vmatprep.subr.mxu0 0.0
    %616 = vmatpush1.msra.mxu0 0.0
    %617 = vmatprep.subr.mxu0 0.0
    %618 = vmatpush1.msra.mxu0 0.0
    %619 = vmatprep.subr.mxu0 0.0
    %620 = vmatpush1.msra.mxu0 0.0
    %621 = vmatprep.subr.mxu0 0.0
    %622 = vmatpush1.msra.mxu0 0.0
    %623 = vmatprep.subr.mxu0 0.0
    %624 = vmatpush1.msra.mxu0 0.0
    %625 = vmatprep.subr.mxu0 0.0
    %626 = vmatpush1.msra.mxu0 0.0
    %627 = vmatprep.subr.mxu0 0.0
    %628 = vmatpush1.msra.mxu0 0.0
    %629 = vmatprep.subr.mxu0 0.0
    %630 = vmatpush1.msra.mxu0 0.0
    %631 = vmatprep.subr.mxu0 0.0
    %632 = vmatpush1.msra.mxu0 0.0
    %633 = vmatprep.subr.mxu0 0.0
    %634 = vmatpush1.msra.mxu0 0.0
    %635 = vmatprep.subr.mxu0 0.0
    %636 = vmatpush1.msra.mxu0 0.0
    %637 = vmatprep.subr.mxu0 0.0
    %638 = vmatpush1.msra.mxu0 0.0
    %639 = vmatprep.subr.mxu0 0.0
    %640 = vmatpush1.msra.mxu0 0.0
    %641 = vmatprep.subr.mxu0 0.0
    %642 = vmatpush1.msra.mxu0 %v444
    %643 = vmatprep.subr.mxu0 0.0
    %644 = vmatpush1.msra.mxu0 %v443
    %645 = vmatprep.subr.mxu0 0.0
    %646 = vmatpush2.msra.mxu0 0.0
    %647 = vmatprep.subr.mxu0 0.0
    %648 = vmatpush2.msra.mxu0 0.0
    %649 = vmatprep.subr.mxu0 0.0
    %650 = vmatpush2.msra.mxu0 0.0
    %651 = vmatprep.subr.mxu0 0.0
    %652 = vmatpush2.msra.mxu0 0.0
    %653 = vmatprep.subr.mxu0 0.0
    %654 = vmatpush2.msra.mxu0 0.0
    %655 = vmatprep.subr.mxu0 0.0
    %656 = vmatpush2.msra.mxu0 0.0
    %657 = vmatprep.subr.mxu0 0.0
    %658 = vmatpush2.msra.mxu0 0.0
    %659 = vmatprep.subr.mxu0 0.0
    %660 = vmatpush2.msra.mxu0 0.0
    %661 = vmatprep.subr.mxu0 0.0
    %662 = vmatpush2.msra.mxu0 0.0
    %663 = vmatprep.subr.mxu0 0.0
    %664 = vmatpush2.msra.mxu0 0.0
    %665 = vmatprep.subr.mxu0 0.0
    %666 = vmatpush2.msra.mxu0 0.0
    %667 = vmatprep.subr.mxu0 0.0
    %668 = vmatpush2.msra.mxu0 0.0
    %669 = vmatprep.subr.mxu0 0.0
    %670 = vmatpush2.msra.mxu0 0.0
    %671 = vmatprep.subr.mxu0 0.0
    %672 = vmatpush2.msra.mxu0 0.0
    %673 = vmatprep.subr.mxu0 0.0
    %674 = vmatpush2.msra.mxu0 0.0
    %675 = vmatprep.subr.mxu0 0.0
    %676 = vmatpush2.msra.mxu0 0.0
    %677 = vmatprep.mubr.f32.mxu0 0.0
    %678 = vmatmul.mubr.f32.gmra.mxu0 %v485
    %v679 = vpop.f32.mrf.mxu0
    %v680 = vadd.f32 0.0, %v679
    %v681 = vpop.f32.mrf.mxu0
    %682 = vmatprep.mubr.f32.mxu0 0.0
    %683 = vmatmul.mubr.f32.gmra.mxu0 %v488
    %v684 = vpop.f32.mrf.mxu0
    %v685 = vadd.f32 0.0, %v684
    %v686 = vpop.f32.mrf.mxu0
    %687 = vmatprep.mubr.f32.mxu0 0.0
    %688 = vmatmul.mubr.f32.gmra.mxu0 %v491
    %v689 = vpop.f32.mrf.mxu0
    %v690 = vadd.f32 0.0, %v689
    %v691 = vpop.f32.mrf.mxu0
    %692 = vmatprep.mubr.f32.mxu0 0.0
    %693 = vmatmul.mubr.f32.gmra.mxu0 %v494
    %v694 = vpop.f32.mrf.mxu0
    %v695 = vadd.f32 0.0, %v694
    %v696 = vpop.f32.mrf.mxu0
    %697 = vmatprep.mubr.f32.mxu0 0.0
    %698 = vmatmul.mubr.f32.gmra.mxu0 %v497
    %v699 = vpop.f32.mrf.mxu0
    %v700 = vadd.f32 0.0, %v699
    %v701 = vpop.f32.mrf.mxu0
    %702 = vmatprep.mubr.f32.mxu0 0.0
    %703 = vmatmul.mubr.f32.gmra.mxu0 %v500
    %v704 = vpop.f32.mrf.mxu0
    %v705 = vadd.f32 0.0, %v704
    %v706 = vpop.f32.mrf.mxu0
    %707 = vmatprep.mubr.f32.mxu0 0.0
    %708 = vmatmul.mubr.f32.gmra.mxu0 %v503
    %v709 = vpop.f32.mrf.mxu0
    %v710 = vadd.f32 0.0, %v709
    %v711 = vpop.f32.mrf.mxu0
    %712 = vmatprep.mubr.f32.mxu0 0.0
    %713 = vmatmul.mubr.f32.gmra.mxu0 %v506
    %v714 = vpop.f32.mrf.mxu0
    %v715 = vadd.f32 0.0, %v714
    %v716 = vpop.f32.mrf.mxu0
    %717 = vdwg.mxu0
    %v718 = vsub.f32 %v680, %v700
    %v719 = vsub.f32 %v685, %v705
    %v720 = vsub.f32 %v690, %v710
    %v721 = vsub.f32 %v695, %v715
    %v722 = vmul.f32 %v718, %v718
    %v723 = vmul.f32 %v719, %v719
    %v724 = vmul.f32 %v720, %v720
    %v725 = vmul.f32 %v721, %v721
    %vm726 = vcmask 23552
    %v727 = vsel %vm726, %v722, 0.0
    %728 = vadd.xlane.f32.xlu0 %v727
    %v729 = vpop.xlane.xlu0 %728
    %v730 = vsel %vm726, %v723, 0.0
    %731 = vadd.xlane.f32.xlu0 %v730
    %v732 = vpop.xlane.xlu0 %731
    %v733 = vsel %vm726, %v724, 0.0
    %734 = vadd.xlane.f32.xlu0 %v733
    %v735 = vpop.xlane.xlu0 %734
    %v736 = vsel %vm726, %v725, 0.0
    %737 = vadd.xlane.f32.xlu0 %v736
    %v738 = vpop.xlane.xlu0 %737
    %v740 = vsel %vm336, %v595, 0
    %v743 = vsel %vm336, %v600, 0
    %v746 = vsel %vm336, %v605, 0
    %v749 = vsel %vm336, %v610, 0
    %751 = vmatprep.subr.mxu0 0.0
    %752 = vmatpush1.msra.mxu0 0.0
    %753 = vmatprep.subr.mxu0 0.0
    %754 = vmatpush1.msra.mxu0 0.0
    %755 = vmatprep.subr.mxu0 0.0
    %756 = vmatpush1.msra.mxu0 0.0
    %757 = vmatprep.subr.mxu0 0.0
    %758 = vmatpush1.msra.mxu0 0.0
    %759 = vmatprep.subr.mxu0 0.0
    %760 = vmatpush1.msra.mxu0 0.0
    %761 = vmatprep.subr.mxu0 0.0
    %762 = vmatpush1.msra.mxu0 0.0
    %763 = vmatprep.subr.mxu0 0.0
    %764 = vmatpush1.msra.mxu0 0.0
    %765 = vmatprep.subr.mxu0 0.0
    %766 = vmatpush1.msra.mxu0 0.0
    %767 = vmatprep.subr.mxu0 0.0
    %768 = vmatpush1.msra.mxu0 0.0
    %769 = vmatprep.subr.mxu0 0.0
    %770 = vmatpush1.msra.mxu0 0.0
    %771 = vmatprep.subr.mxu0 0.0
    %772 = vmatpush1.msra.mxu0 0.0
    %773 = vmatprep.subr.mxu0 0.0
    %774 = vmatpush1.msra.mxu0 0.0
    %775 = vmatprep.subr.mxu0 0.0
    %776 = vmatpush1.msra.mxu0 %v452
    %777 = vmatprep.subr.mxu0 0.0
    %778 = vmatpush1.msra.mxu0 %v451
    %779 = vmatprep.subr.mxu0 0.0
    %780 = vmatpush1.msra.mxu0 %v450
    %781 = vmatprep.subr.mxu0 0.0
    %782 = vmatpush1.msra.mxu0 %v449
    %783 = vmatprep.subr.mxu0 0.0
    %784 = vmatpush2.msra.mxu0 0.0
    %785 = vmatprep.subr.mxu0 0.0
    %786 = vmatpush2.msra.mxu0 0.0
    %787 = vmatprep.subr.mxu0 0.0
    %788 = vmatpush2.msra.mxu0 0.0
    %789 = vmatprep.subr.mxu0 0.0
    %790 = vmatpush2.msra.mxu0 0.0
    %791 = vmatprep.subr.mxu0 0.0
    %792 = vmatpush2.msra.mxu0 0.0
    %793 = vmatprep.subr.mxu0 0.0
    %794 = vmatpush2.msra.mxu0 0.0
    %795 = vmatprep.subr.mxu0 0.0
    %796 = vmatpush2.msra.mxu0 0.0
    %797 = vmatprep.subr.mxu0 0.0
    %798 = vmatpush2.msra.mxu0 0.0
    %799 = vmatprep.subr.mxu0 0.0
    %800 = vmatpush2.msra.mxu0 0.0
    %801 = vmatprep.subr.mxu0 0.0
    %802 = vmatpush2.msra.mxu0 0.0
    %803 = vmatprep.subr.mxu0 0.0
    %804 = vmatpush2.msra.mxu0 0.0
    %805 = vmatprep.subr.mxu0 0.0
    %806 = vmatpush2.msra.mxu0 0.0
    %807 = vmatprep.subr.mxu0 0.0
    %808 = vmatpush2.msra.mxu0 0.0
    %809 = vmatprep.subr.mxu0 0.0
    %810 = vmatpush2.msra.mxu0 0.0
    %811 = vmatprep.subr.mxu0 0.0
    %812 = vmatpush2.msra.mxu0 0.0
    %813 = vmatprep.subr.mxu0 0.0
    %814 = vmatpush2.msra.mxu0 0.0
    %815 = vmatprep.mubr.f32.mxu0 0.0
    %816 = vmatmul.mubr.f32.gmra.mxu0 %v740
    %v817 = vpop.f32.mrf.mxu0
    %v818 = vadd.f32 0.0, %v817
    %v819 = vpop.f32.mrf.mxu0
    %820 = vmatprep.mubr.f32.mxu0 0.0
    %821 = vmatmul.mubr.f32.gmra.mxu0 %v743
    %v822 = vpop.f32.mrf.mxu0
    %v823 = vadd.f32 0.0, %v822
    %v824 = vpop.f32.mrf.mxu0
    %825 = vmatprep.mubr.f32.mxu0 0.0
    %826 = vmatmul.mubr.f32.gmra.mxu0 %v746
    %v827 = vpop.f32.mrf.mxu0
    %v828 = vadd.f32 0.0, %v827
    %v829 = vpop.f32.mrf.mxu0
    %830 = vmatprep.mubr.f32.mxu0 0.0
    %831 = vmatmul.mubr.f32.gmra.mxu0 %v749
    %v832 = vpop.f32.mrf.mxu0
    %v833 = vadd.f32 0.0, %v832
    %v834 = vpop.f32.mrf.mxu0
    %835 = vdwg.mxu0
    %v837 = vsel %vm336, %v575, 0
    %v840 = vsel %vm336, %v580, 0
    %v843 = vsel %vm336, %v585, 0
    %v846 = vsel %vm336, %v590, 0
    %848 = vmatprep.subr.mxu0 0.0
    %849 = vmatpush1.msra.mxu0 0.0
    %850 = vmatprep.subr.mxu0 0.0
    %851 = vmatpush1.msra.mxu0 0.0
    %852 = vmatprep.subr.mxu0 0.0
    %853 = vmatpush1.msra.mxu0 0.0
    %854 = vmatprep.subr.mxu0 0.0
    %855 = vmatpush1.msra.mxu0 0.0
    %856 = vmatprep.subr.mxu0 0.0
    %857 = vmatpush1.msra.mxu0 0.0
    %858 = vmatprep.subr.mxu0 0.0
    %859 = vmatpush1.msra.mxu0 0.0
    %860 = vmatprep.subr.mxu0 0.0
    %861 = vmatpush1.msra.mxu0 0.0
    %862 = vmatprep.subr.mxu0 0.0
    %863 = vmatpush1.msra.mxu0 0.0
    %864 = vmatprep.subr.mxu0 0.0
    %865 = vmatpush1.msra.mxu0 0.0
    %866 = vmatprep.subr.mxu0 0.0
    %867 = vmatpush1.msra.mxu0 0.0
    %868 = vmatprep.subr.mxu0 0.0
    %869 = vmatpush1.msra.mxu0 0.0
    %870 = vmatprep.subr.mxu0 0.0
    %871 = vmatpush1.msra.mxu0 0.0
    %872 = vmatprep.subr.mxu0 0.0
    %873 = vmatpush1.msra.mxu0 %v448
    %874 = vmatprep.subr.mxu0 0.0
    %875 = vmatpush1.msra.mxu0 %v447
    %876 = vmatprep.subr.mxu0 0.0
    %877 = vmatpush1.msra.mxu0 %v446
    %878 = vmatprep.subr.mxu0 0.0
    %879 = vmatpush1.msra.mxu0 %v445
    %880 = vmatprep.subr.mxu0 0.0
    %881 = vmatpush2.msra.mxu0 0.0
    %882 = vmatprep.subr.mxu0 0.0
    %883 = vmatpush2.msra.mxu0 0.0
    %884 = vmatprep.subr.mxu0 0.0
    %885 = vmatpush2.msra.mxu0 0.0
    %886 = vmatprep.subr.mxu0 0.0
    %887 = vmatpush2.msra.mxu0 0.0
    %888 = vmatprep.subr.mxu0 0.0
    %889 = vmatpush2.msra.mxu0 0.0
    %890 = vmatprep.subr.mxu0 0.0
    %891 = vmatpush2.msra.mxu0 0.0
    %892 = vmatprep.subr.mxu0 0.0
    %893 = vmatpush2.msra.mxu0 0.0
    %894 = vmatprep.subr.mxu0 0.0
    %895 = vmatpush2.msra.mxu0 0.0
    %896 = vmatprep.subr.mxu0 0.0
    %897 = vmatpush2.msra.mxu0 0.0
    %898 = vmatprep.subr.mxu0 0.0
    %899 = vmatpush2.msra.mxu0 0.0
    %900 = vmatprep.subr.mxu0 0.0
    %901 = vmatpush2.msra.mxu0 0.0
    %902 = vmatprep.subr.mxu0 0.0
    %903 = vmatpush2.msra.mxu0 0.0
    %904 = vmatprep.subr.mxu0 0.0
    %905 = vmatpush2.msra.mxu0 0.0
    %906 = vmatprep.subr.mxu0 0.0
    %907 = vmatpush2.msra.mxu0 0.0
    %908 = vmatprep.subr.mxu0 0.0
    %909 = vmatpush2.msra.mxu0 0.0
    %910 = vmatprep.subr.mxu0 0.0
    %911 = vmatpush2.msra.mxu0 0.0
    %912 = vmatprep.mubr.f32.mxu0 0.0
    %913 = vmatmul.mubr.f32.gmra.mxu0 %v837
    %v914 = vpop.f32.mrf.mxu0
    %v915 = vadd.f32 %v818, %v914
    %v916 = vpop.f32.mrf.mxu0
    %917 = vmatprep.mubr.f32.mxu0 0.0
    %918 = vmatmul.mubr.f32.gmra.mxu0 %v840
    %v919 = vpop.f32.mrf.mxu0
    %v920 = vadd.f32 %v823, %v919
    %v921 = vpop.f32.mrf.mxu0
    %922 = vmatprep.mubr.f32.mxu0 0.0
    %923 = vmatmul.mubr.f32.gmra.mxu0 %v843
    %v924 = vpop.f32.mrf.mxu0
    %v925 = vadd.f32 %v828, %v924
    %v926 = vpop.f32.mrf.mxu0
    %927 = vmatprep.mubr.f32.mxu0 0.0
    %928 = vmatmul.mubr.f32.gmra.mxu0 %v846
    %v929 = vpop.f32.mrf.mxu0
    %v930 = vadd.f32 %v833, %v929
    %v931 = vpop.f32.mrf.mxu0
    %932 = vdwg.mxu0
    %v934 = vlaneseq
    %v935 = vshrl.u32 %v934, 7
    %v936 = vsub.s32 0, %v935
    %v937 = vrot.slane %v453, %v936
    %v939 = vmul.f32 %v729, %v937
    %v940 = vmul.f32 %v732, %v937
    %v941 = vmul.f32 %v735, %v937
    %v942 = vmul.f32 %v738, %v937
    %v943 = vadd.f32 %v915, %v939
    %v944 = vadd.f32 %v920, %v940
    %v945 = vadd.f32 %v925, %v941
    %v946 = vadd.f32 %v930, %v942
    %v948 = vlaneseq
    %v949 = vshrl.u32 %v948, 7
    %v950 = vsub.s32 0, %v949
    %v951 = vrot.slane %v454, %v950
    %v953 = vadd.f32 %v943, %v951
    %v954 = vadd.f32 %v944, %v951
    %v955 = vadd.f32 %v945, %v951
    %v956 = vadd.f32 %v946, %v951
    %v957 = vxor.u32 %v953, 2147483648
    %v958 = vxor.u32 %v954, 2147483648
    %v959 = vxor.u32 %v955, 2147483648
    %v960 = vxor.u32 %v956, 2147483648
    %v961 = vmul.f32 %v957, 1.442695
    %v962 = vpow.pop %v961
    %v963 = vmul.f32 %v958, 1.442695
    %v964 = vpow.pop %v963
    %v965 = vmul.f32 %v959, 1.442695
    %v966 = vpow.pop %v965
    %v967 = vmul.f32 %v960, 1.442695
    %v968 = vpow.pop %v967
    %v969 = vadd.f32 %v962, 1.0
    %v970 = vadd.f32 %v964, 1.0
    %v971 = vadd.f32 %v966, 1.0
    %v972 = vadd.f32 %v968, 1.0
    %v973 = vrcp.pop %v969
    %v974 = vmul.f32 1.0, %v973
    %v975 = vrcp.pop %v970
    %v976 = vmul.f32 1.0, %v975
    %v977 = vrcp.pop %v971
    %v978 = vmul.f32 1.0, %v977
    %v979 = vrcp.pop %v972
    %v980 = vmul.f32 1.0, %v979
    %v981 = vmul.f32 %v953, %v974
    %v982 = vmul.f32 %v954, %v976
    %v983 = vmul.f32 %v955, %v978
    %v984 = vmul.f32 %v956, %v980
    %v986 = vlaneseq
    %v987 = vshrl.u32 %v986, 7
    %v988 = vsub.s32 0, %v987
    %v989 = vrot.slane %v459, %v988
    %v992 = vsel %vm336, %v981, 0
    %v995 = vsel %vm336, %v982, 0
    %v998 = vsel %vm336, %v983, 0
    %v1001 = vsel %vm336, %v984, 0
    %1003 = vmatprep.subr.mxu0 0.0
    %1004 = vmatpush1.msra.mxu0 0.0
    %1005 = vmatprep.subr.mxu0 0.0
    %1006 = vmatpush1.msra.mxu0 0.0
    %1007 = vmatprep.subr.mxu0 0.0
    %1008 = vmatpush1.msra.mxu0 0.0
    %1009 = vmatprep.subr.mxu0 0.0
    %1010 = vmatpush1.msra.mxu0 0.0
    %1011 = vmatprep.subr.mxu0 0.0
    %1012 = vmatpush1.msra.mxu0 0.0
    %1013 = vmatprep.subr.mxu0 0.0
    %1014 = vmatpush1.msra.mxu0 0.0
    %1015 = vmatprep.subr.mxu0 0.0
    %1016 = vmatpush1.msra.mxu0 0.0
    %1017 = vmatprep.subr.mxu0 0.0
    %1018 = vmatpush1.msra.mxu0 0.0
    %1019 = vmatprep.subr.mxu0 0.0
    %1020 = vmatpush1.msra.mxu0 0.0
    %1021 = vmatprep.subr.mxu0 0.0
    %1022 = vmatpush1.msra.mxu0 0.0
    %1023 = vmatprep.subr.mxu0 0.0
    %1024 = vmatpush1.msra.mxu0 0.0
    %1025 = vmatprep.subr.mxu0 0.0
    %1026 = vmatpush1.msra.mxu0 0.0
    %1027 = vmatprep.subr.mxu0 0.0
    %1028 = vmatpush1.msra.mxu0 %v458
    %1029 = vmatprep.subr.mxu0 0.0
    %1030 = vmatpush1.msra.mxu0 %v457
    %1031 = vmatprep.subr.mxu0 0.0
    %1032 = vmatpush1.msra.mxu0 %v456
    %1033 = vmatprep.subr.mxu0 0.0
    %1034 = vmatpush1.msra.mxu0 %v455
    %1035 = vmatprep.subr.mxu0 0.0
    %1036 = vmatpush2.msra.mxu0 0.0
    %1037 = vmatprep.subr.mxu0 0.0
    %1038 = vmatpush2.msra.mxu0 0.0
    %1039 = vmatprep.subr.mxu0 0.0
    %1040 = vmatpush2.msra.mxu0 0.0
    %1041 = vmatprep.subr.mxu0 0.0
    %1042 = vmatpush2.msra.mxu0 0.0
    %1043 = vmatprep.subr.mxu0 0.0
    %1044 = vmatpush2.msra.mxu0 0.0
    %1045 = vmatprep.subr.mxu0 0.0
    %1046 = vmatpush2.msra.mxu0 0.0
    %1047 = vmatprep.subr.mxu0 0.0
    %1048 = vmatpush2.msra.mxu0 0.0
    %1049 = vmatprep.subr.mxu0 0.0
    %1050 = vmatpush2.msra.mxu0 0.0
    %1051 = vmatprep.subr.mxu0 0.0
    %1052 = vmatpush2.msra.mxu0 0.0
    %1053 = vmatprep.subr.mxu0 0.0
    %1054 = vmatpush2.msra.mxu0 0.0
    %1055 = vmatprep.subr.mxu0 0.0
    %1056 = vmatpush2.msra.mxu0 0.0
    %1057 = vmatprep.subr.mxu0 0.0
    %1058 = vmatpush2.msra.mxu0 0.0
    %1059 = vmatprep.subr.mxu0 0.0
    %1060 = vmatpush2.msra.mxu0 0.0
    %1061 = vmatprep.subr.mxu0 0.0
    %1062 = vmatpush2.msra.mxu0 0.0
    %1063 = vmatprep.subr.mxu0 0.0
    %1064 = vmatpush2.msra.mxu0 0.0
    %1065 = vmatprep.subr.mxu0 0.0
    %1066 = vmatpush2.msra.mxu0 0.0
    %1067 = vmatprep.mubr.f32.mxu0 0.0
    %1068 = vmatmul.mubr.f32.gmra.mxu0 %v992
    %v1069 = vpop.f32.mrf.mxu0
    %v1070 = vadd.f32 %v989, %v1069
    %v1071 = vpop.f32.mrf.mxu0
    %1072 = vmatprep.mubr.f32.mxu0 0.0
    %1073 = vmatmul.mubr.f32.gmra.mxu0 %v995
    %v1074 = vpop.f32.mrf.mxu0
    %v1075 = vadd.f32 %v989, %v1074
    %v1076 = vpop.f32.mrf.mxu0
    %1077 = vmatprep.mubr.f32.mxu0 0.0
    %1078 = vmatmul.mubr.f32.gmra.mxu0 %v998
    %v1079 = vpop.f32.mrf.mxu0
    %v1080 = vadd.f32 %v989, %v1079
    %v1081 = vpop.f32.mrf.mxu0
    %1082 = vmatprep.mubr.f32.mxu0 0.0
    %1083 = vmatmul.mubr.f32.gmra.mxu0 %v1001
    %v1084 = vpop.f32.mrf.mxu0
    %v1085 = vadd.f32 %v989, %v1084
    %v1086 = vpop.f32.mrf.mxu0
    %1087 = vdwg.mxu0
    %v1088 = vxor.u32 %v1070, 2147483648
    %v1089 = vxor.u32 %v1075, 2147483648
    %v1090 = vxor.u32 %v1080, 2147483648
    %v1091 = vxor.u32 %v1085, 2147483648
    %v1092 = vmul.f32 %v1088, 1.442695
    %v1093 = vpow.pop %v1092
    %v1094 = vmul.f32 %v1089, 1.442695
    %v1095 = vpow.pop %v1094
    %v1096 = vmul.f32 %v1090, 1.442695
    %v1097 = vpow.pop %v1096
    %v1098 = vmul.f32 %v1091, 1.442695
    %v1099 = vpow.pop %v1098
    %v1100 = vadd.f32 %v1093, 1.0
    %v1101 = vadd.f32 %v1095, 1.0
    %v1102 = vadd.f32 %v1097, 1.0
    %v1103 = vadd.f32 %v1099, 1.0
    %v1104 = vrcp.pop %v1100
    %v1105 = vmul.f32 1.0, %v1104
    %v1106 = vrcp.pop %v1101
    %v1107 = vmul.f32 1.0, %v1106
    %v1108 = vrcp.pop %v1102
    %v1109 = vmul.f32 1.0, %v1108
    %v1110 = vrcp.pop %v1103
    %v1111 = vmul.f32 1.0, %v1110
    %v1112 = vmul.f32 %v1070, %v1105
    %v1113 = vmul.f32 %v1075, %v1107
    %v1114 = vmul.f32 %v1080, %v1109
    %v1115 = vmul.f32 %v1085, %v1111
    %v1117 = vlaneseq
    %v1118 = vshrl.u32 %v1117, 7
    %v1119 = vsub.s32 0, %v1118
    %v1120 = vrot.slane %v478, %v1119
    %v1123 = vsel %vm336, %v1112, 0
    %v1126 = vsel %vm336, %v1113, 0
    %v1129 = vsel %vm336, %v1114, 0
    %v1132 = vsel %vm336, %v1115, 0
    %1134 = vmatprep.subr.mxu0 0.0
    %1135 = vmatpush1.msra.mxu0 0.0
    %1136 = vmatprep.subr.mxu0 0.0
    %1137 = vmatpush1.msra.mxu0 0.0
    %1138 = vmatprep.subr.mxu0 0.0
    %1139 = vmatpush1.msra.mxu0 0.0
    %1140 = vmatprep.subr.mxu0 0.0
    %1141 = vmatpush1.msra.mxu0 0.0
    %1142 = vmatprep.subr.mxu0 0.0
    %1143 = vmatpush1.msra.mxu0 0.0
    %1144 = vmatprep.subr.mxu0 0.0
    %1145 = vmatpush1.msra.mxu0 0.0
    %1146 = vmatprep.subr.mxu0 0.0
    %1147 = vmatpush1.msra.mxu0 0.0
    %1148 = vmatprep.subr.mxu0 0.0
    %1149 = vmatpush1.msra.mxu0 0.0
    %1150 = vmatprep.subr.mxu0 0.0
    %1151 = vmatpush1.msra.mxu0 0.0
    %1152 = vmatprep.subr.mxu0 0.0
    %1153 = vmatpush1.msra.mxu0 0.0
    %1154 = vmatprep.subr.mxu0 0.0
    %1155 = vmatpush1.msra.mxu0 0.0
    %1156 = vmatprep.subr.mxu0 0.0
    %1157 = vmatpush1.msra.mxu0 0.0
    %1158 = vmatprep.subr.mxu0 0.0
    %1159 = vmatpush1.msra.mxu0 %v477
    %1160 = vmatprep.subr.mxu0 0.0
    %1161 = vmatpush1.msra.mxu0 %v476
    %1162 = vmatprep.subr.mxu0 0.0
    %1163 = vmatpush1.msra.mxu0 %v475
    %1164 = vmatprep.subr.mxu0 0.0
    %1165 = vmatpush1.msra.mxu0 %v474
    %1166 = vmatprep.subr.mxu0 0.0
    %1167 = vmatpush2.msra.mxu0 0.0
    %1168 = vmatprep.subr.mxu0 0.0
    %1169 = vmatpush2.msra.mxu0 0.0
    %1170 = vmatprep.subr.mxu0 0.0
    %1171 = vmatpush2.msra.mxu0 0.0
    %1172 = vmatprep.subr.mxu0 0.0
    %1173 = vmatpush2.msra.mxu0 0.0
    %1174 = vmatprep.subr.mxu0 0.0
    %1175 = vmatpush2.msra.mxu0 0.0
    %1176 = vmatprep.subr.mxu0 0.0
    %1177 = vmatpush2.msra.mxu0 0.0
    %1178 = vmatprep.subr.mxu0 0.0
    %1179 = vmatpush2.msra.mxu0 0.0
    %1180 = vmatprep.subr.mxu0 0.0
    %1181 = vmatpush2.msra.mxu0 0.0
    %1182 = vmatprep.subr.mxu0 0.0
    %1183 = vmatpush2.msra.mxu0 0.0
    %1184 = vmatprep.subr.mxu0 0.0
    %1185 = vmatpush2.msra.mxu0 0.0
    %1186 = vmatprep.subr.mxu0 0.0
    %1187 = vmatpush2.msra.mxu0 0.0
    %1188 = vmatprep.subr.mxu0 0.0
    %1189 = vmatpush2.msra.mxu0 0.0
    %1190 = vmatprep.subr.mxu0 0.0
    %1191 = vmatpush2.msra.mxu0 0.0
    %1192 = vmatprep.subr.mxu0 0.0
    %1193 = vmatpush2.msra.mxu0 0.0
    %1194 = vmatprep.subr.mxu0 0.0
    %1195 = vmatpush2.msra.mxu0 0.0
    %1196 = vmatprep.subr.mxu0 0.0
    %1197 = vmatpush2.msra.mxu0 0.0
    %1198 = vmatprep.mubr.f32.mxu0 0.0
    %1199 = vmatmul.mubr.f32.gmra.mxu0 %v1123
    %v1200 = vpop.f32.mrf.mxu0
    %v1201 = vadd.f32 %v1120, %v1200
    %v1202 = vpop.f32.mrf.mxu0
    %1203 = vmatprep.mubr.f32.mxu0 0.0
    %1204 = vmatmul.mubr.f32.gmra.mxu0 %v1126
    %v1205 = vpop.f32.mrf.mxu0
    %v1206 = vadd.f32 %v1120, %v1205
    %v1207 = vpop.f32.mrf.mxu0
    %1208 = vmatprep.mubr.f32.mxu0 0.0
    %1209 = vmatmul.mubr.f32.gmra.mxu0 %v1129
    %v1210 = vpop.f32.mrf.mxu0
    %v1211 = vadd.f32 %v1120, %v1210
    %v1212 = vpop.f32.mrf.mxu0
    %1213 = vmatprep.mubr.f32.mxu0 0.0
    %1214 = vmatmul.mubr.f32.gmra.mxu0 %v1132
    %v1215 = vpop.f32.mrf.mxu0
    %v1216 = vadd.f32 %v1120, %v1215
    %v1217 = vpop.f32.mrf.mxu0
    %1218 = vdwg.mxu0
    %v1219 = vxor.u32 %v1201, 2147483648
    %v1220 = vxor.u32 %v1206, 2147483648
    %v1221 = vxor.u32 %v1211, 2147483648
    %v1222 = vxor.u32 %v1216, 2147483648
    %v1223 = vmul.f32 %v1219, 1.442695
    %v1224 = vpow.pop %v1223
    %v1225 = vmul.f32 %v1220, 1.442695
    %v1226 = vpow.pop %v1225
    %v1227 = vmul.f32 %v1221, 1.442695
    %v1228 = vpow.pop %v1227
    %v1229 = vmul.f32 %v1222, 1.442695
    %v1230 = vpow.pop %v1229
    %v1231 = vadd.f32 %v1224, 1.0
    %v1232 = vadd.f32 %v1226, 1.0
    %v1233 = vadd.f32 %v1228, 1.0
    %v1234 = vadd.f32 %v1230, 1.0
    %v1235 = vrcp.pop %v1231
    %v1236 = vmul.f32 1.0, %v1235
    %v1237 = vrcp.pop %v1232
    %v1238 = vmul.f32 1.0, %v1237
    %v1239 = vrcp.pop %v1233
    %v1240 = vmul.f32 1.0, %v1239
    %v1241 = vrcp.pop %v1234
    %v1242 = vmul.f32 1.0, %v1241
    %v1243 = vmul.f32 %v1201, %v1236
    %v1244 = vmul.f32 %v1206, %v1238
    %v1245 = vmul.f32 %v1211, %v1240
    %v1246 = vmul.f32 %v1216, %v1242
    %v1248 = vsel %vm336, %v1243, 0
    %v1251 = vsel %vm336, %v1244, 0
    %v1254 = vsel %vm336, %v1245, 0
    %v1257 = vsel %vm336, %v1246, 0
    %1259 = vmatprep.subr.mxu0 0.0
    %1260 = vmatpush1.msra.mxu0 0.0
    %1261 = vmatprep.subr.mxu0 0.0
    %1262 = vmatpush1.msra.mxu0 0.0
    %1263 = vmatprep.subr.mxu0 0.0
    %1264 = vmatpush1.msra.mxu0 0.0
    %1265 = vmatprep.subr.mxu0 0.0
    %1266 = vmatpush1.msra.mxu0 0.0
    %1267 = vmatprep.subr.mxu0 0.0
    %1268 = vmatpush1.msra.mxu0 0.0
    %1269 = vmatprep.subr.mxu0 0.0
    %1270 = vmatpush1.msra.mxu0 0.0
    %1271 = vmatprep.subr.mxu0 0.0
    %1272 = vmatpush1.msra.mxu0 0.0
    %1273 = vmatprep.subr.mxu0 0.0
    %1274 = vmatpush1.msra.mxu0 0.0
    %1275 = vmatprep.subr.mxu0 0.0
    %1276 = vmatpush1.msra.mxu0 0.0
    %1277 = vmatprep.subr.mxu0 0.0
    %1278 = vmatpush1.msra.mxu0 0.0
    %1279 = vmatprep.subr.mxu0 0.0
    %1280 = vmatpush1.msra.mxu0 0.0
    %1281 = vmatprep.subr.mxu0 0.0
    %1282 = vmatpush1.msra.mxu0 0.0
    %1283 = vmatprep.subr.mxu0 0.0
    %1284 = vmatpush1.msra.mxu0 %v482
    %1285 = vmatprep.subr.mxu0 0.0
    %1286 = vmatpush1.msra.mxu0 %v481
    %1287 = vmatprep.subr.mxu0 0.0
    %1288 = vmatpush1.msra.mxu0 %v480
    %1289 = vmatprep.subr.mxu0 0.0
    %1290 = vmatpush1.msra.mxu0 %v479
    %1291 = vmatprep.subr.mxu0 0.0
    %1292 = vmatpush2.msra.mxu0 0.0
    %1293 = vmatprep.subr.mxu0 0.0
    %1294 = vmatpush2.msra.mxu0 0.0
    %1295 = vmatprep.subr.mxu0 0.0
    %1296 = vmatpush2.msra.mxu0 0.0
    %1297 = vmatprep.subr.mxu0 0.0
    %1298 = vmatpush2.msra.mxu0 0.0
    %1299 = vmatprep.subr.mxu0 0.0
    %1300 = vmatpush2.msra.mxu0 0.0
    %1301 = vmatprep.subr.mxu0 0.0
    %1302 = vmatpush2.msra.mxu0 0.0
    %1303 = vmatprep.subr.mxu0 0.0
    %1304 = vmatpush2.msra.mxu0 0.0
    %1305 = vmatprep.subr.mxu0 0.0
    %1306 = vmatpush2.msra.mxu0 0.0
    %1307 = vmatprep.subr.mxu0 0.0
    %1308 = vmatpush2.msra.mxu0 0.0
    %1309 = vmatprep.subr.mxu0 0.0
    %1310 = vmatpush2.msra.mxu0 0.0
    %1311 = vmatprep.subr.mxu0 0.0
    %1312 = vmatpush2.msra.mxu0 0.0
    %1313 = vmatprep.subr.mxu0 0.0
    %1314 = vmatpush2.msra.mxu0 0.0
    %1315 = vmatprep.subr.mxu0 0.0
    %1316 = vmatpush2.msra.mxu0 0.0
    %1317 = vmatprep.subr.mxu0 0.0
    %1318 = vmatpush2.msra.mxu0 0.0
    %1319 = vmatprep.subr.mxu0 0.0
    %1320 = vmatpush2.msra.mxu0 0.0
    %1321 = vmatprep.subr.mxu0 0.0
    %1322 = vmatpush2.msra.mxu0 0.0
    %1323 = vmatprep.mubr.f32.mxu0 0.0
    %1324 = vmatmul.mubr.f32.gmra.mxu0 %v1248
    %v1325 = vpop.f32.mrf.mxu0
    %v1326 = vadd.f32 0.0, %v1325
    %v1327 = vpop.f32.mrf.mxu0
    %1328 = vmatprep.mubr.f32.mxu0 0.0
    %1329 = vmatmul.mubr.f32.gmra.mxu0 %v1251
    %v1330 = vpop.f32.mrf.mxu0
    %v1331 = vadd.f32 0.0, %v1330
    %v1332 = vpop.f32.mrf.mxu0
    %1333 = vmatprep.mubr.f32.mxu0 0.0
    %1334 = vmatmul.mubr.f32.gmra.mxu0 %v1254
    %v1335 = vpop.f32.mrf.mxu0
    %v1336 = vadd.f32 0.0, %v1335
    %v1337 = vpop.f32.mrf.mxu0
    %1338 = vmatprep.mubr.f32.mxu0 0.0
    %1339 = vmatmul.mubr.f32.gmra.mxu0 %v1257
    %v1340 = vpop.f32.mrf.mxu0
    %v1341 = vadd.f32 0.0, %v1340
    %v1342 = vpop.f32.mrf.mxu0
    %1343 = vdwg.mxu0
    %1345 = vset.pattern.permute.xlu0 0
    %1346 = vperm.xlu0 %1345, %v1326
    %v1347 = vpop.permute.xlu0 %1346
    %1350 = vset.pattern.permute.xlu0 0
    %1351 = vperm.xlu0 %1350, %v1331
    %v1352 = vpop.permute.xlu0 %1351
    %1355 = vset.pattern.permute.xlu0 0
    %1356 = vperm.xlu0 %1355, %v1336
    %v1357 = vpop.permute.xlu0 %1356
    %1360 = vset.pattern.permute.xlu0 0
    %1361 = vperm.xlu0 %1360, %v1341
    %v1362 = vpop.permute.xlu0 %1361
    %v1364 = vmul.f32 %v718, %v1347
    %v1365 = vmul.f32 %v719, %v1352
    %v1366 = vmul.f32 %v720, %v1357
    %v1367 = vmul.f32 %v721, %v1362
    %v1369 = vsel %vm336, %v334, 0
    %v1372 = vsel %vm336, %v335, 0
    %1374 = vmatprep.subr.mxu0 0.0
    %1375 = vmatpush1.msra.mxu0 0.0
    %1376 = vmatprep.subr.mxu0 0.0
    %1377 = vmatpush1.msra.mxu0 0.0
    %1378 = vmatprep.subr.mxu0 0.0
    %1379 = vmatpush1.msra.mxu0 0.0
    %1380 = vmatprep.subr.mxu0 0.0
    %1381 = vmatpush1.msra.mxu0 0.0
    %1382 = vmatprep.subr.mxu0 0.0
    %1383 = vmatpush1.msra.mxu0 0.0
    %1384 = vmatprep.subr.mxu0 0.0
    %1385 = vmatpush1.msra.mxu0 0.0
    %1386 = vmatprep.subr.mxu0 0.0
    %1387 = vmatpush1.msra.mxu0 0.0
    %1388 = vmatprep.subr.mxu0 0.0
    %1389 = vmatpush1.msra.mxu0 0.0
    %1390 = vmatprep.subr.mxu0 0.0
    %1391 = vmatpush1.msra.mxu0 0.0
    %1392 = vmatprep.subr.mxu0 0.0
    %1393 = vmatpush1.msra.mxu0 0.0
    %1394 = vmatprep.subr.mxu0 0.0
    %1395 = vmatpush1.msra.mxu0 0.0
    %1396 = vmatprep.subr.mxu0 0.0
    %1397 = vmatpush1.msra.mxu0 0.0
    %1398 = vmatprep.subr.mxu0 0.0
    %1399 = vmatpush1.msra.mxu0 %v1115
    %1400 = vmatprep.subr.mxu0 0.0
    %1401 = vmatpush1.msra.mxu0 %v1114
    %1402 = vmatprep.subr.mxu0 0.0
    %1403 = vmatpush1.msra.mxu0 %v1113
    %1404 = vmatprep.subr.mxu0 0.0
    %1405 = vmatpush1.msra.mxu0 %v1112
    %1406 = vmatprep.subr.mxu0 0.0
    %1407 = vmatpush2.msra.mxu0 0.0
    %1408 = vmatprep.subr.mxu0 0.0
    %1409 = vmatpush2.msra.mxu0 0.0
    %1410 = vmatprep.subr.mxu0 0.0
    %1411 = vmatpush2.msra.mxu0 0.0
    %1412 = vmatprep.subr.mxu0 0.0
    %1413 = vmatpush2.msra.mxu0 0.0
    %1414 = vmatprep.subr.mxu0 0.0
    %1415 = vmatpush2.msra.mxu0 0.0
    %1416 = vmatprep.subr.mxu0 0.0
    %1417 = vmatpush2.msra.mxu0 0.0
    %1418 = vmatprep.subr.mxu0 0.0
    %1419 = vmatpush2.msra.mxu0 0.0
    %1420 = vmatprep.subr.mxu0 0.0
    %1421 = vmatpush2.msra.mxu0 0.0
    %1422 = vmatprep.subr.mxu0 0.0
    %1423 = vmatpush2.msra.mxu0 0.0
    %1424 = vmatprep.subr.mxu0 0.0
    %1425 = vmatpush2.msra.mxu0 0.0
    %1426 = vmatprep.subr.mxu0 0.0
    %1427 = vmatpush2.msra.mxu0 0.0
    %1428 = vmatprep.subr.mxu0 0.0
    %1429 = vmatpush2.msra.mxu0 0.0
    %1430 = vmatprep.subr.mxu0 0.0
    %1431 = vmatpush2.msra.mxu0 0.0
    %1432 = vmatprep.subr.mxu0 0.0
    %1433 = vmatpush2.msra.mxu0 0.0
    %1434 = vmatprep.subr.mxu0 0.0
    %1435 = vmatpush2.msra.mxu0 0.0
    %1436 = vmatprep.subr.mxu0 0.0
    %1437 = vmatpush2.msra.mxu0 0.0
    %1438 = vmatprep.mubr.f32.mxu0 0.0
    %1439 = vmatmul.mubr.f32.gmra.mxu0 %v1369
    %v1440 = vpop.f32.mrf.mxu0
    %v1441 = vadd.f32 0.0, %v1440
    %v1442 = vpop.f32.mrf.mxu0
    %1443 = vmatprep.mubr.f32.mxu0 0.0
    %1444 = vmatmul.mubr.f32.gmra.mxu0 %v1372
    %v1445 = vpop.f32.mrf.mxu0
    %v1446 = vadd.f32 0.0, %v1445
    %v1447 = vpop.f32.mrf.mxu0
    %1448 = vdwg.mxu0
    %v1450 = vsel %vm336, %v349, 0
    %v1453 = vsel %vm336, %v350, 0
    %1455 = vmatprep.subr.mxu0 0.0
    %1456 = vmatpush1.msra.mxu0 0.0
    %1457 = vmatprep.subr.mxu0 0.0
    %1458 = vmatpush1.msra.mxu0 0.0
    %1459 = vmatprep.subr.mxu0 0.0
    %1460 = vmatpush1.msra.mxu0 0.0
    %1461 = vmatprep.subr.mxu0 0.0
    %1462 = vmatpush1.msra.mxu0 0.0
    %1463 = vmatprep.subr.mxu0 0.0
    %1464 = vmatpush1.msra.mxu0 0.0
    %1465 = vmatprep.subr.mxu0 0.0
    %1466 = vmatpush1.msra.mxu0 0.0
    %1467 = vmatprep.subr.mxu0 0.0
    %1468 = vmatpush1.msra.mxu0 0.0
    %1469 = vmatprep.subr.mxu0 0.0
    %1470 = vmatpush1.msra.mxu0 0.0
    %1471 = vmatprep.subr.mxu0 0.0
    %1472 = vmatpush1.msra.mxu0 0.0
    %1473 = vmatprep.subr.mxu0 0.0
    %1474 = vmatpush1.msra.mxu0 0.0
    %1475 = vmatprep.subr.mxu0 0.0
    %1476 = vmatpush1.msra.mxu0 0.0
    %1477 = vmatprep.subr.mxu0 0.0
    %1478 = vmatpush1.msra.mxu0 0.0
    %1479 = vmatprep.subr.mxu0 0.0
    %1480 = vmatpush1.msra.mxu0 %v1367
    %1481 = vmatprep.subr.mxu0 0.0
    %1482 = vmatpush1.msra.mxu0 %v1366
    %1483 = vmatprep.subr.mxu0 0.0
    %1484 = vmatpush1.msra.mxu0 %v1365
    %1485 = vmatprep.subr.mxu0 0.0
    %1486 = vmatpush1.msra.mxu0 %v1364
    %1487 = vmatprep.subr.mxu0 0.0
    %1488 = vmatpush2.msra.mxu0 0.0
    %1489 = vmatprep.subr.mxu0 0.0
    %1490 = vmatpush2.msra.mxu0 0.0
    %1491 = vmatprep.subr.mxu0 0.0
    %1492 = vmatpush2.msra.mxu0 0.0
    %1493 = vmatprep.subr.mxu0 0.0
    %1494 = vmatpush2.msra.mxu0 0.0
    %1495 = vmatprep.subr.mxu0 0.0
    %1496 = vmatpush2.msra.mxu0 0.0
    %1497 = vmatprep.subr.mxu0 0.0
    %1498 = vmatpush2.msra.mxu0 0.0
    %1499 = vmatprep.subr.mxu0 0.0
    %1500 = vmatpush2.msra.mxu0 0.0
    %1501 = vmatprep.subr.mxu0 0.0
    %1502 = vmatpush2.msra.mxu0 0.0
    %1503 = vmatprep.subr.mxu0 0.0
    %1504 = vmatpush2.msra.mxu0 0.0
    %1505 = vmatprep.subr.mxu0 0.0
    %1506 = vmatpush2.msra.mxu0 0.0
    %1507 = vmatprep.subr.mxu0 0.0
    %1508 = vmatpush2.msra.mxu0 0.0
    %1509 = vmatprep.subr.mxu0 0.0
    %1510 = vmatpush2.msra.mxu0 0.0
    %1511 = vmatprep.subr.mxu0 0.0
    %1512 = vmatpush2.msra.mxu0 0.0
    %1513 = vmatprep.subr.mxu0 0.0
    %1514 = vmatpush2.msra.mxu0 0.0
    %1515 = vmatprep.subr.mxu0 0.0
    %1516 = vmatpush2.msra.mxu0 0.0
    %1517 = vmatprep.subr.mxu0 0.0
    %1518 = vmatpush2.msra.mxu0 0.0
    %1519 = vmatprep.mubr.f32.mxu0 0.0
    %1520 = vmatmul.mubr.f32.gmra.mxu0 %v1450
    %v1521 = vpop.f32.mrf.mxu0
    %v1522 = vadd.f32 0.0, %v1521
    %v1523 = vpop.f32.mrf.mxu0
    %1524 = vmatprep.mubr.f32.mxu0 0.0
    %1525 = vmatmul.mubr.f32.gmra.mxu0 %v1453
    %v1526 = vpop.f32.mrf.mxu0
    %v1527 = vadd.f32 0.0, %v1526
    %v1528 = vpop.f32.mrf.mxu0
    %1529 = vdwg.mxu0
    %v1530 = vadd.f32 %v443, %v1522
    %v1531 = vadd.f32 %v444, %v1527
    %v1533 = vsel %vm336, %v1441, 0
    %v1536 = vsel %vm336, %v1446, 0
    %1538 = vmatprep.subr.mxu0 0.0
    %1539 = vmatpush1.msra.mxu0 0.0
    %1540 = vmatprep.subr.mxu0 0.0
    %1541 = vmatpush1.msra.mxu0 0.0
    %1542 = vmatprep.subr.mxu0 0.0
    %1543 = vmatpush1.msra.mxu0 0.0
    %1544 = vmatprep.subr.mxu0 0.0
    %1545 = vmatpush1.msra.mxu0 0.0
    %1546 = vmatprep.subr.mxu0 0.0
    %1547 = vmatpush1.msra.mxu0 0.0
    %1548 = vmatprep.subr.mxu0 0.0
    %1549 = vmatpush1.msra.mxu0 0.0
    %1550 = vmatprep.subr.mxu0 0.0
    %1551 = vmatpush1.msra.mxu0 0.0
    %1552 = vmatprep.subr.mxu0 0.0
    %1553 = vmatpush1.msra.mxu0 0.0
    %1554 = vmatprep.subr.mxu0 0.0
    %1555 = vmatpush1.msra.mxu0 0.0
    %1556 = vmatprep.subr.mxu0 0.0
    %1557 = vmatpush1.msra.mxu0 0.0
    %1558 = vmatprep.subr.mxu0 0.0
    %1559 = vmatpush1.msra.mxu0 0.0
    %1560 = vmatprep.subr.mxu0 0.0
    %1561 = vmatpush1.msra.mxu0 0.0
    %1562 = vmatprep.subr.mxu0 0.0
    %1563 = vmatpush1.msra.mxu0 %v467
    %1564 = vmatprep.subr.mxu0 0.0
    %1565 = vmatpush1.msra.mxu0 %v466
    %1566 = vmatprep.subr.mxu0 0.0
    %1567 = vmatpush1.msra.mxu0 %v465
    %1568 = vmatprep.subr.mxu0 0.0
    %1569 = vmatpush1.msra.mxu0 %v464
    %1570 = vmatprep.subr.mxu0 0.0
    %1571 = vmatpush2.msra.mxu0 0.0
    %1572 = vmatprep.subr.mxu0 0.0
    %1573 = vmatpush2.msra.mxu0 0.0
    %1574 = vmatprep.subr.mxu0 0.0
    %1575 = vmatpush2.msra.mxu0 0.0
    %1576 = vmatprep.subr.mxu0 0.0
    %1577 = vmatpush2.msra.mxu0 0.0
    %1578 = vmatprep.subr.mxu0 0.0
    %1579 = vmatpush2.msra.mxu0 0.0
    %1580 = vmatprep.subr.mxu0 0.0
    %1581 = vmatpush2.msra.mxu0 0.0
    %1582 = vmatprep.subr.mxu0 0.0
    %1583 = vmatpush2.msra.mxu0 0.0
    %1584 = vmatprep.subr.mxu0 0.0
    %1585 = vmatpush2.msra.mxu0 0.0
    %1586 = vmatprep.subr.mxu0 0.0
    %1587 = vmatpush2.msra.mxu0 0.0
    %1588 = vmatprep.subr.mxu0 0.0
    %1589 = vmatpush2.msra.mxu0 0.0
    %1590 = vmatprep.subr.mxu0 0.0
    %1591 = vmatpush2.msra.mxu0 0.0
    %1592 = vmatprep.subr.mxu0 0.0
    %1593 = vmatpush2.msra.mxu0 0.0
    %1594 = vmatprep.subr.mxu0 0.0
    %1595 = vmatpush2.msra.mxu0 0.0
    %1596 = vmatprep.subr.mxu0 0.0
    %1597 = vmatpush2.msra.mxu0 0.0
    %1598 = vmatprep.subr.mxu0 0.0
    %1599 = vmatpush2.msra.mxu0 0.0
    %1600 = vmatprep.subr.mxu0 0.0
    %1601 = vmatpush2.msra.mxu0 0.0
    %1602 = vmatprep.mubr.f32.mxu0 0.0
    %1603 = vmatmul.mubr.f32.gmra.mxu0 %v1533
    %v1604 = vpop.f32.mrf.mxu0
    %v1605 = vadd.f32 0.0, %v1604
    %v1606 = vpop.f32.mrf.mxu0
    %1607 = vmatprep.mubr.f32.mxu0 0.0
    %1608 = vmatmul.mubr.f32.gmra.mxu0 %v1536
    %v1609 = vpop.f32.mrf.mxu0
    %v1610 = vadd.f32 0.0, %v1609
    %v1611 = vpop.f32.mrf.mxu0
    %1612 = vdwg.mxu0
    %v1614 = vsel %vm336, %v435, 0
    %v1617 = vsel %vm336, %v440, 0
    %1619 = vmatprep.subr.mxu0 0.0
    %1620 = vmatpush1.msra.mxu0 0.0
    %1621 = vmatprep.subr.mxu0 0.0
    %1622 = vmatpush1.msra.mxu0 0.0
    %1623 = vmatprep.subr.mxu0 0.0
    %1624 = vmatpush1.msra.mxu0 0.0
    %1625 = vmatprep.subr.mxu0 0.0
    %1626 = vmatpush1.msra.mxu0 0.0
    %1627 = vmatprep.subr.mxu0 0.0
    %1628 = vmatpush1.msra.mxu0 0.0
    %1629 = vmatprep.subr.mxu0 0.0
    %1630 = vmatpush1.msra.mxu0 0.0
    %1631 = vmatprep.subr.mxu0 0.0
    %1632 = vmatpush1.msra.mxu0 0.0
    %1633 = vmatprep.subr.mxu0 0.0
    %1634 = vmatpush1.msra.mxu0 0.0
    %1635 = vmatprep.subr.mxu0 0.0
    %1636 = vmatpush1.msra.mxu0 0.0
    %1637 = vmatprep.subr.mxu0 0.0
    %1638 = vmatpush1.msra.mxu0 0.0
    %1639 = vmatprep.subr.mxu0 0.0
    %1640 = vmatpush1.msra.mxu0 0.0
    %1641 = vmatprep.subr.mxu0 0.0
    %1642 = vmatpush1.msra.mxu0 0.0
    %1643 = vmatprep.subr.mxu0 0.0
    %1644 = vmatpush1.msra.mxu0 %v463
    %1645 = vmatprep.subr.mxu0 0.0
    %1646 = vmatpush1.msra.mxu0 %v462
    %1647 = vmatprep.subr.mxu0 0.0
    %1648 = vmatpush1.msra.mxu0 %v461
    %1649 = vmatprep.subr.mxu0 0.0
    %1650 = vmatpush1.msra.mxu0 %v460
    %1651 = vmatprep.subr.mxu0 0.0
    %1652 = vmatpush2.msra.mxu0 0.0
    %1653 = vmatprep.subr.mxu0 0.0
    %1654 = vmatpush2.msra.mxu0 0.0
    %1655 = vmatprep.subr.mxu0 0.0
    %1656 = vmatpush2.msra.mxu0 0.0
    %1657 = vmatprep.subr.mxu0 0.0
    %1658 = vmatpush2.msra.mxu0 0.0
    %1659 = vmatprep.subr.mxu0 0.0
    %1660 = vmatpush2.msra.mxu0 0.0
    %1661 = vmatprep.subr.mxu0 0.0
    %1662 = vmatpush2.msra.mxu0 0.0
    %1663 = vmatprep.subr.mxu0 0.0
    %1664 = vmatpush2.msra.mxu0 0.0
    %1665 = vmatprep.subr.mxu0 0.0
    %1666 = vmatpush2.msra.mxu0 0.0
    %1667 = vmatprep.subr.mxu0 0.0
    %1668 = vmatpush2.msra.mxu0 0.0
    %1669 = vmatprep.subr.mxu0 0.0
    %1670 = vmatpush2.msra.mxu0 0.0
    %1671 = vmatprep.subr.mxu0 0.0
    %1672 = vmatpush2.msra.mxu0 0.0
    %1673 = vmatprep.subr.mxu0 0.0
    %1674 = vmatpush2.msra.mxu0 0.0
    %1675 = vmatprep.subr.mxu0 0.0
    %1676 = vmatpush2.msra.mxu0 0.0
    %1677 = vmatprep.subr.mxu0 0.0
    %1678 = vmatpush2.msra.mxu0 0.0
    %1679 = vmatprep.subr.mxu0 0.0
    %1680 = vmatpush2.msra.mxu0 0.0
    %1681 = vmatprep.subr.mxu0 0.0
    %1682 = vmatpush2.msra.mxu0 0.0
    %1683 = vmatprep.mubr.f32.mxu0 0.0
    %1684 = vmatmul.mubr.f32.gmra.mxu0 %v1614
    %v1685 = vpop.f32.mrf.mxu0
    %v1686 = vadd.f32 %v1605, %v1685
    %v1687 = vpop.f32.mrf.mxu0
    %1688 = vmatprep.mubr.f32.mxu0 0.0
    %1689 = vmatmul.mubr.f32.gmra.mxu0 %v1617
    %v1690 = vpop.f32.mrf.mxu0
    %v1691 = vadd.f32 %v1610, %v1690
    %v1692 = vpop.f32.mrf.mxu0
    %1693 = vdwg.mxu0
    %v1695 = vlaneseq
    %v1696 = vshrl.u32 %v1695, 7
    %v1697 = vsub.s32 0, %v1696
    %v1698 = vrot.slane %v468, %v1697
    %v1700 = vadd.f32 %v1686, %v1698
    %v1701 = vadd.f32 %v1691, %v1698
    %v1702 = vxor.u32 %v1700, 2147483648
    %v1703 = vxor.u32 %v1701, 2147483648
    %v1704 = vmul.f32 %v1702, 1.442695
    %v1705 = vpow.pop %v1704
    %v1706 = vmul.f32 %v1703, 1.442695
    %v1707 = vpow.pop %v1706
    %v1708 = vadd.f32 %v1705, 1.0
    %v1709 = vadd.f32 %v1707, 1.0
    %v1710 = vrcp.pop %v1708
    %v1711 = vmul.f32 1.0, %v1710
    %v1712 = vrcp.pop %v1709
    %v1713 = vmul.f32 1.0, %v1712
    %v1714 = vmul.f32 %v1700, %v1711
    %v1715 = vmul.f32 %v1701, %v1713
    %v1717 = vlaneseq
    %v1718 = vshrl.u32 %v1717, 7
    %v1719 = vsub.s32 0, %v1718
    %v1720 = vrot.slane %v473, %v1719
    %v1723 = vsel %vm336, %v1714, 0
    %v1726 = vsel %vm336, %v1715, 0
    %1728 = vmatprep.subr.mxu0 0.0
    %1729 = vmatpush1.msra.mxu0 0.0
    %1730 = vmatprep.subr.mxu0 0.0
    %1731 = vmatpush1.msra.mxu0 0.0
    %1732 = vmatprep.subr.mxu0 0.0
    %1733 = vmatpush1.msra.mxu0 0.0
    %1734 = vmatprep.subr.mxu0 0.0
    %1735 = vmatpush1.msra.mxu0 0.0
    %1736 = vmatprep.subr.mxu0 0.0
    %1737 = vmatpush1.msra.mxu0 0.0
    %1738 = vmatprep.subr.mxu0 0.0
    %1739 = vmatpush1.msra.mxu0 0.0
    %1740 = vmatprep.subr.mxu0 0.0
    %1741 = vmatpush1.msra.mxu0 0.0
    %1742 = vmatprep.subr.mxu0 0.0
    %1743 = vmatpush1.msra.mxu0 0.0
    %1744 = vmatprep.subr.mxu0 0.0
    %1745 = vmatpush1.msra.mxu0 0.0
    %1746 = vmatprep.subr.mxu0 0.0
    %1747 = vmatpush1.msra.mxu0 0.0
    %1748 = vmatprep.subr.mxu0 0.0
    %1749 = vmatpush1.msra.mxu0 0.0
    %1750 = vmatprep.subr.mxu0 0.0
    %1751 = vmatpush1.msra.mxu0 0.0
    %1752 = vmatprep.subr.mxu0 0.0
    %1753 = vmatpush1.msra.mxu0 %v472
    %1754 = vmatprep.subr.mxu0 0.0
    %1755 = vmatpush1.msra.mxu0 %v471
    %1756 = vmatprep.subr.mxu0 0.0
    %1757 = vmatpush1.msra.mxu0 %v470
    %1758 = vmatprep.subr.mxu0 0.0
    %1759 = vmatpush1.msra.mxu0 %v469
    %1760 = vmatprep.subr.mxu0 0.0
    %1761 = vmatpush2.msra.mxu0 0.0
    %1762 = vmatprep.subr.mxu0 0.0
    %1763 = vmatpush2.msra.mxu0 0.0
    %1764 = vmatprep.subr.mxu0 0.0
    %1765 = vmatpush2.msra.mxu0 0.0
    %1766 = vmatprep.subr.mxu0 0.0
    %1767 = vmatpush2.msra.mxu0 0.0
    %1768 = vmatprep.subr.mxu0 0.0
    %1769 = vmatpush2.msra.mxu0 0.0
    %1770 = vmatprep.subr.mxu0 0.0
    %1771 = vmatpush2.msra.mxu0 0.0
    %1772 = vmatprep.subr.mxu0 0.0
    %1773 = vmatpush2.msra.mxu0 0.0
    %1774 = vmatprep.subr.mxu0 0.0
    %1775 = vmatpush2.msra.mxu0 0.0
    %1776 = vmatprep.subr.mxu0 0.0
    %1777 = vmatpush2.msra.mxu0 0.0
    %1778 = vmatprep.subr.mxu0 0.0
    %1779 = vmatpush2.msra.mxu0 0.0
    %1780 = vmatprep.subr.mxu0 0.0
    %1781 = vmatpush2.msra.mxu0 0.0
    %1782 = vmatprep.subr.mxu0 0.0
    %1783 = vmatpush2.msra.mxu0 0.0
    %1784 = vmatprep.subr.mxu0 0.0
    %1785 = vmatpush2.msra.mxu0 0.0
    %1786 = vmatprep.subr.mxu0 0.0
    %1787 = vmatpush2.msra.mxu0 0.0
    %1788 = vmatprep.subr.mxu0 0.0
    %1789 = vmatpush2.msra.mxu0 0.0
    %1790 = vmatprep.subr.mxu0 0.0
    %1791 = vmatpush2.msra.mxu0 0.0
    %1792 = vmatprep.mubr.f32.mxu0 0.0
    %1793 = vmatmul.mubr.f32.gmra.mxu0 %v1723
    %v1794 = vpop.f32.mrf.mxu0
    %v1795 = vadd.f32 %v1720, %v1794
    %v1796 = vpop.f32.mrf.mxu0
    %1797 = vmatprep.mubr.f32.mxu0 0.0
    %1798 = vmatmul.mubr.f32.gmra.mxu0 %v1726
    %v1799 = vpop.f32.mrf.mxu0
    %v1800 = vadd.f32 %v1720, %v1799
    %v1801 = vpop.f32.mrf.mxu0
    %1802 = vdwg.mxu0
    %s1803 = scalar_lea.vmem %s15, 32
    %v1804 = vld [vmem:[%s1803] sm:$0xff]
    %v1805 = vld [vmem:[%s1803 + $0x8] sm:$0xff]
    %v1806 = vld [vmem:[%s1803 + $0x10] sm:$0xff]
    %v1807 = vld [vmem:[%s1803 + $0x18] sm:$0xff]
    %s1808 = scalar_lea.vmem %s17, 32
    %v1809 = vld [vmem:[%s1808] sm:$0xff]
    %v1810 = vld [vmem:[%s1808 + $0x8] sm:$0xff]
    %v1811 = vld [vmem:[%s1808 + $0x10] sm:$0xff]
    %v1812 = vld [vmem:[%s1808 + $0x18] sm:$0xff]
    %s1813 = scalar_lea.vmem [#allocation5], 1
    %v1814 = vld [vmem:[%s1813] sm:$0x1]
    %s1815 = scalar_lea.vmem %s21, 1
    %v1816 = vld [vmem:[%s1815] sm:$0x1]
    %s1817 = scalar_lea.vmem %s23, 32
    %v1818 = vld [vmem:[%s1817] sm:$0xff]
    %v1819 = vld [vmem:[%s1817 + $0x8] sm:$0xff]
    %v1820 = vld [vmem:[%s1817 + $0x10] sm:$0xff]
    %v1821 = vld [vmem:[%s1817 + $0x18] sm:$0xff]
    %s1822 = scalar_lea.vmem [#allocation7], 1
    %v1823 = vld [vmem:[%s1822] sm:$0x1]
    %s1824 = scalar_lea.vmem %s27, 32
    %v1825 = vld [vmem:[%s1824] sm:$0xff]
    %v1826 = vld [vmem:[%s1824 + $0x8] sm:$0xff]
    %v1827 = vld [vmem:[%s1824 + $0x10] sm:$0xff]
    %v1828 = vld [vmem:[%s1824 + $0x18] sm:$0xff]
    %s1829 = scalar_lea.vmem %s29, 32
    %v1830 = vld [vmem:[%s1829] sm:$0xff]
    %v1831 = vld [vmem:[%s1829 + $0x8] sm:$0xff]
    %v1832 = vld [vmem:[%s1829 + $0x10] sm:$0xff]
    %v1833 = vld [vmem:[%s1829 + $0x18] sm:$0xff]
    %s1834 = scalar_lea.vmem [#allocation8], 1
    %v1835 = vld [vmem:[%s1834] sm:$0x1]
    %s1836 = scalar_lea.vmem %s33, 32
    %v1837 = vld [vmem:[%s1836] sm:$0xff]
    %v1838 = vld [vmem:[%s1836 + $0x8] sm:$0xff]
    %v1839 = vld [vmem:[%s1836 + $0x10] sm:$0xff]
    %v1840 = vld [vmem:[%s1836 + $0x18] sm:$0xff]
    %s1841 = scalar_lea.vmem [#allocation10], 1
    %v1842 = vld [vmem:[%s1841] sm:$0x1]
    %s1843 = scalar_lea.vmem %s37, 32
    %v1844 = vld [vmem:[%s1843] sm:$0xff]
    %v1845 = vld [vmem:[%s1843 + $0x8] sm:$0xff]
    %v1846 = vld [vmem:[%s1843 + $0x10] sm:$0xff]
    %v1847 = vld [vmem:[%s1843 + $0x18] sm:$0xff]
    %s1848 = scalar_lea.vmem [#allocation11], 1
    %v1849 = vld [vmem:[%s1848] sm:$0x1]
    %s1850 = scalar_lea.vmem %s41, 32
    %v1851 = vld [vmem:[%s1850] sm:$0xff]
    %v1852 = vld [vmem:[%s1850 + $0x8] sm:$0xff]
    %v1853 = vld [vmem:[%s1850 + $0x10] sm:$0xff]
    %v1854 = vld [vmem:[%s1850 + $0x18] sm:$0xff]
    %1855 = vmatprep.subr.mxu0 0.0
    %1856 = vmatpush1.msra.mxu0 0.0
    %1857 = vmatprep.subr.mxu0 0.0
    %1858 = vmatpush1.msra.mxu0 0.0
    %1859 = vmatprep.subr.mxu0 0.0
    %1860 = vmatpush1.msra.mxu0 0.0
    %1861 = vmatprep.subr.mxu0 0.0
    %1862 = vmatpush1.msra.mxu0 0.0
    %1863 = vmatprep.subr.mxu0 0.0
    %1864 = vmatpush1.msra.mxu0 0.0
    %1865 = vmatprep.subr.mxu0 0.0
    %1866 = vmatpush1.msra.mxu0 0.0
    %1867 = vmatprep.subr.mxu0 0.0
    %1868 = vmatpush1.msra.mxu0 0.0
    %1869 = vmatprep.subr.mxu0 0.0
    %1870 = vmatpush1.msra.mxu0 0.0
    %1871 = vmatprep.subr.mxu0 0.0
    %1872 = vmatpush1.msra.mxu0 0.0
    %1873 = vmatprep.subr.mxu0 0.0
    %1874 = vmatpush1.msra.mxu0 0.0
    %1875 = vmatprep.subr.mxu0 0.0
    %1876 = vmatpush1.msra.mxu0 0.0
    %1877 = vmatprep.subr.mxu0 0.0
    %1878 = vmatpush1.msra.mxu0 0.0
    %1879 = vmatprep.subr.mxu0 0.0
    %1880 = vmatpush1.msra.mxu0 0.0
    %1881 = vmatprep.subr.mxu0 0.0
    %1882 = vmatpush1.msra.mxu0 0.0
    %1883 = vmatprep.subr.mxu0 0.0
    %1884 = vmatpush1.msra.mxu0 %v1800
    %1885 = vmatprep.subr.mxu0 0.0
    %1886 = vmatpush1.msra.mxu0 %v1795
    %1887 = vmatprep.subr.mxu0 0.0
    %1888 = vmatpush2.msra.mxu0 0.0
    %1889 = vmatprep.subr.mxu0 0.0
    %1890 = vmatpush2.msra.mxu0 0.0
    %1891 = vmatprep.subr.mxu0 0.0
    %1892 = vmatpush2.msra.mxu0 0.0
    %1893 = vmatprep.subr.mxu0 0.0
    %1894 = vmatpush2.msra.mxu0 0.0
    %1895 = vmatprep.subr.mxu0 0.0
    %1896 = vmatpush2.msra.mxu0 0.0
    %1897 = vmatprep.subr.mxu0 0.0
    %1898 = vmatpush2.msra.mxu0 0.0
    %1899 = vmatprep.subr.mxu0 0.0
    %1900 = vmatpush2.msra.mxu0 0.0
    %1901 = vmatprep.subr.mxu0 0.0
    %1902 = vmatpush2.msra.mxu0 0.0
    %1903 = vmatprep.subr.mxu0 0.0
    %1904 = vmatpush2.msra.mxu0 0.0
    %1905 = vmatprep.subr.mxu0 0.0
    %1906 = vmatpush2.msra.mxu0 0.0
    %1907 = vmatprep.subr.mxu0 0.0
    %1908 = vmatpush2.msra.mxu0 0.0
    %1909 = vmatprep.subr.mxu0 0.0
    %1910 = vmatpush2.msra.mxu0 0.0
    %1911 = vmatprep.subr.mxu0 0.0
    %1912 = vmatpush2.msra.mxu0 0.0
    %1913 = vmatprep.subr.mxu0 0.0
    %1914 = vmatpush2.msra.mxu0 0.0
    %1915 = vmatprep.subr.mxu0 0.0
    %1916 = vmatpush2.msra.mxu0 0.0
    %1917 = vmatprep.subr.mxu0 0.0
    %1918 = vmatpush2.msra.mxu0 0.0
    %1919 = vmatprep.mubr.f32.mxu0 0.0
    %1920 = vmatmul.mubr.f32.gmra.mxu0 %v485
    %v1921 = vpop.f32.mrf.mxu0
    %v1922 = vadd.f32 0.0, %v1921
    %v1923 = vpop.f32.mrf.mxu0
    %1924 = vmatprep.mubr.f32.mxu0 0.0
    %1925 = vmatmul.mubr.f32.gmra.mxu0 %v488
    %v1926 = vpop.f32.mrf.mxu0
    %v1927 = vadd.f32 0.0, %v1926
    %v1928 = vpop.f32.mrf.mxu0
    %1929 = vmatprep.mubr.f32.mxu0 0.0
    %1930 = vmatmul.mubr.f32.gmra.mxu0 %v491
    %v1931 = vpop.f32.mrf.mxu0
    %v1932 = vadd.f32 0.0, %v1931
    %v1933 = vpop.f32.mrf.mxu0
    %1934 = vmatprep.mubr.f32.mxu0 0.0
    %1935 = vmatmul.mubr.f32.gmra.mxu0 %v494
    %v1936 = vpop.f32.mrf.mxu0
    %v1937 = vadd.f32 0.0, %v1936
    %v1938 = vpop.f32.mrf.mxu0
    %1939 = vmatprep.mubr.f32.mxu0 0.0
    %1940 = vmatmul.mubr.f32.gmra.mxu0 %v497
    %v1941 = vpop.f32.mrf.mxu0
    %v1942 = vadd.f32 0.0, %v1941
    %v1943 = vpop.f32.mrf.mxu0
    %1944 = vmatprep.mubr.f32.mxu0 0.0
    %1945 = vmatmul.mubr.f32.gmra.mxu0 %v500
    %v1946 = vpop.f32.mrf.mxu0
    %v1947 = vadd.f32 0.0, %v1946
    %v1948 = vpop.f32.mrf.mxu0
    %1949 = vmatprep.mubr.f32.mxu0 0.0
    %1950 = vmatmul.mubr.f32.gmra.mxu0 %v503
    %v1951 = vpop.f32.mrf.mxu0
    %v1952 = vadd.f32 0.0, %v1951
    %v1953 = vpop.f32.mrf.mxu0
    %1954 = vmatprep.mubr.f32.mxu0 0.0
    %1955 = vmatmul.mubr.f32.gmra.mxu0 %v506
    %v1956 = vpop.f32.mrf.mxu0
    %v1957 = vadd.f32 0.0, %v1956
    %v1958 = vpop.f32.mrf.mxu0
    %1959 = vdwg.mxu0
    %1960 = vmatprep.subr.mxu0 0.0
    %1961 = vmatpush1.msra.mxu0 0.0
    %1962 = vmatprep.subr.mxu0 0.0
    %1963 = vmatpush1.msra.mxu0 0.0
    %1964 = vmatprep.subr.mxu0 0.0
    %1965 = vmatpush1.msra.mxu0 0.0
    %1966 = vmatprep.subr.mxu0 0.0
    %1967 = vmatpush1.msra.mxu0 0.0
    %1968 = vmatprep.subr.mxu0 0.0
    %1969 = vmatpush1.msra.mxu0 0.0
    %1970 = vmatprep.subr.mxu0 0.0
    %1971 = vmatpush1.msra.mxu0 0.0
    %1972 = vmatprep.subr.mxu0 0.0
    %1973 = vmatpush1.msra.mxu0 0.0
    %1974 = vmatprep.subr.mxu0 0.0
    %1975 = vmatpush1.msra.mxu0 0.0
    %1976 = vmatprep.subr.mxu0 0.0
    %1977 = vmatpush1.msra.mxu0 0.0
    %1978 = vmatprep.subr.mxu0 0.0
    %1979 = vmatpush1.msra.mxu0 0.0
    %1980 = vmatprep.subr.mxu0 0.0
    %1981 = vmatpush1.msra.mxu0 0.0
    %1982 = vmatprep.subr.mxu0 0.0
    %1983 = vmatpush1.msra.mxu0 0.0
    %1984 = vmatprep.subr.mxu0 0.0
    %1985 = vmatpush1.msra.mxu0 0.0
    %1986 = vmatprep.subr.mxu0 0.0
    %1987 = vmatpush1.msra.mxu0 0.0
    %1988 = vmatprep.subr.mxu0 0.0
    %1989 = vmatpush1.msra.mxu0 %v1531
    %1990 = vmatprep.subr.mxu0 0.0
    %1991 = vmatpush1.msra.mxu0 %v1530
    %1992 = vmatprep.subr.mxu0 0.0
    %1993 = vmatpush2.msra.mxu0 0.0
    %1994 = vmatprep.subr.mxu0 0.0
    %1995 = vmatpush2.msra.mxu0 0.0
    %1996 = vmatprep.subr.mxu0 0.0
    %1997 = vmatpush2.msra.mxu0 0.0
    %1998 = vmatprep.subr.mxu0 0.0
    %1999 = vmatpush2.msra.mxu0 0.0
    %2000 = vmatprep.subr.mxu0 0.0
    %2001 = vmatpush2.msra.mxu0 0.0
    %2002 = vmatprep.subr.mxu0 0.0
    %2003 = vmatpush2.msra.mxu0 0.0
    %2004 = vmatprep.subr.mxu0 0.0
    %2005 = vmatpush2.msra.mxu0 0.0
    %2006 = vmatprep.subr.mxu0 0.0
    %2007 = vmatpush2.msra.mxu0 0.0
    %2008 = vmatprep.subr.mxu0 0.0
    %2009 = vmatpush2.msra.mxu0 0.0
    %2010 = vmatprep.subr.mxu0 0.0
    %2011 = vmatpush2.msra.mxu0 0.0
    %2012 = vmatprep.subr.mxu0 0.0
    %2013 = vmatpush2.msra.mxu0 0.0
    %2014 = vmatprep.subr.mxu0 0.0
    %2015 = vmatpush2.msra.mxu0 0.0
    %2016 = vmatprep.subr.mxu0 0.0
    %2017 = vmatpush2.msra.mxu0 0.0
    %2018 = vmatprep.subr.mxu0 0.0
    %2019 = vmatpush2.msra.mxu0 0.0
    %2020 = vmatprep.subr.mxu0 0.0
    %2021 = vmatpush2.msra.mxu0 0.0
    %2022 = vmatprep.subr.mxu0 0.0
    %2023 = vmatpush2.msra.mxu0 0.0
    %2024 = vmatprep.mubr.f32.mxu0 0.0
    %2025 = vmatmul.mubr.f32.gmra.mxu0 %v485
    %v2026 = vpop.f32.mrf.mxu0
    %v2027 = vadd.f32 0.0, %v2026
    %v2028 = vpop.f32.mrf.mxu0
    %2029 = vmatprep.mubr.f32.mxu0 0.0
    %2030 = vmatmul.mubr.f32.gmra.mxu0 %v488
    %v2031 = vpop.f32.mrf.mxu0
    %v2032 = vadd.f32 0.0, %v2031
    %v2033 = vpop.f32.mrf.mxu0
    %2034 = vmatprep.mubr.f32.mxu0 0.0
    %2035 = vmatmul.mubr.f32.gmra.mxu0 %v491
    %v2036 = vpop.f32.mrf.mxu0
    %v2037 = vadd.f32 0.0, %v2036
    %v2038 = vpop.f32.mrf.mxu0
    %2039 = vmatprep.mubr.f32.mxu0 0.0
    %2040 = vmatmul.mubr.f32.gmra.mxu0 %v494
    %v2041 = vpop.f32.mrf.mxu0
    %v2042 = vadd.f32 0.0, %v2041
    %v2043 = vpop.f32.mrf.mxu0
    %2044 = vmatprep.mubr.f32.mxu0 0.0
    %2045 = vmatmul.mubr.f32.gmra.mxu0 %v497
    %v2046 = vpop.f32.mrf.mxu0
    %v2047 = vadd.f32 0.0, %v2046
    %v2048 = vpop.f32.mrf.mxu0
    %2049 = vmatprep.mubr.f32.mxu0 0.0
    %2050 = vmatmul.mubr.f32.gmra.mxu0 %v500
    %v2051 = vpop.f32.mrf.mxu0
    %v2052 = vadd.f32 0.0, %v2051
    %v2053 = vpop.f32.mrf.mxu0
    %2054 = vmatprep.mubr.f32.mxu0 0.0
    %2055 = vmatmul.mubr.f32.gmra.mxu0 %v503
    %v2056 = vpop.f32.mrf.mxu0
    %v2057 = vadd.f32 0.0, %v2056
    %v2058 = vpop.f32.mrf.mxu0
    %2059 = vmatprep.mubr.f32.mxu0 0.0
    %2060 = vmatmul.mubr.f32.gmra.mxu0 %v506
    %v2061 = vpop.f32.mrf.mxu0
    %v2062 = vadd.f32 0.0, %v2061
    %v2063 = vpop.f32.mrf.mxu0
    %2064 = vdwg.mxu0
    %v2065 = vsub.f32 %v2027, %v2047
    %v2066 = vsub.f32 %v2032, %v2052
    %v2067 = vsub.f32 %v2037, %v2057
    %v2068 = vsub.f32 %v2042, %v2062
    %v2069 = vmul.f32 %v2065, %v2065
    %v2070 = vmul.f32 %v2066, %v2066
    %v2071 = vmul.f32 %v2067, %v2067
    %v2072 = vmul.f32 %v2068, %v2068
    %v2073 = vsel %vm726, %v2069, 0.0
    %2074 = vadd.xlane.f32.xlu0 %v2073
    %v2075 = vpop.xlane.xlu0 %2074
    %v2076 = vsel %vm726, %v2070, 0.0
    %2077 = vadd.xlane.f32.xlu0 %v2076
    %v2078 = vpop.xlane.xlu0 %2077
    %v2079 = vsel %vm726, %v2071, 0.0
    %2080 = vadd.xlane.f32.xlu0 %v2079
    %v2081 = vpop.xlane.xlu0 %2080
    %v2082 = vsel %vm726, %v2072, 0.0
    %2083 = vadd.xlane.f32.xlu0 %v2082
    %v2084 = vpop.xlane.xlu0 %2083
    %v2086 = vsel %vm336, %v1942, 0
    %v2089 = vsel %vm336, %v1947, 0
    %v2092 = vsel %vm336, %v1952, 0
    %v2095 = vsel %vm336, %v1957, 0
    %2097 = vmatprep.subr.mxu0 0.0
    %2098 = vmatpush1.msra.mxu0 0.0
    %2099 = vmatprep.subr.mxu0 0.0
    %2100 = vmatpush1.msra.mxu0 0.0
    %2101 = vmatprep.subr.mxu0 0.0
    %2102 = vmatpush1.msra.mxu0 0.0
    %2103 = vmatprep.subr.mxu0 0.0
    %2104 = vmatpush1.msra.mxu0 0.0
    %2105 = vmatprep.subr.mxu0 0.0
    %2106 = vmatpush1.msra.mxu0 0.0
    %2107 = vmatprep.subr.mxu0 0.0
    %2108 = vmatpush1.msra.mxu0 0.0
    %2109 = vmatprep.subr.mxu0 0.0
    %2110 = vmatpush1.msra.mxu0 0.0
    %2111 = vmatprep.subr.mxu0 0.0
    %2112 = vmatpush1.msra.mxu0 0.0
    %2113 = vmatprep.subr.mxu0 0.0
    %2114 = vmatpush1.msra.mxu0 0.0
    %2115 = vmatprep.subr.mxu0 0.0
    %2116 = vmatpush1.msra.mxu0 0.0
    %2117 = vmatprep.subr.mxu0 0.0
    %2118 = vmatpush1.msra.mxu0 0.0
    %2119 = vmatprep.subr.mxu0 0.0
    %2120 = vmatpush1.msra.mxu0 0.0
    %2121 = vmatprep.subr.mxu0 0.0
    %2122 = vmatpush1.msra.mxu0 %v1812
    %2123 = vmatprep.subr.mxu0 0.0
    %2124 = vmatpush1.msra.mxu0 %v1811
    %2125 = vmatprep.subr.mxu0 0.0
    %2126 = vmatpush1.msra.mxu0 %v1810
    %2127 = vmatprep.subr.mxu0 0.0
    %2128 = vmatpush1.msra.mxu0 %v1809
    %2129 = vmatprep.subr.mxu0 0.0
    %2130 = vmatpush2.msra.mxu0 0.0
    %2131 = vmatprep.subr.mxu0 0.0
    %2132 = vmatpush2.msra.mxu0 0.0
    %2133 = vmatprep.subr.mxu0 0.0
    %2134 = vmatpush2.msra.mxu0 0.0
    %2135 = vmatprep.subr.mxu0 0.0
    %2136 = vmatpush2.msra.mxu0 0.0
    %2137 = vmatprep.subr.mxu0 0.0
    %2138 = vmatpush2.msra.mxu0 0.0
    %2139 = vmatprep.subr.mxu0 0.0
    %2140 = vmatpush2.msra.mxu0 0.0
    %2141 = vmatprep.subr.mxu0 0.0
    %2142 = vmatpush2.msra.mxu0 0.0
    %2143 = vmatprep.subr.mxu0 0.0
    %2144 = vmatpush2.msra.mxu0 0.0
    %2145 = vmatprep.subr.mxu0 0.0
    %2146 = vmatpush2.msra.mxu0 0.0
    %2147 = vmatprep.subr.mxu0 0.0
    %2148 = vmatpush2.msra.mxu0 0.0
    %2149 = vmatprep.subr.mxu0 0.0
    %2150 = vmatpush2.msra.mxu0 0.0
    %2151 = vmatprep.subr.mxu0 0.0
    %2152 = vmatpush2.msra.mxu0 0.0
    %2153 = vmatprep.subr.mxu0 0.0
    %2154 = vmatpush2.msra.mxu0 0.0
    %2155 = vmatprep.subr.mxu0 0.0
    %2156 = vmatpush2.msra.mxu0 0.0
    %2157 = vmatprep.subr.mxu0 0.0
    %2158 = vmatpush2.msra.mxu0 0.0
    %2159 = vmatprep.subr.mxu0 0.0
    %2160 = vmatpush2.msra.mxu0 0.0
    %2161 = vmatprep.mubr.f32.mxu0 0.0
    %2162 = vmatmul.mubr.f32.gmra.mxu0 %v2086
    %v2163 = vpop.f32.mrf.mxu0
    %v2164 = vadd.f32 0.0, %v2163
    %v2165 = vpop.f32.mrf.mxu0
    %2166 = vmatprep.mubr.f32.mxu0 0.0
    %2167 = vmatmul.mubr.f32.gmra.mxu0 %v2089
    %v2168 = vpop.f32.mrf.mxu0
    %v2169 = vadd.f32 0.0, %v2168
    %v2170 = vpop.f32.mrf.mxu0
    %2171 = vmatprep.mubr.f32.mxu0 0.0
    %2172 = vmatmul.mubr.f32.gmra.mxu0 %v2092
    %v2173 = vpop.f32.mrf.mxu0
    %v2174 = vadd.f32 0.0, %v2173
    %v2175 = vpop.f32.mrf.mxu0
    %2176 = vmatprep.mubr.f32.mxu0 0.0
    %2177 = vmatmul.mubr.f32.gmra.mxu0 %v2095
    %v2178 = vpop.f32.mrf.mxu0
    %v2179 = vadd.f32 0.0, %v2178
    %v2180 = vpop.f32.mrf.mxu0
    %2181 = vdwg.mxu0
    %v2183 = vsel %vm336, %v1922, 0
    %v2186 = vsel %vm336, %v1927, 0
    %v2189 = vsel %vm336, %v1932, 0
    %v2192 = vsel %vm336, %v1937, 0
    %2194 = vmatprep.subr.mxu0 0.0
    %2195 = vmatpush1.msra.mxu0 0.0
    %2196 = vmatprep.subr.mxu0 0.0
    %2197 = vmatpush1.msra.mxu0 0.0
    %2198 = vmatprep.subr.mxu0 0.0
    %2199 = vmatpush1.msra.mxu0 0.0
    %2200 = vmatprep.subr.mxu0 0.0
    %2201 = vmatpush1.msra.mxu0 0.0
    %2202 = vmatprep.subr.mxu0 0.0
    %2203 = vmatpush1.msra.mxu0 0.0
    %2204 = vmatprep.subr.mxu0 0.0
    %2205 = vmatpush1.msra.mxu0 0.0
    %2206 = vmatprep.subr.mxu0 0.0
    %2207 = vmatpush1.msra.mxu0 0.0
    %2208 = vmatprep.subr.mxu0 0.0
    %2209 = vmatpush1.msra.mxu0 0.0
    %2210 = vmatprep.subr.mxu0 0.0
    %2211 = vmatpush1.msra.mxu0 0.0
    %2212 = vmatprep.subr.mxu0 0.0
    %2213 = vmatpush1.msra.mxu0 0.0
    %2214 = vmatprep.subr.mxu0 0.0
    %2215 = vmatpush1.msra.mxu0 0.0
    %2216 = vmatprep.subr.mxu0 0.0
    %2217 = vmatpush1.msra.mxu0 0.0
    %2218 = vmatprep.subr.mxu0 0.0
    %2219 = vmatpush1.msra.mxu0 %v1807
    %2220 = vmatprep.subr.mxu0 0.0
    %2221 = vmatpush1.msra.mxu0 %v1806
    %2222 = vmatprep.subr.mxu0 0.0
    %2223 = vmatpush1.msra.mxu0 %v1805
    %2224 = vmatprep.subr.mxu0 0.0
    %2225 = vmatpush1.msra.mxu0 %v1804
    %2226 = vmatprep.subr.mxu0 0.0
    %2227 = vmatpush2.msra.mxu0 0.0
    %2228 = vmatprep.subr.mxu0 0.0
    %2229 = vmatpush2.msra.mxu0 0.0
    %2230 = vmatprep.subr.mxu0 0.0
    %2231 = vmatpush2.msra.mxu0 0.0
    %2232 = vmatprep.subr.mxu0 0.0
    %2233 = vmatpush2.msra.mxu0 0.0
    %2234 = vmatprep.subr.mxu0 0.0
    %2235 = vmatpush2.msra.mxu0 0.0
    %2236 = vmatprep.subr.mxu0 0.0
    %2237 = vmatpush2.msra.mxu0 0.0
    %2238 = vmatprep.subr.mxu0 0.0
    %2239 = vmatpush2.msra.mxu0 0.0
    %2240 = vmatprep.subr.mxu0 0.0
    %2241 = vmatpush2.msra.mxu0 0.0
    %2242 = vmatprep.subr.mxu0 0.0
    %2243 = vmatpush2.msra.mxu0 0.0
    %2244 = vmatprep.subr.mxu0 0.0
    %2245 = vmatpush2.msra.mxu0 0.0
    %2246 = vmatprep.subr.mxu0 0.0
    %2247 = vmatpush2.msra.mxu0 0.0
    %2248 = vmatprep.subr.mxu0 0.0
    %2249 = vmatpush2.msra.mxu0 0.0
    %2250 = vmatprep.subr.mxu0 0.0
    %2251 = vmatpush2.msra.mxu0 0.0
    %2252 = vmatprep.subr.mxu0 0.0
    %2253 = vmatpush2.msra.mxu0 0.0
    %2254 = vmatprep.subr.mxu0 0.0
    %2255 = vmatpush2.msra.mxu0 0.0
    %2256 = vmatprep.subr.mxu0 0.0
    %2257 = vmatpush2.msra.mxu0 0.0
    %2258 = vmatprep.mubr.f32.mxu0 0.0
    %2259 = vmatmul.mubr.f32.gmra.mxu0 %v2183
    %v2260 = vpop.f32.mrf.mxu0
    %v2261 = vadd.f32 %v2164, %v2260
    %v2262 = vpop.f32.mrf.mxu0
    %2263 = vmatprep.mubr.f32.mxu0 0.0
    %2264 = vmatmul.mubr.f32.gmra.mxu0 %v2186
    %v2265 = vpop.f32.mrf.mxu0
    %v2266 = vadd.f32 %v2169, %v2265
    %v2267 = vpop.f32.mrf.mxu0
    %2268 = vmatprep.mubr.f32.mxu0 0.0
    %2269 = vmatmul.mubr.f32.gmra.mxu0 %v2189
    %v2270 = vpop.f32.mrf.mxu0
    %v2271 = vadd.f32 %v2174, %v2270
    %v2272 = vpop.f32.mrf.mxu0
    %2273 = vmatprep.mubr.f32.mxu0 0.0
    %2274 = vmatmul.mubr.f32.gmra.mxu0 %v2192
    %v2275 = vpop.f32.mrf.mxu0
    %v2276 = vadd.f32 %v2179, %v2275
    %v2277 = vpop.f32.mrf.mxu0
    %2278 = vdwg.mxu0
    %v2280 = vlaneseq
    %v2281 = vshrl.u32 %v2280, 7
    %v2282 = vsub.s32 0, %v2281
    %v2283 = vrot.slane %v1814, %v2282
    %v2285 = vmul.f32 %v2075, %v2283
    %v2286 = vmul.f32 %v2078, %v2283
    %v2287 = vmul.f32 %v2081, %v2283
    %v2288 = vmul.f32 %v2084, %v2283
    %v2289 = vadd.f32 %v2261, %v2285
    %v2290 = vadd.f32 %v2266, %v2286
    %v2291 = vadd.f32 %v2271, %v2287
    %v2292 = vadd.f32 %v2276, %v2288
    %v2294 = vlaneseq
    %v2295 = vshrl.u32 %v2294, 7
    %v2296 = vsub.s32 0, %v2295
    %v2297 = vrot.slane %v1816, %v2296
    %v2299 = vadd.f32 %v2289, %v2297
    %v2300 = vadd.f32 %v2290, %v2297
    %v2301 = vadd.f32 %v2291, %v2297
    %v2302 = vadd.f32 %v2292, %v2297
    %v2303 = vxor.u32 %v2299, 2147483648
    %v2304 = vxor.u32 %v2300, 2147483648
    %v2305 = vxor.u32 %v2301, 2147483648
    %v2306 = vxor.u32 %v2302, 2147483648
    %v2307 = vmul.f32 %v2303, 1.442695
    %v2308 = vpow.pop %v2307
    %v2309 = vmul.f32 %v2304, 1.442695
    %v2310 = vpow.pop %v2309
    %v2311 = vmul.f32 %v2305, 1.442695
    %v2312 = vpow.pop %v2311
    %v2313 = vmul.f32 %v2306, 1.442695
    %v2314 = vpow.pop %v2313
    %v2315 = vadd.f32 %v2308, 1.0
    %v2316 = vadd.f32 %v2310, 1.0
    %v2317 = vadd.f32 %v2312, 1.0
    %v2318 = vadd.f32 %v2314, 1.0
    %v2319 = vrcp.pop %v2315
    %v2320 = vmul.f32 1.0, %v2319
    %v2321 = vrcp.pop %v2316
    %v2322 = vmul.f32 1.0, %v2321
    %v2323 = vrcp.pop %v2317
    %v2324 = vmul.f32 1.0, %v2323
    %v2325 = vrcp.pop %v2318
    %v2326 = vmul.f32 1.0, %v2325
    %v2327 = vmul.f32 %v2299, %v2320
    %v2328 = vmul.f32 %v2300, %v2322
    %v2329 = vmul.f32 %v2301, %v2324
    %v2330 = vmul.f32 %v2302, %v2326
    %v2332 = vlaneseq
    %v2333 = vshrl.u32 %v2332, 7
    %v2334 = vsub.s32 0, %v2333
    %v2335 = vrot.slane %v1823, %v2334
    %v2338 = vsel %vm336, %v2327, 0
    %v2341 = vsel %vm336, %v2328, 0
    %v2344 = vsel %vm336, %v2329, 0
    %v2347 = vsel %vm336, %v2330, 0
    %2349 = vmatprep.subr.mxu0 0.0
    %2350 = vmatpush1.msra.mxu0 0.0
    %2351 = vmatprep.subr.mxu0 0.0
    %2352 = vmatpush1.msra.mxu0 0.0
    %2353 = vmatprep.subr.mxu0 0.0
    %2354 = vmatpush1.msra.mxu0 0.0
    %2355 = vmatprep.subr.mxu0 0.0
    %2356 = vmatpush1.msra.mxu0 0.0
    %2357 = vmatprep.subr.mxu0 0.0
    %2358 = vmatpush1.msra.mxu0 0.0
    %2359 = vmatprep.subr.mxu0 0.0
    %2360 = vmatpush1.msra.mxu0 0.0
    %2361 = vmatprep.subr.mxu0 0.0
    %2362 = vmatpush1.msra.mxu0 0.0
    %2363 = vmatprep.subr.mxu0 0.0
    %2364 = vmatpush1.msra.mxu0 0.0
    %2365 = vmatprep.subr.mxu0 0.0
    %2366 = vmatpush1.msra.mxu0 0.0
    %2367 = vmatprep.subr.mxu0 0.0
    %2368 = vmatpush1.msra.mxu0 0.0
    %2369 = vmatprep.subr.mxu0 0.0
    %2370 = vmatpush1.msra.mxu0 0.0
    %2371 = vmatprep.subr.mxu0 0.0
    %2372 = vmatpush1.msra.mxu0 0.0
    %2373 = vmatprep.subr.mxu0 0.0
    %2374 = vmatpush1.msra.mxu0 %v1821
    %2375 = vmatprep.subr.mxu0 0.0
    %2376 = vmatpush1.msra.mxu0 %v1820
    %2377 = vmatprep.subr.mxu0 0.0
    %2378 = vmatpush1.msra.mxu0 %v1819
    %2379 = vmatprep.subr.mxu0 0.0
    %2380 = vmatpush1.msra.mxu0 %v1818
    %2381 = vmatprep.subr.mxu0 0.0
    %2382 = vmatpush2.msra.mxu0 0.0
    %2383 = vmatprep.subr.mxu0 0.0
    %2384 = vmatpush2.msra.mxu0 0.0
    %2385 = vmatprep.subr.mxu0 0.0
    %2386 = vmatpush2.msra.mxu0 0.0
    %2387 = vmatprep.subr.mxu0 0.0
    %2388 = vmatpush2.msra.mxu0 0.0
    %2389 = vmatprep.subr.mxu0 0.0
    %2390 = vmatpush2.msra.mxu0 0.0
    %2391 = vmatprep.subr.mxu0 0.0
    %2392 = vmatpush2.msra.mxu0 0.0
    %2393 = vmatprep.subr.mxu0 0.0
    %2394 = vmatpush2.msra.mxu0 0.0
    %2395 = vmatprep.subr.mxu0 0.0
    %2396 = vmatpush2.msra.mxu0 0.0
    %2397 = vmatprep.subr.mxu0 0.0
    %2398 = vmatpush2.msra.mxu0 0.0
    %2399 = vmatprep.subr.mxu0 0.0
    %2400 = vmatpush2.msra.mxu0 0.0
    %2401 = vmatprep.subr.mxu0 0.0
    %2402 = vmatpush2.msra.mxu0 0.0
    %2403 = vmatprep.subr.mxu0 0.0
    %2404 = vmatpush2.msra.mxu0 0.0
    %2405 = vmatprep.subr.mxu0 0.0
    %2406 = vmatpush2.msra.mxu0 0.0
    %2407 = vmatprep.subr.mxu0 0.0
    %2408 = vmatpush2.msra.mxu0 0.0
    %2409 = vmatprep.subr.mxu0 0.0
    %2410 = vmatpush2.msra.mxu0 0.0
    %2411 = vmatprep.subr.mxu0 0.0
    %2412 = vmatpush2.msra.mxu0 0.0
    %2413 = vmatprep.mubr.f32.mxu0 0.0
    %2414 = vmatmul.mubr.f32.gmra.mxu0 %v2338
    %v2415 = vpop.f32.mrf.mxu0
    %v2416 = vadd.f32 %v2335, %v2415
    %v2417 = vpop.f32.mrf.mxu0
    %2418 = vmatprep.mubr.f32.mxu0 0.0
    %2419 = vmatmul.mubr.f32.gmra.mxu0 %v2341
    %v2420 = vpop.f32.mrf.mxu0
    %v2421 = vadd.f32 %v2335, %v2420
    %v2422 = vpop.f32.mrf.mxu0
    %2423 = vmatprep.mubr.f32.mxu0 0.0
    %2424 = vmatmul.mubr.f32.gmra.mxu0 %v2344
    %v2425 = vpop.f32.mrf.mxu0
    %v2426 = vadd.f32 %v2335, %v2425
    %v2427 = vpop.f32.mrf.mxu0
    %2428 = vmatprep.mubr.f32.mxu0 0.0
    %2429 = vmatmul.mubr.f32.gmra.mxu0 %v2347
    %v2430 = vpop.f32.mrf.mxu0
    %v2431 = vadd.f32 %v2335, %v2430
    %v2432 = vpop.f32.mrf.mxu0
    %2433 = vdwg.mxu0
    %v2434 = vxor.u32 %v2416, 2147483648
    %v2435 = vxor.u32 %v2421, 2147483648
    %v2436 = vxor.u32 %v2426, 2147483648
    %v2437 = vxor.u32 %v2431, 2147483648
    %v2438 = vmul.f32 %v2434, 1.442695
    %v2439 = vpow.pop %v2438
    %v2440 = vmul.f32 %v2435, 1.442695
    %v2441 = vpow.pop %v2440
    %v2442 = vmul.f32 %v2436, 1.442695
    %v2443 = vpow.pop %v2442
    %v2444 = vmul.f32 %v2437, 1.442695
    %v2445 = vpow.pop %v2444
    %v2446 = vadd.f32 %v2439, 1.0
    %v2447 = vadd.f32 %v2441, 1.0
    %v2448 = vadd.f32 %v2443, 1.0
    %v2449 = vadd.f32 %v2445, 1.0
    %v2450 = vrcp.pop %v2446
    %v2451 = vmul.f32 1.0, %v2450
    %v2452 = vrcp.pop %v2447
    %v2453 = vmul.f32 1.0, %v2452
    %v2454 = vrcp.pop %v2448
    %v2455 = vmul.f32 1.0, %v2454
    %v2456 = vrcp.pop %v2449
    %v2457 = vmul.f32 1.0, %v2456
    %v2458 = vmul.f32 %v2416, %v2451
    %v2459 = vmul.f32 %v2421, %v2453
    %v2460 = vmul.f32 %v2426, %v2455
    %v2461 = vmul.f32 %v2431, %v2457
    %v2463 = vlaneseq
    %v2464 = vshrl.u32 %v2463, 7
    %v2465 = vsub.s32 0, %v2464
    %v2466 = vrot.slane %v1849, %v2465
    %v2469 = vsel %vm336, %v2458, 0
    %v2472 = vsel %vm336, %v2459, 0
    %v2475 = vsel %vm336, %v2460, 0
    %v2478 = vsel %vm336, %v2461, 0
    %2480 = vmatprep.subr.mxu0 0.0
    %2481 = vmatpush1.msra.mxu0 0.0
    %2482 = vmatprep.subr.mxu0 0.0
    %2483 = vmatpush1.msra.mxu0 0.0
    %2484 = vmatprep.subr.mxu0 0.0
    %2485 = vmatpush1.msra.mxu0 0.0
    %2486 = vmatprep.subr.mxu0 0.0
    %2487 = vmatpush1.msra.mxu0 0.0
    %2488 = vmatprep.subr.mxu0 0.0
    %2489 = vmatpush1.msra.mxu0 0.0
    %2490 = vmatprep.subr.mxu0 0.0
    %2491 = vmatpush1.msra.mxu0 0.0
    %2492 = vmatprep.subr.mxu0 0.0
    %2493 = vmatpush1.msra.mxu0 0.0
    %2494 = vmatprep.subr.mxu0 0.0
    %2495 = vmatpush1.msra.mxu0 0.0
    %2496 = vmatprep.subr.mxu0 0.0
    %2497 = vmatpush1.msra.mxu0 0.0
    %2498 = vmatprep.subr.mxu0 0.0
    %2499 = vmatpush1.msra.mxu0 0.0
    %2500 = vmatprep.subr.mxu0 0.0
    %2501 = vmatpush1.msra.mxu0 0.0
    %2502 = vmatprep.subr.mxu0 0.0
    %2503 = vmatpush1.msra.mxu0 0.0
    %2504 = vmatprep.subr.mxu0 0.0
    %2505 = vmatpush1.msra.mxu0 %v1847
    %2506 = vmatprep.subr.mxu0 0.0
    %2507 = vmatpush1.msra.mxu0 %v1846
    %2508 = vmatprep.subr.mxu0 0.0
    %2509 = vmatpush1.msra.mxu0 %v1845
    %2510 = vmatprep.subr.mxu0 0.0
    %2511 = vmatpush1.msra.mxu0 %v1844
    %2512 = vmatprep.subr.mxu0 0.0
    %2513 = vmatpush2.msra.mxu0 0.0
    %2514 = vmatprep.subr.mxu0 0.0
    %2515 = vmatpush2.msra.mxu0 0.0
    %2516 = vmatprep.subr.mxu0 0.0
    %2517 = vmatpush2.msra.mxu0 0.0
    %2518 = vmatprep.subr.mxu0 0.0
    %2519 = vmatpush2.msra.mxu0 0.0
    %2520 = vmatprep.subr.mxu0 0.0
    %2521 = vmatpush2.msra.mxu0 0.0
    %2522 = vmatprep.subr.mxu0 0.0
    %2523 = vmatpush2.msra.mxu0 0.0
    %2524 = vmatprep.subr.mxu0 0.0
    %2525 = vmatpush2.msra.mxu0 0.0
    %2526 = vmatprep.subr.mxu0 0.0
    %2527 = vmatpush2.msra.mxu0 0.0
    %2528 = vmatprep.subr.mxu0 0.0
    %2529 = vmatpush2.msra.mxu0 0.0
    %2530 = vmatprep.subr.mxu0 0.0
    %2531 = vmatpush2.msra.mxu0 0.0
    %2532 = vmatprep.subr.mxu0 0.0
    %2533 = vmatpush2.msra.mxu0 0.0
    %2534 = vmatprep.subr.mxu0 0.0
    %2535 = vmatpush2.msra.mxu0 0.0
    %2536 = vmatprep.subr.mxu0 0.0
    %2537 = vmatpush2.msra.mxu0 0.0
    %2538 = vmatprep.subr.mxu0 0.0
    %2539 = vmatpush2.msra.mxu0 0.0
    %2540 = vmatprep.subr.mxu0 0.0
    %2541 = vmatpush2.msra.mxu0 0.0
    %2542 = vmatprep.subr.mxu0 0.0
    %2543 = vmatpush2.msra.mxu0 0.0
    %2544 = vmatprep.mubr.f32.mxu0 0.0
    %2545 = vmatmul.mubr.f32.gmra.mxu0 %v2469
    %v2546 = vpop.f32.mrf.mxu0
    %v2547 = vadd.f32 %v2466, %v2546
    %v2548 = vpop.f32.mrf.mxu0
    %2549 = vmatprep.mubr.f32.mxu0 0.0
    %2550 = vmatmul.mubr.f32.gmra.mxu0 %v2472
    %v2551 = vpop.f32.mrf.mxu0
    %v2552 = vadd.f32 %v2466, %v2551
    %v2553 = vpop.f32.mrf.mxu0
    %2554 = vmatprep.mubr.f32.mxu0 0.0
    %2555 = vmatmul.mubr.f32.gmra.mxu0 %v2475
    %v2556 = vpop.f32.mrf.mxu0
    %v2557 = vadd.f32 %v2466, %v2556
    %v2558 = vpop.f32.mrf.mxu0
    %2559 = vmatprep.mubr.f32.mxu0 0.0
    %2560 = vmatmul.mubr.f32.gmra.mxu0 %v2478
    %v2561 = vpop.f32.mrf.mxu0
    %v2562 = vadd.f32 %v2466, %v2561
    %v2563 = vpop.f32.mrf.mxu0
    %2564 = vdwg.mxu0
    %v2565 = vxor.u32 %v2547, 2147483648
    %v2566 = vxor.u32 %v2552, 2147483648
    %v2567 = vxor.u32 %v2557, 2147483648
    %v2568 = vxor.u32 %v2562, 2147483648
    %v2569 = vmul.f32 %v2565, 1.442695
    %v2570 = vpow.pop %v2569
    %v2571 = vmul.f32 %v2566, 1.442695
    %v2572 = vpow.pop %v2571
    %v2573 = vmul.f32 %v2567, 1.442695
    %v2574 = vpow.pop %v2573
    %v2575 = vmul.f32 %v2568, 1.442695
    %v2576 = vpow.pop %v2575
    %v2577 = vadd.f32 %v2570, 1.0
    %v2578 = vadd.f32 %v2572, 1.0
    %v2579 = vadd.f32 %v2574, 1.0
    %v2580 = vadd.f32 %v2576, 1.0
    %v2581 = vrcp.pop %v2577
    %v2582 = vmul.f32 1.0, %v2581
    %v2583 = vrcp.pop %v2578
    %v2584 = vmul.f32 1.0, %v2583
    %v2585 = vrcp.pop %v2579
    %v2586 = vmul.f32 1.0, %v2585
    %v2587 = vrcp.pop %v2580
    %v2588 = vmul.f32 1.0, %v2587
    %v2589 = vmul.f32 %v2547, %v2582
    %v2590 = vmul.f32 %v2552, %v2584
    %v2591 = vmul.f32 %v2557, %v2586
    %v2592 = vmul.f32 %v2562, %v2588
    %v2594 = vsel %vm336, %v2589, 0
    %v2597 = vsel %vm336, %v2590, 0
    %v2600 = vsel %vm336, %v2591, 0
    %v2603 = vsel %vm336, %v2592, 0
    %2605 = vmatprep.subr.mxu0 0.0
    %2606 = vmatpush1.msra.mxu0 0.0
    %2607 = vmatprep.subr.mxu0 0.0
    %2608 = vmatpush1.msra.mxu0 0.0
    %2609 = vmatprep.subr.mxu0 0.0
    %2610 = vmatpush1.msra.mxu0 0.0
    %2611 = vmatprep.subr.mxu0 0.0
    %2612 = vmatpush1.msra.mxu0 0.0
    %2613 = vmatprep.subr.mxu0 0.0
    %2614 = vmatpush1.msra.mxu0 0.0
    %2615 = vmatprep.subr.mxu0 0.0
    %2616 = vmatpush1.msra.mxu0 0.0
    %2617 = vmatprep.subr.mxu0 0.0
    %2618 = vmatpush1.msra.mxu0 0.0
    %2619 = vmatprep.subr.mxu0 0.0
    %2620 = vmatpush1.msra.mxu0 0.0
    %2621 = vmatprep.subr.mxu0 0.0
    %2622 = vmatpush1.msra.mxu0 0.0
    %2623 = vmatprep.subr.mxu0 0.0
    %2624 = vmatpush1.msra.mxu0 0.0
    %2625 = vmatprep.subr.mxu0 0.0
    %2626 = vmatpush1.msra.mxu0 0.0
    %2627 = vmatprep.subr.mxu0 0.0
    %2628 = vmatpush1.msra.mxu0 0.0
    %2629 = vmatprep.subr.mxu0 0.0
    %2630 = vmatpush1.msra.mxu0 %v1854
    %2631 = vmatprep.subr.mxu0 0.0
    %2632 = vmatpush1.msra.mxu0 %v1853
    %2633 = vmatprep.subr.mxu0 0.0
    %2634 = vmatpush1.msra.mxu0 %v1852
    %2635 = vmatprep.subr.mxu0 0.0
    %2636 = vmatpush1.msra.mxu0 %v1851
    %2637 = vmatprep.subr.mxu0 0.0
    %2638 = vmatpush2.msra.mxu0 0.0
    %2639 = vmatprep.subr.mxu0 0.0
    %2640 = vmatpush2.msra.mxu0 0.0
    %2641 = vmatprep.subr.mxu0 0.0
    %2642 = vmatpush2.msra.mxu0 0.0
    %2643 = vmatprep.subr.mxu0 0.0
    %2644 = vmatpush2.msra.mxu0 0.0
    %2645 = vmatprep.subr.mxu0 0.0
    %2646 = vmatpush2.msra.mxu0 0.0
    %2647 = vmatprep.subr.mxu0 0.0
    %2648 = vmatpush2.msra.mxu0 0.0
    %2649 = vmatprep.subr.mxu0 0.0
    %2650 = vmatpush2.msra.mxu0 0.0
    %2651 = vmatprep.subr.mxu0 0.0
    %2652 = vmatpush2.msra.mxu0 0.0
    %2653 = vmatprep.subr.mxu0 0.0
    %2654 = vmatpush2.msra.mxu0 0.0
    %2655 = vmatprep.subr.mxu0 0.0
    %2656 = vmatpush2.msra.mxu0 0.0
    %2657 = vmatprep.subr.mxu0 0.0
    %2658 = vmatpush2.msra.mxu0 0.0
    %2659 = vmatprep.subr.mxu0 0.0
    %2660 = vmatpush2.msra.mxu0 0.0
    %2661 = vmatprep.subr.mxu0 0.0
    %2662 = vmatpush2.msra.mxu0 0.0
    %2663 = vmatprep.subr.mxu0 0.0
    %2664 = vmatpush2.msra.mxu0 0.0
    %2665 = vmatprep.subr.mxu0 0.0
    %2666 = vmatpush2.msra.mxu0 0.0
    %2667 = vmatprep.subr.mxu0 0.0
    %2668 = vmatpush2.msra.mxu0 0.0
    %2669 = vmatprep.mubr.f32.mxu0 0.0
    %2670 = vmatmul.mubr.f32.gmra.mxu0 %v2594
    %v2671 = vpop.f32.mrf.mxu0
    %v2672 = vadd.f32 0.0, %v2671
    %v2673 = vpop.f32.mrf.mxu0
    %2674 = vmatprep.mubr.f32.mxu0 0.0
    %2675 = vmatmul.mubr.f32.gmra.mxu0 %v2597
    %v2676 = vpop.f32.mrf.mxu0
    %v2677 = vadd.f32 0.0, %v2676
    %v2678 = vpop.f32.mrf.mxu0
    %2679 = vmatprep.mubr.f32.mxu0 0.0
    %2680 = vmatmul.mubr.f32.gmra.mxu0 %v2600
    %v2681 = vpop.f32.mrf.mxu0
    %v2682 = vadd.f32 0.0, %v2681
    %v2683 = vpop.f32.mrf.mxu0
    %2684 = vmatprep.mubr.f32.mxu0 0.0
    %2685 = vmatmul.mubr.f32.gmra.mxu0 %v2603
    %v2686 = vpop.f32.mrf.mxu0
    %v2687 = vadd.f32 0.0, %v2686
    %v2688 = vpop.f32.mrf.mxu0
    %2689 = vdwg.mxu0
    %2691 = vset.pattern.permute.xlu0 0
    %2692 = vperm.xlu0 %2691, %v2672
    %v2693 = vpop.permute.xlu0 %2692
    %2696 = vset.pattern.permute.xlu0 0
    %2697 = vperm.xlu0 %2696, %v2677
    %v2698 = vpop.permute.xlu0 %2697
    %2701 = vset.pattern.permute.xlu0 0
    %2702 = vperm.xlu0 %2701, %v2682
    %v2703 = vpop.permute.xlu0 %2702
    %2706 = vset.pattern.permute.xlu0 0
    %2707 = vperm.xlu0 %2706, %v2687
    %v2708 = vpop.permute.xlu0 %2707
    %v2710 = vmul.f32 %v2065, %v2693
    %v2711 = vmul.f32 %v2066, %v2698
    %v2712 = vmul.f32 %v2067, %v2703
    %v2713 = vmul.f32 %v2068, %v2708
    %2714 = vmatprep.subr.mxu0 0.0
    %2715 = vmatpush1.msra.mxu0 0.0
    %2716 = vmatprep.subr.mxu0 0.0
    %2717 = vmatpush1.msra.mxu0 0.0
    %2718 = vmatprep.subr.mxu0 0.0
    %2719 = vmatpush1.msra.mxu0 0.0
    %2720 = vmatprep.subr.mxu0 0.0
    %2721 = vmatpush1.msra.mxu0 0.0
    %2722 = vmatprep.subr.mxu0 0.0
    %2723 = vmatpush1.msra.mxu0 0.0
    %2724 = vmatprep.subr.mxu0 0.0
    %2725 = vmatpush1.msra.mxu0 0.0
    %2726 = vmatprep.subr.mxu0 0.0
    %2727 = vmatpush1.msra.mxu0 0.0
    %2728 = vmatprep.subr.mxu0 0.0
    %2729 = vmatpush1.msra.mxu0 0.0
    %2730 = vmatprep.subr.mxu0 0.0
    %2731 = vmatpush1.msra.mxu0 0.0
    %2732 = vmatprep.subr.mxu0 0.0
    %2733 = vmatpush1.msra.mxu0 0.0
    %2734 = vmatprep.subr.mxu0 0.0
    %2735 = vmatpush1.msra.mxu0 0.0
    %2736 = vmatprep.subr.mxu0 0.0
    %2737 = vmatpush1.msra.mxu0 0.0
    %2738 = vmatprep.subr.mxu0 0.0
    %2739 = vmatpush1.msra.mxu0 %v2461
    %2740 = vmatprep.subr.mxu0 0.0
    %2741 = vmatpush1.msra.mxu0 %v2460
    %2742 = vmatprep.subr.mxu0 0.0
    %2743 = vmatpush1.msra.mxu0 %v2459
    %2744 = vmatprep.subr.mxu0 0.0
    %2745 = vmatpush1.msra.mxu0 %v2458
    %2746 = vmatprep.subr.mxu0 0.0
    %2747 = vmatpush2.msra.mxu0 0.0
    %2748 = vmatprep.subr.mxu0 0.0
    %2749 = vmatpush2.msra.mxu0 0.0
    %2750 = vmatprep.subr.mxu0 0.0
    %2751 = vmatpush2.msra.mxu0 0.0
    %2752 = vmatprep.subr.mxu0 0.0
    %2753 = vmatpush2.msra.mxu0 0.0
    %2754 = vmatprep.subr.mxu0 0.0
    %2755 = vmatpush2.msra.mxu0 0.0
    %2756 = vmatprep.subr.mxu0 0.0
    %2757 = vmatpush2.msra.mxu0 0.0
    %2758 = vmatprep.subr.mxu0 0.0
    %2759 = vmatpush2.msra.mxu0 0.0
    %2760 = vmatprep.subr.mxu0 0.0
    %2761 = vmatpush2.msra.mxu0 0.0
    %2762 = vmatprep.subr.mxu0 0.0
    %2763 = vmatpush2.msra.mxu0 0.0
    %2764 = vmatprep.subr.mxu0 0.0
    %2765 = vmatpush2.msra.mxu0 0.0
    %2766 = vmatprep.subr.mxu0 0.0
    %2767 = vmatpush2.msra.mxu0 0.0
    %2768 = vmatprep.subr.mxu0 0.0
    %2769 = vmatpush2.msra.mxu0 0.0
    %2770 = vmatprep.subr.mxu0 0.0
    %2771 = vmatpush2.msra.mxu0 0.0
    %2772 = vmatprep.subr.mxu0 0.0
    %2773 = vmatpush2.msra.mxu0 0.0
    %2774 = vmatprep.subr.mxu0 0.0
    %2775 = vmatpush2.msra.mxu0 0.0
    %2776 = vmatprep.subr.mxu0 0.0
    %2777 = vmatpush2.msra.mxu0 0.0
    %2778 = vmatprep.mubr.f32.mxu0 0.0
    %2779 = vmatmul.mubr.f32.gmra.mxu0 %v1369
    %v2780 = vpop.f32.mrf.mxu0
    %v2781 = vadd.f32 0.0, %v2780
    %v2782 = vpop.f32.mrf.mxu0
    %2783 = vmatprep.mubr.f32.mxu0 0.0
    %2784 = vmatmul.mubr.f32.gmra.mxu0 %v1372
    %v2785 = vpop.f32.mrf.mxu0
    %v2786 = vadd.f32 0.0, %v2785
    %v2787 = vpop.f32.mrf.mxu0
    %2788 = vdwg.mxu0
    %2789 = vmatprep.subr.mxu0 0.0
    %2790 = vmatpush1.msra.mxu0 0.0
    %2791 = vmatprep.subr.mxu0 0.0
    %2792 = vmatpush1.msra.mxu0 0.0
    %2793 = vmatprep.subr.mxu0 0.0
    %2794 = vmatpush1.msra.mxu0 0.0
    %2795 = vmatprep.subr.mxu0 0.0
    %2796 = vmatpush1.msra.mxu0 0.0
    %2797 = vmatprep.subr.mxu0 0.0
    %2798 = vmatpush1.msra.mxu0 0.0
    %2799 = vmatprep.subr.mxu0 0.0
    %2800 = vmatpush1.msra.mxu0 0.0
    %2801 = vmatprep.subr.mxu0 0.0
    %2802 = vmatpush1.msra.mxu0 0.0
    %2803 = vmatprep.subr.mxu0 0.0
    %2804 = vmatpush1.msra.mxu0 0.0
    %2805 = vmatprep.subr.mxu0 0.0
    %2806 = vmatpush1.msra.mxu0 0.0
    %2807 = vmatprep.subr.mxu0 0.0
    %2808 = vmatpush1.msra.mxu0 0.0
    %2809 = vmatprep.subr.mxu0 0.0
    %2810 = vmatpush1.msra.mxu0 0.0
    %2811 = vmatprep.subr.mxu0 0.0
    %2812 = vmatpush1.msra.mxu0 0.0
    %2813 = vmatprep.subr.mxu0 0.0
    %2814 = vmatpush1.msra.mxu0 %v2713
    %2815 = vmatprep.subr.mxu0 0.0
    %2816 = vmatpush1.msra.mxu0 %v2712
    %2817 = vmatprep.subr.mxu0 0.0
    %2818 = vmatpush1.msra.mxu0 %v2711
    %2819 = vmatprep.subr.mxu0 0.0
    %2820 = vmatpush1.msra.mxu0 %v2710
    %2821 = vmatprep.subr.mxu0 0.0
    %2822 = vmatpush2.msra.mxu0 0.0
    %2823 = vmatprep.subr.mxu0 0.0
    %2824 = vmatpush2.msra.mxu0 0.0
    %2825 = vmatprep.subr.mxu0 0.0
    %2826 = vmatpush2.msra.mxu0 0.0
    %2827 = vmatprep.subr.mxu0 0.0
    %2828 = vmatpush2.msra.mxu0 0.0
    %2829 = vmatprep.subr.mxu0 0.0
    %2830 = vmatpush2.msra.mxu0 0.0
    %2831 = vmatprep.subr.mxu0 0.0
    %2832 = vmatpush2.msra.mxu0 0.0
    %2833 = vmatprep.subr.mxu0 0.0
    %2834 = vmatpush2.msra.mxu0 0.0
    %2835 = vmatprep.subr.mxu0 0.0
    %2836 = vmatpush2.msra.mxu0 0.0
    %2837 = vmatprep.subr.mxu0 0.0
    %2838 = vmatpush2.msra.mxu0 0.0
    %2839 = vmatprep.subr.mxu0 0.0
    %2840 = vmatpush2.msra.mxu0 0.0
    %2841 = vmatprep.subr.mxu0 0.0
    %2842 = vmatpush2.msra.mxu0 0.0
    %2843 = vmatprep.subr.mxu0 0.0
    %2844 = vmatpush2.msra.mxu0 0.0
    %2845 = vmatprep.subr.mxu0 0.0
    %2846 = vmatpush2.msra.mxu0 0.0
    %2847 = vmatprep.subr.mxu0 0.0
    %2848 = vmatpush2.msra.mxu0 0.0
    %2849 = vmatprep.subr.mxu0 0.0
    %2850 = vmatpush2.msra.mxu0 0.0
    %2851 = vmatprep.subr.mxu0 0.0
    %2852 = vmatpush2.msra.mxu0 0.0
    %2853 = vmatprep.mubr.f32.mxu0 0.0
    %2854 = vmatmul.mubr.f32.gmra.mxu0 %v1450
    %v2855 = vpop.f32.mrf.mxu0
    %v2856 = vadd.f32 0.0, %v2855
    %v2857 = vpop.f32.mrf.mxu0
    %2858 = vmatprep.mubr.f32.mxu0 0.0
    %2859 = vmatmul.mubr.f32.gmra.mxu0 %v1453
    %v2860 = vpop.f32.mrf.mxu0
    %v2861 = vadd.f32 0.0, %v2860
    %v2862 = vpop.f32.mrf.mxu0
    %2863 = vdwg.mxu0
    %v2864 = vadd.f32 %v1530, %v2856
    %v2865 = vadd.f32 %v1531, %v2861
    %v2867 = vsel %vm336, %v2781, 0
    %v2870 = vsel %vm336, %v2786, 0
    %2872 = vmatprep.subr.mxu0 0.0
    %2873 = vmatpush1.msra.mxu0 0.0
    %2874 = vmatprep.subr.mxu0 0.0
    %2875 = vmatpush1.msra.mxu0 0.0
    %2876 = vmatprep.subr.mxu0 0.0
    %2877 = vmatpush1.msra.mxu0 0.0
    %2878 = vmatprep.subr.mxu0 0.0
    %2879 = vmatpush1.msra.mxu0 0.0
    %2880 = vmatprep.subr.mxu0 0.0
    %2881 = vmatpush1.msra.mxu0 0.0
    %2882 = vmatprep.subr.mxu0 0.0
    %2883 = vmatpush1.msra.mxu0 0.0
    %2884 = vmatprep.subr.mxu0 0.0
    %2885 = vmatpush1.msra.mxu0 0.0
    %2886 = vmatprep.subr.mxu0 0.0
    %2887 = vmatpush1.msra.mxu0 0.0
    %2888 = vmatprep.subr.mxu0 0.0
    %2889 = vmatpush1.msra.mxu0 0.0
    %2890 = vmatprep.subr.mxu0 0.0
    %2891 = vmatpush1.msra.mxu0 0.0
    %2892 = vmatprep.subr.mxu0 0.0
    %2893 = vmatpush1.msra.mxu0 0.0
    %2894 = vmatprep.subr.mxu0 0.0
    %2895 = vmatpush1.msra.mxu0 0.0
    %2896 = vmatprep.subr.mxu0 0.0
    %2897 = vmatpush1.msra.mxu0 %v1833
    %2898 = vmatprep.subr.mxu0 0.0
    %2899 = vmatpush1.msra.mxu0 %v1832
    %2900 = vmatprep.subr.mxu0 0.0
    %2901 = vmatpush1.msra.mxu0 %v1831
    %2902 = vmatprep.subr.mxu0 0.0
    %2903 = vmatpush1.msra.mxu0 %v1830
    %2904 = vmatprep.subr.mxu0 0.0
    %2905 = vmatpush2.msra.mxu0 0.0
    %2906 = vmatprep.subr.mxu0 0.0
    %2907 = vmatpush2.msra.mxu0 0.0
    %2908 = vmatprep.subr.mxu0 0.0
    %2909 = vmatpush2.msra.mxu0 0.0
    %2910 = vmatprep.subr.mxu0 0.0
    %2911 = vmatpush2.msra.mxu0 0.0
    %2912 = vmatprep.subr.mxu0 0.0
    %2913 = vmatpush2.msra.mxu0 0.0
    %2914 = vmatprep.subr.mxu0 0.0
    %2915 = vmatpush2.msra.mxu0 0.0
    %2916 = vmatprep.subr.mxu0 0.0
    %2917 = vmatpush2.msra.mxu0 0.0
    %2918 = vmatprep.subr.mxu0 0.0
    %2919 = vmatpush2.msra.mxu0 0.0
    %2920 = vmatprep.subr.mxu0 0.0
    %2921 = vmatpush2.msra.mxu0 0.0
    %2922 = vmatprep.subr.mxu0 0.0
    %2923 = vmatpush2.msra.mxu0 0.0
    %2924 = vmatprep.subr.mxu0 0.0
    %2925 = vmatpush2.msra.mxu0 0.0
    %2926 = vmatprep.subr.mxu0 0.0
    %2927 = vmatpush2.msra.mxu0 0.0
    %2928 = vmatprep.subr.mxu0 0.0
    %2929 = vmatpush2.msra.mxu0 0.0
    %2930 = vmatprep.subr.mxu0 0.0
    %2931 = vmatpush2.msra.mxu0 0.0
    %2932 = vmatprep.subr.mxu0 0.0
    %2933 = vmatpush2.msra.mxu0 0.0
    %2934 = vmatprep.subr.mxu0 0.0
    %2935 = vmatpush2.msra.mxu0 0.0
    %2936 = vmatprep.mubr.f32.mxu0 0.0
    %2937 = vmatmul.mubr.f32.gmra.mxu0 %v2867
    %v2938 = vpop.f32.mrf.mxu0
    %v2939 = vadd.f32 0.0, %v2938
    %v2940 = vpop.f32.mrf.mxu0
    %2941 = vmatprep.mubr.f32.mxu0 0.0
    %2942 = vmatmul.mubr.f32.gmra.mxu0 %v2870
    %v2943 = vpop.f32.mrf.mxu0
    %v2944 = vadd.f32 0.0, %v2943
    %v2945 = vpop.f32.mrf.mxu0
    %2946 = vdwg.mxu0
    %v2948 = vsel %vm336, %v1795, 0
    %v2951 = vsel %vm336, %v1800, 0
    %2953 = vmatprep.subr.mxu0 0.0
    %2954 = vmatpush1.msra.mxu0 0.0
    %2955 = vmatprep.subr.mxu0 0.0
    %2956 = vmatpush1.msra.mxu0 0.0
    %2957 = vmatprep.subr.mxu0 0.0
    %2958 = vmatpush1.msra.mxu0 0.0
    %2959 = vmatprep.subr.mxu0 0.0
    %2960 = vmatpush1.msra.mxu0 0.0
    %2961 = vmatprep.subr.mxu0 0.0
    %2962 = vmatpush1.msra.mxu0 0.0
    %2963 = vmatprep.subr.mxu0 0.0
    %2964 = vmatpush1.msra.mxu0 0.0
    %2965 = vmatprep.subr.mxu0 0.0
    %2966 = vmatpush1.msra.mxu0 0.0
    %2967 = vmatprep.subr.mxu0 0.0
    %2968 = vmatpush1.msra.mxu0 0.0
    %2969 = vmatprep.subr.mxu0 0.0
    %2970 = vmatpush1.msra.mxu0 0.0
    %2971 = vmatprep.subr.mxu0 0.0
    %2972 = vmatpush1.msra.mxu0 0.0
    %2973 = vmatprep.subr.mxu0 0.0
    %2974 = vmatpush1.msra.mxu0 0.0
    %2975 = vmatprep.subr.mxu0 0.0
    %2976 = vmatpush1.msra.mxu0 0.0
    %2977 = vmatprep.subr.mxu0 0.0
    %2978 = vmatpush1.msra.mxu0 %v1828
    %2979 = vmatprep.subr.mxu0 0.0
    %2980 = vmatpush1.msra.mxu0 %v1827
    %2981 = vmatprep.subr.mxu0 0.0
    %2982 = vmatpush1.msra.mxu0 %v1826
    %2983 = vmatprep.subr.mxu0 0.0
    %2984 = vmatpush1.msra.mxu0 %v1825
    %2985 = vmatprep.subr.mxu0 0.0
    %2986 = vmatpush2.msra.mxu0 0.0
    %2987 = vmatprep.subr.mxu0 0.0
    %2988 = vmatpush2.msra.mxu0 0.0
    %2989 = vmatprep.subr.mxu0 0.0
    %2990 = vmatpush2.msra.mxu0 0.0
    %2991 = vmatprep.subr.mxu0 0.0
    %2992 = vmatpush2.msra.mxu0 0.0
    %2993 = vmatprep.subr.mxu0 0.0
    %2994 = vmatpush2.msra.mxu0 0.0
    %2995 = vmatprep.subr.mxu0 0.0
    %2996 = vmatpush2.msra.mxu0 0.0
    %2997 = vmatprep.subr.mxu0 0.0
    %2998 = vmatpush2.msra.mxu0 0.0
    %2999 = vmatprep.subr.mxu0 0.0
    %3000 = vmatpush2.msra.mxu0 0.0
    %3001 = vmatprep.subr.mxu0 0.0
    %3002 = vmatpush2.msra.mxu0 0.0
    %3003 = vmatprep.subr.mxu0 0.0
    %3004 = vmatpush2.msra.mxu0 0.0
    %3005 = vmatprep.subr.mxu0 0.0
    %3006 = vmatpush2.msra.mxu0 0.0
    %3007 = vmatprep.subr.mxu0 0.0
    %3008 = vmatpush2.msra.mxu0 0.0
    %3009 = vmatprep.subr.mxu0 0.0
    %3010 = vmatpush2.msra.mxu0 0.0
    %3011 = vmatprep.subr.mxu0 0.0
    %3012 = vmatpush2.msra.mxu0 0.0
    %3013 = vmatprep.subr.mxu0 0.0
    %3014 = vmatpush2.msra.mxu0 0.0
    %3015 = vmatprep.subr.mxu0 0.0
    %3016 = vmatpush2.msra.mxu0 0.0
    %3017 = vmatprep.mubr.f32.mxu0 0.0
    %3018 = vmatmul.mubr.f32.gmra.mxu0 %v2948
    %v3019 = vpop.f32.mrf.mxu0
    %v3020 = vadd.f32 %v2939, %v3019
    %v3021 = vpop.f32.mrf.mxu0
    %3022 = vmatprep.mubr.f32.mxu0 0.0
    %3023 = vmatmul.mubr.f32.gmra.mxu0 %v2951
    %v3024 = vpop.f32.mrf.mxu0
    %v3025 = vadd.f32 %v2944, %v3024
    %v3026 = vpop.f32.mrf.mxu0
    %3027 = vdwg.mxu0
    %v3029 = vlaneseq
    %v3030 = vshrl.u32 %v3029, 7
    %v3031 = vsub.s32 0, %v3030
    %v3032 = vrot.slane %v1835, %v3031
    %v3034 = vadd.f32 %v3020, %v3032
    %v3035 = vadd.f32 %v3025, %v3032
    %v3036 = vxor.u32 %v3034, 2147483648
    %v3037 = vxor.u32 %v3035, 2147483648
    %v3038 = vmul.f32 %v3036, 1.442695
    %v3039 = vpow.pop %v3038
    %v3040 = vmul.f32 %v3037, 1.442695
    %v3041 = vpow.pop %v3040
    %v3042 = vadd.f32 %v3039, 1.0
    %v3043 = vadd.f32 %v3041, 1.0
    %v3044 = vrcp.pop %v3042
    %v3045 = vmul.f32 1.0, %v3044
    %v3046 = vrcp.pop %v3043
    %v3047 = vmul.f32 1.0, %v3046
    %v3048 = vmul.f32 %v3034, %v3045
    %v3049 = vmul.f32 %v3035, %v3047
    %v3051 = vlaneseq
    %v3052 = vshrl.u32 %v3051, 7
    %v3053 = vsub.s32 0, %v3052
    %v3054 = vrot.slane %v1842, %v3053
    %v3057 = vsel %vm336, %v3048, 0
    %v3060 = vsel %vm336, %v3049, 0
    %3062 = vmatprep.subr.mxu0 0.0
    %3063 = vmatpush1.msra.mxu0 0.0
    %3064 = vmatprep.subr.mxu0 0.0
    %3065 = vmatpush1.msra.mxu0 0.0
    %3066 = vmatprep.subr.mxu0 0.0
    %3067 = vmatpush1.msra.mxu0 0.0
    %3068 = vmatprep.subr.mxu0 0.0
    %3069 = vmatpush1.msra.mxu0 0.0
    %3070 = vmatprep.subr.mxu0 0.0
    %3071 = vmatpush1.msra.mxu0 0.0
    %3072 = vmatprep.subr.mxu0 0.0
    %3073 = vmatpush1.msra.mxu0 0.0
    %3074 = vmatprep.subr.mxu0 0.0
    %3075 = vmatpush1.msra.mxu0 0.0
    %3076 = vmatprep.subr.mxu0 0.0
    %3077 = vmatpush1.msra.mxu0 0.0
    %3078 = vmatprep.subr.mxu0 0.0
    %3079 = vmatpush1.msra.mxu0 0.0
    %3080 = vmatprep.subr.mxu0 0.0
    %3081 = vmatpush1.msra.mxu0 0.0
    %3082 = vmatprep.subr.mxu0 0.0
    %3083 = vmatpush1.msra.mxu0 0.0
    %3084 = vmatprep.subr.mxu0 0.0
    %3085 = vmatpush1.msra.mxu0 0.0
    %3086 = vmatprep.subr.mxu0 0.0
    %3087 = vmatpush1.msra.mxu0 %v1840
    %3088 = vmatprep.subr.mxu0 0.0
    %3089 = vmatpush1.msra.mxu0 %v1839
    %3090 = vmatprep.subr.mxu0 0.0
    %3091 = vmatpush1.msra.mxu0 %v1838
    %3092 = vmatprep.subr.mxu0 0.0
    %3093 = vmatpush1.msra.mxu0 %v1837
    %3094 = vmatprep.subr.mxu0 0.0
    %3095 = vmatpush2.msra.mxu0 0.0
    %3096 = vmatprep.subr.mxu0 0.0
    %3097 = vmatpush2.msra.mxu0 0.0
    %3098 = vmatprep.subr.mxu0 0.0
    %3099 = vmatpush2.msra.mxu0 0.0
    %3100 = vmatprep.subr.mxu0 0.0
    %3101 = vmatpush2.msra.mxu0 0.0
    %3102 = vmatprep.subr.mxu0 0.0
    %3103 = vmatpush2.msra.mxu0 0.0
    %3104 = vmatprep.subr.mxu0 0.0
    %3105 = vmatpush2.msra.mxu0 0.0
    %3106 = vmatprep.subr.mxu0 0.0
    %3107 = vmatpush2.msra.mxu0 0.0
    %3108 = vmatprep.subr.mxu0 0.0
    %3109 = vmatpush2.msra.mxu0 0.0
    %3110 = vmatprep.subr.mxu0 0.0
    %3111 = vmatpush2.msra.mxu0 0.0
    %3112 = vmatprep.subr.mxu0 0.0
    %3113 = vmatpush2.msra.mxu0 0.0
    %3114 = vmatprep.subr.mxu0 0.0
    %3115 = vmatpush2.msra.mxu0 0.0
    %3116 = vmatprep.subr.mxu0 0.0
    %3117 = vmatpush2.msra.mxu0 0.0
    %3118 = vmatprep.subr.mxu0 0.0
    %3119 = vmatpush2.msra.mxu0 0.0
    %3120 = vmatprep.subr.mxu0 0.0
    %3121 = vmatpush2.msra.mxu0 0.0
    %3122 = vmatprep.subr.mxu0 0.0
    %3123 = vmatpush2.msra.mxu0 0.0
    %3124 = vmatprep.subr.mxu0 0.0
    %3125 = vmatpush2.msra.mxu0 0.0
    %3126 = vmatprep.mubr.f32.mxu0 0.0
    %3127 = vmatmul.mubr.f32.gmra.mxu0 %v3057
    %v3128 = vpop.f32.mrf.mxu0
    %v3129 = vadd.f32 %v3054, %v3128
    %v3130 = vpop.f32.mrf.mxu0
    %3131 = vmatprep.mubr.f32.mxu0 0.0
    %3132 = vmatmul.mubr.f32.gmra.mxu0 %v3060
    %v3133 = vpop.f32.mrf.mxu0
    %v3134 = vadd.f32 %v3054, %v3133
    %v3135 = vpop.f32.mrf.mxu0
    %3136 = vdwg.mxu0
    %s3137 = scalar_lea.vmem %s15, 64
    %v3138 = vld [vmem:[%s3137] sm:$0xff]
    %v3139 = vld [vmem:[%s3137 + $0x8] sm:$0xff]
    %v3140 = vld [vmem:[%s3137 + $0x10] sm:$0xff]
    %v3141 = vld [vmem:[%s3137 + $0x18] sm:$0xff]
    %s3142 = scalar_lea.vmem %s17, 64
    %v3143 = vld [vmem:[%s3142] sm:$0xff]
    %v3144 = vld [vmem:[%s3142 + $0x8] sm:$0xff]
    %v3145 = vld [vmem:[%s3142 + $0x10] sm:$0xff]
    %v3146 = vld [vmem:[%s3142 + $0x18] sm:$0xff]
    %s3147 = scalar_lea.vmem [#allocation5], 2
    %v3148 = vld [vmem:[%s3147] sm:$0x1]
    %s3149 = scalar_lea.vmem %s21, 2
    %v3150 = vld [vmem:[%s3149] sm:$0x1]
    %s3151 = scalar_lea.vmem %s23, 64
    %v3152 = vld [vmem:[%s3151] sm:$0xff]
    %v3153 = vld [vmem:[%s3151 + $0x8] sm:$0xff]
    %v3154 = vld [vmem:[%s3151 + $0x10] sm:$0xff]
    %v3155 = vld [vmem:[%s3151 + $0x18] sm:$0xff]
    %s3156 = scalar_lea.vmem [#allocation7], 2
    %v3157 = vld [vmem:[%s3156] sm:$0x1]
    %s3158 = scalar_lea.vmem %s27, 64
    %v3159 = vld [vmem:[%s3158] sm:$0xff]
    %v3160 = vld [vmem:[%s3158 + $0x8] sm:$0xff]
    %v3161 = vld [vmem:[%s3158 + $0x10] sm:$0xff]
    %v3162 = vld [vmem:[%s3158 + $0x18] sm:$0xff]
    %s3163 = scalar_lea.vmem %s29, 64
    %v3164 = vld [vmem:[%s3163] sm:$0xff]
    %v3165 = vld [vmem:[%s3163 + $0x8] sm:$0xff]
    %v3166 = vld [vmem:[%s3163 + $0x10] sm:$0xff]
    %v3167 = vld [vmem:[%s3163 + $0x18] sm:$0xff]
    %s3168 = scalar_lea.vmem [#allocation8], 2
    %v3169 = vld [vmem:[%s3168] sm:$0x1]
    %s3170 = scalar_lea.vmem %s33, 64
    %v3171 = vld [vmem:[%s3170] sm:$0xff]
    %v3172 = vld [vmem:[%s3170 + $0x8] sm:$0xff]
    %v3173 = vld [vmem:[%s3170 + $0x10] sm:$0xff]
    %v3174 = vld [vmem:[%s3170 + $0x18] sm:$0xff]
    %s3175 = scalar_lea.vmem [#allocation10], 2
    %v3176 = vld [vmem:[%s3175] sm:$0x1]
    %s3177 = scalar_lea.vmem %s37, 64
    %v3178 = vld [vmem:[%s3177] sm:$0xff]
    %v3179 = vld [vmem:[%s3177 + $0x8] sm:$0xff]
    %v3180 = vld [vmem:[%s3177 + $0x10] sm:$0xff]
    %v3181 = vld [vmem:[%s3177 + $0x18] sm:$0xff]
    %s3182 = scalar_lea.vmem [#allocation11], 2
    %v3183 = vld [vmem:[%s3182] sm:$0x1]
    %s3184 = scalar_lea.vmem %s41, 64
    %v3185 = vld [vmem:[%s3184] sm:$0xff]
    %v3186 = vld [vmem:[%s3184 + $0x8] sm:$0xff]
    %v3187 = vld [vmem:[%s3184 + $0x10] sm:$0xff]
    %v3188 = vld [vmem:[%s3184 + $0x18] sm:$0xff]
    %3189 = vmatprep.subr.mxu0 0.0
    %3190 = vmatpush1.msra.mxu0 0.0
    %3191 = vmatprep.subr.mxu0 0.0
    %3192 = vmatpush1.msra.mxu0 0.0
    %3193 = vmatprep.subr.mxu0 0.0
    %3194 = vmatpush1.msra.mxu0 0.0
    %3195 = vmatprep.subr.mxu0 0.0
    %3196 = vmatpush1.msra.mxu0 0.0
    %3197 = vmatprep.subr.mxu0 0.0
    %3198 = vmatpush1.msra.mxu0 0.0
    %3199 = vmatprep.subr.mxu0 0.0
    %3200 = vmatpush1.msra.mxu0 0.0
    %3201 = vmatprep.subr.mxu0 0.0
    %3202 = vmatpush1.msra.mxu0 0.0
    %3203 = vmatprep.subr.mxu0 0.0
    %3204 = vmatpush1.msra.mxu0 0.0
    %3205 = vmatprep.subr.mxu0 0.0
    %3206 = vmatpush1.msra.mxu0 0.0
    %3207 = vmatprep.subr.mxu0 0.0
    %3208 = vmatpush1.msra.mxu0 0.0
    %3209 = vmatprep.subr.mxu0 0.0
    %3210 = vmatpush1.msra.mxu0 0.0
    %3211 = vmatprep.subr.mxu0 0.0
    %3212 = vmatpush1.msra.mxu0 0.0
    %3213 = vmatprep.subr.mxu0 0.0
    %3214 = vmatpush1.msra.mxu0 0.0
    %3215 = vmatprep.subr.mxu0 0.0
    %3216 = vmatpush1.msra.mxu0 0.0
    %3217 = vmatprep.subr.mxu0 0.0
    %3218 = vmatpush1.msra.mxu0 %v3134
    %3219 = vmatprep.subr.mxu0 0.0
    %3220 = vmatpush1.msra.mxu0 %v3129
    %3221 = vmatprep.subr.mxu0 0.0
    %3222 = vmatpush2.msra.mxu0 0.0
    %3223 = vmatprep.subr.mxu0 0.0
    %3224 = vmatpush2.msra.mxu0 0.0
    %3225 = vmatprep.subr.mxu0 0.0
    %3226 = vmatpush2.msra.mxu0 0.0
    %3227 = vmatprep.subr.mxu0 0.0
    %3228 = vmatpush2.msra.mxu0 0.0
    %3229 = vmatprep.subr.mxu0 0.0
    %3230 = vmatpush2.msra.mxu0 0.0
    %3231 = vmatprep.subr.mxu0 0.0
    %3232 = vmatpush2.msra.mxu0 0.0
    %3233 = vmatprep.subr.mxu0 0.0
    %3234 = vmatpush2.msra.mxu0 0.0
    %3235 = vmatprep.subr.mxu0 0.0
    %3236 = vmatpush2.msra.mxu0 0.0
    %3237 = vmatprep.subr.mxu0 0.0
    %3238 = vmatpush2.msra.mxu0 0.0
    %3239 = vmatprep.subr.mxu0 0.0
    %3240 = vmatpush2.msra.mxu0 0.0
    %3241 = vmatprep.subr.mxu0 0.0
    %3242 = vmatpush2.msra.mxu0 0.0
    %3243 = vmatprep.subr.mxu0 0.0
    %3244 = vmatpush2.msra.mxu0 0.0
    %3245 = vmatprep.subr.mxu0 0.0
    %3246 = vmatpush2.msra.mxu0 0.0
    %3247 = vmatprep.subr.mxu0 0.0
    %3248 = vmatpush2.msra.mxu0 0.0
    %3249 = vmatprep.subr.mxu0 0.0
    %3250 = vmatpush2.msra.mxu0 0.0
    %3251 = vmatprep.subr.mxu0 0.0
    %3252 = vmatpush2.msra.mxu0 0.0
    %3253 = vmatprep.mubr.f32.mxu0 0.0
    %3254 = vmatmul.mubr.f32.gmra.mxu0 %v485
    %v3255 = vpop.f32.mrf.mxu0
    %v3256 = vadd.f32 0.0, %v3255
    %v3257 = vpop.f32.mrf.mxu0
    %3258 = vmatprep.mubr.f32.mxu0 0.0
    %3259 = vmatmul.mubr.f32.gmra.mxu0 %v488
    %v3260 = vpop.f32.mrf.mxu0
    %v3261 = vadd.f32 0.0, %v3260
    %v3262 = vpop.f32.mrf.mxu0
    %3263 = vmatprep.mubr.f32.mxu0 0.0
    %3264 = vmatmul.mubr.f32.gmra.mxu0 %v491
    %v3265 = vpop.f32.mrf.mxu0
    %v3266 = vadd.f32 0.0, %v3265
    %v3267 = vpop.f32.mrf.mxu0
    %3268 = vmatprep.mubr.f32.mxu0 0.0
    %3269 = vmatmul.mubr.f32.gmra.mxu0 %v494
    %v3270 = vpop.f32.mrf.mxu0
    %v3271 = vadd.f32 0.0, %v3270
    %v3272 = vpop.f32.mrf.mxu0
    %3273 = vmatprep.mubr.f32.mxu0 0.0
    %3274 = vmatmul.mubr.f32.gmra.mxu0 %v497
    %v3275 = vpop.f32.mrf.mxu0
    %v3276 = vadd.f32 0.0, %v3275
    %v3277 = vpop.f32.mrf.mxu0
    %3278 = vmatprep.mubr.f32.mxu0 0.0
    %3279 = vmatmul.mubr.f32.gmra.mxu0 %v500
    %v3280 = vpop.f32.mrf.mxu0
    %v3281 = vadd.f32 0.0, %v3280
    %v3282 = vpop.f32.mrf.mxu0
    %3283 = vmatprep.mubr.f32.mxu0 0.0
    %3284 = vmatmul.mubr.f32.gmra.mxu0 %v503
    %v3285 = vpop.f32.mrf.mxu0
    %v3286 = vadd.f32 0.0, %v3285
    %v3287 = vpop.f32.mrf.mxu0
    %3288 = vmatprep.mubr.f32.mxu0 0.0
    %3289 = vmatmul.mubr.f32.gmra.mxu0 %v506
    %v3290 = vpop.f32.mrf.mxu0
    %v3291 = vadd.f32 0.0, %v3290
    %v3292 = vpop.f32.mrf.mxu0
    %3293 = vdwg.mxu0
    %3294 = vmatprep.subr.mxu0 0.0
    %3295 = vmatpush1.msra.mxu0 0.0
    %3296 = vmatprep.subr.mxu0 0.0
    %3297 = vmatpush1.msra.mxu0 0.0
    %3298 = vmatprep.subr.mxu0 0.0
    %3299 = vmatpush1.msra.mxu0 0.0
    %3300 = vmatprep.subr.mxu0 0.0
    %3301 = vmatpush1.msra.mxu0 0.0
    %3302 = vmatprep.subr.mxu0 0.0
    %3303 = vmatpush1.msra.mxu0 0.0
    %3304 = vmatprep.subr.mxu0 0.0
    %3305 = vmatpush1.msra.mxu0 0.0
    %3306 = vmatprep.subr.mxu0 0.0
    %3307 = vmatpush1.msra.mxu0 0.0
    %3308 = vmatprep.subr.mxu0 0.0
    %3309 = vmatpush1.msra.mxu0 0.0
    %3310 = vmatprep.subr.mxu0 0.0
    %3311 = vmatpush1.msra.mxu0 0.0
    %3312 = vmatprep.subr.mxu0 0.0
    %3313 = vmatpush1.msra.mxu0 0.0
    %3314 = vmatprep.subr.mxu0 0.0
    %3315 = vmatpush1.msra.mxu0 0.0
    %3316 = vmatprep.subr.mxu0 0.0
    %3317 = vmatpush1.msra.mxu0 0.0
    %3318 = vmatprep.subr.mxu0 0.0
    %3319 = vmatpush1.msra.mxu0 0.0
    %3320 = vmatprep.subr.mxu0 0.0
    %3321 = vmatpush1.msra.mxu0 0.0
    %3322 = vmatprep.subr.mxu0 0.0
    %3323 = vmatpush1.msra.mxu0 %v2865
    %3324 = vmatprep.subr.mxu0 0.0
    %3325 = vmatpush1.msra.mxu0 %v2864
    %3326 = vmatprep.subr.mxu0 0.0
    %3327 = vmatpush2.msra.mxu0 0.0
    %3328 = vmatprep.subr.mxu0 0.0
    %3329 = vmatpush2.msra.mxu0 0.0
    %3330 = vmatprep.subr.mxu0 0.0
    %3331 = vmatpush2.msra.mxu0 0.0
    %3332 = vmatprep.subr.mxu0 0.0
    %3333 = vmatpush2.msra.mxu0 0.0
    %3334 = vmatprep.subr.mxu0 0.0
    %3335 = vmatpush2.msra.mxu0 0.0
    %3336 = vmatprep.subr.mxu0 0.0
    %3337 = vmatpush2.msra.mxu0 0.0
    %3338 = vmatprep.subr.mxu0 0.0
    %3339 = vmatpush2.msra.mxu0 0.0
    %3340 = vmatprep.subr.mxu0 0.0
    %3341 = vmatpush2.msra.mxu0 0.0
    %3342 = vmatprep.subr.mxu0 0.0
    %3343 = vmatpush2.msra.mxu0 0.0
    %3344 = vmatprep.subr.mxu0 0.0
    %3345 = vmatpush2.msra.mxu0 0.0
    %3346 = vmatprep.subr.mxu0 0.0
    %3347 = vmatpush2.msra.mxu0 0.0
    %3348 = vmatprep.subr.mxu0 0.0
    %3349 = vmatpush2.msra.mxu0 0.0
    %3350 = vmatprep.subr.mxu0 0.0
    %3351 = vmatpush2.msra.mxu0 0.0
    %3352 = vmatprep.subr.mxu0 0.0
    %3353 = vmatpush2.msra.mxu0 0.0
    %3354 = vmatprep.subr.mxu0 0.0
    %3355 = vmatpush2.msra.mxu0 0.0
    %3356 = vmatprep.subr.mxu0 0.0
    %3357 = vmatpush2.msra.mxu0 0.0
    %3358 = vmatprep.mubr.f32.mxu0 0.0
    %3359 = vmatmul.mubr.f32.gmra.mxu0 %v485
    %v3360 = vpop.f32.mrf.mxu0
    %v3361 = vadd.f32 0.0, %v3360
    %v3362 = vpop.f32.mrf.mxu0
    %3363 = vmatprep.mubr.f32.mxu0 0.0
    %3364 = vmatmul.mubr.f32.gmra.mxu0 %v488
    %v3365 = vpop.f32.mrf.mxu0
    %v3366 = vadd.f32 0.0, %v3365
    %v3367 = vpop.f32.mrf.mxu0
    %3368 = vmatprep.mubr.f32.mxu0 0.0
    %3369 = vmatmul.mubr.f32.gmra.mxu0 %v491
    %v3370 = vpop.f32.mrf.mxu0
    %v3371 = vadd.f32 0.0, %v3370
    %v3372 = vpop.f32.mrf.mxu0
    %3373 = vmatprep.mubr.f32.mxu0 0.0
    %3374 = vmatmul.mubr.f32.gmra.mxu0 %v494
    %v3375 = vpop.f32.mrf.mxu0
    %v3376 = vadd.f32 0.0, %v3375
    %v3377 = vpop.f32.mrf.mxu0
    %3378 = vmatprep.mubr.f32.mxu0 0.0
    %3379 = vmatmul.mubr.f32.gmra.mxu0 %v497
    %v3380 = vpop.f32.mrf.mxu0
    %v3381 = vadd.f32 0.0, %v3380
    %v3382 = vpop.f32.mrf.mxu0
    %3383 = vmatprep.mubr.f32.mxu0 0.0
    %3384 = vmatmul.mubr.f32.gmra.mxu0 %v500
    %v3385 = vpop.f32.mrf.mxu0
    %v3386 = vadd.f32 0.0, %v3385
    %v3387 = vpop.f32.mrf.mxu0
    %3388 = vmatprep.mubr.f32.mxu0 0.0
    %3389 = vmatmul.mubr.f32.gmra.mxu0 %v503
    %v3390 = vpop.f32.mrf.mxu0
    %v3391 = vadd.f32 0.0, %v3390
    %v3392 = vpop.f32.mrf.mxu0
    %3393 = vmatprep.mubr.f32.mxu0 0.0
    %3394 = vmatmul.mubr.f32.gmra.mxu0 %v506
    %v3395 = vpop.f32.mrf.mxu0
    %v3396 = vadd.f32 0.0, %v3395
    %v3397 = vpop.f32.mrf.mxu0
    %3398 = vdwg.mxu0
    %v3399 = vsub.f32 %v3361, %v3381
    %v3400 = vsub.f32 %v3366, %v3386
    %v3401 = vsub.f32 %v3371, %v3391
    %v3402 = vsub.f32 %v3376, %v3396
    %v3403 = vmul.f32 %v3399, %v3399
    %v3404 = vmul.f32 %v3400, %v3400
    %v3405 = vmul.f32 %v3401, %v3401
    %v3406 = vmul.f32 %v3402, %v3402
    %v3407 = vsel %vm726, %v3403, 0.0
    %3408 = vadd.xlane.f32.xlu0 %v3407
    %v3409 = vpop.xlane.xlu0 %3408
    %v3410 = vsel %vm726, %v3404, 0.0
    %3411 = vadd.xlane.f32.xlu0 %v3410
    %v3412 = vpop.xlane.xlu0 %3411
    %v3413 = vsel %vm726, %v3405, 0.0
    %3414 = vadd.xlane.f32.xlu0 %v3413
    %v3415 = vpop.xlane.xlu0 %3414
    %v3416 = vsel %vm726, %v3406, 0.0
    %3417 = vadd.xlane.f32.xlu0 %v3416
    %v3418 = vpop.xlane.xlu0 %3417
    %v3420 = vsel %vm336, %v3276, 0
    %v3423 = vsel %vm336, %v3281, 0
    %v3426 = vsel %vm336, %v3286, 0
    %v3429 = vsel %vm336, %v3291, 0
    %3431 = vmatprep.subr.mxu0 0.0
    %3432 = vmatpush1.msra.mxu0 0.0
    %3433 = vmatprep.subr.mxu0 0.0
    %3434 = vmatpush1.msra.mxu0 0.0
    %3435 = vmatprep.subr.mxu0 0.0
    %3436 = vmatpush1.msra.mxu0 0.0
    %3437 = vmatprep.subr.mxu0 0.0
    %3438 = vmatpush1.msra.mxu0 0.0
    %3439 = vmatprep.subr.mxu0 0.0
    %3440 = vmatpush1.msra.mxu0 0.0
    %3441 = vmatprep.subr.mxu0 0.0
    %3442 = vmatpush1.msra.mxu0 0.0
    %3443 = vmatprep.subr.mxu0 0.0
    %3444 = vmatpush1.msra.mxu0 0.0
    %3445 = vmatprep.subr.mxu0 0.0
    %3446 = vmatpush1.msra.mxu0 0.0
    %3447 = vmatprep.subr.mxu0 0.0
    %3448 = vmatpush1.msra.mxu0 0.0
    %3449 = vmatprep.subr.mxu0 0.0
    %3450 = vmatpush1.msra.mxu0 0.0
    %3451 = vmatprep.subr.mxu0 0.0
    %3452 = vmatpush1.msra.mxu0 0.0
    %3453 = vmatprep.subr.mxu0 0.0
    %3454 = vmatpush1.msra.mxu0 0.0
    %3455 = vmatprep.subr.mxu0 0.0
    %3456 = vmatpush1.msra.mxu0 %v3146
    %3457 = vmatprep.subr.mxu0 0.0
    %3458 = vmatpush1.msra.mxu0 %v3145
    %3459 = vmatprep.subr.mxu0 0.0
    %3460 = vmatpush1.msra.mxu0 %v3144
    %3461 = vmatprep.subr.mxu0 0.0
    %3462 = vmatpush1.msra.mxu0 %v3143
    %3463 = vmatprep.subr.mxu0 0.0
    %3464 = vmatpush2.msra.mxu0 0.0
    %3465 = vmatprep.subr.mxu0 0.0
    %3466 = vmatpush2.msra.mxu0 0.0
    %3467 = vmatprep.subr.mxu0 0.0
    %3468 = vmatpush2.msra.mxu0 0.0
    %3469 = vmatprep.subr.mxu0 0.0
    %3470 = vmatpush2.msra.mxu0 0.0
    %3471 = vmatprep.subr.mxu0 0.0
    %3472 = vmatpush2.msra.mxu0 0.0
    %3473 = vmatprep.subr.mxu0 0.0
    %3474 = vmatpush2.msra.mxu0 0.0
    %3475 = vmatprep.subr.mxu0 0.0
    %3476 = vmatpush2.msra.mxu0 0.0
    %3477 = vmatprep.subr.mxu0 0.0
    %3478 = vmatpush2.msra.mxu0 0.0
    %3479 = vmatprep.subr.mxu0 0.0
    %3480 = vmatpush2.msra.mxu0 0.0
    %3481 = vmatprep.subr.mxu0 0.0
    %3482 = vmatpush2.msra.mxu0 0.0
    %3483 = vmatprep.subr.mxu0 0.0
    %3484 = vmatpush2.msra.mxu0 0.0
    %3485 = vmatprep.subr.mxu0 0.0
    %3486 = vmatpush2.msra.mxu0 0.0
    %3487 = vmatprep.subr.mxu0 0.0
    %3488 = vmatpush2.msra.mxu0 0.0
    %3489 = vmatprep.subr.mxu0 0.0
    %3490 = vmatpush2.msra.mxu0 0.0
    %3491 = vmatprep.subr.mxu0 0.0
    %3492 = vmatpush2.msra.mxu0 0.0
    %3493 = vmatprep.subr.mxu0 0.0
    %3494 = vmatpush2.msra.mxu0 0.0
    %3495 = vmatprep.mubr.f32.mxu0 0.0
    %3496 = vmatmul.mubr.f32.gmra.mxu0 %v3420
    %v3497 = vpop.f32.mrf.mxu0
    %v3498 = vadd.f32 0.0, %v3497
    %v3499 = vpop.f32.mrf.mxu0
    %3500 = vmatprep.mubr.f32.mxu0 0.0
    %3501 = vmatmul.mubr.f32.gmra.mxu0 %v3423
    %v3502 = vpop.f32.mrf.mxu0
    %v3503 = vadd.f32 0.0, %v3502
    %v3504 = vpop.f32.mrf.mxu0
    %3505 = vmatprep.mubr.f32.mxu0 0.0
    %3506 = vmatmul.mubr.f32.gmra.mxu0 %v3426
    %v3507 = vpop.f32.mrf.mxu0
    %v3508 = vadd.f32 0.0, %v3507
    %v3509 = vpop.f32.mrf.mxu0
    %3510 = vmatprep.mubr.f32.mxu0 0.0
    %3511 = vmatmul.mubr.f32.gmra.mxu0 %v3429
    %v3512 = vpop.f32.mrf.mxu0
    %v3513 = vadd.f32 0.0, %v3512
    %v3514 = vpop.f32.mrf.mxu0
    %3515 = vdwg.mxu0
    %v3517 = vsel %vm336, %v3256, 0
    %v3520 = vsel %vm336, %v3261, 0
    %v3523 = vsel %vm336, %v3266, 0
    %v3526 = vsel %vm336, %v3271, 0
    %3528 = vmatprep.subr.mxu0 0.0
    %3529 = vmatpush1.msra.mxu0 0.0
    %3530 = vmatprep.subr.mxu0 0.0
    %3531 = vmatpush1.msra.mxu0 0.0
    %3532 = vmatprep.subr.mxu0 0.0
    %3533 = vmatpush1.msra.mxu0 0.0
    %3534 = vmatprep.subr.mxu0 0.0
    %3535 = vmatpush1.msra.mxu0 0.0
    %3536 = vmatprep.subr.mxu0 0.0
    %3537 = vmatpush1.msra.mxu0 0.0
    %3538 = vmatprep.subr.mxu0 0.0
    %3539 = vmatpush1.msra.mxu0 0.0
    %3540 = vmatprep.subr.mxu0 0.0
    %3541 = vmatpush1.msra.mxu0 0.0
    %3542 = vmatprep.subr.mxu0 0.0
    %3543 = vmatpush1.msra.mxu0 0.0
    %3544 = vmatprep.subr.mxu0 0.0
    %3545 = vmatpush1.msra.mxu0 0.0
    %3546 = vmatprep.subr.mxu0 0.0
    %3547 = vmatpush1.msra.mxu0 0.0
    %3548 = vmatprep.subr.mxu0 0.0
    %3549 = vmatpush1.msra.mxu0 0.0
    %3550 = vmatprep.subr.mxu0 0.0
    %3551 = vmatpush1.msra.mxu0 0.0
    %3552 = vmatprep.subr.mxu0 0.0
    %3553 = vmatpush1.msra.mxu0 %v3141
    %3554 = vmatprep.subr.mxu0 0.0
    %3555 = vmatpush1.msra.mxu0 %v3140
    %3556 = vmatprep.subr.mxu0 0.0
    %3557 = vmatpush1.msra.mxu0 %v3139
    %3558 = vmatprep.subr.mxu0 0.0
    %3559 = vmatpush1.msra.mxu0 %v3138
    %3560 = vmatprep.subr.mxu0 0.0
    %3561 = vmatpush2.msra.mxu0 0.0
    %3562 = vmatprep.subr.mxu0 0.0
    %3563 = vmatpush2.msra.mxu0 0.0
    %3564 = vmatprep.subr.mxu0 0.0
    %3565 = vmatpush2.msra.mxu0 0.0
    %3566 = vmatprep.subr.mxu0 0.0
    %3567 = vmatpush2.msra.mxu0 0.0
    %3568 = vmatprep.subr.mxu0 0.0
    %3569 = vmatpush2.msra.mxu0 0.0
    %3570 = vmatprep.subr.mxu0 0.0
    %3571 = vmatpush2.msra.mxu0 0.0
    %3572 = vmatprep.subr.mxu0 0.0
    %3573 = vmatpush2.msra.mxu0 0.0
    %3574 = vmatprep.subr.mxu0 0.0
    %3575 = vmatpush2.msra.mxu0 0.0
    %3576 = vmatprep.subr.mxu0 0.0
    %3577 = vmatpush2.msra.mxu0 0.0
    %3578 = vmatprep.subr.mxu0 0.0
    %3579 = vmatpush2.msra.mxu0 0.0
    %3580 = vmatprep.subr.mxu0 0.0
    %3581 = vmatpush2.msra.mxu0 0.0
    %3582 = vmatprep.subr.mxu0 0.0
    %3583 = vmatpush2.msra.mxu0 0.0
    %3584 = vmatprep.subr.mxu0 0.0
    %3585 = vmatpush2.msra.mxu0 0.0
    %3586 = vmatprep.subr.mxu0 0.0
    %3587 = vmatpush2.msra.mxu0 0.0
    %3588 = vmatprep.subr.mxu0 0.0
    %3589 = vmatpush2.msra.mxu0 0.0
    %3590 = vmatprep.subr.mxu0 0.0
    %3591 = vmatpush2.msra.mxu0 0.0
    %3592 = vmatprep.mubr.f32.mxu0 0.0
    %3593 = vmatmul.mubr.f32.gmra.mxu0 %v3517
    %v3594 = vpop.f32.mrf.mxu0
    %v3595 = vadd.f32 %v3498, %v3594
    %v3596 = vpop.f32.mrf.mxu0
    %3597 = vmatprep.mubr.f32.mxu0 0.0
    %3598 = vmatmul.mubr.f32.gmra.mxu0 %v3520
    %v3599 = vpop.f32.mrf.mxu0
    %v3600 = vadd.f32 %v3503, %v3599
    %v3601 = vpop.f32.mrf.mxu0
    %3602 = vmatprep.mubr.f32.mxu0 0.0
    %3603 = vmatmul.mubr.f32.gmra.mxu0 %v3523
    %v3604 = vpop.f32.mrf.mxu0
    %v3605 = vadd.f32 %v3508, %v3604
    %v3606 = vpop.f32.mrf.mxu0
    %3607 = vmatprep.mubr.f32.mxu0 0.0
    %3608 = vmatmul.mubr.f32.gmra.mxu0 %v3526
    %v3609 = vpop.f32.mrf.mxu0
    %v3610 = vadd.f32 %v3513, %v3609
    %v3611 = vpop.f32.mrf.mxu0
    %3612 = vdwg.mxu0
    %v3614 = vlaneseq
    %v3615 = vshrl.u32 %v3614, 7
    %v3616 = vsub.s32 0, %v3615
    %v3617 = vrot.slane %v3148, %v3616
    %v3619 = vmul.f32 %v3409, %v3617
    %v3620 = vmul.f32 %v3412, %v3617
    %v3621 = vmul.f32 %v3415, %v3617
    %v3622 = vmul.f32 %v3418, %v3617
    %v3623 = vadd.f32 %v3595, %v3619
    %v3624 = vadd.f32 %v3600, %v3620
    %v3625 = vadd.f32 %v3605, %v3621
    %v3626 = vadd.f32 %v3610, %v3622
    %v3628 = vlaneseq
    %v3629 = vshrl.u32 %v3628, 7
    %v3630 = vsub.s32 0, %v3629
    %v3631 = vrot.slane %v3150, %v3630
    %v3633 = vadd.f32 %v3623, %v3631
    %v3634 = vadd.f32 %v3624, %v3631
    %v3635 = vadd.f32 %v3625, %v3631
    %v3636 = vadd.f32 %v3626, %v3631
    %v3637 = vxor.u32 %v3633, 2147483648
    %v3638 = vxor.u32 %v3634, 2147483648
    %v3639 = vxor.u32 %v3635, 2147483648
    %v3640 = vxor.u32 %v3636, 2147483648
    %v3641 = vmul.f32 %v3637, 1.442695
    %v3642 = vpow.pop %v3641
    %v3643 = vmul.f32 %v3638, 1.442695
    %v3644 = vpow.pop %v3643
    %v3645 = vmul.f32 %v3639, 1.442695
    %v3646 = vpow.pop %v3645
    %v3647 = vmul.f32 %v3640, 1.442695
    %v3648 = vpow.pop %v3647
    %v3649 = vadd.f32 %v3642, 1.0
    %v3650 = vadd.f32 %v3644, 1.0
    %v3651 = vadd.f32 %v3646, 1.0
    %v3652 = vadd.f32 %v3648, 1.0
    %v3653 = vrcp.pop %v3649
    %v3654 = vmul.f32 1.0, %v3653
    %v3655 = vrcp.pop %v3650
    %v3656 = vmul.f32 1.0, %v3655
    %v3657 = vrcp.pop %v3651
    %v3658 = vmul.f32 1.0, %v3657
    %v3659 = vrcp.pop %v3652
    %v3660 = vmul.f32 1.0, %v3659
    %v3661 = vmul.f32 %v3633, %v3654
    %v3662 = vmul.f32 %v3634, %v3656
    %v3663 = vmul.f32 %v3635, %v3658
    %v3664 = vmul.f32 %v3636, %v3660
    %v3666 = vlaneseq
    %v3667 = vshrl.u32 %v3666, 7
    %v3668 = vsub.s32 0, %v3667
    %v3669 = vrot.slane %v3157, %v3668
    %v3672 = vsel %vm336, %v3661, 0
    %v3675 = vsel %vm336, %v3662, 0
    %v3678 = vsel %vm336, %v3663, 0
    %v3681 = vsel %vm336, %v3664, 0
    %3683 = vmatprep.subr.mxu0 0.0
    %3684 = vmatpush1.msra.mxu0 0.0
    %3685 = vmatprep.subr.mxu0 0.0
    %3686 = vmatpush1.msra.mxu0 0.0
    %3687 = vmatprep.subr.mxu0 0.0
    %3688 = vmatpush1.msra.mxu0 0.0
    %3689 = vmatprep.subr.mxu0 0.0
    %3690 = vmatpush1.msra.mxu0 0.0
    %3691 = vmatprep.subr.mxu0 0.0
    %3692 = vmatpush1.msra.mxu0 0.0
    %3693 = vmatprep.subr.mxu0 0.0
    %3694 = vmatpush1.msra.mxu0 0.0
    %3695 = vmatprep.subr.mxu0 0.0
    %3696 = vmatpush1.msra.mxu0 0.0
    %3697 = vmatprep.subr.mxu0 0.0
    %3698 = vmatpush1.msra.mxu0 0.0
    %3699 = vmatprep.subr.mxu0 0.0
    %3700 = vmatpush1.msra.mxu0 0.0
    %3701 = vmatprep.subr.mxu0 0.0
    %3702 = vmatpush1.msra.mxu0 0.0
    %3703 = vmatprep.subr.mxu0 0.0
    %3704 = vmatpush1.msra.mxu0 0.0
    %3705 = vmatprep.subr.mxu0 0.0
    %3706 = vmatpush1.msra.mxu0 0.0
    %3707 = vmatprep.subr.mxu0 0.0
    %3708 = vmatpush1.msra.mxu0 %v3155
    %3709 = vmatprep.subr.mxu0 0.0
    %3710 = vmatpush1.msra.mxu0 %v3154
    %3711 = vmatprep.subr.mxu0 0.0
    %3712 = vmatpush1.msra.mxu0 %v3153
    %3713 = vmatprep.subr.mxu0 0.0
    %3714 = vmatpush1.msra.mxu0 %v3152
    %3715 = vmatprep.subr.mxu0 0.0
    %3716 = vmatpush2.msra.mxu0 0.0
    %3717 = vmatprep.subr.mxu0 0.0
    %3718 = vmatpush2.msra.mxu0 0.0
    %3719 = vmatprep.subr.mxu0 0.0
    %3720 = vmatpush2.msra.mxu0 0.0
    %3721 = vmatprep.subr.mxu0 0.0
    %3722 = vmatpush2.msra.mxu0 0.0
    %3723 = vmatprep.subr.mxu0 0.0
    %3724 = vmatpush2.msra.mxu0 0.0
    %3725 = vmatprep.subr.mxu0 0.0
    %3726 = vmatpush2.msra.mxu0 0.0
    %3727 = vmatprep.subr.mxu0 0.0
    %3728 = vmatpush2.msra.mxu0 0.0
    %3729 = vmatprep.subr.mxu0 0.0
    %3730 = vmatpush2.msra.mxu0 0.0
    %3731 = vmatprep.subr.mxu0 0.0
    %3732 = vmatpush2.msra.mxu0 0.0
    %3733 = vmatprep.subr.mxu0 0.0
    %3734 = vmatpush2.msra.mxu0 0.0
    %3735 = vmatprep.subr.mxu0 0.0
    %3736 = vmatpush2.msra.mxu0 0.0
    %3737 = vmatprep.subr.mxu0 0.0
    %3738 = vmatpush2.msra.mxu0 0.0
    %3739 = vmatprep.subr.mxu0 0.0
    %3740 = vmatpush2.msra.mxu0 0.0
    %3741 = vmatprep.subr.mxu0 0.0
    %3742 = vmatpush2.msra.mxu0 0.0
    %3743 = vmatprep.subr.mxu0 0.0
    %3744 = vmatpush2.msra.mxu0 0.0
    %3745 = vmatprep.subr.mxu0 0.0
    %3746 = vmatpush2.msra.mxu0 0.0
    %3747 = vmatprep.mubr.f32.mxu0 0.0
    %3748 = vmatmul.mubr.f32.gmra.mxu0 %v3672
    %v3749 = vpop.f32.mrf.mxu0
    %v3750 = vadd.f32 %v3669, %v3749
    %v3751 = vpop.f32.mrf.mxu0
    %3752 = vmatprep.mubr.f32.mxu0 0.0
    %3753 = vmatmul.mubr.f32.gmra.mxu0 %v3675
    %v3754 = vpop.f32.mrf.mxu0
    %v3755 = vadd.f32 %v3669, %v3754
    %v3756 = vpop.f32.mrf.mxu0
    %3757 = vmatprep.mubr.f32.mxu0 0.0
    %3758 = vmatmul.mubr.f32.gmra.mxu0 %v3678
    %v3759 = vpop.f32.mrf.mxu0
    %v3760 = vadd.f32 %v3669, %v3759
    %v3761 = vpop.f32.mrf.mxu0
    %3762 = vmatprep.mubr.f32.mxu0 0.0
    %3763 = vmatmul.mubr.f32.gmra.mxu0 %v3681
    %v3764 = vpop.f32.mrf.mxu0
    %v3765 = vadd.f32 %v3669, %v3764
    %v3766 = vpop.f32.mrf.mxu0
    %3767 = vdwg.mxu0
    %v3768 = vxor.u32 %v3750, 2147483648
    %v3769 = vxor.u32 %v3755, 2147483648
    %v3770 = vxor.u32 %v3760, 2147483648
    %v3771 = vxor.u32 %v3765, 2147483648
    %v3772 = vmul.f32 %v3768, 1.442695
    %v3773 = vpow.pop %v3772
    %v3774 = vmul.f32 %v3769, 1.442695
    %v3775 = vpow.pop %v3774
    %v3776 = vmul.f32 %v3770, 1.442695
    %v3777 = vpow.pop %v3776
    %v3778 = vmul.f32 %v3771, 1.442695
    %v3779 = vpow.pop %v3778
    %v3780 = vadd.f32 %v3773, 1.0
    %v3781 = vadd.f32 %v3775, 1.0
    %v3782 = vadd.f32 %v3777, 1.0
    %v3783 = vadd.f32 %v3779, 1.0
    %v3784 = vrcp.pop %v3780
    %v3785 = vmul.f32 1.0, %v3784
    %v3786 = vrcp.pop %v3781
    %v3787 = vmul.f32 1.0, %v3786
    %v3788 = vrcp.pop %v3782
    %v3789 = vmul.f32 1.0, %v3788
    %v3790 = vrcp.pop %v3783
    %v3791 = vmul.f32 1.0, %v3790
    %v3792 = vmul.f32 %v3750, %v3785
    %v3793 = vmul.f32 %v3755, %v3787
    %v3794 = vmul.f32 %v3760, %v3789
    %v3795 = vmul.f32 %v3765, %v3791
    %v3797 = vlaneseq
    %v3798 = vshrl.u32 %v3797, 7
    %v3799 = vsub.s32 0, %v3798
    %v3800 = vrot.slane %v3183, %v3799
    %v3803 = vsel %vm336, %v3792, 0
    %v3806 = vsel %vm336, %v3793, 0
    %v3809 = vsel %vm336, %v3794, 0
    %v3812 = vsel %vm336, %v3795, 0
    %3814 = vmatprep.subr.mxu0 0.0
    %3815 = vmatpush1.msra.mxu0 0.0
    %3816 = vmatprep.subr.mxu0 0.0
    %3817 = vmatpush1.msra.mxu0 0.0
    %3818 = vmatprep.subr.mxu0 0.0
    %3819 = vmatpush1.msra.mxu0 0.0
    %3820 = vmatprep.subr.mxu0 0.0
    %3821 = vmatpush1.msra.mxu0 0.0
    %3822 = vmatprep.subr.mxu0 0.0
    %3823 = vmatpush1.msra.mxu0 0.0
    %3824 = vmatprep.subr.mxu0 0.0
    %3825 = vmatpush1.msra.mxu0 0.0
    %3826 = vmatprep.subr.mxu0 0.0
    %3827 = vmatpush1.msra.mxu0 0.0
    %3828 = vmatprep.subr.mxu0 0.0
    %3829 = vmatpush1.msra.mxu0 0.0
    %3830 = vmatprep.subr.mxu0 0.0
    %3831 = vmatpush1.msra.mxu0 0.0
    %3832 = vmatprep.subr.mxu0 0.0
    %3833 = vmatpush1.msra.mxu0 0.0
    %3834 = vmatprep.subr.mxu0 0.0
    %3835 = vmatpush1.msra.mxu0 0.0
    %3836 = vmatprep.subr.mxu0 0.0
    %3837 = vmatpush1.msra.mxu0 0.0
    %3838 = vmatprep.subr.mxu0 0.0
    %3839 = vmatpush1.msra.mxu0 %v3181
    %3840 = vmatprep.subr.mxu0 0.0
    %3841 = vmatpush1.msra.mxu0 %v3180
    %3842 = vmatprep.subr.mxu0 0.0
    %3843 = vmatpush1.msra.mxu0 %v3179
    %3844 = vmatprep.subr.mxu0 0.0
    %3845 = vmatpush1.msra.mxu0 %v3178
    %3846 = vmatprep.subr.mxu0 0.0
    %3847 = vmatpush2.msra.mxu0 0.0
    %3848 = vmatprep.subr.mxu0 0.0
    %3849 = vmatpush2.msra.mxu0 0.0
    %3850 = vmatprep.subr.mxu0 0.0
    %3851 = vmatpush2.msra.mxu0 0.0
    %3852 = vmatprep.subr.mxu0 0.0
    %3853 = vmatpush2.msra.mxu0 0.0
    %3854 = vmatprep.subr.mxu0 0.0
    %3855 = vmatpush2.msra.mxu0 0.0
    %3856 = vmatprep.subr.mxu0 0.0
    %3857 = vmatpush2.msra.mxu0 0.0
    %3858 = vmatprep.subr.mxu0 0.0
    %3859 = vmatpush2.msra.mxu0 0.0
    %3860 = vmatprep.subr.mxu0 0.0
    %3861 = vmatpush2.msra.mxu0 0.0
    %3862 = vmatprep.subr.mxu0 0.0
    %3863 = vmatpush2.msra.mxu0 0.0
    %3864 = vmatprep.subr.mxu0 0.0
    %3865 = vmatpush2.msra.mxu0 0.0
    %3866 = vmatprep.subr.mxu0 0.0
    %3867 = vmatpush2.msra.mxu0 0.0
    %3868 = vmatprep.subr.mxu0 0.0
    %3869 = vmatpush2.msra.mxu0 0.0
    %3870 = vmatprep.subr.mxu0 0.0
    %3871 = vmatpush2.msra.mxu0 0.0
    %3872 = vmatprep.subr.mxu0 0.0
    %3873 = vmatpush2.msra.mxu0 0.0
    %3874 = vmatprep.subr.mxu0 0.0
    %3875 = vmatpush2.msra.mxu0 0.0
    %3876 = vmatprep.subr.mxu0 0.0
    %3877 = vmatpush2.msra.mxu0 0.0
    %3878 = vmatprep.mubr.f32.mxu0 0.0
    %3879 = vmatmul.mubr.f32.gmra.mxu0 %v3803
    %v3880 = vpop.f32.mrf.mxu0
    %v3881 = vadd.f32 %v3800, %v3880
    %v3882 = vpop.f32.mrf.mxu0
    %3883 = vmatprep.mubr.f32.mxu0 0.0
    %3884 = vmatmul.mubr.f32.gmra.mxu0 %v3806
    %v3885 = vpop.f32.mrf.mxu0
    %v3886 = vadd.f32 %v3800, %v3885
    %v3887 = vpop.f32.mrf.mxu0
    %3888 = vmatprep.mubr.f32.mxu0 0.0
    %3889 = vmatmul.mubr.f32.gmra.mxu0 %v3809
    %v3890 = vpop.f32.mrf.mxu0
    %v3891 = vadd.f32 %v3800, %v3890
    %v3892 = vpop.f32.mrf.mxu0
    %3893 = vmatprep.mubr.f32.mxu0 0.0
    %3894 = vmatmul.mubr.f32.gmra.mxu0 %v3812
    %v3895 = vpop.f32.mrf.mxu0
    %v3896 = vadd.f32 %v3800, %v3895
    %v3897 = vpop.f32.mrf.mxu0
    %3898 = vdwg.mxu0
    %v3899 = vxor.u32 %v3881, 2147483648
    %v3900 = vxor.u32 %v3886, 2147483648
    %v3901 = vxor.u32 %v3891, 2147483648
    %v3902 = vxor.u32 %v3896, 2147483648
    %v3903 = vmul.f32 %v3899, 1.442695
    %v3904 = vpow.pop %v3903
    %v3905 = vmul.f32 %v3900, 1.442695
    %v3906 = vpow.pop %v3905
    %v3907 = vmul.f32 %v3901, 1.442695
    %v3908 = vpow.pop %v3907
    %v3909 = vmul.f32 %v3902, 1.442695
    %v3910 = vpow.pop %v3909
    %v3911 = vadd.f32 %v3904, 1.0
    %v3912 = vadd.f32 %v3906, 1.0
    %v3913 = vadd.f32 %v3908, 1.0
    %v3914 = vadd.f32 %v3910, 1.0
    %v3915 = vrcp.pop %v3911
    %v3916 = vmul.f32 1.0, %v3915
    %v3917 = vrcp.pop %v3912
    %v3918 = vmul.f32 1.0, %v3917
    %v3919 = vrcp.pop %v3913
    %v3920 = vmul.f32 1.0, %v3919
    %v3921 = vrcp.pop %v3914
    %v3922 = vmul.f32 1.0, %v3921
    %v3923 = vmul.f32 %v3881, %v3916
    %v3924 = vmul.f32 %v3886, %v3918
    %v3925 = vmul.f32 %v3891, %v3920
    %v3926 = vmul.f32 %v3896, %v3922
    %v3928 = vsel %vm336, %v3923, 0
    %v3931 = vsel %vm336, %v3924, 0
    %v3934 = vsel %vm336, %v3925, 0
    %v3937 = vsel %vm336, %v3926, 0
    %3939 = vmatprep.subr.mxu0 0.0
    %3940 = vmatpush1.msra.mxu0 0.0
    %3941 = vmatprep.subr.mxu0 0.0
    %3942 = vmatpush1.msra.mxu0 0.0
    %3943 = vmatprep.subr.mxu0 0.0
    %3944 = vmatpush1.msra.mxu0 0.0
    %3945 = vmatprep.subr.mxu0 0.0
    %3946 = vmatpush1.msra.mxu0 0.0
    %3947 = vmatprep.subr.mxu0 0.0
    %3948 = vmatpush1.msra.mxu0 0.0
    %3949 = vmatprep.subr.mxu0 0.0
    %3950 = vmatpush1.msra.mxu0 0.0
    %3951 = vmatprep.subr.mxu0 0.0
    %3952 = vmatpush1.msra.mxu0 0.0
    %3953 = vmatprep.subr.mxu0 0.0
    %3954 = vmatpush1.msra.mxu0 0.0
    %3955 = vmatprep.subr.mxu0 0.0
    %3956 = vmatpush1.msra.mxu0 0.0
    %3957 = vmatprep.subr.mxu0 0.0
    %3958 = vmatpush1.msra.mxu0 0.0
    %3959 = vmatprep.subr.mxu0 0.0
    %3960 = vmatpush1.msra.mxu0 0.0
    %3961 = vmatprep.subr.mxu0 0.0
    %3962 = vmatpush1.msra.mxu0 0.0
    %3963 = vmatprep.subr.mxu0 0.0
    %3964 = vmatpush1.msra.mxu0 %v3188
    %3965 = vmatprep.subr.mxu0 0.0
    %3966 = vmatpush1.msra.mxu0 %v3187
    %3967 = vmatprep.subr.mxu0 0.0
    %3968 = vmatpush1.msra.mxu0 %v3186
    %3969 = vmatprep.subr.mxu0 0.0
    %3970 = vmatpush1.msra.mxu0 %v3185
    %3971 = vmatprep.subr.mxu0 0.0
    %3972 = vmatpush2.msra.mxu0 0.0
    %3973 = vmatprep.subr.mxu0 0.0
    %3974 = vmatpush2.msra.mxu0 0.0
    %3975 = vmatprep.subr.mxu0 0.0
    %3976 = vmatpush2.msra.mxu0 0.0
    %3977 = vmatprep.subr.mxu0 0.0
    %3978 = vmatpush2.msra.mxu0 0.0
    %3979 = vmatprep.subr.mxu0 0.0
    %3980 = vmatpush2.msra.mxu0 0.0
    %3981 = vmatprep.subr.mxu0 0.0
    %3982 = vmatpush2.msra.mxu0 0.0
    %3983 = vmatprep.subr.mxu0 0.0
    %3984 = vmatpush2.msra.mxu0 0.0
    %3985 = vmatprep.subr.mxu0 0.0
    %3986 = vmatpush2.msra.mxu0 0.0
    %3987 = vmatprep.subr.mxu0 0.0
    %3988 = vmatpush2.msra.mxu0 0.0
    %3989 = vmatprep.subr.mxu0 0.0
    %3990 = vmatpush2.msra.mxu0 0.0
    %3991 = vmatprep.subr.mxu0 0.0
    %3992 = vmatpush2.msra.mxu0 0.0
    %3993 = vmatprep.subr.mxu0 0.0
    %3994 = vmatpush2.msra.mxu0 0.0
    %3995 = vmatprep.subr.mxu0 0.0
    %3996 = vmatpush2.msra.mxu0 0.0
    %3997 = vmatprep.subr.mxu0 0.0
    %3998 = vmatpush2.msra.mxu0 0.0
    %3999 = vmatprep.subr.mxu0 0.0
    %4000 = vmatpush2.msra.mxu0 0.0
    %4001 = vmatprep.subr.mxu0 0.0
    %4002 = vmatpush2.msra.mxu0 0.0
    %4003 = vmatprep.mubr.f32.mxu0 0.0
    %4004 = vmatmul.mubr.f32.gmra.mxu0 %v3928
    %v4005 = vpop.f32.mrf.mxu0
    %v4006 = vadd.f32 0.0, %v4005
    %v4007 = vpop.f32.mrf.mxu0
    %4008 = vmatprep.mubr.f32.mxu0 0.0
    %4009 = vmatmul.mubr.f32.gmra.mxu0 %v3931
    %v4010 = vpop.f32.mrf.mxu0
    %v4011 = vadd.f32 0.0, %v4010
    %v4012 = vpop.f32.mrf.mxu0
    %4013 = vmatprep.mubr.f32.mxu0 0.0
    %4014 = vmatmul.mubr.f32.gmra.mxu0 %v3934
    %v4015 = vpop.f32.mrf.mxu0
    %v4016 = vadd.f32 0.0, %v4015
    %v4017 = vpop.f32.mrf.mxu0
    %4018 = vmatprep.mubr.f32.mxu0 0.0
    %4019 = vmatmul.mubr.f32.gmra.mxu0 %v3937
    %v4020 = vpop.f32.mrf.mxu0
    %v4021 = vadd.f32 0.0, %v4020
    %v4022 = vpop.f32.mrf.mxu0
    %4023 = vdwg.mxu0
    %4025 = vset.pattern.permute.xlu0 0
    %4026 = vperm.xlu0 %4025, %v4006
    %v4027 = vpop.permute.xlu0 %4026
    %4030 = vset.pattern.permute.xlu0 0
    %4031 = vperm.xlu0 %4030, %v4011
    %v4032 = vpop.permute.xlu0 %4031
    %4035 = vset.pattern.permute.xlu0 0
    %4036 = vperm.xlu0 %4035, %v4016
    %v4037 = vpop.permute.xlu0 %4036
    %4040 = vset.pattern.permute.xlu0 0
    %4041 = vperm.xlu0 %4040, %v4021
    %v4042 = vpop.permute.xlu0 %4041
    %v4044 = vmul.f32 %v3399, %v4027
    %v4045 = vmul.f32 %v3400, %v4032
    %v4046 = vmul.f32 %v3401, %v4037
    %v4047 = vmul.f32 %v3402, %v4042
    %4048 = vmatprep.subr.mxu0 0.0
    %4049 = vmatpush1.msra.mxu0 0.0
    %4050 = vmatprep.subr.mxu0 0.0
    %4051 = vmatpush1.msra.mxu0 0.0
    %4052 = vmatprep.subr.mxu0 0.0
    %4053 = vmatpush1.msra.mxu0 0.0
    %4054 = vmatprep.subr.mxu0 0.0
    %4055 = vmatpush1.msra.mxu0 0.0
    %4056 = vmatprep.subr.mxu0 0.0
    %4057 = vmatpush1.msra.mxu0 0.0
    %4058 = vmatprep.subr.mxu0 0.0
    %4059 = vmatpush1.msra.mxu0 0.0
    %4060 = vmatprep.subr.mxu0 0.0
    %4061 = vmatpush1.msra.mxu0 0.0
    %4062 = vmatprep.subr.mxu0 0.0
    %4063 = vmatpush1.msra.mxu0 0.0
    %4064 = vmatprep.subr.mxu0 0.0
    %4065 = vmatpush1.msra.mxu0 0.0
    %4066 = vmatprep.subr.mxu0 0.0
    %4067 = vmatpush1.msra.mxu0 0.0
    %4068 = vmatprep.subr.mxu0 0.0
    %4069 = vmatpush1.msra.mxu0 0.0
    %4070 = vmatprep.subr.mxu0 0.0
    %4071 = vmatpush1.msra.mxu0 0.0
    %4072 = vmatprep.subr.mxu0 0.0
    %4073 = vmatpush1.msra.mxu0 %v3795
    %4074 = vmatprep.subr.mxu0 0.0
    %4075 = vmatpush1.msra.mxu0 %v3794
    %4076 = vmatprep.subr.mxu0 0.0
    %4077 = vmatpush1.msra.mxu0 %v3793
    %4078 = vmatprep.subr.mxu0 0.0
    %4079 = vmatpush1.msra.mxu0 %v3792
    %4080 = vmatprep.subr.mxu0 0.0
    %4081 = vmatpush2.msra.mxu0 0.0
    %4082 = vmatprep.subr.mxu0 0.0
    %4083 = vmatpush2.msra.mxu0 0.0
    %4084 = vmatprep.subr.mxu0 0.0
    %4085 = vmatpush2.msra.mxu0 0.0
    %4086 = vmatprep.subr.mxu0 0.0
    %4087 = vmatpush2.msra.mxu0 0.0
    %4088 = vmatprep.subr.mxu0 0.0
    %4089 = vmatpush2.msra.mxu0 0.0
    %4090 = vmatprep.subr.mxu0 0.0
    %4091 = vmatpush2.msra.mxu0 0.0
    %4092 = vmatprep.subr.mxu0 0.0
    %4093 = vmatpush2.msra.mxu0 0.0
    %4094 = vmatprep.subr.mxu0 0.0
    %4095 = vmatpush2.msra.mxu0 0.0
    %4096 = vmatprep.subr.mxu0 0.0
    %4097 = vmatpush2.msra.mxu0 0.0
    %4098 = vmatprep.subr.mxu0 0.0
    %4099 = vmatpush2.msra.mxu0 0.0
    %4100 = vmatprep.subr.mxu0 0.0
    %4101 = vmatpush2.msra.mxu0 0.0
    %4102 = vmatprep.subr.mxu0 0.0
    %4103 = vmatpush2.msra.mxu0 0.0
    %4104 = vmatprep.subr.mxu0 0.0
    %4105 = vmatpush2.msra.mxu0 0.0
    %4106 = vmatprep.subr.mxu0 0.0
    %4107 = vmatpush2.msra.mxu0 0.0
    %4108 = vmatprep.subr.mxu0 0.0
    %4109 = vmatpush2.msra.mxu0 0.0
    %4110 = vmatprep.subr.mxu0 0.0
    %4111 = vmatpush2.msra.mxu0 0.0
    %4112 = vmatprep.mubr.f32.mxu0 0.0
    %4113 = vmatmul.mubr.f32.gmra.mxu0 %v1369
    %v4114 = vpop.f32.mrf.mxu0
    %v4115 = vadd.f32 0.0, %v4114
    %v4116 = vpop.f32.mrf.mxu0
    %4117 = vmatprep.mubr.f32.mxu0 0.0
    %4118 = vmatmul.mubr.f32.gmra.mxu0 %v1372
    %v4119 = vpop.f32.mrf.mxu0
    %v4120 = vadd.f32 0.0, %v4119
    %v4121 = vpop.f32.mrf.mxu0
    %4122 = vdwg.mxu0
    %4123 = vmatprep.subr.mxu0 0.0
    %4124 = vmatpush1.msra.mxu0 0.0
    %4125 = vmatprep.subr.mxu0 0.0
    %4126 = vmatpush1.msra.mxu0 0.0
    %4127 = vmatprep.subr.mxu0 0.0
    %4128 = vmatpush1.msra.mxu0 0.0
    %4129 = vmatprep.subr.mxu0 0.0
    %4130 = vmatpush1.msra.mxu0 0.0
    %4131 = vmatprep.subr.mxu0 0.0
    %4132 = vmatpush1.msra.mxu0 0.0
    %4133 = vmatprep.subr.mxu0 0.0
    %4134 = vmatpush1.msra.mxu0 0.0
    %4135 = vmatprep.subr.mxu0 0.0
    %4136 = vmatpush1.msra.mxu0 0.0
    %4137 = vmatprep.subr.mxu0 0.0
    %4138 = vmatpush1.msra.mxu0 0.0
    %4139 = vmatprep.subr.mxu0 0.0
    %4140 = vmatpush1.msra.mxu0 0.0
    %4141 = vmatprep.subr.mxu0 0.0
    %4142 = vmatpush1.msra.mxu0 0.0
    %4143 = vmatprep.subr.mxu0 0.0
    %4144 = vmatpush1.msra.mxu0 0.0
    %4145 = vmatprep.subr.mxu0 0.0
    %4146 = vmatpush1.msra.mxu0 0.0
    %4147 = vmatprep.subr.mxu0 0.0
    %4148 = vmatpush1.msra.mxu0 %v4047
    %4149 = vmatprep.subr.mxu0 0.0
    %4150 = vmatpush1.msra.mxu0 %v4046
    %4151 = vmatprep.subr.mxu0 0.0
    %4152 = vmatpush1.msra.mxu0 %v4045
    %4153 = vmatprep.subr.mxu0 0.0
    %4154 = vmatpush1.msra.mxu0 %v4044
    %4155 = vmatprep.subr.mxu0 0.0
    %4156 = vmatpush2.msra.mxu0 0.0
    %4157 = vmatprep.subr.mxu0 0.0
    %4158 = vmatpush2.msra.mxu0 0.0
    %4159 = vmatprep.subr.mxu0 0.0
    %4160 = vmatpush2.msra.mxu0 0.0
    %4161 = vmatprep.subr.mxu0 0.0
    %4162 = vmatpush2.msra.mxu0 0.0
    %4163 = vmatprep.subr.mxu0 0.0
    %4164 = vmatpush2.msra.mxu0 0.0
    %4165 = vmatprep.subr.mxu0 0.0
    %4166 = vmatpush2.msra.mxu0 0.0
    %4167 = vmatprep.subr.mxu0 0.0
    %4168 = vmatpush2.msra.mxu0 0.0
    %4169 = vmatprep.subr.mxu0 0.0
    %4170 = vmatpush2.msra.mxu0 0.0
    %4171 = vmatprep.subr.mxu0 0.0
    %4172 = vmatpush2.msra.mxu0 0.0
    %4173 = vmatprep.subr.mxu0 0.0
    %4174 = vmatpush2.msra.mxu0 0.0
    %4175 = vmatprep.subr.mxu0 0.0
    %4176 = vmatpush2.msra.mxu0 0.0
    %4177 = vmatprep.subr.mxu0 0.0
    %4178 = vmatpush2.msra.mxu0 0.0
    %4179 = vmatprep.subr.mxu0 0.0
    %4180 = vmatpush2.msra.mxu0 0.0
    %4181 = vmatprep.subr.mxu0 0.0
    %4182 = vmatpush2.msra.mxu0 0.0
    %4183 = vmatprep.subr.mxu0 0.0
    %4184 = vmatpush2.msra.mxu0 0.0
    %4185 = vmatprep.subr.mxu0 0.0
    %4186 = vmatpush2.msra.mxu0 0.0
    %4187 = vmatprep.mubr.f32.mxu0 0.0
    %4188 = vmatmul.mubr.f32.gmra.mxu0 %v1450
    %v4189 = vpop.f32.mrf.mxu0
    %v4190 = vadd.f32 0.0, %v4189
    %v4191 = vpop.f32.mrf.mxu0
    %4192 = vmatprep.mubr.f32.mxu0 0.0
    %4193 = vmatmul.mubr.f32.gmra.mxu0 %v1453
    %v4194 = vpop.f32.mrf.mxu0
    %v4195 = vadd.f32 0.0, %v4194
    %v4196 = vpop.f32.mrf.mxu0
    %4197 = vdwg.mxu0
    %v4198 = vadd.f32 %v2864, %v4190
    %v4199 = vadd.f32 %v2865, %v4195
    %v4201 = vsel %vm336, %v4115, 0
    %v4204 = vsel %vm336, %v4120, 0
    %4206 = vmatprep.subr.mxu0 0.0
    %4207 = vmatpush1.msra.mxu0 0.0
    %4208 = vmatprep.subr.mxu0 0.0
    %4209 = vmatpush1.msra.mxu0 0.0
    %4210 = vmatprep.subr.mxu0 0.0
    %4211 = vmatpush1.msra.mxu0 0.0
    %4212 = vmatprep.subr.mxu0 0.0
    %4213 = vmatpush1.msra.mxu0 0.0
    %4214 = vmatprep.subr.mxu0 0.0
    %4215 = vmatpush1.msra.mxu0 0.0
    %4216 = vmatprep.subr.mxu0 0.0
    %4217 = vmatpush1.msra.mxu0 0.0
    %4218 = vmatprep.subr.mxu0 0.0
    %4219 = vmatpush1.msra.mxu0 0.0
    %4220 = vmatprep.subr.mxu0 0.0
    %4221 = vmatpush1.msra.mxu0 0.0
    %4222 = vmatprep.subr.mxu0 0.0
    %4223 = vmatpush1.msra.mxu0 0.0
    %4224 = vmatprep.subr.mxu0 0.0
    %4225 = vmatpush1.msra.mxu0 0.0
    %4226 = vmatprep.subr.mxu0 0.0
    %4227 = vmatpush1.msra.mxu0 0.0
    %4228 = vmatprep.subr.mxu0 0.0
    %4229 = vmatpush1.msra.mxu0 0.0
    %4230 = vmatprep.subr.mxu0 0.0
    %4231 = vmatpush1.msra.mxu0 %v3167
    %4232 = vmatprep.subr.mxu0 0.0
    %4233 = vmatpush1.msra.mxu0 %v3166
    %4234 = vmatprep.subr.mxu0 0.0
    %4235 = vmatpush1.msra.mxu0 %v3165
    %4236 = vmatprep.subr.mxu0 0.0
    %4237 = vmatpush1.msra.mxu0 %v3164
    %4238 = vmatprep.subr.mxu0 0.0
    %4239 = vmatpush2.msra.mxu0 0.0
    %4240 = vmatprep.subr.mxu0 0.0
    %4241 = vmatpush2.msra.mxu0 0.0
    %4242 = vmatprep.subr.mxu0 0.0
    %4243 = vmatpush2.msra.mxu0 0.0
    %4244 = vmatprep.subr.mxu0 0.0
    %4245 = vmatpush2.msra.mxu0 0.0
    %4246 = vmatprep.subr.mxu0 0.0
    %4247 = vmatpush2.msra.mxu0 0.0
    %4248 = vmatprep.subr.mxu0 0.0
    %4249 = vmatpush2.msra.mxu0 0.0
    %4250 = vmatprep.subr.mxu0 0.0
    %4251 = vmatpush2.msra.mxu0 0.0
    %4252 = vmatprep.subr.mxu0 0.0
    %4253 = vmatpush2.msra.mxu0 0.0
    %4254 = vmatprep.subr.mxu0 0.0
    %4255 = vmatpush2.msra.mxu0 0.0
    %4256 = vmatprep.subr.mxu0 0.0
    %4257 = vmatpush2.msra.mxu0 0.0
    %4258 = vmatprep.subr.mxu0 0.0
    %4259 = vmatpush2.msra.mxu0 0.0
    %4260 = vmatprep.subr.mxu0 0.0
    %4261 = vmatpush2.msra.mxu0 0.0
    %4262 = vmatprep.subr.mxu0 0.0
    %4263 = vmatpush2.msra.mxu0 0.0
    %4264 = vmatprep.subr.mxu0 0.0
    %4265 = vmatpush2.msra.mxu0 0.0
    %4266 = vmatprep.subr.mxu0 0.0
    %4267 = vmatpush2.msra.mxu0 0.0
    %4268 = vmatprep.subr.mxu0 0.0
    %4269 = vmatpush2.msra.mxu0 0.0
    %4270 = vmatprep.mubr.f32.mxu0 0.0
    %4271 = vmatmul.mubr.f32.gmra.mxu0 %v4201
    %v4272 = vpop.f32.mrf.mxu0
    %v4273 = vadd.f32 0.0, %v4272
    %v4274 = vpop.f32.mrf.mxu0
    %4275 = vmatprep.mubr.f32.mxu0 0.0
    %4276 = vmatmul.mubr.f32.gmra.mxu0 %v4204
    %v4277 = vpop.f32.mrf.mxu0
    %v4278 = vadd.f32 0.0, %v4277
    %v4279 = vpop.f32.mrf.mxu0
    %4280 = vdwg.mxu0
    %v4282 = vsel %vm336, %v3129, 0
    %v4285 = vsel %vm336, %v3134, 0
    %4287 = vmatprep.subr.mxu0 0.0
    %4288 = vmatpush1.msra.mxu0 0.0
    %4289 = vmatprep.subr.mxu0 0.0
    %4290 = vmatpush1.msra.mxu0 0.0
    %4291 = vmatprep.subr.mxu0 0.0
    %4292 = vmatpush1.msra.mxu0 0.0
    %4293 = vmatprep.subr.mxu0 0.0
    %4294 = vmatpush1.msra.mxu0 0.0
    %4295 = vmatprep.subr.mxu0 0.0
    %4296 = vmatpush1.msra.mxu0 0.0
    %4297 = vmatprep.subr.mxu0 0.0
    %4298 = vmatpush1.msra.mxu0 0.0
    %4299 = vmatprep.subr.mxu0 0.0
    %4300 = vmatpush1.msra.mxu0 0.0
    %4301 = vmatprep.subr.mxu0 0.0
    %4302 = vmatpush1.msra.mxu0 0.0
    %4303 = vmatprep.subr.mxu0 0.0
    %4304 = vmatpush1.msra.mxu0 0.0
    %4305 = vmatprep.subr.mxu0 0.0
    %4306 = vmatpush1.msra.mxu0 0.0
    %4307 = vmatprep.subr.mxu0 0.0
    %4308 = vmatpush1.msra.mxu0 0.0
    %4309 = vmatprep.subr.mxu0 0.0
    %4310 = vmatpush1.msra.mxu0 0.0
    %4311 = vmatprep.subr.mxu0 0.0
    %4312 = vmatpush1.msra.mxu0 %v3162
    %4313 = vmatprep.subr.mxu0 0.0
    %4314 = vmatpush1.msra.mxu0 %v3161
    %4315 = vmatprep.subr.mxu0 0.0
    %4316 = vmatpush1.msra.mxu0 %v3160
    %4317 = vmatprep.subr.mxu0 0.0
    %4318 = vmatpush1.msra.mxu0 %v3159
    %4319 = vmatprep.subr.mxu0 0.0
    %4320 = vmatpush2.msra.mxu0 0.0
    %4321 = vmatprep.subr.mxu0 0.0
    %4322 = vmatpush2.msra.mxu0 0.0
    %4323 = vmatprep.subr.mxu0 0.0
    %4324 = vmatpush2.msra.mxu0 0.0
    %4325 = vmatprep.subr.mxu0 0.0
    %4326 = vmatpush2.msra.mxu0 0.0
    %4327 = vmatprep.subr.mxu0 0.0
    %4328 = vmatpush2.msra.mxu0 0.0
    %4329 = vmatprep.subr.mxu0 0.0
    %4330 = vmatpush2.msra.mxu0 0.0
    %4331 = vmatprep.subr.mxu0 0.0
    %4332 = vmatpush2.msra.mxu0 0.0
    %4333 = vmatprep.subr.mxu0 0.0
    %4334 = vmatpush2.msra.mxu0 0.0
    %4335 = vmatprep.subr.mxu0 0.0
    %4336 = vmatpush2.msra.mxu0 0.0
    %4337 = vmatprep.subr.mxu0 0.0
    %4338 = vmatpush2.msra.mxu0 0.0
    %4339 = vmatprep.subr.mxu0 0.0
    %4340 = vmatpush2.msra.mxu0 0.0
    %4341 = vmatprep.subr.mxu0 0.0
    %4342 = vmatpush2.msra.mxu0 0.0
    %4343 = vmatprep.subr.mxu0 0.0
    %4344 = vmatpush2.msra.mxu0 0.0
    %4345 = vmatprep.subr.mxu0 0.0
    %4346 = vmatpush2.msra.mxu0 0.0
    %4347 = vmatprep.subr.mxu0 0.0
    %4348 = vmatpush2.msra.mxu0 0.0
    %4349 = vmatprep.subr.mxu0 0.0
    %4350 = vmatpush2.msra.mxu0 0.0
    %4351 = vmatprep.mubr.f32.mxu0 0.0
    %4352 = vmatmul.mubr.f32.gmra.mxu0 %v4282
    %v4353 = vpop.f32.mrf.mxu0
    %v4354 = vadd.f32 %v4273, %v4353
    %v4355 = vpop.f32.mrf.mxu0
    %4356 = vmatprep.mubr.f32.mxu0 0.0
    %4357 = vmatmul.mubr.f32.gmra.mxu0 %v4285
    %v4358 = vpop.f32.mrf.mxu0
    %v4359 = vadd.f32 %v4278, %v4358
    %v4360 = vpop.f32.mrf.mxu0
    %4361 = vdwg.mxu0
    %v4363 = vlaneseq
    %v4364 = vshrl.u32 %v4363, 7
    %v4365 = vsub.s32 0, %v4364
    %v4366 = vrot.slane %v3169, %v4365
    %v4368 = vadd.f32 %v4354, %v4366
    %v4369 = vadd.f32 %v4359, %v4366
    %v4370 = vxor.u32 %v4368, 2147483648
    %v4371 = vxor.u32 %v4369, 2147483648
    %v4372 = vmul.f32 %v4370, 1.442695
    %v4373 = vpow.pop %v4372
    %v4374 = vmul.f32 %v4371, 1.442695
    %v4375 = vpow.pop %v4374
    %v4376 = vadd.f32 %v4373, 1.0
    %v4377 = vadd.f32 %v4375, 1.0
    %v4378 = vrcp.pop %v4376
    %v4379 = vmul.f32 1.0, %v4378
    %v4380 = vrcp.pop %v4377
    %v4381 = vmul.f32 1.0, %v4380
    %v4382 = vmul.f32 %v4368, %v4379
    %v4383 = vmul.f32 %v4369, %v4381
    %v4385 = vlaneseq
    %v4386 = vshrl.u32 %v4385, 7
    %v4387 = vsub.s32 0, %v4386
    %v4388 = vrot.slane %v3176, %v4387
    %v4391 = vsel %vm336, %v4382, 0
    %v4394 = vsel %vm336, %v4383, 0
    %4396 = vmatprep.subr.mxu0 0.0
    %4397 = vmatpush1.msra.mxu0 0.0
    %4398 = vmatprep.subr.mxu0 0.0
    %4399 = vmatpush1.msra.mxu0 0.0
    %4400 = vmatprep.subr.mxu0 0.0
    %4401 = vmatpush1.msra.mxu0 0.0
    %4402 = vmatprep.subr.mxu0 0.0
    %4403 = vmatpush1.msra.mxu0 0.0
    %4404 = vmatprep.subr.mxu0 0.0
    %4405 = vmatpush1.msra.mxu0 0.0
    %4406 = vmatprep.subr.mxu0 0.0
    %4407 = vmatpush1.msra.mxu0 0.0
    %4408 = vmatprep.subr.mxu0 0.0
    %4409 = vmatpush1.msra.mxu0 0.0
    %4410 = vmatprep.subr.mxu0 0.0
    %4411 = vmatpush1.msra.mxu0 0.0
    %4412 = vmatprep.subr.mxu0 0.0
    %4413 = vmatpush1.msra.mxu0 0.0
    %4414 = vmatprep.subr.mxu0 0.0
    %4415 = vmatpush1.msra.mxu0 0.0
    %4416 = vmatprep.subr.mxu0 0.0
    %4417 = vmatpush1.msra.mxu0 0.0
    %4418 = vmatprep.subr.mxu0 0.0
    %4419 = vmatpush1.msra.mxu0 0.0
    %4420 = vmatprep.subr.mxu0 0.0
    %4421 = vmatpush1.msra.mxu0 %v3174
    %4422 = vmatprep.subr.mxu0 0.0
    %4423 = vmatpush1.msra.mxu0 %v3173
    %4424 = vmatprep.subr.mxu0 0.0
    %4425 = vmatpush1.msra.mxu0 %v3172
    %4426 = vmatprep.subr.mxu0 0.0
    %4427 = vmatpush1.msra.mxu0 %v3171
    %4428 = vmatprep.subr.mxu0 0.0
    %4429 = vmatpush2.msra.mxu0 0.0
    %4430 = vmatprep.subr.mxu0 0.0
    %4431 = vmatpush2.msra.mxu0 0.0
    %4432 = vmatprep.subr.mxu0 0.0
    %4433 = vmatpush2.msra.mxu0 0.0
    %4434 = vmatprep.subr.mxu0 0.0
    %4435 = vmatpush2.msra.mxu0 0.0
    %4436 = vmatprep.subr.mxu0 0.0
    %4437 = vmatpush2.msra.mxu0 0.0
    %4438 = vmatprep.subr.mxu0 0.0
    %4439 = vmatpush2.msra.mxu0 0.0
    %4440 = vmatprep.subr.mxu0 0.0
    %4441 = vmatpush2.msra.mxu0 0.0
    %4442 = vmatprep.subr.mxu0 0.0
    %4443 = vmatpush2.msra.mxu0 0.0
    %4444 = vmatprep.subr.mxu0 0.0
    %4445 = vmatpush2.msra.mxu0 0.0
    %4446 = vmatprep.subr.mxu0 0.0
    %4447 = vmatpush2.msra.mxu0 0.0
    %4448 = vmatprep.subr.mxu0 0.0
    %4449 = vmatpush2.msra.mxu0 0.0
    %4450 = vmatprep.subr.mxu0 0.0
    %4451 = vmatpush2.msra.mxu0 0.0
    %4452 = vmatprep.subr.mxu0 0.0
    %4453 = vmatpush2.msra.mxu0 0.0
    %4454 = vmatprep.subr.mxu0 0.0
    %4455 = vmatpush2.msra.mxu0 0.0
    %4456 = vmatprep.subr.mxu0 0.0
    %4457 = vmatpush2.msra.mxu0 0.0
    %4458 = vmatprep.subr.mxu0 0.0
    %4459 = vmatpush2.msra.mxu0 0.0
    %4460 = vmatprep.mubr.f32.mxu0 0.0
    %4461 = vmatmul.mubr.f32.gmra.mxu0 %v4391
    %v4462 = vpop.f32.mrf.mxu0
    %v4463 = vadd.f32 %v4388, %v4462
    %v4464 = vpop.f32.mrf.mxu0
    %4465 = vmatprep.mubr.f32.mxu0 0.0
    %4466 = vmatmul.mubr.f32.gmra.mxu0 %v4394
    %v4467 = vpop.f32.mrf.mxu0
    %v4468 = vadd.f32 %v4388, %v4467
    %v4469 = vpop.f32.mrf.mxu0
    %4470 = vdwg.mxu0
    %s4471 = scalar_lea.vmem %s15, 96
    %v4472 = vld [vmem:[%s4471] sm:$0xff]
    %v4473 = vld [vmem:[%s4471 + $0x8] sm:$0xff]
    %v4474 = vld [vmem:[%s4471 + $0x10] sm:$0xff]
    %v4475 = vld [vmem:[%s4471 + $0x18] sm:$0xff]
    %s4476 = scalar_lea.vmem %s17, 96
    %v4477 = vld [vmem:[%s4476] sm:$0xff]
    %v4478 = vld [vmem:[%s4476 + $0x8] sm:$0xff]
    %v4479 = vld [vmem:[%s4476 + $0x10] sm:$0xff]
    %v4480 = vld [vmem:[%s4476 + $0x18] sm:$0xff]
    %s4481 = scalar_lea.vmem [#allocation5], 3
    %v4482 = vld [vmem:[%s4481] sm:$0x1]
    %s4483 = scalar_lea.vmem %s21, 3
    %v4484 = vld [vmem:[%s4483] sm:$0x1]
    %s4485 = scalar_lea.vmem %s23, 96
    %v4486 = vld [vmem:[%s4485] sm:$0xff]
    %v4487 = vld [vmem:[%s4485 + $0x8] sm:$0xff]
    %v4488 = vld [vmem:[%s4485 + $0x10] sm:$0xff]
    %v4489 = vld [vmem:[%s4485 + $0x18] sm:$0xff]
    %s4490 = scalar_lea.vmem [#allocation7], 3
    %v4491 = vld [vmem:[%s4490] sm:$0x1]
    %s4492 = scalar_lea.vmem %s27, 96
    %v4493 = vld [vmem:[%s4492] sm:$0xff]
    %v4494 = vld [vmem:[%s4492 + $0x8] sm:$0xff]
    %v4495 = vld [vmem:[%s4492 + $0x10] sm:$0xff]
    %v4496 = vld [vmem:[%s4492 + $0x18] sm:$0xff]
    %s4497 = scalar_lea.vmem %s29, 96
    %v4498 = vld [vmem:[%s4497] sm:$0xff]
    %v4499 = vld [vmem:[%s4497 + $0x8] sm:$0xff]
    %v4500 = vld [vmem:[%s4497 + $0x10] sm:$0xff]
    %v4501 = vld [vmem:[%s4497 + $0x18] sm:$0xff]
    %s4502 = scalar_lea.vmem [#allocation8], 3
    %v4503 = vld [vmem:[%s4502] sm:$0x1]
    %s4504 = scalar_lea.vmem %s33, 96
    %v4505 = vld [vmem:[%s4504] sm:$0xff]
    %v4506 = vld [vmem:[%s4504 + $0x8] sm:$0xff]
    %v4507 = vld [vmem:[%s4504 + $0x10] sm:$0xff]
    %v4508 = vld [vmem:[%s4504 + $0x18] sm:$0xff]
    %s4509 = scalar_lea.vmem [#allocation10], 3
    %v4510 = vld [vmem:[%s4509] sm:$0x1]
    %4511 = vmatprep.subr.mxu0 0.0
    %4512 = vmatpush1.msra.mxu0 0.0
    %4513 = vmatprep.subr.mxu0 0.0
    %4514 = vmatpush1.msra.mxu0 0.0
    %4515 = vmatprep.subr.mxu0 0.0
    %4516 = vmatpush1.msra.mxu0 0.0
    %4517 = vmatprep.subr.mxu0 0.0
    %4518 = vmatpush1.msra.mxu0 0.0
    %4519 = vmatprep.subr.mxu0 0.0
    %4520 = vmatpush1.msra.mxu0 0.0
    %4521 = vmatprep.subr.mxu0 0.0
    %4522 = vmatpush1.msra.mxu0 0.0
    %4523 = vmatprep.subr.mxu0 0.0
    %4524 = vmatpush1.msra.mxu0 0.0
    %4525 = vmatprep.subr.mxu0 0.0
    %4526 = vmatpush1.msra.mxu0 0.0
    %4527 = vmatprep.subr.mxu0 0.0
    %4528 = vmatpush1.msra.mxu0 0.0
    %4529 = vmatprep.subr.mxu0 0.0
    %4530 = vmatpush1.msra.mxu0 0.0
    %4531 = vmatprep.subr.mxu0 0.0
    %4532 = vmatpush1.msra.mxu0 0.0
    %4533 = vmatprep.subr.mxu0 0.0
    %4534 = vmatpush1.msra.mxu0 0.0
    %4535 = vmatprep.subr.mxu0 0.0
    %4536 = vmatpush1.msra.mxu0 0.0
    %4537 = vmatprep.subr.mxu0 0.0
    %4538 = vmatpush1.msra.mxu0 0.0
    %4539 = vmatprep.subr.mxu0 0.0
    %4540 = vmatpush1.msra.mxu0 %v4468
    %4541 = vmatprep.subr.mxu0 0.0
    %4542 = vmatpush1.msra.mxu0 %v4463
    %4543 = vmatprep.subr.mxu0 0.0
    %4544 = vmatpush2.msra.mxu0 0.0
    %4545 = vmatprep.subr.mxu0 0.0
    %4546 = vmatpush2.msra.mxu0 0.0
    %4547 = vmatprep.subr.mxu0 0.0
    %4548 = vmatpush2.msra.mxu0 0.0
    %4549 = vmatprep.subr.mxu0 0.0
    %4550 = vmatpush2.msra.mxu0 0.0
    %4551 = vmatprep.subr.mxu0 0.0
    %4552 = vmatpush2.msra.mxu0 0.0
    %4553 = vmatprep.subr.mxu0 0.0
    %4554 = vmatpush2.msra.mxu0 0.0
    %4555 = vmatprep.subr.mxu0 0.0
    %4556 = vmatpush2.msra.mxu0 0.0
    %4557 = vmatprep.subr.mxu0 0.0
    %4558 = vmatpush2.msra.mxu0 0.0
    %4559 = vmatprep.subr.mxu0 0.0
    %4560 = vmatpush2.msra.mxu0 0.0
    %4561 = vmatprep.subr.mxu0 0.0
    %4562 = vmatpush2.msra.mxu0 0.0
    %4563 = vmatprep.subr.mxu0 0.0
    %4564 = vmatpush2.msra.mxu0 0.0
    %4565 = vmatprep.subr.mxu0 0.0
    %4566 = vmatpush2.msra.mxu0 0.0
    %4567 = vmatprep.subr.mxu0 0.0
    %4568 = vmatpush2.msra.mxu0 0.0
    %4569 = vmatprep.subr.mxu0 0.0
    %4570 = vmatpush2.msra.mxu0 0.0
    %4571 = vmatprep.subr.mxu0 0.0
    %4572 = vmatpush2.msra.mxu0 0.0
    %4573 = vmatprep.subr.mxu0 0.0
    %4574 = vmatpush2.msra.mxu0 0.0
    %4575 = vmatprep.mubr.f32.mxu0 0.0
    %4576 = vmatmul.mubr.f32.gmra.mxu0 %v485
    %v4577 = vpop.f32.mrf.mxu0
    %v4578 = vadd.f32 0.0, %v4577
    %v4579 = vpop.f32.mrf.mxu0
    %4580 = vmatprep.mubr.f32.mxu0 0.0
    %4581 = vmatmul.mubr.f32.gmra.mxu0 %v488
    %v4582 = vpop.f32.mrf.mxu0
    %v4583 = vadd.f32 0.0, %v4582
    %v4584 = vpop.f32.mrf.mxu0
    %4585 = vmatprep.mubr.f32.mxu0 0.0
    %4586 = vmatmul.mubr.f32.gmra.mxu0 %v491
    %v4587 = vpop.f32.mrf.mxu0
    %v4588 = vadd.f32 0.0, %v4587
    %v4589 = vpop.f32.mrf.mxu0
    %4590 = vmatprep.mubr.f32.mxu0 0.0
    %4591 = vmatmul.mubr.f32.gmra.mxu0 %v494
    %v4592 = vpop.f32.mrf.mxu0
    %v4593 = vadd.f32 0.0, %v4592
    %v4594 = vpop.f32.mrf.mxu0
    %4595 = vmatprep.mubr.f32.mxu0 0.0
    %4596 = vmatmul.mubr.f32.gmra.mxu0 %v497
    %v4597 = vpop.f32.mrf.mxu0
    %v4598 = vadd.f32 0.0, %v4597
    %v4599 = vpop.f32.mrf.mxu0
    %4600 = vmatprep.mubr.f32.mxu0 0.0
    %4601 = vmatmul.mubr.f32.gmra.mxu0 %v500
    %v4602 = vpop.f32.mrf.mxu0
    %v4603 = vadd.f32 0.0, %v4602
    %v4604 = vpop.f32.mrf.mxu0
    %4605 = vmatprep.mubr.f32.mxu0 0.0
    %4606 = vmatmul.mubr.f32.gmra.mxu0 %v503
    %v4607 = vpop.f32.mrf.mxu0
    %v4608 = vadd.f32 0.0, %v4607
    %v4609 = vpop.f32.mrf.mxu0
    %4610 = vmatprep.mubr.f32.mxu0 0.0
    %4611 = vmatmul.mubr.f32.gmra.mxu0 %v506
    %v4612 = vpop.f32.mrf.mxu0
    %v4613 = vadd.f32 0.0, %v4612
    %v4614 = vpop.f32.mrf.mxu0
    %4615 = vdwg.mxu0
    %4616 = vmatprep.subr.mxu0 0.0
    %4617 = vmatpush1.msra.mxu0 0.0
    %4618 = vmatprep.subr.mxu0 0.0
    %4619 = vmatpush1.msra.mxu0 0.0
    %4620 = vmatprep.subr.mxu0 0.0
    %4621 = vmatpush1.msra.mxu0 0.0
    %4622 = vmatprep.subr.mxu0 0.0
    %4623 = vmatpush1.msra.mxu0 0.0
    %4624 = vmatprep.subr.mxu0 0.0
    %4625 = vmatpush1.msra.mxu0 0.0
    %4626 = vmatprep.subr.mxu0 0.0
    %4627 = vmatpush1.msra.mxu0 0.0
    %4628 = vmatprep.subr.mxu0 0.0
    %4629 = vmatpush1.msra.mxu0 0.0
    %4630 = vmatprep.subr.mxu0 0.0
    %4631 = vmatpush1.msra.mxu0 0.0
    %4632 = vmatprep.subr.mxu0 0.0
    %4633 = vmatpush1.msra.mxu0 0.0
    %4634 = vmatprep.subr.mxu0 0.0
    %4635 = vmatpush1.msra.mxu0 0.0
    %4636 = vmatprep.subr.mxu0 0.0
    %4637 = vmatpush1.msra.mxu0 0.0
    %4638 = vmatprep.subr.mxu0 0.0
    %4639 = vmatpush1.msra.mxu0 0.0
    %4640 = vmatprep.subr.mxu0 0.0
    %4641 = vmatpush1.msra.mxu0 0.0
    %4642 = vmatprep.subr.mxu0 0.0
    %4643 = vmatpush1.msra.mxu0 0.0
    %4644 = vmatprep.subr.mxu0 0.0
    %4645 = vmatpush1.msra.mxu0 %v4199
    %4646 = vmatprep.subr.mxu0 0.0
    %4647 = vmatpush1.msra.mxu0 %v4198
    %4648 = vmatprep.subr.mxu0 0.0
    %4649 = vmatpush2.msra.mxu0 0.0
    %4650 = vmatprep.subr.mxu0 0.0
    %4651 = vmatpush2.msra.mxu0 0.0
    %4652 = vmatprep.subr.mxu0 0.0
    %4653 = vmatpush2.msra.mxu0 0.0
    %4654 = vmatprep.subr.mxu0 0.0
    %4655 = vmatpush2.msra.mxu0 0.0
    %4656 = vmatprep.subr.mxu0 0.0
    %4657 = vmatpush2.msra.mxu0 0.0
    %4658 = vmatprep.subr.mxu0 0.0
    %4659 = vmatpush2.msra.mxu0 0.0
    %4660 = vmatprep.subr.mxu0 0.0
    %4661 = vmatpush2.msra.mxu0 0.0
    %4662 = vmatprep.subr.mxu0 0.0
    %4663 = vmatpush2.msra.mxu0 0.0
    %4664 = vmatprep.subr.mxu0 0.0
    %4665 = vmatpush2.msra.mxu0 0.0
    %4666 = vmatprep.subr.mxu0 0.0
    %4667 = vmatpush2.msra.mxu0 0.0
    %4668 = vmatprep.subr.mxu0 0.0
    %4669 = vmatpush2.msra.mxu0 0.0
    %4670 = vmatprep.subr.mxu0 0.0
    %4671 = vmatpush2.msra.mxu0 0.0
    %4672 = vmatprep.subr.mxu0 0.0
    %4673 = vmatpush2.msra.mxu0 0.0
    %4674 = vmatprep.subr.mxu0 0.0
    %4675 = vmatpush2.msra.mxu0 0.0
    %4676 = vmatprep.subr.mxu0 0.0
    %4677 = vmatpush2.msra.mxu0 0.0
    %4678 = vmatprep.subr.mxu0 0.0
    %4679 = vmatpush2.msra.mxu0 0.0
    %4680 = vmatprep.mubr.f32.mxu0 0.0
    %4681 = vmatmul.mubr.f32.gmra.mxu0 %v485
    %v4682 = vpop.f32.mrf.mxu0
    %v4683 = vadd.f32 0.0, %v4682
    %v4684 = vpop.f32.mrf.mxu0
    %4685 = vmatprep.mubr.f32.mxu0 0.0
    %4686 = vmatmul.mubr.f32.gmra.mxu0 %v488
    %v4687 = vpop.f32.mrf.mxu0
    %v4688 = vadd.f32 0.0, %v4687
    %v4689 = vpop.f32.mrf.mxu0
    %4690 = vmatprep.mubr.f32.mxu0 0.0
    %4691 = vmatmul.mubr.f32.gmra.mxu0 %v491
    %v4692 = vpop.f32.mrf.mxu0
    %v4693 = vadd.f32 0.0, %v4692
    %v4694 = vpop.f32.mrf.mxu0
    %4695 = vmatprep.mubr.f32.mxu0 0.0
    %4696 = vmatmul.mubr.f32.gmra.mxu0 %v494
    %v4697 = vpop.f32.mrf.mxu0
    %v4698 = vadd.f32 0.0, %v4697
    %v4699 = vpop.f32.mrf.mxu0
    %4700 = vmatprep.mubr.f32.mxu0 0.0
    %4701 = vmatmul.mubr.f32.gmra.mxu0 %v497
    %v4702 = vpop.f32.mrf.mxu0
    %v4703 = vadd.f32 0.0, %v4702
    %v4704 = vpop.f32.mrf.mxu0
    %4705 = vmatprep.mubr.f32.mxu0 0.0
    %4706 = vmatmul.mubr.f32.gmra.mxu0 %v500
    %v4707 = vpop.f32.mrf.mxu0
    %v4708 = vadd.f32 0.0, %v4707
    %v4709 = vpop.f32.mrf.mxu0
    %4710 = vmatprep.mubr.f32.mxu0 0.0
    %4711 = vmatmul.mubr.f32.gmra.mxu0 %v503
    %v4712 = vpop.f32.mrf.mxu0
    %v4713 = vadd.f32 0.0, %v4712
    %v4714 = vpop.f32.mrf.mxu0
    %4715 = vmatprep.mubr.f32.mxu0 0.0
    %4716 = vmatmul.mubr.f32.gmra.mxu0 %v506
    %v4717 = vpop.f32.mrf.mxu0
    %v4718 = vadd.f32 0.0, %v4717
    %v4719 = vpop.f32.mrf.mxu0
    %4720 = vdwg.mxu0
    %v4721 = vsub.f32 %v4683, %v4703
    %v4722 = vsub.f32 %v4688, %v4708
    %v4723 = vsub.f32 %v4693, %v4713
    %v4724 = vsub.f32 %v4698, %v4718
    %v4725 = vmul.f32 %v4721, %v4721
    %v4726 = vmul.f32 %v4722, %v4722
    %v4727 = vmul.f32 %v4723, %v4723
    %v4728 = vmul.f32 %v4724, %v4724
    %v4729 = vsel %vm726, %v4725, 0.0
    %4730 = vadd.xlane.f32.xlu0 %v4729
    %v4731 = vpop.xlane.xlu0 %4730
    %v4732 = vsel %vm726, %v4726, 0.0
    %4733 = vadd.xlane.f32.xlu0 %v4732
    %v4734 = vpop.xlane.xlu0 %4733
    %v4735 = vsel %vm726, %v4727, 0.0
    %4736 = vadd.xlane.f32.xlu0 %v4735
    %v4737 = vpop.xlane.xlu0 %4736
    %v4738 = vsel %vm726, %v4728, 0.0
    %4739 = vadd.xlane.f32.xlu0 %v4738
    %v4740 = vpop.xlane.xlu0 %4739
    %v4742 = vsel %vm336, %v4598, 0
    %v4745 = vsel %vm336, %v4603, 0
    %v4748 = vsel %vm336, %v4608, 0
    %v4751 = vsel %vm336, %v4613, 0
    %4753 = vmatprep.subr.mxu0 0.0
    %4754 = vmatpush1.msra.mxu0 0.0
    %4755 = vmatprep.subr.mxu0 0.0
    %4756 = vmatpush1.msra.mxu0 0.0
    %4757 = vmatprep.subr.mxu0 0.0
    %4758 = vmatpush1.msra.mxu0 0.0
    %4759 = vmatprep.subr.mxu0 0.0
    %4760 = vmatpush1.msra.mxu0 0.0
    %4761 = vmatprep.subr.mxu0 0.0
    %4762 = vmatpush1.msra.mxu0 0.0
    %4763 = vmatprep.subr.mxu0 0.0
    %4764 = vmatpush1.msra.mxu0 0.0
    %4765 = vmatprep.subr.mxu0 0.0
    %4766 = vmatpush1.msra.mxu0 0.0
    %4767 = vmatprep.subr.mxu0 0.0
    %4768 = vmatpush1.msra.mxu0 0.0
    %4769 = vmatprep.subr.mxu0 0.0
    %4770 = vmatpush1.msra.mxu0 0.0
    %4771 = vmatprep.subr.mxu0 0.0
    %4772 = vmatpush1.msra.mxu0 0.0
    %4773 = vmatprep.subr.mxu0 0.0
    %4774 = vmatpush1.msra.mxu0 0.0
    %4775 = vmatprep.subr.mxu0 0.0
    %4776 = vmatpush1.msra.mxu0 0.0
    %4777 = vmatprep.subr.mxu0 0.0
    %4778 = vmatpush1.msra.mxu0 %v4480
    %4779 = vmatprep.subr.mxu0 0.0
    %4780 = vmatpush1.msra.mxu0 %v4479
    %4781 = vmatprep.subr.mxu0 0.0
    %4782 = vmatpush1.msra.mxu0 %v4478
    %4783 = vmatprep.subr.mxu0 0.0
    %4784 = vmatpush1.msra.mxu0 %v4477
    %4785 = vmatprep.subr.mxu0 0.0
    %4786 = vmatpush2.msra.mxu0 0.0
    %4787 = vmatprep.subr.mxu0 0.0
    %4788 = vmatpush2.msra.mxu0 0.0
    %4789 = vmatprep.subr.mxu0 0.0
    %4790 = vmatpush2.msra.mxu0 0.0
    %4791 = vmatprep.subr.mxu0 0.0
    %4792 = vmatpush2.msra.mxu0 0.0
    %4793 = vmatprep.subr.mxu0 0.0
    %4794 = vmatpush2.msra.mxu0 0.0
    %4795 = vmatprep.subr.mxu0 0.0
    %4796 = vmatpush2.msra.mxu0 0.0
    %4797 = vmatprep.subr.mxu0 0.0
    %4798 = vmatpush2.msra.mxu0 0.0
    %4799 = vmatprep.subr.mxu0 0.0
    %4800 = vmatpush2.msra.mxu0 0.0
    %4801 = vmatprep.subr.mxu0 0.0
    %4802 = vmatpush2.msra.mxu0 0.0
    %4803 = vmatprep.subr.mxu0 0.0
    %4804 = vmatpush2.msra.mxu0 0.0
    %4805 = vmatprep.subr.mxu0 0.0
    %4806 = vmatpush2.msra.mxu0 0.0
    %4807 = vmatprep.subr.mxu0 0.0
    %4808 = vmatpush2.msra.mxu0 0.0
    %4809 = vmatprep.subr.mxu0 0.0
    %4810 = vmatpush2.msra.mxu0 0.0
    %4811 = vmatprep.subr.mxu0 0.0
    %4812 = vmatpush2.msra.mxu0 0.0
    %4813 = vmatprep.subr.mxu0 0.0
    %4814 = vmatpush2.msra.mxu0 0.0
    %4815 = vmatprep.subr.mxu0 0.0
    %4816 = vmatpush2.msra.mxu0 0.0
    %4817 = vmatprep.mubr.f32.mxu0 0.0
    %4818 = vmatmul.mubr.f32.gmra.mxu0 %v4742
    %v4819 = vpop.f32.mrf.mxu0
    %v4820 = vadd.f32 0.0, %v4819
    %v4821 = vpop.f32.mrf.mxu0
    %4822 = vmatprep.mubr.f32.mxu0 0.0
    %4823 = vmatmul.mubr.f32.gmra.mxu0 %v4745
    %v4824 = vpop.f32.mrf.mxu0
    %v4825 = vadd.f32 0.0, %v4824
    %v4826 = vpop.f32.mrf.mxu0
    %4827 = vmatprep.mubr.f32.mxu0 0.0
    %4828 = vmatmul.mubr.f32.gmra.mxu0 %v4748
    %v4829 = vpop.f32.mrf.mxu0
    %v4830 = vadd.f32 0.0, %v4829
    %v4831 = vpop.f32.mrf.mxu0
    %4832 = vmatprep.mubr.f32.mxu0 0.0
    %4833 = vmatmul.mubr.f32.gmra.mxu0 %v4751
    %v4834 = vpop.f32.mrf.mxu0
    %v4835 = vadd.f32 0.0, %v4834
    %v4836 = vpop.f32.mrf.mxu0
    %4837 = vdwg.mxu0
    %v4839 = vsel %vm336, %v4578, 0
    %v4842 = vsel %vm336, %v4583, 0
    %v4845 = vsel %vm336, %v4588, 0
    %v4848 = vsel %vm336, %v4593, 0
    %4850 = vmatprep.subr.mxu0 0.0
    %4851 = vmatpush1.msra.mxu0 0.0
    %4852 = vmatprep.subr.mxu0 0.0
    %4853 = vmatpush1.msra.mxu0 0.0
    %4854 = vmatprep.subr.mxu0 0.0
    %4855 = vmatpush1.msra.mxu0 0.0
    %4856 = vmatprep.subr.mxu0 0.0
    %4857 = vmatpush1.msra.mxu0 0.0
    %4858 = vmatprep.subr.mxu0 0.0
    %4859 = vmatpush1.msra.mxu0 0.0
    %4860 = vmatprep.subr.mxu0 0.0
    %4861 = vmatpush1.msra.mxu0 0.0
    %4862 = vmatprep.subr.mxu0 0.0
    %4863 = vmatpush1.msra.mxu0 0.0
    %4864 = vmatprep.subr.mxu0 0.0
    %4865 = vmatpush1.msra.mxu0 0.0
    %4866 = vmatprep.subr.mxu0 0.0
    %4867 = vmatpush1.msra.mxu0 0.0
    %4868 = vmatprep.subr.mxu0 0.0
    %4869 = vmatpush1.msra.mxu0 0.0
    %4870 = vmatprep.subr.mxu0 0.0
    %4871 = vmatpush1.msra.mxu0 0.0
    %4872 = vmatprep.subr.mxu0 0.0
    %4873 = vmatpush1.msra.mxu0 0.0
    %4874 = vmatprep.subr.mxu0 0.0
    %4875 = vmatpush1.msra.mxu0 %v4475
    %4876 = vmatprep.subr.mxu0 0.0
    %4877 = vmatpush1.msra.mxu0 %v4474
    %4878 = vmatprep.subr.mxu0 0.0
    %4879 = vmatpush1.msra.mxu0 %v4473
    %4880 = vmatprep.subr.mxu0 0.0
    %4881 = vmatpush1.msra.mxu0 %v4472
    %4882 = vmatprep.subr.mxu0 0.0
    %4883 = vmatpush2.msra.mxu0 0.0
    %4884 = vmatprep.subr.mxu0 0.0
    %4885 = vmatpush2.msra.mxu0 0.0
    %4886 = vmatprep.subr.mxu0 0.0
    %4887 = vmatpush2.msra.mxu0 0.0
    %4888 = vmatprep.subr.mxu0 0.0
    %4889 = vmatpush2.msra.mxu0 0.0
    %4890 = vmatprep.subr.mxu0 0.0
    %4891 = vmatpush2.msra.mxu0 0.0
    %4892 = vmatprep.subr.mxu0 0.0
    %4893 = vmatpush2.msra.mxu0 0.0
    %4894 = vmatprep.subr.mxu0 0.0
    %4895 = vmatpush2.msra.mxu0 0.0
    %4896 = vmatprep.subr.mxu0 0.0
    %4897 = vmatpush2.msra.mxu0 0.0
    %4898 = vmatprep.subr.mxu0 0.0
    %4899 = vmatpush2.msra.mxu0 0.0
    %4900 = vmatprep.subr.mxu0 0.0
    %4901 = vmatpush2.msra.mxu0 0.0
    %4902 = vmatprep.subr.mxu0 0.0
    %4903 = vmatpush2.msra.mxu0 0.0
    %4904 = vmatprep.subr.mxu0 0.0
    %4905 = vmatpush2.msra.mxu0 0.0
    %4906 = vmatprep.subr.mxu0 0.0
    %4907 = vmatpush2.msra.mxu0 0.0
    %4908 = vmatprep.subr.mxu0 0.0
    %4909 = vmatpush2.msra.mxu0 0.0
    %4910 = vmatprep.subr.mxu0 0.0
    %4911 = vmatpush2.msra.mxu0 0.0
    %4912 = vmatprep.subr.mxu0 0.0
    %4913 = vmatpush2.msra.mxu0 0.0
    %4914 = vmatprep.mubr.f32.mxu0 0.0
    %4915 = vmatmul.mubr.f32.gmra.mxu0 %v4839
    %v4916 = vpop.f32.mrf.mxu0
    %v4917 = vadd.f32 %v4820, %v4916
    %v4918 = vpop.f32.mrf.mxu0
    %4919 = vmatprep.mubr.f32.mxu0 0.0
    %4920 = vmatmul.mubr.f32.gmra.mxu0 %v4842
    %v4921 = vpop.f32.mrf.mxu0
    %v4922 = vadd.f32 %v4825, %v4921
    %v4923 = vpop.f32.mrf.mxu0
    %4924 = vmatprep.mubr.f32.mxu0 0.0
    %4925 = vmatmul.mubr.f32.gmra.mxu0 %v4845
    %v4926 = vpop.f32.mrf.mxu0
    %v4927 = vadd.f32 %v4830, %v4926
    %v4928 = vpop.f32.mrf.mxu0
    %4929 = vmatprep.mubr.f32.mxu0 0.0
    %4930 = vmatmul.mubr.f32.gmra.mxu0 %v4848
    %v4931 = vpop.f32.mrf.mxu0
    %v4932 = vadd.f32 %v4835, %v4931
    %v4933 = vpop.f32.mrf.mxu0
    %4934 = vdwg.mxu0
    %v4936 = vlaneseq
    %v4937 = vshrl.u32 %v4936, 7
    %v4938 = vsub.s32 0, %v4937
    %v4939 = vrot.slane %v4482, %v4938
    %v4941 = vmul.f32 %v4731, %v4939
    %v4942 = vmul.f32 %v4734, %v4939
    %v4943 = vmul.f32 %v4737, %v4939
    %v4944 = vmul.f32 %v4740, %v4939
    %v4945 = vadd.f32 %v4917, %v4941
    %v4946 = vadd.f32 %v4922, %v4942
    %v4947 = vadd.f32 %v4927, %v4943
    %v4948 = vadd.f32 %v4932, %v4944
    %v4950 = vlaneseq
    %v4951 = vshrl.u32 %v4950, 7
    %v4952 = vsub.s32 0, %v4951
    %v4953 = vrot.slane %v4484, %v4952
    %v4955 = vadd.f32 %v4945, %v4953
    %v4956 = vadd.f32 %v4946, %v4953
    %v4957 = vadd.f32 %v4947, %v4953
    %v4958 = vadd.f32 %v4948, %v4953
    %v4959 = vxor.u32 %v4955, 2147483648
    %v4960 = vxor.u32 %v4956, 2147483648
    %v4961 = vxor.u32 %v4957, 2147483648
    %v4962 = vxor.u32 %v4958, 2147483648
    %v4963 = vmul.f32 %v4959, 1.442695
    %v4964 = vpow.pop %v4963
    %v4965 = vmul.f32 %v4960, 1.442695
    %v4966 = vpow.pop %v4965
    %v4967 = vmul.f32 %v4961, 1.442695
    %v4968 = vpow.pop %v4967
    %v4969 = vmul.f32 %v4962, 1.442695
    %v4970 = vpow.pop %v4969
    %v4971 = vadd.f32 %v4964, 1.0
    %v4972 = vadd.f32 %v4966, 1.0
    %v4973 = vadd.f32 %v4968, 1.0
    %v4974 = vadd.f32 %v4970, 1.0
    %v4975 = vrcp.pop %v4971
    %v4976 = vmul.f32 1.0, %v4975
    %v4977 = vrcp.pop %v4972
    %v4978 = vmul.f32 1.0, %v4977
    %v4979 = vrcp.pop %v4973
    %v4980 = vmul.f32 1.0, %v4979
    %v4981 = vrcp.pop %v4974
    %v4982 = vmul.f32 1.0, %v4981
    %v4983 = vmul.f32 %v4955, %v4976
    %v4984 = vmul.f32 %v4956, %v4978
    %v4985 = vmul.f32 %v4957, %v4980
    %v4986 = vmul.f32 %v4958, %v4982
    %v4988 = vlaneseq
    %v4989 = vshrl.u32 %v4988, 7
    %v4990 = vsub.s32 0, %v4989
    %v4991 = vrot.slane %v4491, %v4990
    %v4994 = vsel %vm336, %v4983, 0
    %v4997 = vsel %vm336, %v4984, 0
    %v5000 = vsel %vm336, %v4985, 0
    %v5003 = vsel %vm336, %v4986, 0
    %5005 = vmatprep.subr.mxu0 0.0
    %5006 = vmatpush1.msra.mxu0 0.0
    %5007 = vmatprep.subr.mxu0 0.0
    %5008 = vmatpush1.msra.mxu0 0.0
    %5009 = vmatprep.subr.mxu0 0.0
    %5010 = vmatpush1.msra.mxu0 0.0
    %5011 = vmatprep.subr.mxu0 0.0
    %5012 = vmatpush1.msra.mxu0 0.0
    %5013 = vmatprep.subr.mxu0 0.0
    %5014 = vmatpush1.msra.mxu0 0.0
    %5015 = vmatprep.subr.mxu0 0.0
    %5016 = vmatpush1.msra.mxu0 0.0
    %5017 = vmatprep.subr.mxu0 0.0
    %5018 = vmatpush1.msra.mxu0 0.0
    %5019 = vmatprep.subr.mxu0 0.0
    %5020 = vmatpush1.msra.mxu0 0.0
    %5021 = vmatprep.subr.mxu0 0.0
    %5022 = vmatpush1.msra.mxu0 0.0
    %5023 = vmatprep.subr.mxu0 0.0
    %5024 = vmatpush1.msra.mxu0 0.0
    %5025 = vmatprep.subr.mxu0 0.0
    %5026 = vmatpush1.msra.mxu0 0.0
    %5027 = vmatprep.subr.mxu0 0.0
    %5028 = vmatpush1.msra.mxu0 0.0
    %5029 = vmatprep.subr.mxu0 0.0
    %5030 = vmatpush1.msra.mxu0 %v4489
    %5031 = vmatprep.subr.mxu0 0.0
    %5032 = vmatpush1.msra.mxu0 %v4488
    %5033 = vmatprep.subr.mxu0 0.0
    %5034 = vmatpush1.msra.mxu0 %v4487
    %5035 = vmatprep.subr.mxu0 0.0
    %5036 = vmatpush1.msra.mxu0 %v4486
    %5037 = vmatprep.subr.mxu0 0.0
    %5038 = vmatpush2.msra.mxu0 0.0
    %5039 = vmatprep.subr.mxu0 0.0
    %5040 = vmatpush2.msra.mxu0 0.0
    %5041 = vmatprep.subr.mxu0 0.0
    %5042 = vmatpush2.msra.mxu0 0.0
    %5043 = vmatprep.subr.mxu0 0.0
    %5044 = vmatpush2.msra.mxu0 0.0
    %5045 = vmatprep.subr.mxu0 0.0
    %5046 = vmatpush2.msra.mxu0 0.0
    %5047 = vmatprep.subr.mxu0 0.0
    %5048 = vmatpush2.msra.mxu0 0.0
    %5049 = vmatprep.subr.mxu0 0.0
    %5050 = vmatpush2.msra.mxu0 0.0
    %5051 = vmatprep.subr.mxu0 0.0
    %5052 = vmatpush2.msra.mxu0 0.0
    %5053 = vmatprep.subr.mxu0 0.0
    %5054 = vmatpush2.msra.mxu0 0.0
    %5055 = vmatprep.subr.mxu0 0.0
    %5056 = vmatpush2.msra.mxu0 0.0
    %5057 = vmatprep.subr.mxu0 0.0
    %5058 = vmatpush2.msra.mxu0 0.0
    %5059 = vmatprep.subr.mxu0 0.0
    %5060 = vmatpush2.msra.mxu0 0.0
    %5061 = vmatprep.subr.mxu0 0.0
    %5062 = vmatpush2.msra.mxu0 0.0
    %5063 = vmatprep.subr.mxu0 0.0
    %5064 = vmatpush2.msra.mxu0 0.0
    %5065 = vmatprep.subr.mxu0 0.0
    %5066 = vmatpush2.msra.mxu0 0.0
    %5067 = vmatprep.subr.mxu0 0.0
    %5068 = vmatpush2.msra.mxu0 0.0
    %5069 = vmatprep.mubr.f32.mxu0 0.0
    %5070 = vmatmul.mubr.f32.gmra.mxu0 %v4994
    %v5071 = vpop.f32.mrf.mxu0
    %v5072 = vadd.f32 %v4991, %v5071
    %v5073 = vpop.f32.mrf.mxu0
    %5074 = vmatprep.mubr.f32.mxu0 0.0
    %5075 = vmatmul.mubr.f32.gmra.mxu0 %v4997
    %v5076 = vpop.f32.mrf.mxu0
    %v5077 = vadd.f32 %v4991, %v5076
    %v5078 = vpop.f32.mrf.mxu0
    %5079 = vmatprep.mubr.f32.mxu0 0.0
    %5080 = vmatmul.mubr.f32.gmra.mxu0 %v5000
    %v5081 = vpop.f32.mrf.mxu0
    %v5082 = vadd.f32 %v4991, %v5081
    %v5083 = vpop.f32.mrf.mxu0
    %5084 = vmatprep.mubr.f32.mxu0 0.0
    %5085 = vmatmul.mubr.f32.gmra.mxu0 %v5003
    %v5086 = vpop.f32.mrf.mxu0
    %v5087 = vadd.f32 %v4991, %v5086
    %v5088 = vpop.f32.mrf.mxu0
    %5089 = vdwg.mxu0
    %v5090 = vxor.u32 %v5072, 2147483648
    %v5091 = vxor.u32 %v5077, 2147483648
    %v5092 = vxor.u32 %v5082, 2147483648
    %v5093 = vxor.u32 %v5087, 2147483648
    %v5094 = vmul.f32 %v5090, 1.442695
    %v5095 = vpow.pop %v5094
    %v5096 = vmul.f32 %v5091, 1.442695
    %v5097 = vpow.pop %v5096
    %v5098 = vmul.f32 %v5092, 1.442695
    %v5099 = vpow.pop %v5098
    %v5100 = vmul.f32 %v5093, 1.442695
    %v5101 = vpow.pop %v5100
    %v5102 = vadd.f32 %v5095, 1.0
    %v5103 = vadd.f32 %v5097, 1.0
    %v5104 = vadd.f32 %v5099, 1.0
    %v5105 = vadd.f32 %v5101, 1.0
    %v5106 = vrcp.pop %v5102
    %v5107 = vmul.f32 1.0, %v5106
    %v5108 = vrcp.pop %v5103
    %v5109 = vmul.f32 1.0, %v5108
    %v5110 = vrcp.pop %v5104
    %v5111 = vmul.f32 1.0, %v5110
    %v5112 = vrcp.pop %v5105
    %v5113 = vmul.f32 1.0, %v5112
    %v5114 = vmul.f32 %v5072, %v5107
    %v5115 = vmul.f32 %v5077, %v5109
    %v5116 = vmul.f32 %v5082, %v5111
    %v5117 = vmul.f32 %v5087, %v5113
    %5118 = vmatprep.subr.mxu0 0.0
    %5119 = vmatpush1.msra.mxu0 0.0
    %5120 = vmatprep.subr.mxu0 0.0
    %5121 = vmatpush1.msra.mxu0 0.0
    %5122 = vmatprep.subr.mxu0 0.0
    %5123 = vmatpush1.msra.mxu0 0.0
    %5124 = vmatprep.subr.mxu0 0.0
    %5125 = vmatpush1.msra.mxu0 0.0
    %5126 = vmatprep.subr.mxu0 0.0
    %5127 = vmatpush1.msra.mxu0 0.0
    %5128 = vmatprep.subr.mxu0 0.0
    %5129 = vmatpush1.msra.mxu0 0.0
    %5130 = vmatprep.subr.mxu0 0.0
    %5131 = vmatpush1.msra.mxu0 0.0
    %5132 = vmatprep.subr.mxu0 0.0
    %5133 = vmatpush1.msra.mxu0 0.0
    %5134 = vmatprep.subr.mxu0 0.0
    %5135 = vmatpush1.msra.mxu0 0.0
    %5136 = vmatprep.subr.mxu0 0.0
    %5137 = vmatpush1.msra.mxu0 0.0
    %5138 = vmatprep.subr.mxu0 0.0
    %5139 = vmatpush1.msra.mxu0 0.0
    %5140 = vmatprep.subr.mxu0 0.0
    %5141 = vmatpush1.msra.mxu0 0.0
    %5142 = vmatprep.subr.mxu0 0.0
    %5143 = vmatpush1.msra.mxu0 %v5117
    %5144 = vmatprep.subr.mxu0 0.0
    %5145 = vmatpush1.msra.mxu0 %v5116
    %5146 = vmatprep.subr.mxu0 0.0
    %5147 = vmatpush1.msra.mxu0 %v5115
    %5148 = vmatprep.subr.mxu0 0.0
    %5149 = vmatpush1.msra.mxu0 %v5114
    %5150 = vmatprep.subr.mxu0 0.0
    %5151 = vmatpush2.msra.mxu0 0.0
    %5152 = vmatprep.subr.mxu0 0.0
    %5153 = vmatpush2.msra.mxu0 0.0
    %5154 = vmatprep.subr.mxu0 0.0
    %5155 = vmatpush2.msra.mxu0 0.0
    %5156 = vmatprep.subr.mxu0 0.0
    %5157 = vmatpush2.msra.mxu0 0.0
    %5158 = vmatprep.subr.mxu0 0.0
    %5159 = vmatpush2.msra.mxu0 0.0
    %5160 = vmatprep.subr.mxu0 0.0
    %5161 = vmatpush2.msra.mxu0 0.0
    %5162 = vmatprep.subr.mxu0 0.0
    %5163 = vmatpush2.msra.mxu0 0.0
    %5164 = vmatprep.subr.mxu0 0.0
    %5165 = vmatpush2.msra.mxu0 0.0
    %5166 = vmatprep.subr.mxu0 0.0
    %5167 = vmatpush2.msra.mxu0 0.0
    %5168 = vmatprep.subr.mxu0 0.0
    %5169 = vmatpush2.msra.mxu0 0.0
    %5170 = vmatprep.subr.mxu0 0.0
    %5171 = vmatpush2.msra.mxu0 0.0
    %5172 = vmatprep.subr.mxu0 0.0
    %5173 = vmatpush2.msra.mxu0 0.0
    %5174 = vmatprep.subr.mxu0 0.0
    %5175 = vmatpush2.msra.mxu0 0.0
    %5176 = vmatprep.subr.mxu0 0.0
    %5177 = vmatpush2.msra.mxu0 0.0
    %5178 = vmatprep.subr.mxu0 0.0
    %5179 = vmatpush2.msra.mxu0 0.0
    %5180 = vmatprep.subr.mxu0 0.0
    %5181 = vmatpush2.msra.mxu0 0.0
    %5182 = vmatprep.mubr.f32.mxu0 0.0
    %5183 = vmatmul.mubr.f32.gmra.mxu0 %v1369
    %v5184 = vpop.f32.mrf.mxu0
    %v5185 = vadd.f32 0.0, %v5184
    %v5186 = vpop.f32.mrf.mxu0
    %5187 = vmatprep.mubr.f32.mxu0 0.0
    %5188 = vmatmul.mubr.f32.gmra.mxu0 %v1372
    %v5189 = vpop.f32.mrf.mxu0
    %v5190 = vadd.f32 0.0, %v5189
    %v5191 = vpop.f32.mrf.mxu0
    %5192 = vdwg.mxu0
    %v5194 = vsel %vm336, %v5185, 0
    %v5197 = vsel %vm336, %v5190, 0
    %5199 = vmatprep.subr.mxu0 0.0
    %5200 = vmatpush1.msra.mxu0 0.0
    %5201 = vmatprep.subr.mxu0 0.0
    %5202 = vmatpush1.msra.mxu0 0.0
    %5203 = vmatprep.subr.mxu0 0.0
    %5204 = vmatpush1.msra.mxu0 0.0
    %5205 = vmatprep.subr.mxu0 0.0
    %5206 = vmatpush1.msra.mxu0 0.0
    %5207 = vmatprep.subr.mxu0 0.0
    %5208 = vmatpush1.msra.mxu0 0.0
    %5209 = vmatprep.subr.mxu0 0.0
    %5210 = vmatpush1.msra.mxu0 0.0
    %5211 = vmatprep.subr.mxu0 0.0
    %5212 = vmatpush1.msra.mxu0 0.0
    %5213 = vmatprep.subr.mxu0 0.0
    %5214 = vmatpush1.msra.mxu0 0.0
    %5215 = vmatprep.subr.mxu0 0.0
    %5216 = vmatpush1.msra.mxu0 0.0
    %5217 = vmatprep.subr.mxu0 0.0
    %5218 = vmatpush1.msra.mxu0 0.0
    %5219 = vmatprep.subr.mxu0 0.0
    %5220 = vmatpush1.msra.mxu0 0.0
    %5221 = vmatprep.subr.mxu0 0.0
    %5222 = vmatpush1.msra.mxu0 0.0
    %5223 = vmatprep.subr.mxu0 0.0
    %5224 = vmatpush1.msra.mxu0 %v4501
    %5225 = vmatprep.subr.mxu0 0.0
    %5226 = vmatpush1.msra.mxu0 %v4500
    %5227 = vmatprep.subr.mxu0 0.0
    %5228 = vmatpush1.msra.mxu0 %v4499
    %5229 = vmatprep.subr.mxu0 0.0
    %5230 = vmatpush1.msra.mxu0 %v4498
    %5231 = vmatprep.subr.mxu0 0.0
    %5232 = vmatpush2.msra.mxu0 0.0
    %5233 = vmatprep.subr.mxu0 0.0
    %5234 = vmatpush2.msra.mxu0 0.0
    %5235 = vmatprep.subr.mxu0 0.0
    %5236 = vmatpush2.msra.mxu0 0.0
    %5237 = vmatprep.subr.mxu0 0.0
    %5238 = vmatpush2.msra.mxu0 0.0
    %5239 = vmatprep.subr.mxu0 0.0
    %5240 = vmatpush2.msra.mxu0 0.0
    %5241 = vmatprep.subr.mxu0 0.0
    %5242 = vmatpush2.msra.mxu0 0.0
    %5243 = vmatprep.subr.mxu0 0.0
    %5244 = vmatpush2.msra.mxu0 0.0
    %5245 = vmatprep.subr.mxu0 0.0
    %5246 = vmatpush2.msra.mxu0 0.0
    %5247 = vmatprep.subr.mxu0 0.0
    %5248 = vmatpush2.msra.mxu0 0.0
    %5249 = vmatprep.subr.mxu0 0.0
    %5250 = vmatpush2.msra.mxu0 0.0
    %5251 = vmatprep.subr.mxu0 0.0
    %5252 = vmatpush2.msra.mxu0 0.0
    %5253 = vmatprep.subr.mxu0 0.0
    %5254 = vmatpush2.msra.mxu0 0.0
    %5255 = vmatprep.subr.mxu0 0.0
    %5256 = vmatpush2.msra.mxu0 0.0
    %5257 = vmatprep.subr.mxu0 0.0
    %5258 = vmatpush2.msra.mxu0 0.0
    %5259 = vmatprep.subr.mxu0 0.0
    %5260 = vmatpush2.msra.mxu0 0.0
    %5261 = vmatprep.subr.mxu0 0.0
    %5262 = vmatpush2.msra.mxu0 0.0
    %5263 = vmatprep.mubr.f32.mxu0 0.0
    %5264 = vmatmul.mubr.f32.gmra.mxu0 %v5194
    %v5265 = vpop.f32.mrf.mxu0
    %v5266 = vadd.f32 0.0, %v5265
    %v5267 = vpop.f32.mrf.mxu0
    %5268 = vmatprep.mubr.f32.mxu0 0.0
    %5269 = vmatmul.mubr.f32.gmra.mxu0 %v5197
    %v5270 = vpop.f32.mrf.mxu0
    %v5271 = vadd.f32 0.0, %v5270
    %v5272 = vpop.f32.mrf.mxu0
    %5273 = vdwg.mxu0
    %v5275 = vsel %vm336, %v4463, 0
    %v5278 = vsel %vm336, %v4468, 0
    %5280 = vmatprep.subr.mxu0 0.0
    %5281 = vmatpush1.msra.mxu0 0.0
    %5282 = vmatprep.subr.mxu0 0.0
    %5283 = vmatpush1.msra.mxu0 0.0
    %5284 = vmatprep.subr.mxu0 0.0
    %5285 = vmatpush1.msra.mxu0 0.0
    %5286 = vmatprep.subr.mxu0 0.0
    %5287 = vmatpush1.msra.mxu0 0.0
    %5288 = vmatprep.subr.mxu0 0.0
    %5289 = vmatpush1.msra.mxu0 0.0
    %5290 = vmatprep.subr.mxu0 0.0
    %5291 = vmatpush1.msra.mxu0 0.0
    %5292 = vmatprep.subr.mxu0 0.0
    %5293 = vmatpush1.msra.mxu0 0.0
    %5294 = vmatprep.subr.mxu0 0.0
    %5295 = vmatpush1.msra.mxu0 0.0
    %5296 = vmatprep.subr.mxu0 0.0
    %5297 = vmatpush1.msra.mxu0 0.0
    %5298 = vmatprep.subr.mxu0 0.0
    %5299 = vmatpush1.msra.mxu0 0.0
    %5300 = vmatprep.subr.mxu0 0.0
    %5301 = vmatpush1.msra.mxu0 0.0
    %5302 = vmatprep.subr.mxu0 0.0
    %5303 = vmatpush1.msra.mxu0 0.0
    %5304 = vmatprep.subr.mxu0 0.0
    %5305 = vmatpush1.msra.mxu0 %v4496
    %5306 = vmatprep.subr.mxu0 0.0
    %5307 = vmatpush1.msra.mxu0 %v4495
    %5308 = vmatprep.subr.mxu0 0.0
    %5309 = vmatpush1.msra.mxu0 %v4494
    %5310 = vmatprep.subr.mxu0 0.0
    %5311 = vmatpush1.msra.mxu0 %v4493
    %5312 = vmatprep.subr.mxu0 0.0
    %5313 = vmatpush2.msra.mxu0 0.0
    %5314 = vmatprep.subr.mxu0 0.0
    %5315 = vmatpush2.msra.mxu0 0.0
    %5316 = vmatprep.subr.mxu0 0.0
    %5317 = vmatpush2.msra.mxu0 0.0
    %5318 = vmatprep.subr.mxu0 0.0
    %5319 = vmatpush2.msra.mxu0 0.0
    %5320 = vmatprep.subr.mxu0 0.0
    %5321 = vmatpush2.msra.mxu0 0.0
    %5322 = vmatprep.subr.mxu0 0.0
    %5323 = vmatpush2.msra.mxu0 0.0
    %5324 = vmatprep.subr.mxu0 0.0
    %5325 = vmatpush2.msra.mxu0 0.0
    %5326 = vmatprep.subr.mxu0 0.0
    %5327 = vmatpush2.msra.mxu0 0.0
    %5328 = vmatprep.subr.mxu0 0.0
    %5329 = vmatpush2.msra.mxu0 0.0
    %5330 = vmatprep.subr.mxu0 0.0
    %5331 = vmatpush2.msra.mxu0 0.0
    %5332 = vmatprep.subr.mxu0 0.0
    %5333 = vmatpush2.msra.mxu0 0.0
    %5334 = vmatprep.subr.mxu0 0.0
    %5335 = vmatpush2.msra.mxu0 0.0
    %5336 = vmatprep.subr.mxu0 0.0
    %5337 = vmatpush2.msra.mxu0 0.0
    %5338 = vmatprep.subr.mxu0 0.0
    %5339 = vmatpush2.msra.mxu0 0.0
    %5340 = vmatprep.subr.mxu0 0.0
    %5341 = vmatpush2.msra.mxu0 0.0
    %5342 = vmatprep.subr.mxu0 0.0
    %5343 = vmatpush2.msra.mxu0 0.0
    %5344 = vmatprep.mubr.f32.mxu0 0.0
    %5345 = vmatmul.mubr.f32.gmra.mxu0 %v5275
    %v5346 = vpop.f32.mrf.mxu0
    %v5347 = vadd.f32 %v5266, %v5346
    %v5348 = vpop.f32.mrf.mxu0
    %5349 = vmatprep.mubr.f32.mxu0 0.0
    %5350 = vmatmul.mubr.f32.gmra.mxu0 %v5278
    %v5351 = vpop.f32.mrf.mxu0
    %v5352 = vadd.f32 %v5271, %v5351
    %v5353 = vpop.f32.mrf.mxu0
    %5354 = vdwg.mxu0
    %v5356 = vlaneseq
    %v5357 = vshrl.u32 %v5356, 7
    %v5358 = vsub.s32 0, %v5357
    %v5359 = vrot.slane %v4503, %v5358
    %v5361 = vadd.f32 %v5347, %v5359
    %v5362 = vadd.f32 %v5352, %v5359
    %v5363 = vxor.u32 %v5361, 2147483648
    %v5364 = vxor.u32 %v5362, 2147483648
    %v5365 = vmul.f32 %v5363, 1.442695
    %v5366 = vpow.pop %v5365
    %v5367 = vmul.f32 %v5364, 1.442695
    %v5368 = vpow.pop %v5367
    %v5369 = vadd.f32 %v5366, 1.0
    %v5370 = vadd.f32 %v5368, 1.0
    %v5371 = vrcp.pop %v5369
    %v5372 = vmul.f32 1.0, %v5371
    %v5373 = vrcp.pop %v5370
    %v5374 = vmul.f32 1.0, %v5373
    %v5375 = vmul.f32 %v5361, %v5372
    %v5376 = vmul.f32 %v5362, %v5374
    %v5378 = vlaneseq
    %v5379 = vshrl.u32 %v5378, 7
    %v5380 = vsub.s32 0, %v5379
    %v5381 = vrot.slane %v4510, %v5380
    %v5384 = vsel %vm336, %v5375, 0
    %v5387 = vsel %vm336, %v5376, 0
    %5389 = vmatprep.subr.mxu0 0.0
    %5390 = vmatpush1.msra.mxu0 0.0
    %5391 = vmatprep.subr.mxu0 0.0
    %5392 = vmatpush1.msra.mxu0 0.0
    %5393 = vmatprep.subr.mxu0 0.0
    %5394 = vmatpush1.msra.mxu0 0.0
    %5395 = vmatprep.subr.mxu0 0.0
    %5396 = vmatpush1.msra.mxu0 0.0
    %5397 = vmatprep.subr.mxu0 0.0
    %5398 = vmatpush1.msra.mxu0 0.0
    %5399 = vmatprep.subr.mxu0 0.0
    %5400 = vmatpush1.msra.mxu0 0.0
    %5401 = vmatprep.subr.mxu0 0.0
    %5402 = vmatpush1.msra.mxu0 0.0
    %5403 = vmatprep.subr.mxu0 0.0
    %5404 = vmatpush1.msra.mxu0 0.0
    %5405 = vmatprep.subr.mxu0 0.0
    %5406 = vmatpush1.msra.mxu0 0.0
    %5407 = vmatprep.subr.mxu0 0.0
    %5408 = vmatpush1.msra.mxu0 0.0
    %5409 = vmatprep.subr.mxu0 0.0
    %5410 = vmatpush1.msra.mxu0 0.0
    %5411 = vmatprep.subr.mxu0 0.0
    %5412 = vmatpush1.msra.mxu0 0.0
    %5413 = vmatprep.subr.mxu0 0.0
    %5414 = vmatpush1.msra.mxu0 %v4508
    %5415 = vmatprep.subr.mxu0 0.0
    %5416 = vmatpush1.msra.mxu0 %v4507
    %5417 = vmatprep.subr.mxu0 0.0
    %5418 = vmatpush1.msra.mxu0 %v4506
    %5419 = vmatprep.subr.mxu0 0.0
    %5420 = vmatpush1.msra.mxu0 %v4505
    %5421 = vmatprep.subr.mxu0 0.0
    %5422 = vmatpush2.msra.mxu0 0.0
    %5423 = vmatprep.subr.mxu0 0.0
    %5424 = vmatpush2.msra.mxu0 0.0
    %5425 = vmatprep.subr.mxu0 0.0
    %5426 = vmatpush2.msra.mxu0 0.0
    %5427 = vmatprep.subr.mxu0 0.0
    %5428 = vmatpush2.msra.mxu0 0.0
    %5429 = vmatprep.subr.mxu0 0.0
    %5430 = vmatpush2.msra.mxu0 0.0
    %5431 = vmatprep.subr.mxu0 0.0
    %5432 = vmatpush2.msra.mxu0 0.0
    %5433 = vmatprep.subr.mxu0 0.0
    %5434 = vmatpush2.msra.mxu0 0.0
    %5435 = vmatprep.subr.mxu0 0.0
    %5436 = vmatpush2.msra.mxu0 0.0
    %5437 = vmatprep.subr.mxu0 0.0
    %5438 = vmatpush2.msra.mxu0 0.0
    %5439 = vmatprep.subr.mxu0 0.0
    %5440 = vmatpush2.msra.mxu0 0.0
    %5441 = vmatprep.subr.mxu0 0.0
    %5442 = vmatpush2.msra.mxu0 0.0
    %5443 = vmatprep.subr.mxu0 0.0
    %5444 = vmatpush2.msra.mxu0 0.0
    %5445 = vmatprep.subr.mxu0 0.0
    %5446 = vmatpush2.msra.mxu0 0.0
    %5447 = vmatprep.subr.mxu0 0.0
    %5448 = vmatpush2.msra.mxu0 0.0
    %5449 = vmatprep.subr.mxu0 0.0
    %5450 = vmatpush2.msra.mxu0 0.0
    %5451 = vmatprep.subr.mxu0 0.0
    %5452 = vmatpush2.msra.mxu0 0.0
    %5453 = vmatprep.mubr.f32.mxu0 0.0
    %5454 = vmatmul.mubr.f32.gmra.mxu0 %v5384
    %v5455 = vpop.f32.mrf.mxu0
    %v5456 = vadd.f32 %v5381, %v5455
    %v5457 = vpop.f32.mrf.mxu0
    %5458 = vmatprep.mubr.f32.mxu0 0.0
    %5459 = vmatmul.mubr.f32.gmra.mxu0 %v5387
    %v5460 = vpop.f32.mrf.mxu0
    %v5461 = vadd.f32 %v5381, %v5460
    %v5462 = vpop.f32.mrf.mxu0
    %5463 = vdwg.mxu0
    %v5464 = vld [vmem:[%s43] sm:$0xff]
    %v5465 = vld [vmem:[%s43 + $0x8] sm:$0xff]
    %v5466 = vld [vmem:[%s43 + $0x10] sm:$0xff]
    %v5467 = vld [vmem:[%s43 + $0x18] sm:$0xff]
    %v5468 = vld [vmem:[#allocation13] sm:$0x1]
    %v5470 = vlaneseq
    %v5471 = vshrl.u32 %v5470, 7
    %v5472 = vsub.s32 0, %v5471
    %v5473 = vrot.slane %v5468, %v5472
    %v5476 = vsel %vm336, %v5456, 0
    %v5479 = vsel %vm336, %v5461, 0
    %5481 = vmatprep.subr.mxu0 0.0
    %5482 = vmatpush1.msra.mxu0 0.0
    %5483 = vmatprep.subr.mxu0 0.0
    %5484 = vmatpush1.msra.mxu0 0.0
    %5485 = vmatprep.subr.mxu0 0.0
    %5486 = vmatpush1.msra.mxu0 0.0
    %5487 = vmatprep.subr.mxu0 0.0
    %5488 = vmatpush1.msra.mxu0 0.0
    %5489 = vmatprep.subr.mxu0 0.0
    %5490 = vmatpush1.msra.mxu0 0.0
    %5491 = vmatprep.subr.mxu0 0.0
    %5492 = vmatpush1.msra.mxu0 0.0
    %5493 = vmatprep.subr.mxu0 0.0
    %5494 = vmatpush1.msra.mxu0 0.0
    %5495 = vmatprep.subr.mxu0 0.0
    %5496 = vmatpush1.msra.mxu0 0.0
    %5497 = vmatprep.subr.mxu0 0.0
    %5498 = vmatpush1.msra.mxu0 0.0
    %5499 = vmatprep.subr.mxu0 0.0
    %5500 = vmatpush1.msra.mxu0 0.0
    %5501 = vmatprep.subr.mxu0 0.0
    %5502 = vmatpush1.msra.mxu0 0.0
    %5503 = vmatprep.subr.mxu0 0.0
    %5504 = vmatpush1.msra.mxu0 0.0
    %5505 = vmatprep.subr.mxu0 0.0
    %5506 = vmatpush1.msra.mxu0 %v5467
    %5507 = vmatprep.subr.mxu0 0.0
    %5508 = vmatpush1.msra.mxu0 %v5466
    %5509 = vmatprep.subr.mxu0 0.0
    %5510 = vmatpush1.msra.mxu0 %v5465
    %5511 = vmatprep.subr.mxu0 0.0
    %5512 = vmatpush1.msra.mxu0 %v5464
    %5513 = vmatprep.subr.mxu0 0.0
    %5514 = vmatpush2.msra.mxu0 0.0
    %5515 = vmatprep.subr.mxu0 0.0
    %5516 = vmatpush2.msra.mxu0 0.0
    %5517 = vmatprep.subr.mxu0 0.0
    %5518 = vmatpush2.msra.mxu0 0.0
    %5519 = vmatprep.subr.mxu0 0.0
    %5520 = vmatpush2.msra.mxu0 0.0
    %5521 = vmatprep.subr.mxu0 0.0
    %5522 = vmatpush2.msra.mxu0 0.0
    %5523 = vmatprep.subr.mxu0 0.0
    %5524 = vmatpush2.msra.mxu0 0.0
    %5525 = vmatprep.subr.mxu0 0.0
    %5526 = vmatpush2.msra.mxu0 0.0
    %5527 = vmatprep.subr.mxu0 0.0
    %5528 = vmatpush2.msra.mxu0 0.0
    %5529 = vmatprep.subr.mxu0 0.0
    %5530 = vmatpush2.msra.mxu0 0.0
    %5531 = vmatprep.subr.mxu0 0.0
    %5532 = vmatpush2.msra.mxu0 0.0
    %5533 = vmatprep.subr.mxu0 0.0
    %5534 = vmatpush2.msra.mxu0 0.0
    %5535 = vmatprep.subr.mxu0 0.0
    %5536 = vmatpush2.msra.mxu0 0.0
    %5537 = vmatprep.subr.mxu0 0.0
    %5538 = vmatpush2.msra.mxu0 0.0
    %5539 = vmatprep.subr.mxu0 0.0
    %5540 = vmatpush2.msra.mxu0 0.0
    %5541 = vmatprep.subr.mxu0 0.0
    %5542 = vmatpush2.msra.mxu0 0.0
    %5543 = vmatprep.subr.mxu0 0.0
    %5544 = vmatpush2.msra.mxu0 0.0
    %5545 = vmatprep.mubr.f32.mxu0 0.0
    %5546 = vmatmul.mubr.f32.gmra.mxu0 %v5476
    %v5547 = vpop.f32.mrf.mxu0
    %v5548 = vadd.f32 %v5473, %v5547
    %v5549 = vpop.f32.mrf.mxu0
    %5550 = vmatprep.mubr.f32.mxu0 0.0
    %5551 = vmatmul.mubr.f32.gmra.mxu0 %v5479
    %v5552 = vpop.f32.mrf.mxu0
    %v5553 = vadd.f32 %v5473, %v5552
    %v5554 = vpop.f32.mrf.mxu0
    %5555 = vdwg.mxu0
    %v5556 = vld [vmem:[%s5] sm:$0xff]
    %v5557 = vld [vmem:[%s5 + $0x8] sm:$0xff]
    %vm5558 = vcmp.eq.s32.totalorder %v5556, 0
    %vm5559 = vcmp.eq.s32.totalorder %v5557, 0
    %v5560 = vsel %vm5558, 1, 0
    %v5561 = vsel %vm5559, 1, 0
    %5562 = vset.pattern.permute.xlu0 0
    %5563 = vperm.xlu0 %5562, %v5560
    %v5564 = vpop.permute.xlu0 %5563
    %5565 = vset.pattern.permute.xlu0 0
    %5566 = vperm.xlu0 %5565, %v5561
    %v5567 = vpop.permute.xlu0 %5566
    %vm5568 = vcmp.eq.s32.totalorder %v5564, 1
    %vm5569 = vcmp.eq.s32.totalorder %v5567, 1
    %v5570 = vsel %vm5568, %v5548, -1e+30
    %v5571 = vsel %vm5569, %v5553, -1e+30
    %v5572 = vsel %vm336, %v5570, -inf
    %v5573 = vsel %vm336, %v5571, -inf
    %v5574 = vmax.f32 %v5572, %v5573
    %v5575 = vrot.slane %v5574, 4
    %v5576 = vmax.f32 %v5574, %v5575
    %v5577 = vrot.slane %v5576, 2
    %v5578 = vmax.f32 %v5576, %v5577
    %v5579 = vrot.slane %v5578, 1
    %v5580 = vmax.f32 %v5578, %v5579
    %vm5581 = vcmp.eq.s32.totalorder %v5556, 1
    %vm5582 = vcmp.eq.s32.totalorder %v5557, 1
    %v5583 = vsel %vm5581, 1, 0
    %v5584 = vsel %vm5582, 1, 0
    %5585 = vset.pattern.permute.xlu0 0
    %5586 = vperm.xlu0 %5585, %v5583
    %v5587 = vpop.permute.xlu0 %5586
    %5588 = vset.pattern.permute.xlu0 0
    %5589 = vperm.xlu0 %5588, %v5584
    %v5590 = vpop.permute.xlu0 %5589
    %vm5591 = vcmp.eq.s32.totalorder %v5587, 1
    %vm5592 = vcmp.eq.s32.totalorder %v5590, 1
    %v5593 = vsel %vm5591, %v5548, -1e+30
    %v5594 = vsel %vm5592, %v5553, -1e+30
    %v5595 = vsel %vm336, %v5593, -inf
    %v5596 = vsel %vm336, %v5594, -inf
    %v5597 = vmax.f32 %v5595, %v5596
    %v5598 = vrot.slane %v5597, 4
    %v5599 = vmax.f32 %v5597, %v5598
    %v5600 = vrot.slane %v5599, 2
    %v5601 = vmax.f32 %v5599, %v5600
    %v5602 = vrot.slane %v5601, 1
    %v5603 = vmax.f32 %v5601, %v5602
    %vm5604 = vcmask 1040384
    %v5605 = vsel %vm5604, %v5580, %v5603
    %v5606 = vld [vmem:[#allocation14] sm:$0xff]
    %v5607 = vld [vmem:[#allocation14 + $0x8] sm:$0xff]
    %v5608 = vld [vmem:[#allocation14 + $0x10] sm:$0xff]
    %v5609 = vld [vmem:[#allocation14 + $0x18] sm:$0xff]
    %v5610 = vld [vmem:[#allocation16] sm:$0x1]
    %v5612 = vlaneseq
    %v5613 = vshrl.u32 %v5612, 7
    %v5614 = vsub.s32 0, %v5613
    %v5615 = vrot.slane %v5610, %v5614
    %v5618 = vsel %vm336, %v5605, 0
    %5620 = vmatprep.subr.mxu0 0.0
    %5621 = vmatpush1.msra.mxu0 0.0
    %5622 = vmatprep.subr.mxu0 0.0
    %5623 = vmatpush1.msra.mxu0 0.0
    %5624 = vmatprep.subr.mxu0 0.0
    %5625 = vmatpush1.msra.mxu0 0.0
    %5626 = vmatprep.subr.mxu0 0.0
    %5627 = vmatpush1.msra.mxu0 0.0
    %5628 = vmatprep.subr.mxu0 0.0
    %5629 = vmatpush1.msra.mxu0 0.0
    %5630 = vmatprep.subr.mxu0 0.0
    %5631 = vmatpush1.msra.mxu0 0.0
    %5632 = vmatprep.subr.mxu0 0.0
    %5633 = vmatpush1.msra.mxu0 0.0
    %5634 = vmatprep.subr.mxu0 0.0
    %5635 = vmatpush1.msra.mxu0 0.0
    %5636 = vmatprep.subr.mxu0 0.0
    %5637 = vmatpush1.msra.mxu0 0.0
    %5638 = vmatprep.subr.mxu0 0.0
    %5639 = vmatpush1.msra.mxu0 0.0
    %5640 = vmatprep.subr.mxu0 0.0
    %5641 = vmatpush1.msra.mxu0 0.0
    %5642 = vmatprep.subr.mxu0 0.0
    %5643 = vmatpush1.msra.mxu0 0.0
    %5644 = vmatprep.subr.mxu0 0.0
    %5645 = vmatpush1.msra.mxu0 %v5609
    %5646 = vmatprep.subr.mxu0 0.0
    %5647 = vmatpush1.msra.mxu0 %v5608
    %5648 = vmatprep.subr.mxu0 0.0
    %5649 = vmatpush1.msra.mxu0 %v5607
    %5650 = vmatprep.subr.mxu0 0.0
    %5651 = vmatpush1.msra.mxu0 %v5606
    %5652 = vmatprep.subr.mxu0 0.0
    %5653 = vmatpush2.msra.mxu0 0.0
    %5654 = vmatprep.subr.mxu0 0.0
    %5655 = vmatpush2.msra.mxu0 0.0
    %5656 = vmatprep.subr.mxu0 0.0
    %5657 = vmatpush2.msra.mxu0 0.0
    %5658 = vmatprep.subr.mxu0 0.0
    %5659 = vmatpush2.msra.mxu0 0.0
    %5660 = vmatprep.subr.mxu0 0.0
    %5661 = vmatpush2.msra.mxu0 0.0
    %5662 = vmatprep.subr.mxu0 0.0
    %5663 = vmatpush2.msra.mxu0 0.0
    %5664 = vmatprep.subr.mxu0 0.0
    %5665 = vmatpush2.msra.mxu0 0.0
    %5666 = vmatprep.subr.mxu0 0.0
    %5667 = vmatpush2.msra.mxu0 0.0
    %5668 = vmatprep.subr.mxu0 0.0
    %5669 = vmatpush2.msra.mxu0 0.0
    %5670 = vmatprep.subr.mxu0 0.0
    %5671 = vmatpush2.msra.mxu0 0.0
    %5672 = vmatprep.subr.mxu0 0.0
    %5673 = vmatpush2.msra.mxu0 0.0
    %5674 = vmatprep.subr.mxu0 0.0
    %5675 = vmatpush2.msra.mxu0 0.0
    %5676 = vmatprep.subr.mxu0 0.0
    %5677 = vmatpush2.msra.mxu0 0.0
    %5678 = vmatprep.subr.mxu0 0.0
    %5679 = vmatpush2.msra.mxu0 0.0
    %5680 = vmatprep.subr.mxu0 0.0
    %5681 = vmatpush2.msra.mxu0 0.0
    %5682 = vmatprep.subr.mxu0 0.0
    %5683 = vmatpush2.msra.mxu0 0.0
    %5684 = vmatprep.mubr.f32.mxu0 0.0
    %5685 = vmatmul.mubr.f32.gmra.mxu0 %v5618
    %v5686 = vpop.f32.mrf.mxu0
    %v5687 = vadd.f32 %v5615, %v5686
    %v5688 = vpop.f32.mrf.mxu0
    %5689 = vdwg.mxu0
    %v5690 = vmax.f32 %v5687, 0.0
    %v5691 = vld [vmem:[#allocation17] sm:$0xff]
    %v5692 = vld [vmem:[#allocation17 + $0x8] sm:$0xff]
    %v5693 = vld [vmem:[#allocation17 + $0x10] sm:$0xff]
    %v5694 = vld [vmem:[#allocation17 + $0x18] sm:$0xff]
    %v5695 = vld [vmem:[#allocation17 + $0x20] sm:$0xff]
    %v5696 = vld [vmem:[#allocation17 + $0x28] sm:$0xff]
    %v5697 = vld [vmem:[#allocation17 + $0x30] sm:$0xff]
    %v5698 = vld [vmem:[#allocation17 + $0x38] sm:$0xff]
    %v5699 = vld [vmem:[#allocation17 + $0x40] sm:$0xff]
    %v5700 = vld [vmem:[#allocation17 + $0x48] sm:$0xff]
    %v5701 = vld [vmem:[#allocation17 + $0x50] sm:$0xff]
    %v5702 = vld [vmem:[#allocation17 + $0x58] sm:$0xff]
    %v5703 = vld [vmem:[#allocation17 + $0x60] sm:$0xff]
    %v5704 = vld [vmem:[#allocation17 + $0x68] sm:$0xff]
    %v5705 = vld [vmem:[#allocation17 + $0x70] sm:$0xff]
    %v5706 = vld [vmem:[#allocation17 + $0x78] sm:$0xff]
    %v5707 = vld [vmem:[#allocation19] sm:$0x1]
    %v5709 = vlaneseq
    %v5710 = vshrl.u32 %v5709, 7
    %v5711 = vsub.s32 0, %v5710
    %v5712 = vrot.slane %v5707, %v5711
    %5714 = vmatprep.subr.mxu0 0.0
    %5715 = vmatpush1.msra.mxu0 %v5706
    %5716 = vmatprep.subr.mxu0 0.0
    %5717 = vmatpush1.msra.mxu0 %v5705
    %5718 = vmatprep.subr.mxu0 0.0
    %5719 = vmatpush1.msra.mxu0 %v5704
    %5720 = vmatprep.subr.mxu0 0.0
    %5721 = vmatpush1.msra.mxu0 %v5703
    %5722 = vmatprep.subr.mxu0 0.0
    %5723 = vmatpush1.msra.mxu0 %v5702
    %5724 = vmatprep.subr.mxu0 0.0
    %5725 = vmatpush1.msra.mxu0 %v5701
    %5726 = vmatprep.subr.mxu0 0.0
    %5727 = vmatpush1.msra.mxu0 %v5700
    %5728 = vmatprep.subr.mxu0 0.0
    %5729 = vmatpush1.msra.mxu0 %v5699
    %5730 = vmatprep.subr.mxu0 0.0
    %5731 = vmatpush1.msra.mxu0 %v5698
    %5732 = vmatprep.subr.mxu0 0.0
    %5733 = vmatpush1.msra.mxu0 %v5697
    %5734 = vmatprep.subr.mxu0 0.0
    %5735 = vmatpush1.msra.mxu0 %v5696
    %5736 = vmatprep.subr.mxu0 0.0
    %5737 = vmatpush1.msra.mxu0 %v5695
    %5738 = vmatprep.subr.mxu0 0.0
    %5739 = vmatpush1.msra.mxu0 %v5694
    %5740 = vmatprep.subr.mxu0 0.0
    %5741 = vmatpush1.msra.mxu0 %v5693
    %5742 = vmatprep.subr.mxu0 0.0
    %5743 = vmatpush1.msra.mxu0 %v5692
    %5744 = vmatprep.subr.mxu0 0.0
    %5745 = vmatpush1.msra.mxu0 %v5691
    %5746 = vmatprep.subr.mxu0 0.0
    %5747 = vmatpush2.msra.mxu0 0.0
    %5748 = vmatprep.subr.mxu0 0.0
    %5749 = vmatpush2.msra.mxu0 0.0
    %5750 = vmatprep.subr.mxu0 0.0
    %5751 = vmatpush2.msra.mxu0 0.0
    %5752 = vmatprep.subr.mxu0 0.0
    %5753 = vmatpush2.msra.mxu0 0.0
    %5754 = vmatprep.subr.mxu0 0.0
    %5755 = vmatpush2.msra.mxu0 0.0
    %5756 = vmatprep.subr.mxu0 0.0
    %5757 = vmatpush2.msra.mxu0 0.0
    %5758 = vmatprep.subr.mxu0 0.0
    %5759 = vmatpush2.msra.mxu0 0.0
    %5760 = vmatprep.subr.mxu0 0.0
    %5761 = vmatpush2.msra.mxu0 0.0
    %5762 = vmatprep.subr.mxu0 0.0
    %5763 = vmatpush2.msra.mxu0 0.0
    %5764 = vmatprep.subr.mxu0 0.0
    %5765 = vmatpush2.msra.mxu0 0.0
    %5766 = vmatprep.subr.mxu0 0.0
    %5767 = vmatpush2.msra.mxu0 0.0
    %5768 = vmatprep.subr.mxu0 0.0
    %5769 = vmatpush2.msra.mxu0 0.0
    %5770 = vmatprep.subr.mxu0 0.0
    %5771 = vmatpush2.msra.mxu0 0.0
    %5772 = vmatprep.subr.mxu0 0.0
    %5773 = vmatpush2.msra.mxu0 0.0
    %5774 = vmatprep.subr.mxu0 0.0
    %5775 = vmatpush2.msra.mxu0 0.0
    %5776 = vmatprep.subr.mxu0 0.0
    %5777 = vmatpush2.msra.mxu0 0.0
    %5778 = vmatprep.mubr.f32.mxu0 0.0
    %5779 = vmatmul.mubr.f32.gmra.mxu0 %v5690
    %v5780 = vpop.f32.mrf.mxu0
    %v5781 = vadd.f32 %v5712, %v5780
    %v5782 = vpop.f32.mrf.mxu0
    %5783 = vdwg.mxu0
    %v5784 = vmax.f32 %v5781, 0.0
    %v5785 = vld [vmem:[%s55] sm:$0xff]
    %v5786 = vld [vmem:[%s55 + $0x8] sm:$0xff]
    %v5787 = vld [vmem:[%s55 + $0x10] sm:$0xff]
    %v5788 = vld [vmem:[%s55 + $0x18] sm:$0xff]
    %v5789 = vld [vmem:[%s55 + $0x20] sm:$0xff]
    %v5790 = vld [vmem:[%s55 + $0x28] sm:$0xff]
    %v5791 = vld [vmem:[%s55 + $0x30] sm:$0xff]
    %v5792 = vld [vmem:[%s55 + $0x38] sm:$0xff]
    %v5793 = vld [vmem:[%s55 + $0x40] sm:$0xff]
    %v5794 = vld [vmem:[%s55 + $0x48] sm:$0xff]
    %v5795 = vld [vmem:[%s55 + $0x50] sm:$0xff]
    %v5796 = vld [vmem:[%s55 + $0x58] sm:$0xff]
    %v5797 = vld [vmem:[%s55 + $0x60] sm:$0xff]
    %v5798 = vld [vmem:[%s55 + $0x68] sm:$0xff]
    %v5799 = vld [vmem:[%s55 + $0x70] sm:$0xff]
    %v5800 = vld [vmem:[%s55 + $0x78] sm:$0xff]
    %v5801 = vld [vmem:[%s57] sm:$0x1]
    %v5803 = vlaneseq
    %v5804 = vshrl.u32 %v5803, 7
    %v5805 = vsub.s32 0, %v5804
    %v5806 = vrot.slane %v5801, %v5805
    %5808 = vmatprep.subr.mxu0 0.0
    %5809 = vmatpush1.msra.mxu0 %v5800
    %5810 = vmatprep.subr.mxu0 0.0
    %5811 = vmatpush1.msra.mxu0 %v5799
    %5812 = vmatprep.subr.mxu0 0.0
    %5813 = vmatpush1.msra.mxu0 %v5798
    %5814 = vmatprep.subr.mxu0 0.0
    %5815 = vmatpush1.msra.mxu0 %v5797
    %5816 = vmatprep.subr.mxu0 0.0
    %5817 = vmatpush1.msra.mxu0 %v5796
    %5818 = vmatprep.subr.mxu0 0.0
    %5819 = vmatpush1.msra.mxu0 %v5795
    %5820 = vmatprep.subr.mxu0 0.0
    %5821 = vmatpush1.msra.mxu0 %v5794
    %5822 = vmatprep.subr.mxu0 0.0
    %5823 = vmatpush1.msra.mxu0 %v5793
    %5824 = vmatprep.subr.mxu0 0.0
    %5825 = vmatpush1.msra.mxu0 %v5792
    %5826 = vmatprep.subr.mxu0 0.0
    %5827 = vmatpush1.msra.mxu0 %v5791
    %5828 = vmatprep.subr.mxu0 0.0
    %5829 = vmatpush1.msra.mxu0 %v5790
    %5830 = vmatprep.subr.mxu0 0.0
    %5831 = vmatpush1.msra.mxu0 %v5789
    %5832 = vmatprep.subr.mxu0 0.0
    %5833 = vmatpush1.msra.mxu0 %v5788
    %5834 = vmatprep.subr.mxu0 0.0
    %5835 = vmatpush1.msra.mxu0 %v5787
    %5836 = vmatprep.subr.mxu0 0.0
    %5837 = vmatpush1.msra.mxu0 %v5786
    %5838 = vmatprep.subr.mxu0 0.0
    %5839 = vmatpush1.msra.mxu0 %v5785
    %5840 = vmatprep.subr.mxu0 0.0
    %5841 = vmatpush2.msra.mxu0 0.0
    %5842 = vmatprep.subr.mxu0 0.0
    %5843 = vmatpush2.msra.mxu0 0.0
    %5844 = vmatprep.subr.mxu0 0.0
    %5845 = vmatpush2.msra.mxu0 0.0
    %5846 = vmatprep.subr.mxu0 0.0
    %5847 = vmatpush2.msra.mxu0 0.0
    %5848 = vmatprep.subr.mxu0 0.0
    %5849 = vmatpush2.msra.mxu0 0.0
    %5850 = vmatprep.subr.mxu0 0.0
    %5851 = vmatpush2.msra.mxu0 0.0
    %5852 = vmatprep.subr.mxu0 0.0
    %5853 = vmatpush2.msra.mxu0 0.0
    %5854 = vmatprep.subr.mxu0 0.0
    %5855 = vmatpush2.msra.mxu0 0.0
    %5856 = vmatprep.subr.mxu0 0.0
    %5857 = vmatpush2.msra.mxu0 0.0
    %5858 = vmatprep.subr.mxu0 0.0
    %5859 = vmatpush2.msra.mxu0 0.0
    %5860 = vmatprep.subr.mxu0 0.0
    %5861 = vmatpush2.msra.mxu0 0.0
    %5862 = vmatprep.subr.mxu0 0.0
    %5863 = vmatpush2.msra.mxu0 0.0
    %5864 = vmatprep.subr.mxu0 0.0
    %5865 = vmatpush2.msra.mxu0 0.0
    %5866 = vmatprep.subr.mxu0 0.0
    %5867 = vmatpush2.msra.mxu0 0.0
    %5868 = vmatprep.subr.mxu0 0.0
    %5869 = vmatpush2.msra.mxu0 0.0
    %5870 = vmatprep.subr.mxu0 0.0
    %5871 = vmatpush2.msra.mxu0 0.0
    %5872 = vmatprep.mubr.f32.mxu0 0.0
    %5873 = vmatmul.mubr.f32.gmra.mxu0 %v5784
    %v5874 = vpop.f32.mrf.mxu0
    %v5875 = vadd.f32 %v5806, %v5874
    %v5876 = vpop.f32.mrf.mxu0
    %5877 = vdwg.mxu0
    %vm5878 = vcmask 1041408
    %v5879 = vsel %vm5878, %v5875, -inf
    %5880 = vmax.xlane.f32.xlu0 %v5879
    %v5881 = vpop.xlane.xlu0 %5880
    %v5882 = vsub.f32 %v5875, %v5881
    %v5883 = vmul.f32 %v5882, 1.442695
    %v5884 = vpow.pop %v5883
    %v5885 = vsel %vm5878, %v5884, 0.0
    %5886 = vadd.xlane.f32.xlu0 %v5885
    %v5887 = vpop.xlane.xlu0 %5886
    %v5888 = vlog2.pop %v5887
    %v5889 = vmul.f32 %v5888, 0.6931472
    %v5890 = vadd.f32 %v5889, %v5881
    %v5891 = vsub.f32 %v5875, %v5890
    %5892 = vst [vmem:[#allocation20] sm:$0x3] %v5891
    // Predicated region
    $region162: #{en_gnn_forward.1} parent=1 // pred_check
      _
    $region163: #{en_gnn_forward.1} parent=1 // pred_check_branch
      %5894 = sbr.rel (0) target = $region165
    $region164: #{en_gnn_forward.1} parent=1 // pred_region
      %s5896 = ssub.s32 32, 32
      %5897 = vsyncadd [#allocation4], %s5896
      %s5899 = sshll.u32 [#allocation20], 4
      %s5900 = int_to_ptr.vmem [resolvable:$true] %s5899
      %5902 = dma.vmem_to_hbm [thread:$0]  %s5900, 32, %s59, [#allocation4]
    $region165: #{en_gnn_forward.1} parent=1 // pred_fallthru
      _
    // Predicated region
    $region166: #{en_gnn_forward.1} parent=1 // pred_check
      _
    $region167: #{en_gnn_forward.1} parent=1 // pred_check_branch
      %5904 = sbr.rel (0) target = $region169
    $region168: #{en_gnn_forward.1} parent=1 // pred_region
      %5905 = dma.done [#allocation4], 32
    $region169: #{en_gnn_forward.1} parent=1 // pred_fallthru
      _
    %5906 = vsyncpa [#allocation3], 1
    %5907 = vsyncpa [#allocation6], 1
    %5908 = vsyncpa [#allocation9], 1
    %5909 = vsyncpa [#allocation12], 1
    %5910 = vsyncpa [#allocation15], 1
    %5911 = vsyncpa [#allocation18], 1
    %5912 = vsyncpa [#allocation4], 1

</llo_original>
